<compile_context>
chip_gen: v7x
topology: tpu7x:2x2x1
jax: 0.10.0
libtpu: 0.0.40
codegen_flags: <defaults>
</compile_context>

<pallas_src>
import jax
import jax.numpy as jnp
from jax import lax
from jax.experimental import pallas as pl
from jax.experimental.pallas import tpu as pltpu


# -----------------------------------------------------------------------------
# Kernel 1: conv1 as a single big matmul (+ bias + ReLU), spatial-major output
# -----------------------------------------------------------------------------
def _conv1_kernel(p_ref, w_ref, b_ref, o_ref):
    # (TS, KKC) @ (KKC, C1) -> (TS, C1), f32 accumulation, fused bias + ReLU.
    acc = jnp.dot(p_ref[...], w_ref[...], preferred_element_type=jnp.float32)
    acc = acc + b_ref[...]                      # (1, C1) broadcast over sublanes
    o_ref[...] = jnp.maximum(acc, 0.0).astype(o_ref.dtype)


def conv1_mm_relu(patches, w_packed, b_row):
    """patches: (B, S, K*K*C_in), w_packed: (K*K*C_in, C1), b_row: (1, C1)."""
    B, S, KKC = patches.shape
    C1 = w_packed.shape[1]
    TS = 2048 if S % 2048 == 0 else S           # big tile: amortize step overhead
    grid = (B, S // TS)
    return pl.pallas_call(
        _conv1_kernel,
        out_shape=jax.ShapeDtypeStruct((B, S, C1), jnp.float32),
        grid=grid,
        in_specs=[
            pl.BlockSpec((pl.Squeezed(), TS, KKC), lambda bi, si: (bi, si, 0)),
            pl.BlockSpec((KKC, C1), lambda bi, si: (0, 0)),
            pl.BlockSpec((1, C1), lambda bi, si: (0, 0)),
        ],
        out_specs=pl.BlockSpec((pl.Squeezed(), TS, C1), lambda bi, si: (bi, si, 0)),
        compiler_params=pltpu.CompilerParams(
            dimension_semantics=("parallel", "parallel")),
    )(patches, w_packed, b_row)


# -----------------------------------------------------------------------------
# Kernel 2: fused convs 2-5 + flatten + linear (+ bias/ReLU), fully VMEM-resident
# -----------------------------------------------------------------------------
def _make_tail_kernel(h1, chans, latent):
    """h1: spatial size of conv1 output (square); chans: (C1, C2, C3, C4, C5)."""
    n_conv = len(chans) - 1
    hs = [h1 // (2 ** i) for i in range(n_conv + 1)]        # [64, 32, 16, 8, 4]

    def conv3x3_s2(src, dst, w_ref, b_ref, c_in, c_out, h_in, out_padded):
        # src: ((h_in+2)^2, c_in) zero-padded activation (spatial-major).
        # dst: padded ((h_out+2)^2, c_out) or unpadded (h_out^2, c_out).
        wp_in = h_in + 2
        h_out = h_in // 2
        wp_out = h_out + 2 if out_padded else h_out

        @pl.loop(0, h_out)
        def _(i):
            acc = jnp.zeros((h_out, c_out), jnp.float32)
            for kh in range(3):
                base = (2 * i + kh) * wp_in
                for kw in range(3):
                    t = kh * 3 + kw
                    # in-kernel im2col: stride-2 sublane read of one tap row
                    rows = src[pl.ds(base + kw, h_out, stride=2), :]
                    acc = acc + jnp.dot(
                        rows, w_ref[pl.ds(t * c_in, c_in), :],
                        preferred_element_type=jnp.float32)
            acc = jnp.maximum(acc + b_ref[...], 0.0)
            if out_padded:
                dst[pl.ds((i + 1) * wp_out + 1, h_out), :] = acc
            else:
                dst[pl.ds(i * wp_out, h_out), :] = acc

    def kernel(x_ref, w2, b2, w3, b3, w4, b4, w5, b5, lw, lb, o_ref,
               a2, a3, a4, a5, a6):
        # Zero the padded scratches each batch step: borders == conv zero-padding.
        for buf in (a2, a3, a4, a5):
            buf[...] = jnp.zeros_like(buf)

        # conv1 output (spatial-major (S1, C1)) -> interior of padded conv2 input.
        h0, wp0 = hs[0], hs[0] + 2

        @pl.loop(0, h0)
        def _(r):
            a2[pl.ds((r + 1) * wp0 + 1, h0), :] = x_ref[pl.ds(r * h0, h0), :]

        acts = (a2, a3, a4, a5, a6)
        ws = (w2, w3, w4, w5)
        bs = (b2, b3, b4, b5)
        for li in range(n_conv):
            conv3x3_s2(acts[li], acts[li + 1], ws[li], bs[li],
                       chans[li], chans[li + 1], hs[li],
                       out_padded=(li != n_conv - 1))

        # flatten (torch NCHW flatten(1); lin_w rows pre-permuted to s*C5 + c
        # order in pack_params) + Linear + ReLU, accumulated per spatial site.
        c5 = chans[-1]
        s5 = hs[-1] * hs[-1]
        acc = jnp.zeros((1, latent), jnp.float32)
        for s in range(s5):
            acc = acc + jnp.dot(a6[pl.ds(s, 1), :], lw[pl.ds(s * c5, c5), :],
                                preferred_element_type=jnp.float32)
        o_ref[...] = jnp.maximum(acc + lb[...], 0.0)

    return kernel


def tail_forward(y1, h1, packed):
    """y1: (B, S1, C1) f32 conv1 output (spatial-major) -> (B, latent) f32."""
    B, S1, C1 = y1.shape
    assert S1 == h1 * h1
    tail_w, tail_b = packed["tail_w"], packed["tail_b"]
    n_conv = len(tail_w)
    assert n_conv == 4
    chans = (C1,) + tuple(w.shape[1] for w in tail_w)
    hs = [h1 // (2 ** i) for i in range(n_conv + 1)]
    latent = packed["lin_w"].shape[1]
    assert packed["lin_w"].shape[0] == hs[-1] * hs[-1] * chans[-1]

    # VMEM scratch: padded inputs of convs 2..5 plus the unpadded conv5 output.
    scratch = [pltpu.VMEM(((hs[i] + 2) ** 2, chans[i]), jnp.float32)
               for i in range(n_conv)]
    scratch.append(pltpu.VMEM((hs[-1] * hs[-1], chans[-1]), jnp.float32))

    in_specs = [pl.BlockSpec((pl.Squeezed(), S1, C1), lambda b: (b, 0, 0))]
    inputs = [y1]
    for w, bvec in zip(tail_w, tail_b):
        in_specs.append(pl.BlockSpec(w.shape, lambda b: (0, 0)))
        in_specs.append(pl.BlockSpec(bvec.shape, lambda b: (0, 0)))
        inputs += [w, bvec]
    in_specs.append(pl.BlockSpec(packed["lin_w"].shape, lambda b: (0, 0)))
    in_specs.append(pl.BlockSpec(packed["lin_b"].shape, lambda b: (0, 0)))
    inputs += [packed["lin_w"], packed["lin_b"]]

    out = pl.pallas_call(
        _make_tail_kernel(h1, chans, latent),
        out_shape=jax.ShapeDtypeStruct((B, 1, latent), jnp.float32),
        grid=(B,),
        in_specs=in_specs,
        out_specs=pl.BlockSpec((pl.Squeezed(), 1, latent), lambda b: (b, 0, 0)),
        scratch_shapes=scratch,
        compiler_params=pltpu.CompilerParams(
            dimension_semantics=("parallel",)),
    )(*inputs)
    return out.reshape(B, latent)


# -----------------------------------------------------------------------------
# XLA-side im2col for conv1 only (stride 2, pad K//2), spatial-major patches
# -----------------------------------------------------------------------------
def _im2col_stride2_sp(x, K):
    """x: (B, C, H, W) -> (patches (B, H_out*W_out, K*K*C), H_out, W_out)."""
    B, C, H, W = x.shape
    p = K // 2
    H_out = (H + 2 * p - K) // 2 + 1
    W_out = (W + 2 * p - K) // 2 + 1
    x_pad = jnp.pad(x, ((0, 0), (0, 0), (p, p), (p, p)))
    cols = []
    for kh in range(K):
        for kw in range(K):
            win = lax.slice(x_pad, (0, 0, kh, kw),
                            (B, C, kh + 2 * H_out - 1, kw + 2 * W_out - 1),
                            (1, 1, 2, 2))
            cols.append(win)                            # (B, C, H_out, W_out)
    patches = jnp.stack(cols, axis=1)                   # (B, K*K, C, H_out, W_out)
    patches = patches.transpose(0, 3, 4, 1, 2)          # (B, H_out, W_out, K*K, C)
    return patches.reshape(B, H_out * W_out, K * K * C), H_out, W_out


# -----------------------------------------------------------------------------
# One-time parameter packing (all transposes/casts hoisted out of the forward)
# -----------------------------------------------------------------------------
def pack_params(params, compute_dtype=jnp.bfloat16):
    convs = params["convs"]
    (w1, b1) = convs[0]
    packed = {
        # (K,K,Cin,C1) -> (K*K*Cin, C1), cast to MXU compute dtype.
        "w1": w1.reshape(-1, w1.shape[-1]).astype(compute_dtype),
        "b1": b1.reshape(1, -1).astype(jnp.float32),
        "tail_w": [], "tail_b": [],
    }
    for (w, b) in convs[1:]:
        packed["tail_w"].append(w.reshape(-1, w.shape[-1]).astype(jnp.float32))
        packed["tail_b"].append(b.reshape(1, -1).astype(jnp.float32))
    # torch flatten(1) on NCHW is channel-major (c*S5 + s); the fused kernel
    # holds conv5 output spatial-major (s, c), so permute rows to s*C5 + c.
    lw, lb = params["lin_w"], params["lin_b"]
    c5 = convs[-1][0].shape[-1]
    s5 = lw.shape[0] // c5
    lw_p = lw.reshape(c5, s5, -1).transpose(1, 0, 2).reshape(c5 * s5, -1)
    packed["lin_w"] = lw_p.astype(jnp.float32)
    packed["lin_b"] = lb.reshape(1, -1).astype(jnp.float32)
    return packed


# -----------------------------------------------------------------------------
# Full forward pass (matches PyTorch ImageEncoder.forward semantics)
# -----------------------------------------------------------------------------
def image_encoder_forward(x_nchw, packed):
    w1 = packed["w1"]
    c_in = x_nchw.shape[1]
    k1 = int(round((w1.shape[0] // c_in) ** 0.5))
    patches, h1, w1_sp = _im2col_stride2_sp(x_nchw.astype(w1.dtype), k1)
    assert h1 == w1_sp
    y1 = conv1_mm_relu(patches, w1, packed["b1"])       # (B, S1, C1) f32
    return tail_forward(y1, h1, packed)                 # (B, latent) f32


# -----------------------------------------------------------------------------
# Parameter initialization (deterministic, synthetic; conv weights in HWIO)
# -----------------------------------------------------------------------------
def init_params(key, img_dim, latent_dim, base_dim):
    conv_cfg = [
        (img_dim, base_dim * 2, 7),
        (base_dim * 2, base_dim * 4, 3),
        (base_dim * 4, base_dim * 8, 3),
        (base_dim * 8, base_dim * 16, 3),
        (base_dim * 16, base_dim * 16, 3),
    ]
    convs = []
    for (cin, cout, k) in conv_cfg:
        key, kw_key, kb_key = jax.random.split(key, 3)
        scale = (2.0 / (k * k * cin)) ** 0.5
        w = jax.random.normal(kw_key, (k, k, cin, cout), jnp.float32) * scale
        b = jax.random.normal(kb_key, (cout,), jnp.float32) * 0.01
        convs.append((w, b))
    fin = base_dim * 16 * 4 * 4
    key, kw_key, kb_key = jax.random.split(key, 3)
    lin_w = jax.random.normal(kw_key, (fin, latent_dim), jnp.float32) * (2.0 / fin) ** 0.5
    lin_b = jax.random.normal(kb_key, (latent_dim,), jnp.float32) * 0.01
    return {"convs": convs, "lin_w": lin_w, "lin_b": lin_b}


# -----------------------------------------------------------------------------
# Pure-JAX f32 reference (torch-equivalent) for correctness checks
# -----------------------------------------------------------------------------
def reference_forward(x_nchw, params):
    x = x_nchw
    for (w, b) in params["convs"]:
        k = w.shape[0]
        p = k // 2
        y = lax.conv_general_dilated(
            x, w, (2, 2), [(p, p), (p, p)],
            dimension_numbers=("NCHW", "HWIO", "NCHW"))
        x = jax.nn.relu(y + b.reshape(1, -1, 1, 1))
    feat = x.reshape(x.shape[0], -1)
    return jax.nn.relu(feat @ params["lin_w"] + params["lin_b"])


if __name__ == "__main__":
    # The linear layer expects base_dim*16*4*4 features => 5 stride-2 convs must
    # end at 4x4, which forces a 128x128 spatial input. Keep batch/base_dim small.
    batch, img_dim, spatial = 2, 3, 128
    base_dim, latent_dim = 4, 16

    key = jax.random.PRNGKey(0)
    key, xkey = jax.random.split(key)
    x = jax.random.normal(xkey, (batch, img_dim, spatial, spatial), jnp.float32)
    params = init_params(key, img_dim, latent_dim, base_dim)

    fwd = jax.jit(image_encoder_forward)

    # bf16 MXU path (default).
    packed_bf16 = pack_params(params, jnp.bfloat16)
    out = jax.block_until_ready(fwd(x, packed_bf16))
    assert out.shape == (batch, latent_dim), out.shape

    # Exact-math validation: run the same kernels with f32 conv1 operands.
    packed_f32 = pack_params(params, jnp.float32)
    out_f32 = jax.block_until_ready(fwd(x, packed_f32))
    ref = jax.block_until_ready(reference_forward(x, params))

    err_f32 = float(jnp.max(jnp.abs(out_f32 - ref)))
    assert err_f32 < 1e-2, f"f32 kernel path mismatch vs reference: {err_f32}"

    err_bf16 = float(jnp.max(jnp.abs(out - ref)))
    tol_bf16 = 0.1 * (1.0 + float(jnp.max(jnp.abs(ref))))
    assert err_bf16 < tol_bf16, f"bf16 kernel path mismatch vs reference: {err_bf16}"

    print("KERNEL_OK")
</pallas_src>

<mosaic_0001>
module attributes {stable_mosaic.version = 11 : i64} {
  func.func @_conv1_kernel(%arg0: i32, %arg1: i32, %arg2: memref<1x2048x147xbf16, #tpu.memory_space<vmem>>, %arg3: memref<147x8xbf16, #tpu.memory_space<vmem>>, %arg4: memref<1x8xf32, #tpu.memory_space<vmem>>, %arg5: memref<1x2048x8xf32, #tpu.memory_space<vmem>>) attributes {dimension_semantics = [#tpu.dimension_semantics<parallel>, #tpu.dimension_semantics<parallel>], iteration_bounds = array<i64: 2, 2>, scalar_prefetch = 0 : i64, scratch_operands = 0 : i64, tpu.core_type = #tpu.core_type<tc>, window_params = [{transform_indices = @transform_0, window_bounds = array<i64: 1, 2048, 147>}, {pipeline_mode = #tpu.pipeline_mode<synchronous>, transform_indices = @transform_1, window_bounds = array<i64: 147, 8>}, {pipeline_mode = #tpu.pipeline_mode<synchronous>, transform_indices = @transform_2, window_bounds = array<i64: 1, 8>}, {transform_indices = @transform_3, window_bounds = array<i64: 1, 2048, 8>}]} {
    %c0 = arith.constant 0 : index
    %c0_0 = arith.constant 0 : index
    %c0_1 = arith.constant 0 : index
    %0 = vector.load %arg2[%c0, %c0_0, %c0_1] : memref<1x2048x147xbf16, #tpu.memory_space<vmem>>, vector<1x2048x147xbf16>
    %1 = vector.shape_cast %0 : vector<1x2048x147xbf16> to vector<2048x147xbf16>
    %c0_2 = arith.constant 0 : index
    %c0_3 = arith.constant 0 : index
    %2 = vector.load %arg3[%c0_2, %c0_3] : memref<147x8xbf16, #tpu.memory_space<vmem>>, vector<147x8xbf16>
    %cst = arith.constant dense<0.000000e+00> : vector<2048x8xf32>
    %3 = tpu.matmul %1, %2, %cst {dimension_numbers = #tpu.dot_dimension_numbers<[1], [0], [0], [1], [0, 0, 1, 1], [], []>} : vector<2048x147xbf16>, vector<147x8xbf16>, vector<2048x8xf32> -> vector<2048x8xf32>
    %c0_4 = arith.constant 0 : index
    %c0_5 = arith.constant 0 : index
    %4 = vector.load %arg4[%c0_4, %c0_5] : memref<1x8xf32, #tpu.memory_space<vmem>>, vector<1x8xf32>
    %5 = vector.broadcast %4 : vector<1x8xf32> to vector<2048x8xf32>
    %6 = arith.addf %3, %5 : vector<2048x8xf32>
    %cst_6 = arith.constant 0.000000e+00 : f32
    %7 = vector.broadcast %cst_6 : f32 to vector<2048x8xf32>
    %8 = arith.maximumf %6, %7 : vector<2048x8xf32>
    %c0_7 = arith.constant 0 : index
    %c0_8 = arith.constant 0 : index
    %c0_9 = arith.constant 0 : index
    %9 = vector.load %arg5[%c0_7, %c0_8, %c0_9] : memref<1x2048x8xf32, #tpu.memory_space<vmem>>, vector<1x2048x8xf32>
    %10 = vector.shape_cast %9 : vector<1x2048x8xf32> to vector<2048x8xf32>
    %11 = vector.shape_cast %8 : vector<2048x8xf32> to vector<1x2048x8xf32>
    tpu.vector_store %arg5[%c0_7, %c0_8, %c0_9], %11 {strides = array<i32>} : memref<1x2048x8xf32, #tpu.memory_space<vmem>>, vector<1x2048x8xf32>,
    return
  }
  func.func @transform_0(%arg0: i32, %arg1: i32) -> (i32, i32, i32) {
    %c0_i32 = arith.constant 0 : i32
    %c0_i32_0 = arith.constant 0 : i32
    return %arg0, %arg1, %c0_i32 : i32, i32, i32
  }
  func.func @transform_1(%arg0: i32, %arg1: i32) -> (i32, i32) {
    %c0_i32 = arith.constant 0 : i32
    %c0_i32_0 = arith.constant 0 : i32
    %c0_i32_1 = arith.constant 0 : i32
    return %c0_i32, %c0_i32_0 : i32, i32
  }
  func.func @transform_2(%arg0: i32, %arg1: i32) -> (i32, i32) {
    %c0_i32 = arith.constant 0 : i32
    %c0_i32_0 = arith.constant 0 : i32
    %c0_i32_1 = arith.constant 0 : i32
    return %c0_i32, %c0_i32_0 : i32, i32
  }
  func.func @transform_3(%arg0: i32, %arg1: i32) -> (i32, i32, i32) {
    %c0_i32 = arith.constant 0 : i32
    %c0_i32_0 = arith.constant 0 : i32
    return %arg0, %arg1, %c0_i32 : i32, i32, i32
  }
}

module attributes {stable_mosaic.version = 11 : i64} {
  func.func @kernel(%arg0: i32, %arg1: memref<1x4096x8xf32, #tpu.memory_space<vmem>>, %arg2: memref<72x16xf32, #tpu.memory_space<vmem>>, %arg3: memref<1x16xf32, #tpu.memory_space<vmem>>, %arg4: memref<144x32xf32, #tpu.memory_space<vmem>>, %arg5: memref<1x32xf32, #tpu.memory_space<vmem>>, %arg6: memref<288x64xf32, #tpu.memory_space<vmem>>, %arg7: memref<1x64xf32, #tpu.memory_space<vmem>>, %arg8: memref<576x64xf32, #tpu.memory_space<vmem>>, %arg9: memref<1x64xf32, #tpu.memory_space<vmem>>, %arg10: memref<1024x16xf32, #tpu.memory_space<vmem>>, %arg11: memref<1x16xf32, #tpu.memory_space<vmem>>, %arg12: memref<1x1x16xf32, #tpu.memory_space<vmem>>, %arg13: memref<4356x8xf32, #tpu.memory_space<vmem>>, %arg14: memref<1156x16xf32, #tpu.memory_space<vmem>>, %arg15: memref<324x32xf32, #tpu.memory_space<vmem>>, %arg16: memref<100x64xf32, #tpu.memory_space<vmem>>, %arg17: memref<16x64xf32, #tpu.memory_space<vmem>>) attributes {dimension_semantics = [#tpu.dimension_semantics<parallel>], iteration_bounds = array<i64: 2>, scalar_prefetch = 0 : i64, scratch_operands = 5 : i64, tpu.core_type = #tpu.core_type<tc>, window_params = [{transform_indices = @transform_0, window_bounds = array<i64: 1, 4096, 8>}, {pipeline_mode = #tpu.pipeline_mode<synchronous>, transform_indices = @transform_1, window_bounds = array<i64: 72, 16>}, {pipeline_mode = #tpu.pipeline_mode<synchronous>, transform_indices = @transform_2, window_bounds = array<i64: 1, 16>}, {pipeline_mode = #tpu.pipeline_mode<synchronous>, transform_indices = @transform_3, window_bounds = array<i64: 144, 32>}, {pipeline_mode = #tpu.pipeline_mode<synchronous>, transform_indices = @transform_4, window_bounds = array<i64: 1, 32>}, {pipeline_mode = #tpu.pipeline_mode<synchronous>, transform_indices = @transform_5, window_bounds = array<i64: 288, 64>}, {pipeline_mode = #tpu.pipeline_mode<synchronous>, transform_indices = @transform_6, window_bounds = array<i64: 1, 64>}, {pipeline_mode = #tpu.pipeline_mode<synchronous>, transform_indices = @transform_7, window_bounds = array<i64: 576, 64>}, {pipeline_mode = #tpu.pipeline_mode<synchronous>, transform_indices = @transform_8, window_bounds = array<i64: 1, 64>}, {pipeline_mode = #tpu.pipeline_mode<synchronous>, transform_indices = @transform_9, window_bounds = array<i64: 1024, 16>}, {pipeline_mode = #tpu.pipeline_mode<synchronous>, transform_indices = @transform_10, window_bounds = array<i64: 1, 16>}, {transform_indices = @transform_11, window_bounds = array<i64: 1, 1, 16>}]} {
    %cst = arith.constant 0.000000e+00 : f32
    %0 = vector.broadcast %cst : f32 to vector<4356x8xf32>
    %c0 = arith.constant 0 : index
    %c0_0 = arith.constant 0 : index
    %1 = vector.load %arg13[%c0, %c0_0] : memref<4356x8xf32, #tpu.memory_space<vmem>>, vector<4356x8xf32>
    tpu.vector_store %arg13[%c0, %c0_0], %0 {strides = array<i32>} : memref<4356x8xf32, #tpu.memory_space<vmem>>, vector<4356x8xf32>,
    %cst_1 = arith.constant 0.000000e+00 : f32
    %2 = vector.broadcast %cst_1 : f32 to vector<1156x16xf32>
    %c0_2 = arith.constant 0 : index
    %c0_3 = arith.constant 0 : index
    %3 = vector.load %arg14[%c0_2, %c0_3] : memref<1156x16xf32, #tpu.memory_space<vmem>>, vector<1156x16xf32>
    tpu.vector_store %arg14[%c0_2, %c0_3], %2 {strides = array<i32>} : memref<1156x16xf32, #tpu.memory_space<vmem>>, vector<1156x16xf32>,
    %cst_4 = arith.constant 0.000000e+00 : f32
    %4 = vector.broadcast %cst_4 : f32 to vector<324x32xf32>
    %c0_5 = arith.constant 0 : index
    %c0_6 = arith.constant 0 : index
    %5 = vector.load %arg15[%c0_5, %c0_6] : memref<324x32xf32, #tpu.memory_space<vmem>>, vector<324x32xf32>
    tpu.vector_store %arg15[%c0_5, %c0_6], %4 {strides = array<i32>} : memref<324x32xf32, #tpu.memory_space<vmem>>, vector<324x32xf32>,
    %cst_7 = arith.constant 0.000000e+00 : f32
    %6 = vector.broadcast %cst_7 : f32 to vector<100x64xf32>
    %c0_8 = arith.constant 0 : index
    %c0_9 = arith.constant 0 : index
    %7 = vector.load %arg16[%c0_8, %c0_9] : memref<100x64xf32, #tpu.memory_space<vmem>>, vector<100x64xf32>
    tpu.vector_store %arg16[%c0_8, %c0_9], %6 {strides = array<i32>} : memref<100x64xf32, #tpu.memory_space<vmem>>, vector<100x64xf32>,
    %c0_i32 = arith.constant 0 : i32
    %c64_i32 = arith.constant 64 : i32
    %8 = arith.addi %c0_i32, %c64_i32 : i32
    %c1_i32 = arith.constant 1 : i32
    scf.for %arg18 = %c0_i32 to %8 step %c1_i32  : i32 {
      %c1_i32_80 = arith.constant 1 : i32
      %85 = arith.muli %arg18, %c1_i32_80 : i32
      %c0_i32_81 = arith.constant 0 : i32
      %86 = arith.addi %c0_i32_81, %85 : i32
      %c64_i32_82 = arith.constant 64 : i32
      %87 = arith.muli %86, %c64_i32_82 : i32
      %c0_83 = arith.constant 0 : index
      %88 = arith.index_cast %87 : i32 to index
      %c0_84 = arith.constant 0 : index
      %89 = vector.load %arg1[%c0_83, %88, %c0_84] : memref<1x4096x8xf32, #tpu.memory_space<vmem>>, vector<1x64x8xf32>
      %90 = vector.shape_cast %89 : vector<1x64x8xf32> to vector<64x8xf32>
      %c1_i32_85 = arith.constant 1 : i32
      %91 = arith.addi %86, %c1_i32_85 : i32
      %c66_i32 = arith.constant 66 : i32
      %92 = arith.muli %91, %c66_i32 : i32
      %c1_i32_86 = arith.constant 1 : i32
      %93 = arith.addi %92, %c1_i32_86 : i32
      %94 = arith.index_cast %93 : i32 to index
      %c0_87 = arith.constant 0 : index
      %95 = vector.load %arg13[%94, %c0_87] : memref<4356x8xf32, #tpu.memory_space<vmem>>, vector<64x8xf32>
      tpu.vector_store %arg13[%94, %c0_87], %90 {strides = array<i32>} : memref<4356x8xf32, #tpu.memory_space<vmem>>, vector<64x8xf32>,
    }
    %c64_i32_10 = arith.constant 64 : i32
    %c0_i32_11 = arith.constant 0 : i32
    %c32_i32 = arith.constant 32 : i32
    %9 = arith.addi %c0_i32_11, %c32_i32 : i32
    %c1_i32_12 = arith.constant 1 : i32
    scf.for %arg18 = %c0_i32_11 to %9 step %c1_i32_12  : i32 {
      %c1_i32_80 = arith.constant 1 : i32
      %85 = arith.muli %arg18, %c1_i32_80 : i32
      %c0_i32_81 = arith.constant 0 : i32
      %86 = arith.addi %c0_i32_81, %85 : i32
      %cst_82 = arith.constant 0.000000e+00 : f32
      %87 = vector.broadcast %cst_82 : f32 to vector<32x16xf32>
      %c2_i32 = arith.constant 2 : i32
      %88 = arith.muli %c2_i32, %86 : i32
      %c0_i32_83 = arith.constant 0 : i32
      %89 = arith.addi %88, %c0_i32_83 : i32
      %c66_i32 = arith.constant 66 : i32
      %90 = arith.muli %89, %c66_i32 : i32
      %c0_i32_84 = arith.constant 0 : i32
      %91 = arith.addi %90, %c0_i32_84 : i32
      %92 = arith.index_cast %91 : i32 to index
      %c0_85 = arith.constant 0 : index
      %93 = tpu.strided_load %arg13[%92, %c0_85] {strides = array<i32: 2, 1>} : memref<4356x8xf32, #tpu.memory_space<vmem>>, vector<32x8xf32>
      %c0_86 = arith.constant 0 : index
      %c0_87 = arith.constant 0 : index
      %94 = vector.load %arg2[%c0_86, %c0_87] : memref<72x16xf32, #tpu.memory_space<vmem>>, vector<8x16xf32>
      %cst_88 = arith.constant dense<0.000000e+00> : vector<32x16xf32>
      %95 = tpu.matmul %93, %94, %cst_88 {dimension_numbers = #tpu.dot_dimension_numbers<[1], [0], [0], [1], [0, 0, 1, 1], [], []>} : vector<32x8xf32>, vector<8x16xf32>, vector<32x16xf32> -> vector<32x16xf32>
      %96 = arith.addf %87, %95 : vector<32x16xf32>
      %c1_i32_89 = arith.constant 1 : i32
      %97 = arith.addi %90, %c1_i32_89 : i32
      %98 = arith.index_cast %97 : i32 to index
      %c0_90 = arith.constant 0 : index
      %99 = tpu.strided_load %arg13[%98, %c0_90] {strides = array<i32: 2, 1>} : memref<4356x8xf32, #tpu.memory_space<vmem>>, vector<32x8xf32>
      %c8_91 = arith.constant 8 : index
      %c0_92 = arith.constant 0 : index
      %100 = vector.load %arg2[%c8_91, %c0_92] : memref<72x16xf32, #tpu.memory_space<vmem>>, vector<8x16xf32>
      %cst_93 = arith.constant dense<0.000000e+00> : vector<32x16xf32>
      %101 = tpu.matmul %99, %100, %cst_93 {dimension_numbers = #tpu.dot_dimension_numbers<[1], [0], [0], [1], [0, 0, 1, 1], [], []>} : vector<32x8xf32>, vector<8x16xf32>, vector<32x16xf32> -> vector<32x16xf32>
      %102 = arith.addf %96, %101 : vector<32x16xf32>
      %c2_i32_94 = arith.constant 2 : i32
      %103 = arith.addi %90, %c2_i32_94 : i32
      %104 = arith.index_cast %103 : i32 to index
      %c0_95 = arith.constant 0 : index
      %105 = tpu.strided_load %arg13[%104, %c0_95] {strides = array<i32: 2, 1>} : memref<4356x8xf32, #tpu.memory_space<vmem>>, vector<32x8xf32>
      %c16 = arith.constant 16 : index
      %c0_96 = arith.constant 0 : index
      %106 = vector.load %arg2[%c16, %c0_96] : memref<72x16xf32, #tpu.memory_space<vmem>>, vector<8x16xf32>
      %cst_97 = arith.constant dense<0.000000e+00> : vector<32x16xf32>
      %107 = tpu.matmul %105, %106, %cst_97 {dimension_numbers = #tpu.dot_dimension_numbers<[1], [0], [0], [1], [0, 0, 1, 1], [], []>} : vector<32x8xf32>, vector<8x16xf32>, vector<32x16xf32> -> vector<32x16xf32>
      %108 = arith.addf %102, %107 : vector<32x16xf32>
      %c2_i32_98 = arith.constant 2 : i32
      %109 = arith.muli %c2_i32_98, %86 : i32
      %c1_i32_99 = arith.constant 1 : i32
      %110 = arith.addi %109, %c1_i32_99 : i32
      %c66_i32_100 = arith.constant 66 : i32
      %111 = arith.muli %110, %c66_i32_100 : i32
      %c0_i32_101 = arith.constant 0 : i32
      %112 = arith.addi %111, %c0_i32_101 : i32
      %113 = arith.index_cast %112 : i32 to index
      %c0_102 = arith.constant 0 : index
      %114 = tpu.strided_load %arg13[%113, %c0_102] {strides = array<i32: 2, 1>} : memref<4356x8xf32, #tpu.memory_space<vmem>>, vector<32x8xf32>
      %c24 = arith.constant 24 : index
      %c0_103 = arith.constant 0 : index
      %115 = vector.load %arg2[%c24, %c0_103] : memref<72x16xf32, #tpu.memory_space<vmem>>, vector<8x16xf32>
      %cst_104 = arith.constant dense<0.000000e+00> : vector<32x16xf32>
      %116 = tpu.matmul %114, %115, %cst_104 {dimension_numbers = #tpu.dot_dimension_numbers<[1], [0], [0], [1], [0, 0, 1, 1], [], []>} : vector<32x8xf32>, vector<8x16xf32>, vector<32x16xf32> -> vector<32x16xf32>
      %117 = arith.addf %108, %116 : vector<32x16xf32>
      %c1_i32_105 = arith.constant 1 : i32
      %118 = arith.addi %111, %c1_i32_105 : i32
      %119 = arith.index_cast %118 : i32 to index
      %c0_106 = arith.constant 0 : index
      %120 = tpu.strided_load %arg13[%119, %c0_106] {strides = array<i32: 2, 1>} : memref<4356x8xf32, #tpu.memory_space<vmem>>, vector<32x8xf32>
      %c32 = arith.constant 32 : index
      %c0_107 = arith.constant 0 : index
      %121 = vector.load %arg2[%c32, %c0_107] : memref<72x16xf32, #tpu.memory_space<vmem>>, vector<8x16xf32>
      %cst_108 = arith.constant dense<0.000000e+00> : vector<32x16xf32>
      %122 = tpu.matmul %120, %121, %cst_108 {dimension_numbers = #tpu.dot_dimension_numbers<[1], [0], [0], [1], [0, 0, 1, 1], [], []>} : vector<32x8xf32>, vector<8x16xf32>, vector<32x16xf32> -> vector<32x16xf32>
      %123 = arith.addf %117, %122 : vector<32x16xf32>
      %c2_i32_109 = arith.constant 2 : i32
      %124 = arith.addi %111, %c2_i32_109 : i32
      %125 = arith.index_cast %124 : i32 to index
      %c0_110 = arith.constant 0 : index
      %126 = tpu.strided_load %arg13[%125, %c0_110] {strides = array<i32: 2, 1>} : memref<4356x8xf32, #tpu.memory_space<vmem>>, vector<32x8xf32>
      %c40 = arith.constant 40 : index
      %c0_111 = arith.constant 0 : index
      %127 = vector.load %arg2[%c40, %c0_111] : memref<72x16xf32, #tpu.memory_space<vmem>>, vector<8x16xf32>
      %cst_112 = arith.constant dense<0.000000e+00> : vector<32x16xf32>
      %128 = tpu.matmul %126, %127, %cst_112 {dimension_numbers = #tpu.dot_dimension_numbers<[1], [0], [0], [1], [0, 0, 1, 1], [], []>} : vector<32x8xf32>, vector<8x16xf32>, vector<32x16xf32> -> vector<32x16xf32>
      %129 = arith.addf %123, %128 : vector<32x16xf32>
      %c2_i32_113 = arith.constant 2 : i32
      %130 = arith.muli %c2_i32_113, %86 : i32
      %c2_i32_114 = arith.constant 2 : i32
      %131 = arith.addi %130, %c2_i32_114 : i32
      %c66_i32_115 = arith.constant 66 : i32
      %132 = arith.muli %131, %c66_i32_115 : i32
      %c0_i32_116 = arith.constant 0 : i32
      %133 = arith.addi %132, %c0_i32_116 : i32
      %134 = arith.index_cast %133 : i32 to index
      %c0_117 = arith.constant 0 : index
      %135 = tpu.strided_load %arg13[%134, %c0_117] {strides = array<i32: 2, 1>} : memref<4356x8xf32, #tpu.memory_space<vmem>>, vector<32x8xf32>
      %c48 = arith.constant 48 : index
      %c0_118 = arith.constant 0 : index
      %136 = vector.load %arg2[%c48, %c0_118] : memref<72x16xf32, #tpu.memory_space<vmem>>, vector<8x16xf32>
      %cst_119 = arith.constant dense<0.000000e+00> : vector<32x16xf32>
      %137 = tpu.matmul %135, %136, %cst_119 {dimension_numbers = #tpu.dot_dimension_numbers<[1], [0], [0], [1], [0, 0, 1, 1], [], []>} : vector<32x8xf32>, vector<8x16xf32>, vector<32x16xf32> -> vector<32x16xf32>
      %138 = arith.addf %129, %137 : vector<32x16xf32>
      %c1_i32_120 = arith.constant 1 : i32
      %139 = arith.addi %132, %c1_i32_120 : i32
      %140 = arith.index_cast %139 : i32 to index
      %c0_121 = arith.constant 0 : index
      %141 = tpu.strided_load %arg13[%140, %c0_121] {strides = array<i32: 2, 1>} : memref<4356x8xf32, #tpu.memory_space<vmem>>, vector<32x8xf32>
      %c56 = arith.constant 56 : index
      %c0_122 = arith.constant 0 : index
      %142 = vector.load %arg2[%c56, %c0_122] : memref<72x16xf32, #tpu.memory_space<vmem>>, vector<8x16xf32>
      %cst_123 = arith.constant dense<0.000000e+00> : vector<32x16xf32>
      %143 = tpu.matmul %141, %142, %cst_123 {dimension_numbers = #tpu.dot_dimension_numbers<[1], [0], [0], [1], [0, 0, 1, 1], [], []>} : vector<32x8xf32>, vector<8x16xf32>, vector<32x16xf32> -> vector<32x16xf32>
      %144 = arith.addf %138, %143 : vector<32x16xf32>
      %c2_i32_124 = arith.constant 2 : i32
      %145 = arith.addi %132, %c2_i32_124 : i32
      %146 = arith.index_cast %145 : i32 to index
      %c0_125 = arith.constant 0 : index
      %147 = tpu.strided_load %arg13[%146, %c0_125] {strides = array<i32: 2, 1>} : memref<4356x8xf32, #tpu.memory_space<vmem>>, vector<32x8xf32>
      %c64_126 = arith.constant 64 : index
      %c0_127 = arith.constant 0 : index
      %148 = vector.load %arg2[%c64_126, %c0_127] : memref<72x16xf32, #tpu.memory_space<vmem>>, vector<8x16xf32>
      %cst_128 = arith.constant dense<0.000000e+00> : vector<32x16xf32>
      %149 = tpu.matmul %147, %148, %cst_128 {dimension_numbers = #tpu.dot_dimension_numbers<[1], [0], [0], [1], [0, 0, 1, 1], [], []>} : vector<32x8xf32>, vector<8x16xf32>, vector<32x16xf32> -> vector<32x16xf32>
      %150 = arith.addf %144, %149 : vector<32x16xf32>
      %c0_129 = arith.constant 0 : index
      %c0_130 = arith.constant 0 : index
      %151 = vector.load %arg3[%c0_129, %c0_130] : memref<1x16xf32, #tpu.memory_space<vmem>>, vector<1x16xf32>
      %152 = vector.broadcast %151 : vector<1x16xf32> to vector<32x16xf32>
      %153 = arith.addf %150, %152 : vector<32x16xf32>
      %cst_131 = arith.constant 0.000000e+00 : f32
      %154 = vector.broadcast %cst_131 : f32 to vector<32x16xf32>
      %155 = arith.maximumf %153, %154 : vector<32x16xf32>
      %c1_i32_132 = arith.constant 1 : i32
      %156 = arith.addi %86, %c1_i32_132 : i32
      %c34_i32 = arith.constant 34 : i32
      %157 = arith.muli %156, %c34_i32 : i32
      %c1_i32_133 = arith.constant 1 : i32
      %158 = arith.addi %157, %c1_i32_133 : i32
      %159 = arith.index_cast %158 : i32 to index
      %c0_134 = arith.constant 0 : index
      %160 = vector.load %arg14[%159, %c0_134] : memref<1156x16xf32, #tpu.memory_space<vmem>>, vector<32x16xf32>
      tpu.vector_store %arg14[%159, %c0_134], %155 {strides = array<i32>} : memref<1156x16xf32, #tpu.memory_space<vmem>>, vector<32x16xf32>,
    }
    %c32_i32_13 = arith.constant 32 : i32
    %c0_i32_14 = arith.constant 0 : i32
    %c16_i32 = arith.constant 16 : i32
    %10 = arith.addi %c0_i32_14, %c16_i32 : i32
    %c1_i32_15 = arith.constant 1 : i32
    scf.for %arg18 = %c0_i32_14 to %10 step %c1_i32_15  : i32 {
      %c1_i32_80 = arith.constant 1 : i32
      %85 = arith.muli %arg18, %c1_i32_80 : i32
      %c0_i32_81 = arith.constant 0 : i32
      %86 = arith.addi %c0_i32_81, %85 : i32
      %cst_82 = arith.constant 0.000000e+00 : f32
      %87 = vector.broadcast %cst_82 : f32 to vector<16x32xf32>
      %c2_i32 = arith.constant 2 : i32
      %88 = arith.muli %c2_i32, %86 : i32
      %c0_i32_83 = arith.constant 0 : i32
      %89 = arith.addi %88, %c0_i32_83 : i32
      %c34_i32 = arith.constant 34 : i32
      %90 = arith.muli %89, %c34_i32 : i32
      %c0_i32_84 = arith.constant 0 : i32
      %91 = arith.addi %90, %c0_i32_84 : i32
      %92 = arith.index_cast %91 : i32 to index
      %c0_85 = arith.constant 0 : index
      %93 = tpu.strided_load %arg14[%92, %c0_85] {strides = array<i32: 2, 1>} : memref<1156x16xf32, #tpu.memory_space<vmem>>, vector<16x16xf32>
      %c0_86 = arith.constant 0 : index
      %c0_87 = arith.constant 0 : index
      %94 = vector.load %arg4[%c0_86, %c0_87] : memref<144x32xf32, #tpu.memory_space<vmem>>, vector<16x32xf32>
      %cst_88 = arith.constant dense<0.000000e+00> : vector<16x32xf32>
      %95 = tpu.matmul %93, %94, %cst_88 {dimension_numbers = #tpu.dot_dimension_numbers<[1], [0], [0], [1], [0, 0, 1, 1], [], []>} : vector<16x16xf32>, vector<16x32xf32>, vector<16x32xf32> -> vector<16x32xf32>
      %96 = arith.addf %87, %95 : vector<16x32xf32>
      %c1_i32_89 = arith.constant 1 : i32
      %97 = arith.addi %90, %c1_i32_89 : i32
      %98 = arith.index_cast %97 : i32 to index
      %c0_90 = arith.constant 0 : index
      %99 = tpu.strided_load %arg14[%98, %c0_90] {strides = array<i32: 2, 1>} : memref<1156x16xf32, #tpu.memory_space<vmem>>, vector<16x16xf32>
      %c16 = arith.constant 16 : index
      %c0_91 = arith.constant 0 : index
      %100 = vector.load %arg4[%c16, %c0_91] : memref<144x32xf32, #tpu.memory_space<vmem>>, vector<16x32xf32>
      %cst_92 = arith.constant dense<0.000000e+00> : vector<16x32xf32>
      %101 = tpu.matmul %99, %100, %cst_92 {dimension_numbers = #tpu.dot_dimension_numbers<[1], [0], [0], [1], [0, 0, 1, 1], [], []>} : vector<16x16xf32>, vector<16x32xf32>, vector<16x32xf32> -> vector<16x32xf32>
      %102 = arith.addf %96, %101 : vector<16x32xf32>
      %c2_i32_93 = arith.constant 2 : i32
      %103 = arith.addi %90, %c2_i32_93 : i32
      %104 = arith.index_cast %103 : i32 to index
      %c0_94 = arith.constant 0 : index
      %105 = tpu.strided_load %arg14[%104, %c0_94] {strides = array<i32: 2, 1>} : memref<1156x16xf32, #tpu.memory_space<vmem>>, vector<16x16xf32>
      %c32 = arith.constant 32 : index
      %c0_95 = arith.constant 0 : index
      %106 = vector.load %arg4[%c32, %c0_95] : memref<144x32xf32, #tpu.memory_space<vmem>>, vector<16x32xf32>
      %cst_96 = arith.constant dense<0.000000e+00> : vector<16x32xf32>
      %107 = tpu.matmul %105, %106, %cst_96 {dimension_numbers = #tpu.dot_dimension_numbers<[1], [0], [0], [1], [0, 0, 1, 1], [], []>} : vector<16x16xf32>, vector<16x32xf32>, vector<16x32xf32> -> vector<16x32xf32>
      %108 = arith.addf %102, %107 : vector<16x32xf32>
      %c2_i32_97 = arith.constant 2 : i32
      %109 = arith.muli %c2_i32_97, %86 : i32
      %c1_i32_98 = arith.constant 1 : i32
      %110 = arith.addi %109, %c1_i32_98 : i32
      %c34_i32_99 = arith.constant 34 : i32
      %111 = arith.muli %110, %c34_i32_99 : i32
      %c0_i32_100 = arith.constant 0 : i32
      %112 = arith.addi %111, %c0_i32_100 : i32
      %113 = arith.index_cast %112 : i32 to index
      %c0_101 = arith.constant 0 : index
      %114 = tpu.strided_load %arg14[%113, %c0_101] {strides = array<i32: 2, 1>} : memref<1156x16xf32, #tpu.memory_space<vmem>>, vector<16x16xf32>
      %c48 = arith.constant 48 : index
      %c0_102 = arith.constant 0 : index
      %115 = vector.load %arg4[%c48, %c0_102] : memref<144x32xf32, #tpu.memory_space<vmem>>, vector<16x32xf32>
      %cst_103 = arith.constant dense<0.000000e+00> : vector<16x32xf32>
      %116 = tpu.matmul %114, %115, %cst_103 {dimension_numbers = #tpu.dot_dimension_numbers<[1], [0], [0], [1], [0, 0, 1, 1], [], []>} : vector<16x16xf32>, vector<16x32xf32>, vector<16x32xf32> -> vector<16x32xf32>
      %117 = arith.addf %108, %116 : vector<16x32xf32>
      %c1_i32_104 = arith.constant 1 : i32
      %118 = arith.addi %111, %c1_i32_104 : i32
      %119 = arith.index_cast %118 : i32 to index
      %c0_105 = arith.constant 0 : index
      %120 = tpu.strided_load %arg14[%119, %c0_105] {strides = array<i32: 2, 1>} : memref<1156x16xf32, #tpu.memory_space<vmem>>, vector<16x16xf32>
      %c64_106 = arith.constant 64 : index
      %c0_107 = arith.constant 0 : index
      %121 = vector.load %arg4[%c64_106, %c0_107] : memref<144x32xf32, #tpu.memory_space<vmem>>, vector<16x32xf32>
      %cst_108 = arith.constant dense<0.000000e+00> : vector<16x32xf32>
      %122 = tpu.matmul %120, %121, %cst_108 {dimension_numbers = #tpu.dot_dimension_numbers<[1], [0], [0], [1], [0, 0, 1, 1], [], []>} : vector<16x16xf32>, vector<16x32xf32>, vector<16x32xf32> -> vector<16x32xf32>
      %123 = arith.addf %117, %122 : vector<16x32xf32>
      %c2_i32_109 = arith.constant 2 : i32
      %124 = arith.addi %111, %c2_i32_109 : i32
      %125 = arith.index_cast %124 : i32 to index
      %c0_110 = arith.constant 0 : index
      %126 = tpu.strided_load %arg14[%125, %c0_110] {strides = array<i32: 2, 1>} : memref<1156x16xf32, #tpu.memory_space<vmem>>, vector<16x16xf32>
      %c80 = arith.constant 80 : index
      %c0_111 = arith.constant 0 : index
      %127 = vector.load %arg4[%c80, %c0_111] : memref<144x32xf32, #tpu.memory_space<vmem>>, vector<16x32xf32>
      %cst_112 = arith.constant dense<0.000000e+00> : vector<16x32xf32>
      %128 = tpu.matmul %126, %127, %cst_112 {dimension_numbers = #tpu.dot_dimension_numbers<[1], [0], [0], [1], [0, 0, 1, 1], [], []>} : vector<16x16xf32>, vector<16x32xf32>, vector<16x32xf32> -> vector<16x32xf32>
      %129 = arith.addf %123, %128 : vector<16x32xf32>
      %c2_i32_113 = arith.constant 2 : i32
      %130 = arith.muli %c2_i32_113, %86 : i32
      %c2_i32_114 = arith.constant 2 : i32
      %131 = arith.addi %130, %c2_i32_114 : i32
      %c34_i32_115 = arith.constant 34 : i32
      %132 = arith.muli %131, %c34_i32_115 : i32
      %c0_i32_116 = arith.constant 0 : i32
      %133 = arith.addi %132, %c0_i32_116 : i32
      %134 = arith.index_cast %133 : i32 to index
      %c0_117 = arith.constant 0 : index
      %135 = tpu.strided_load %arg14[%134, %c0_117] {strides = array<i32: 2, 1>} : memref<1156x16xf32, #tpu.memory_space<vmem>>, vector<16x16xf32>
      %c96 = arith.constant 96 : index
      %c0_118 = arith.constant 0 : index
      %136 = vector.load %arg4[%c96, %c0_118] : memref<144x32xf32, #tpu.memory_space<vmem>>, vector<16x32xf32>
      %cst_119 = arith.constant dense<0.000000e+00> : vector<16x32xf32>
      %137 = tpu.matmul %135, %136, %cst_119 {dimension_numbers = #tpu.dot_dimension_numbers<[1], [0], [0], [1], [0, 0, 1, 1], [], []>} : vector<16x16xf32>, vector<16x32xf32>, vector<16x32xf32> -> vector<16x32xf32>
      %138 = arith.addf %129, %137 : vector<16x32xf32>
      %c1_i32_120 = arith.constant 1 : i32
      %139 = arith.addi %132, %c1_i32_120 : i32
      %140 = arith.index_cast %139 : i32 to index
      %c0_121 = arith.constant 0 : index
      %141 = tpu.strided_load %arg14[%140, %c0_121] {strides = array<i32: 2, 1>} : memref<1156x16xf32, #tpu.memory_space<vmem>>, vector<16x16xf32>
      %c112 = arith.constant 112 : index
      %c0_122 = arith.constant 0 : index
      %142 = vector.load %arg4[%c112, %c0_122] : memref<144x32xf32, #tpu.memory_space<vmem>>, vector<16x32xf32>
      %cst_123 = arith.constant dense<0.000000e+00> : vector<16x32xf32>
      %143 = tpu.matmul %141, %142, %cst_123 {dimension_numbers = #tpu.dot_dimension_numbers<[1], [0], [0], [1], [0, 0, 1, 1], [], []>} : vector<16x16xf32>, vector<16x32xf32>, vector<16x32xf32> -> vector<16x32xf32>
      %144 = arith.addf %138, %143 : vector<16x32xf32>
      %c2_i32_124 = arith.constant 2 : i32
      %145 = arith.addi %132, %c2_i32_124 : i32
      %146 = arith.index_cast %145 : i32 to index
      %c0_125 = arith.constant 0 : index
      %147 = tpu.strided_load %arg14[%146, %c0_125] {strides = array<i32: 2, 1>} : memref<1156x16xf32, #tpu.memory_space<vmem>>, vector<16x16xf32>
      %c128_126 = arith.constant 128 : index
      %c0_127 = arith.constant 0 : index
      %148 = vector.load %arg4[%c128_126, %c0_127] : memref<144x32xf32, #tpu.memory_space<vmem>>, vector<16x32xf32>
      %cst_128 = arith.constant dense<0.000000e+00> : vector<16x32xf32>
      %149 = tpu.matmul %147, %148, %cst_128 {dimension_numbers = #tpu.dot_dimension_numbers<[1], [0], [0], [1], [0, 0, 1, 1], [], []>} : vector<16x16xf32>, vector<16x32xf32>, vector<16x32xf32> -> vector<16x32xf32>
      %150 = arith.addf %144, %149 : vector<16x32xf32>
      %c0_129 = arith.constant 0 : index
      %c0_130 = arith.constant 0 : index
      %151 = vector.load %arg5[%c0_129, %c0_130] : memref<1x32xf32, #tpu.memory_space<vmem>>, vector<1x32xf32>
      %152 = vector.broadcast %151 : vector<1x32xf32> to vector<16x32xf32>
      %153 = arith.addf %150, %152 : vector<16x32xf32>
      %cst_131 = arith.constant 0.000000e+00 : f32
      %154 = vector.broadcast %cst_131 : f32 to vector<16x32xf32>
      %155 = arith.maximumf %153, %154 : vector<16x32xf32>
      %c1_i32_132 = arith.constant 1 : i32
      %156 = arith.addi %86, %c1_i32_132 : i32
      %c18_i32 = arith.constant 18 : i32
      %157 = arith.muli %156, %c18_i32 : i32
      %c1_i32_133 = arith.constant 1 : i32
      %158 = arith.addi %157, %c1_i32_133 : i32
      %159 = arith.index_cast %158 : i32 to index
      %c0_134 = arith.constant 0 : index
      %160 = vector.load %arg15[%159, %c0_134] : memref<324x32xf32, #tpu.memory_space<vmem>>, vector<16x32xf32>
      tpu.vector_store %arg15[%159, %c0_134], %155 {strides = array<i32>} : memref<324x32xf32, #tpu.memory_space<vmem>>, vector<16x32xf32>,
    }
    %c16_i32_16 = arith.constant 16 : i32
    %c0_i32_17 = arith.constant 0 : i32
    %c8_i32 = arith.constant 8 : i32
    %11 = arith.addi %c0_i32_17, %c8_i32 : i32
    %c1_i32_18 = arith.constant 1 : i32
    scf.for %arg18 = %c0_i32_17 to %11 step %c1_i32_18  : i32 {
      %c1_i32_80 = arith.constant 1 : i32
      %85 = arith.muli %arg18, %c1_i32_80 : i32
      %c0_i32_81 = arith.constant 0 : i32
      %86 = arith.addi %c0_i32_81, %85 : i32
      %cst_82 = arith.constant 0.000000e+00 : f32
      %87 = vector.broadcast %cst_82 : f32 to vector<8x64xf32>
      %c2_i32 = arith.constant 2 : i32
      %88 = arith.muli %c2_i32, %86 : i32
      %c0_i32_83 = arith.constant 0 : i32
      %89 = arith.addi %88, %c0_i32_83 : i32
      %c18_i32 = arith.constant 18 : i32
      %90 = arith.muli %89, %c18_i32 : i32
      %c0_i32_84 = arith.constant 0 : i32
      %91 = arith.addi %90, %c0_i32_84 : i32
      %92 = arith.index_cast %91 : i32 to index
      %c0_85 = arith.constant 0 : index
      %93 = tpu.strided_load %arg15[%92, %c0_85] {strides = array<i32: 2, 1>} : memref<324x32xf32, #tpu.memory_space<vmem>>, vector<8x32xf32>
      %c0_86 = arith.constant 0 : index
      %c0_87 = arith.constant 0 : index
      %94 = vector.load %arg6[%c0_86, %c0_87] : memref<288x64xf32, #tpu.memory_space<vmem>>, vector<32x64xf32>
      %cst_88 = arith.constant dense<0.000000e+00> : vector<8x64xf32>
      %95 = tpu.matmul %93, %94, %cst_88 {dimension_numbers = #tpu.dot_dimension_numbers<[1], [0], [0], [1], [0, 0, 1, 1], [], []>} : vector<8x32xf32>, vector<32x64xf32>, vector<8x64xf32> -> vector<8x64xf32>
      %96 = arith.addf %87, %95 : vector<8x64xf32>
      %c1_i32_89 = arith.constant 1 : i32
      %97 = arith.addi %90, %c1_i32_89 : i32
      %98 = arith.index_cast %97 : i32 to index
      %c0_90 = arith.constant 0 : index
      %99 = tpu.strided_load %arg15[%98, %c0_90] {strides = array<i32: 2, 1>} : memref<324x32xf32, #tpu.memory_space<vmem>>, vector<8x32xf32>
      %c32 = arith.constant 32 : index
      %c0_91 = arith.constant 0 : index
      %100 = vector.load %arg6[%c32, %c0_91] : memref<288x64xf32, #tpu.memory_space<vmem>>, vector<32x64xf32>
      %cst_92 = arith.constant dense<0.000000e+00> : vector<8x64xf32>
      %101 = tpu.matmul %99, %100, %cst_92 {dimension_numbers = #tpu.dot_dimension_numbers<[1], [0], [0], [1], [0, 0, 1, 1], [], []>} : vector<8x32xf32>, vector<32x64xf32>, vector<8x64xf32> -> vector<8x64xf32>
      %102 = arith.addf %96, %101 : vector<8x64xf32>
      %c2_i32_93 = arith.constant 2 : i32
      %103 = arith.addi %90, %c2_i32_93 : i32
      %104 = arith.index_cast %103 : i32 to index
      %c0_94 = arith.constant 0 : index
      %105 = tpu.strided_load %arg15[%104, %c0_94] {strides = array<i32: 2, 1>} : memref<324x32xf32, #tpu.memory_space<vmem>>, vector<8x32xf32>
      %c64_95 = arith.constant 64 : index
      %c0_96 = arith.constant 0 : index
      %106 = vector.load %arg6[%c64_95, %c0_96] : memref<288x64xf32, #tpu.memory_space<vmem>>, vector<32x64xf32>
      %cst_97 = arith.constant dense<0.000000e+00> : vector<8x64xf32>
      %107 = tpu.matmul %105, %106, %cst_97 {dimension_numbers = #tpu.dot_dimension_numbers<[1], [0], [0], [1], [0, 0, 1, 1], [], []>} : vector<8x32xf32>, vector<32x64xf32>, vector<8x64xf32> -> vector<8x64xf32>
      %108 = arith.addf %102, %107 : vector<8x64xf32>
      %c2_i32_98 = arith.constant 2 : i32
      %109 = arith.muli %c2_i32_98, %86 : i32
      %c1_i32_99 = arith.constant 1 : i32
      %110 = arith.addi %109, %c1_i32_99 : i32
      %c18_i32_100 = arith.constant 18 : i32
      %111 = arith.muli %110, %c18_i32_100 : i32
      %c0_i32_101 = arith.constant 0 : i32
      %112 = arith.addi %111, %c0_i32_101 : i32
      %113 = arith.index_cast %112 : i32 to index
      %c0_102 = arith.constant 0 : index
      %114 = tpu.strided_load %arg15[%113, %c0_102] {strides = array<i32: 2, 1>} : memref<324x32xf32, #tpu.memory_space<vmem>>, vector<8x32xf32>
      %c96 = arith.constant 96 : index
      %c0_103 = arith.constant 0 : index
      %115 = vector.load %arg6[%c96, %c0_103] : memref<288x64xf32, #tpu.memory_space<vmem>>, vector<32x64xf32>
      %cst_104 = arith.constant dense<0.000000e+00> : vector<8x64xf32>
      %116 = tpu.matmul %114, %115, %cst_104 {dimension_numbers = #tpu.dot_dimension_numbers<[1], [0], [0], [1], [0, 0, 1, 1], [], []>} : vector<8x32xf32>, vector<32x64xf32>, vector<8x64xf32> -> vector<8x64xf32>
      %117 = arith.addf %108, %116 : vector<8x64xf32>
      %c1_i32_105 = arith.constant 1 : i32
      %118 = arith.addi %111, %c1_i32_105 : i32
      %119 = arith.index_cast %118 : i32 to index
      %c0_106 = arith.constant 0 : index
      %120 = tpu.strided_load %arg15[%119, %c0_106] {strides = array<i32: 2, 1>} : memref<324x32xf32, #tpu.memory_space<vmem>>, vector<8x32xf32>
      %c128_107 = arith.constant 128 : index
      %c0_108 = arith.constant 0 : index
      %121 = vector.load %arg6[%c128_107, %c0_108] : memref<288x64xf32, #tpu.memory_space<vmem>>, vector<32x64xf32>
      %cst_109 = arith.constant dense<0.000000e+00> : vector<8x64xf32>
      %122 = tpu.matmul %120, %121, %cst_109 {dimension_numbers = #tpu.dot_dimension_numbers<[1], [0], [0], [1], [0, 0, 1, 1], [], []>} : vector<8x32xf32>, vector<32x64xf32>, vector<8x64xf32> -> vector<8x64xf32>
      %123 = arith.addf %117, %122 : vector<8x64xf32>
      %c2_i32_110 = arith.constant 2 : i32
      %124 = arith.addi %111, %c2_i32_110 : i32
      %125 = arith.index_cast %124 : i32 to index
      %c0_111 = arith.constant 0 : index
      %126 = tpu.strided_load %arg15[%125, %c0_111] {strides = array<i32: 2, 1>} : memref<324x32xf32, #tpu.memory_space<vmem>>, vector<8x32xf32>
      %c160 = arith.constant 160 : index
      %c0_112 = arith.constant 0 : index
      %127 = vector.load %arg6[%c160, %c0_112] : memref<288x64xf32, #tpu.memory_space<vmem>>, vector<32x64xf32>
      %cst_113 = arith.constant dense<0.000000e+00> : vector<8x64xf32>
      %128 = tpu.matmul %126, %127, %cst_113 {dimension_numbers = #tpu.dot_dimension_numbers<[1], [0], [0], [1], [0, 0, 1, 1], [], []>} : vector<8x32xf32>, vector<32x64xf32>, vector<8x64xf32> -> vector<8x64xf32>
      %129 = arith.addf %123, %128 : vector<8x64xf32>
      %c2_i32_114 = arith.constant 2 : i32
      %130 = arith.muli %c2_i32_114, %86 : i32
      %c2_i32_115 = arith.constant 2 : i32
      %131 = arith.addi %130, %c2_i32_115 : i32
      %c18_i32_116 = arith.constant 18 : i32
      %132 = arith.muli %131, %c18_i32_116 : i32
      %c0_i32_117 = arith.constant 0 : i32
      %133 = arith.addi %132, %c0_i32_117 : i32
      %134 = arith.index_cast %133 : i32 to index
      %c0_118 = arith.constant 0 : index
      %135 = tpu.strided_load %arg15[%134, %c0_118] {strides = array<i32: 2, 1>} : memref<324x32xf32, #tpu.memory_space<vmem>>, vector<8x32xf32>
      %c192_119 = arith.constant 192 : index
      %c0_120 = arith.constant 0 : index
      %136 = vector.load %arg6[%c192_119, %c0_120] : memref<288x64xf32, #tpu.memory_space<vmem>>, vector<32x64xf32>
      %cst_121 = arith.constant dense<0.000000e+00> : vector<8x64xf32>
      %137 = tpu.matmul %135, %136, %cst_121 {dimension_numbers = #tpu.dot_dimension_numbers<[1], [0], [0], [1], [0, 0, 1, 1], [], []>} : vector<8x32xf32>, vector<32x64xf32>, vector<8x64xf32> -> vector<8x64xf32>
      %138 = arith.addf %129, %137 : vector<8x64xf32>
      %c1_i32_122 = arith.constant 1 : i32
      %139 = arith.addi %132, %c1_i32_122 : i32
      %140 = arith.index_cast %139 : i32 to index
      %c0_123 = arith.constant 0 : index
      %141 = tpu.strided_load %arg15[%140, %c0_123] {strides = array<i32: 2, 1>} : memref<324x32xf32, #tpu.memory_space<vmem>>, vector<8x32xf32>
      %c224 = arith.constant 224 : index
      %c0_124 = arith.constant 0 : index
      %142 = vector.load %arg6[%c224, %c0_124] : memref<288x64xf32, #tpu.memory_space<vmem>>, vector<32x64xf32>
      %cst_125 = arith.constant dense<0.000000e+00> : vector<8x64xf32>
      %143 = tpu.matmul %141, %142, %cst_125 {dimension_numbers = #tpu.dot_dimension_numbers<[1], [0], [0], [1], [0, 0, 1, 1], [], []>} : vector<8x32xf32>, vector<32x64xf32>, vector<8x64xf32> -> vector<8x64xf32>
      %144 = arith.addf %138, %143 : vector<8x64xf32>
      %c2_i32_126 = arith.constant 2 : i32
      %145 = arith.addi %132, %c2_i32_126 : i32
      %146 = arith.index_cast %145 : i32 to index
      %c0_127 = arith.constant 0 : index
      %147 = tpu.strided_load %arg15[%146, %c0_127] {strides = array<i32: 2, 1>} : memref<324x32xf32, #tpu.memory_space<vmem>>, vector<8x32xf32>
      %c256_128 = arith.constant 256 : index
      %c0_129 = arith.constant 0 : index
      %148 = vector.load %arg6[%c256_128, %c0_129] : memref<288x64xf32, #tpu.memory_space<vmem>>, vector<32x64xf32>
      %cst_130 = arith.constant dense<0.000000e+00> : vector<8x64xf32>
      %149 = tpu.matmul %147, %148, %cst_130 {dimension_numbers = #tpu.dot_dimension_numbers<[1], [0], [0], [1], [0, 0, 1, 1], [], []>} : vector<8x32xf32>, vector<32x64xf32>, vector<8x64xf32> -> vector<8x64xf32>
      %150 = arith.addf %144, %149 : vector<8x64xf32>
      %c0_131 = arith.constant 0 : index
      %c0_132 = arith.constant 0 : index
      %151 = vector.load %arg7[%c0_131, %c0_132] : memref<1x64xf32, #tpu.memory_space<vmem>>, vector<1x64xf32>
      %152 = vector.broadcast %151 : vector<1x64xf32> to vector<8x64xf32>
      %153 = arith.addf %150, %152 : vector<8x64xf32>
      %cst_133 = arith.constant 0.000000e+00 : f32
      %154 = vector.broadcast %cst_133 : f32 to vector<8x64xf32>
      %155 = arith.maximumf %153, %154 : vector<8x64xf32>
      %c1_i32_134 = arith.constant 1 : i32
      %156 = arith.addi %86, %c1_i32_134 : i32
      %c10_i32 = arith.constant 10 : i32
      %157 = arith.muli %156, %c10_i32 : i32
      %c1_i32_135 = arith.constant 1 : i32
      %158 = arith.addi %157, %c1_i32_135 : i32
      %159 = arith.index_cast %158 : i32 to index
      %c0_136 = arith.constant 0 : index
      %160 = vector.load %arg16[%159, %c0_136] : memref<100x64xf32, #tpu.memory_space<vmem>>, vector<8x64xf32>
      tpu.vector_store %arg16[%159, %c0_136], %155 {strides = array<i32>} : memref<100x64xf32, #tpu.memory_space<vmem>>, vector<8x64xf32>,
    }
    %c8_i32_19 = arith.constant 8 : i32
    %c0_i32_20 = arith.constant 0 : i32
    %c4_i32 = arith.constant 4 : i32
    %12 = arith.addi %c0_i32_20, %c4_i32 : i32
    %c1_i32_21 = arith.constant 1 : i32
    scf.for %arg18 = %c0_i32_20 to %12 step %c1_i32_21  : i32 {
      %c1_i32_80 = arith.constant 1 : i32
      %85 = arith.muli %arg18, %c1_i32_80 : i32
      %c0_i32_81 = arith.constant 0 : i32
      %86 = arith.addi %c0_i32_81, %85 : i32
      %cst_82 = arith.constant 0.000000e+00 : f32
      %87 = vector.broadcast %cst_82 : f32 to vector<4x64xf32>
      %c2_i32 = arith.constant 2 : i32
      %88 = arith.muli %c2_i32, %86 : i32
      %c0_i32_83 = arith.constant 0 : i32
      %89 = arith.addi %88, %c0_i32_83 : i32
      %c10_i32 = arith.constant 10 : i32
      %90 = arith.muli %89, %c10_i32 : i32
      %c0_i32_84 = arith.constant 0 : i32
      %91 = arith.addi %90, %c0_i32_84 : i32
      %92 = arith.index_cast %91 : i32 to index
      %c0_85 = arith.constant 0 : index
      %93 = tpu.strided_load %arg16[%92, %c0_85] {strides = array<i32: 2, 1>} : memref<100x64xf32, #tpu.memory_space<vmem>>, vector<4x64xf32>
      %c0_86 = arith.constant 0 : index
      %c0_87 = arith.constant 0 : index
      %94 = vector.load %arg8[%c0_86, %c0_87] : memref<576x64xf32, #tpu.memory_space<vmem>>, vector<64x64xf32>
      %cst_88 = arith.constant dense<0.000000e+00> : vector<4x64xf32>
      %95 = tpu.matmul %93, %94, %cst_88 {dimension_numbers = #tpu.dot_dimension_numbers<[1], [0], [0], [1], [0, 0, 1, 1], [], []>} : vector<4x64xf32>, vector<64x64xf32>, vector<4x64xf32> -> vector<4x64xf32>
      %96 = arith.addf %87, %95 : vector<4x64xf32>
      %c1_i32_89 = arith.constant 1 : i32
      %97 = arith.addi %90, %c1_i32_89 : i32
      %98 = arith.index_cast %97 : i32 to index
      %c0_90 = arith.constant 0 : index
      %99 = tpu.strided_load %arg16[%98, %c0_90] {strides = array<i32: 2, 1>} : memref<100x64xf32, #tpu.memory_space<vmem>>, vector<4x64xf32>
      %c64_91 = arith.constant 64 : index
      %c0_92 = arith.constant 0 : index
      %100 = vector.load %arg8[%c64_91, %c0_92] : memref<576x64xf32, #tpu.memory_space<vmem>>, vector<64x64xf32>
      %cst_93 = arith.constant dense<0.000000e+00> : vector<4x64xf32>
      %101 = tpu.matmul %99, %100, %cst_93 {dimension_numbers = #tpu.dot_dimension_numbers<[1], [0], [0], [1], [0, 0, 1, 1], [], []>} : vector<4x64xf32>, vector<64x64xf32>, vector<4x64xf32> -> vector<4x64xf32>
      %102 = arith.addf %96, %101 : vector<4x64xf32>
      %c2_i32_94 = arith.constant 2 : i32
      %103 = arith.addi %90, %c2_i32_94 : i32
      %104 = arith.index_cast %103 : i32 to index
      %c0_95 = arith.constant 0 : index
      %105 = tpu.strided_load %arg16[%104, %c0_95] {strides = array<i32: 2, 1>} : memref<100x64xf32, #tpu.memory_space<vmem>>, vector<4x64xf32>
      %c128_96 = arith.constant 128 : index
      %c0_97 = arith.constant 0 : index
      %106 = vector.load %arg8[%c128_96, %c0_97] : memref<576x64xf32, #tpu.memory_space<vmem>>, vector<64x64xf32>
      %cst_98 = arith.constant dense<0.000000e+00> : vector<4x64xf32>
      %107 = tpu.matmul %105, %106, %cst_98 {dimension_numbers = #tpu.dot_dimension_numbers<[1], [0], [0], [1], [0, 0, 1, 1], [], []>} : vector<4x64xf32>, vector<64x64xf32>, vector<4x64xf32> -> vector<4x64xf32>
      %108 = arith.addf %102, %107 : vector<4x64xf32>
      %c2_i32_99 = arith.constant 2 : i32
      %109 = arith.muli %c2_i32_99, %86 : i32
      %c1_i32_100 = arith.constant 1 : i32
      %110 = arith.addi %109, %c1_i32_100 : i32
      %c10_i32_101 = arith.constant 10 : i32
      %111 = arith.muli %110, %c10_i32_101 : i32
      %c0_i32_102 = arith.constant 0 : i32
      %112 = arith.addi %111, %c0_i32_102 : i32
      %113 = arith.index_cast %112 : i32 to index
      %c0_103 = arith.constant 0 : index
      %114 = tpu.strided_load %arg16[%113, %c0_103] {strides = array<i32: 2, 1>} : memref<100x64xf32, #tpu.memory_space<vmem>>, vector<4x64xf32>
      %c192_104 = arith.constant 192 : index
      %c0_105 = arith.constant 0 : index
      %115 = vector.load %arg8[%c192_104, %c0_105] : memref<576x64xf32, #tpu.memory_space<vmem>>, vector<64x64xf32>
      %cst_106 = arith.constant dense<0.000000e+00> : vector<4x64xf32>
      %116 = tpu.matmul %114, %115, %cst_106 {dimension_numbers = #tpu.dot_dimension_numbers<[1], [0], [0], [1], [0, 0, 1, 1], [], []>} : vector<4x64xf32>, vector<64x64xf32>, vector<4x64xf32> -> vector<4x64xf32>
      %117 = arith.addf %108, %116 : vector<4x64xf32>
      %c1_i32_107 = arith.constant 1 : i32
      %118 = arith.addi %111, %c1_i32_107 : i32
      %119 = arith.index_cast %118 : i32 to index
      %c0_108 = arith.constant 0 : index
      %120 = tpu.strided_load %arg16[%119, %c0_108] {strides = array<i32: 2, 1>} : memref<100x64xf32, #tpu.memory_space<vmem>>, vector<4x64xf32>
      %c256_109 = arith.constant 256 : index
      %c0_110 = arith.constant 0 : index
      %121 = vector.load %arg8[%c256_109, %c0_110] : memref<576x64xf32, #tpu.memory_space<vmem>>, vector<64x64xf32>
      %cst_111 = arith.constant dense<0.000000e+00> : vector<4x64xf32>
      %122 = tpu.matmul %120, %121, %cst_111 {dimension_numbers = #tpu.dot_dimension_numbers<[1], [0], [0], [1], [0, 0, 1, 1], [], []>} : vector<4x64xf32>, vector<64x64xf32>, vector<4x64xf32> -> vector<4x64xf32>
      %123 = arith.addf %117, %122 : vector<4x64xf32>
      %c2_i32_112 = arith.constant 2 : i32
      %124 = arith.addi %111, %c2_i32_112 : i32
      %125 = arith.index_cast %124 : i32 to index
      %c0_113 = arith.constant 0 : index
      %126 = tpu.strided_load %arg16[%125, %c0_113] {strides = array<i32: 2, 1>} : memref<100x64xf32, #tpu.memory_space<vmem>>, vector<4x64xf32>
      %c320_114 = arith.constant 320 : index
      %c0_115 = arith.constant 0 : index
      %127 = vector.load %arg8[%c320_114, %c0_115] : memref<576x64xf32, #tpu.memory_space<vmem>>, vector<64x64xf32>
      %cst_116 = arith.constant dense<0.000000e+00> : vector<4x64xf32>
      %128 = tpu.matmul %126, %127, %cst_116 {dimension_numbers = #tpu.dot_dimension_numbers<[1], [0], [0], [1], [0, 0, 1, 1], [], []>} : vector<4x64xf32>, vector<64x64xf32>, vector<4x64xf32> -> vector<4x64xf32>
      %129 = arith.addf %123, %128 : vector<4x64xf32>
      %c2_i32_117 = arith.constant 2 : i32
      %130 = arith.muli %c2_i32_117, %86 : i32
      %c2_i32_118 = arith.constant 2 : i32
      %131 = arith.addi %130, %c2_i32_118 : i32
      %c10_i32_119 = arith.constant 10 : i32
      %132 = arith.muli %131, %c10_i32_119 : i32
      %c0_i32_120 = arith.constant 0 : i32
      %133 = arith.addi %132, %c0_i32_120 : i32
      %134 = arith.index_cast %133 : i32 to index
      %c0_121 = arith.constant 0 : index
      %135 = tpu.strided_load %arg16[%134, %c0_121] {strides = array<i32: 2, 1>} : memref<100x64xf32, #tpu.memory_space<vmem>>, vector<4x64xf32>
      %c384_122 = arith.constant 384 : index
      %c0_123 = arith.constant 0 : index
      %136 = vector.load %arg8[%c384_122, %c0_123] : memref<576x64xf32, #tpu.memory_space<vmem>>, vector<64x64xf32>
      %cst_124 = arith.constant dense<0.000000e+00> : vector<4x64xf32>
      %137 = tpu.matmul %135, %136, %cst_124 {dimension_numbers = #tpu.dot_dimension_numbers<[1], [0], [0], [1], [0, 0, 1, 1], [], []>} : vector<4x64xf32>, vector<64x64xf32>, vector<4x64xf32> -> vector<4x64xf32>
      %138 = arith.addf %129, %137 : vector<4x64xf32>
      %c1_i32_125 = arith.constant 1 : i32
      %139 = arith.addi %132, %c1_i32_125 : i32
      %140 = arith.index_cast %139 : i32 to index
      %c0_126 = arith.constant 0 : index
      %141 = tpu.strided_load %arg16[%140, %c0_126] {strides = array<i32: 2, 1>} : memref<100x64xf32, #tpu.memory_space<vmem>>, vector<4x64xf32>
      %c448_127 = arith.constant 448 : index
      %c0_128 = arith.constant 0 : index
      %142 = vector.load %arg8[%c448_127, %c0_128] : memref<576x64xf32, #tpu.memory_space<vmem>>, vector<64x64xf32>
      %cst_129 = arith.constant dense<0.000000e+00> : vector<4x64xf32>
      %143 = tpu.matmul %141, %142, %cst_129 {dimension_numbers = #tpu.dot_dimension_numbers<[1], [0], [0], [1], [0, 0, 1, 1], [], []>} : vector<4x64xf32>, vector<64x64xf32>, vector<4x64xf32> -> vector<4x64xf32>
      %144 = arith.addf %138, %143 : vector<4x64xf32>
      %c2_i32_130 = arith.constant 2 : i32
      %145 = arith.addi %132, %c2_i32_130 : i32
      %146 = arith.index_cast %145 : i32 to index
      %c0_131 = arith.constant 0 : index
      %147 = tpu.strided_load %arg16[%146, %c0_131] {strides = array<i32: 2, 1>} : memref<100x64xf32, #tpu.memory_space<vmem>>, vector<4x64xf32>
      %c512_132 = arith.constant 512 : index
      %c0_133 = arith.constant 0 : index
      %148 = vector.load %arg8[%c512_132, %c0_133] : memref<576x64xf32, #tpu.memory_space<vmem>>, vector<64x64xf32>
      %cst_134 = arith.constant dense<0.000000e+00> : vector<4x64xf32>
      %149 = tpu.matmul %147, %148, %cst_134 {dimension_numbers = #tpu.dot_dimension_numbers<[1], [0], [0], [1], [0, 0, 1, 1], [], []>} : vector<4x64xf32>, vector<64x64xf32>, vector<4x64xf32> -> vector<4x64xf32>
      %150 = arith.addf %144, %149 : vector<4x64xf32>
      %c0_135 = arith.constant 0 : index
      %c0_136 = arith.constant 0 : index
      %151 = vector.load %arg9[%c0_135, %c0_136] : memref<1x64xf32, #tpu.memory_space<vmem>>, vector<1x64xf32>
      %152 = vector.broadcast %151 : vector<1x64xf32> to vector<4x64xf32>
      %153 = arith.addf %150, %152 : vector<4x64xf32>
      %cst_137 = arith.constant 0.000000e+00 : f32
      %154 = vector.broadcast %cst_137 : f32 to vector<4x64xf32>
      %155 = arith.maximumf %153, %154 : vector<4x64xf32>
      %c4_i32_138 = arith.constant 4 : i32
      %156 = arith.muli %86, %c4_i32_138 : i32
      %157 = arith.index_cast %156 : i32 to index
      %c0_139 = arith.constant 0 : index
      %158 = vector.load %arg17[%157, %c0_139] : memref<16x64xf32, #tpu.memory_space<vmem>>, vector<4x64xf32>
      tpu.vector_store %arg17[%157, %c0_139], %155 {strides = array<i32>} : memref<16x64xf32, #tpu.memory_space<vmem>>, vector<4x64xf32>,
    }
    %c4_i32_22 = arith.constant 4 : i32
    %cst_23 = arith.constant 0.000000e+00 : f32
    %13 = vector.broadcast %cst_23 : f32 to vector<1x16xf32>
    %c0_24 = arith.constant 0 : index
    %c0_25 = arith.constant 0 : index
    %14 = vector.load %arg17[%c0_24, %c0_25] : memref<16x64xf32, #tpu.memory_space<vmem>>, vector<1x64xf32>
    %c0_26 = arith.constant 0 : index
    %c0_27 = arith.constant 0 : index
    %15 = vector.load %arg10[%c0_26, %c0_27] : memref<1024x16xf32, #tpu.memory_space<vmem>>, vector<64x16xf32>
    %cst_28 = arith.constant dense<0.000000e+00> : vector<1x16xf32>
    %16 = tpu.matmul %14, %15, %cst_28 {dimension_numbers = #tpu.dot_dimension_numbers<[1], [0], [0], [1], [0, 0, 1, 1], [], []>} : vector<1x64xf32>, vector<64x16xf32>, vector<1x16xf32> -> vector<1x16xf32>
    %17 = arith.addf %13, %16 : vector<1x16xf32>
    %c1 = arith.constant 1 : index
    %c0_29 = arith.constant 0 : index
    %18 = vector.load %arg17[%c1, %c0_29] : memref<16x64xf32, #tpu.memory_space<vmem>>, vector<1x64xf32>
    %c64 = arith.constant 64 : index
    %c0_30 = arith.constant 0 : index
    %19 = vector.load %arg10[%c64, %c0_30] : memref<1024x16xf32, #tpu.memory_space<vmem>>, vector<64x16xf32>
    %cst_31 = arith.constant dense<0.000000e+00> : vector<1x16xf32>
    %20 = tpu.matmul %18, %19, %cst_31 {dimension_numbers = #tpu.dot_dimension_numbers<[1], [0], [0], [1], [0, 0, 1, 1], [], []>} : vector<1x64xf32>, vector<64x16xf32>, vector<1x16xf32> -> vector<1x16xf32>
    %21 = arith.addf %17, %20 : vector<1x16xf32>
    %c2 = arith.constant 2 : index
    %c0_32 = arith.constant 0 : index
    %22 = vector.load %arg17[%c2, %c0_32] : memref<16x64xf32, #tpu.memory_space<vmem>>, vector<1x64xf32>
    %c128 = arith.constant 128 : index
    %c0_33 = arith.constant 0 : index
    %23 = vector.load %arg10[%c128, %c0_33] : memref<1024x16xf32, #tpu.memory_space<vmem>>, vector<64x16xf32>
    %cst_34 = arith.constant dense<0.000000e+00> : vector<1x16xf32>
    %24 = tpu.matmul %22, %23, %cst_34 {dimension_numbers = #tpu.dot_dimension_numbers<[1], [0], [0], [1], [0, 0, 1, 1], [], []>} : vector<1x64xf32>, vector<64x16xf32>, vector<1x16xf32> -> vector<1x16xf32>
    %25 = arith.addf %21, %24 : vector<1x16xf32>
    %c3 = arith.constant 3 : index
    %c0_35 = arith.constant 0 : index
    %26 = vector.load %arg17[%c3, %c0_35] : memref<16x64xf32, #tpu.memory_space<vmem>>, vector<1x64xf32>
    %c192 = arith.constant 192 : index
    %c0_36 = arith.constant 0 : index
    %27 = vector.load %arg10[%c192, %c0_36] : memref<1024x16xf32, #tpu.memory_space<vmem>>, vector<64x16xf32>
    %cst_37 = arith.constant dense<0.000000e+00> : vector<1x16xf32>
    %28 = tpu.matmul %26, %27, %cst_37 {dimension_numbers = #tpu.dot_dimension_numbers<[1], [0], [0], [1], [0, 0, 1, 1], [], []>} : vector<1x64xf32>, vector<64x16xf32>, vector<1x16xf32> -> vector<1x16xf32>
    %29 = arith.addf %25, %28 : vector<1x16xf32>
    %c4 = arith.constant 4 : index
    %c0_38 = arith.constant 0 : index
    %30 = vector.load %arg17[%c4, %c0_38] : memref<16x64xf32, #tpu.memory_space<vmem>>, vector<1x64xf32>
    %c256 = arith.constant 256 : index
    %c0_39 = arith.constant 0 : index
    %31 = vector.load %arg10[%c256, %c0_39] : memref<1024x16xf32, #tpu.memory_space<vmem>>, vector<64x16xf32>
    %cst_40 = arith.constant dense<0.000000e+00> : vector<1x16xf32>
    %32 = tpu.matmul %30, %31, %cst_40 {dimension_numbers = #tpu.dot_dimension_numbers<[1], [0], [0], [1], [0, 0, 1, 1], [], []>} : vector<1x64xf32>, vector<64x16xf32>, vector<1x16xf32> -> vector<1x16xf32>
    %33 = arith.addf %29, %32 : vector<1x16xf32>
    %c5 = arith.constant 5 : index
    %c0_41 = arith.constant 0 : index
    %34 = vector.load %arg17[%c5, %c0_41] : memref<16x64xf32, #tpu.memory_space<vmem>>, vector<1x64xf32>
    %c320 = arith.constant 320 : index
    %c0_42 = arith.constant 0 : index
    %35 = vector.load %arg10[%c320, %c0_42] : memref<1024x16xf32, #tpu.memory_space<vmem>>, vector<64x16xf32>
    %cst_43 = arith.constant dense<0.000000e+00> : vector<1x16xf32>
    %36 = tpu.matmul %34, %35, %cst_43 {dimension_numbers = #tpu.dot_dimension_numbers<[1], [0], [0], [1], [0, 0, 1, 1], [], []>} : vector<1x64xf32>, vector<64x16xf32>, vector<1x16xf32> -> vector<1x16xf32>
    %37 = arith.addf %33, %36 : vector<1x16xf32>
    %c6 = arith.constant 6 : index
    %c0_44 = arith.constant 0 : index
    %38 = vector.load %arg17[%c6, %c0_44] : memref<16x64xf32, #tpu.memory_space<vmem>>, vector<1x64xf32>
    %c384 = arith.constant 384 : index
    %c0_45 = arith.constant 0 : index
    %39 = vector.load %arg10[%c384, %c0_45] : memref<1024x16xf32, #tpu.memory_space<vmem>>, vector<64x16xf32>
    %cst_46 = arith.constant dense<0.000000e+00> : vector<1x16xf32>
    %40 = tpu.matmul %38, %39, %cst_46 {dimension_numbers = #tpu.dot_dimension_numbers<[1], [0], [0], [1], [0, 0, 1, 1], [], []>} : vector<1x64xf32>, vector<64x16xf32>, vector<1x16xf32> -> vector<1x16xf32>
    %41 = arith.addf %37, %40 : vector<1x16xf32>
    %c7 = arith.constant 7 : index
    %c0_47 = arith.constant 0 : index
    %42 = vector.load %arg17[%c7, %c0_47] : memref<16x64xf32, #tpu.memory_space<vmem>>, vector<1x64xf32>
    %c448 = arith.constant 448 : index
    %c0_48 = arith.constant 0 : index
    %43 = vector.load %arg10[%c448, %c0_48] : memref<1024x16xf32, #tpu.memory_space<vmem>>, vector<64x16xf32>
    %cst_49 = arith.constant dense<0.000000e+00> : vector<1x16xf32>
    %44 = tpu.matmul %42, %43, %cst_49 {dimension_numbers = #tpu.dot_dimension_numbers<[1], [0], [0], [1], [0, 0, 1, 1], [], []>} : vector<1x64xf32>, vector<64x16xf32>, vector<1x16xf32> -> vector<1x16xf32>
    %45 = arith.addf %41, %44 : vector<1x16xf32>
    %c8 = arith.constant 8 : index
    %c0_50 = arith.constant 0 : index
    %46 = vector.load %arg17[%c8, %c0_50] : memref<16x64xf32, #tpu.memory_space<vmem>>, vector<1x64xf32>
    %c512 = arith.constant 512 : index
    %c0_51 = arith.constant 0 : index
    %47 = vector.load %arg10[%c512, %c0_51] : memref<1024x16xf32, #tpu.memory_space<vmem>>, vector<64x16xf32>
    %cst_52 = arith.constant dense<0.000000e+00> : vector<1x16xf32>
    %48 = tpu.matmul %46, %47, %cst_52 {dimension_numbers = #tpu.dot_dimension_numbers<[1], [0], [0], [1], [0, 0, 1, 1], [], []>} : vector<1x64xf32>, vector<64x16xf32>, vector<1x16xf32> -> vector<1x16xf32>
    %49 = arith.addf %45, %48 : vector<1x16xf32>
    %c9 = arith.constant 9 : index
    %c0_53 = arith.constant 0 : index
    %50 = vector.load %arg17[%c9, %c0_53] : memref<16x64xf32, #tpu.memory_space<vmem>>, vector<1x64xf32>
    %c576 = arith.constant 576 : index
    %c0_54 = arith.constant 0 : index
    %51 = vector.load %arg10[%c576, %c0_54] : memref<1024x16xf32, #tpu.memory_space<vmem>>, vector<64x16xf32>
    %cst_55 = arith.constant dense<0.000000e+00> : vector<1x16xf32>
    %52 = tpu.matmul %50, %51, %cst_55 {dimension_numbers = #tpu.dot_dimension_numbers<[1], [0], [0], [1], [0, 0, 1, 1], [], []>} : vector<1x64xf32>, vector<64x16xf32>, vector<1x16xf32> -> vector<1x16xf32>
    %53 = arith.addf %49, %52 : vector<1x16xf32>
    %c10 = arith.constant 10 : index
    %c0_56 = arith.constant 0 : index
    %54 = vector.load %arg17[%c10, %c0_56] : memref<16x64xf32, #tpu.memory_space<vmem>>, vector<1x64xf32>
    %c640 = arith.constant 640 : index
    %c0_57 = arith.constant 0 : index
    %55 = vector.load %arg10[%c640, %c0_57] : memref<1024x16xf32, #tpu.memory_space<vmem>>, vector<64x16xf32>
    %cst_58 = arith.constant dense<0.000000e+00> : vector<1x16xf32>
    %56 = tpu.matmul %54, %55, %cst_58 {dimension_numbers = #tpu.dot_dimension_numbers<[1], [0], [0], [1], [0, 0, 1, 1], [], []>} : vector<1x64xf32>, vector<64x16xf32>, vector<1x16xf32> -> vector<1x16xf32>
    %57 = arith.addf %53, %56 : vector<1x16xf32>
    %c11 = arith.constant 11 : index
    %c0_59 = arith.constant 0 : index
    %58 = vector.load %arg17[%c11, %c0_59] : memref<16x64xf32, #tpu.memory_space<vmem>>, vector<1x64xf32>
    %c704 = arith.constant 704 : index
    %c0_60 = arith.constant 0 : index
    %59 = vector.load %arg10[%c704, %c0_60] : memref<1024x16xf32, #tpu.memory_space<vmem>>, vector<64x16xf32>
    %cst_61 = arith.constant dense<0.000000e+00> : vector<1x16xf32>
    %60 = tpu.matmul %58, %59, %cst_61 {dimension_numbers = #tpu.dot_dimension_numbers<[1], [0], [0], [1], [0, 0, 1, 1], [], []>} : vector<1x64xf32>, vector<64x16xf32>, vector<1x16xf32> -> vector<1x16xf32>
    %61 = arith.addf %57, %60 : vector<1x16xf32>
    %c12 = arith.constant 12 : index
    %c0_62 = arith.constant 0 : index
    %62 = vector.load %arg17[%c12, %c0_62] : memref<16x64xf32, #tpu.memory_space<vmem>>, vector<1x64xf32>
    %c768 = arith.constant 768 : index
    %c0_63 = arith.constant 0 : index
    %63 = vector.load %arg10[%c768, %c0_63] : memref<1024x16xf32, #tpu.memory_space<vmem>>, vector<64x16xf32>
    %cst_64 = arith.constant dense<0.000000e+00> : vector<1x16xf32>
    %64 = tpu.matmul %62, %63, %cst_64 {dimension_numbers = #tpu.dot_dimension_numbers<[1], [0], [0], [1], [0, 0, 1, 1], [], []>} : vector<1x64xf32>, vector<64x16xf32>, vector<1x16xf32> -> vector<1x16xf32>
    %65 = arith.addf %61, %64 : vector<1x16xf32>
    %c13 = arith.constant 13 : index
    %c0_65 = arith.constant 0 : index
    %66 = vector.load %arg17[%c13, %c0_65] : memref<16x64xf32, #tpu.memory_space<vmem>>, vector<1x64xf32>
    %c832 = arith.constant 832 : index
    %c0_66 = arith.constant 0 : index
    %67 = vector.load %arg10[%c832, %c0_66] : memref<1024x16xf32, #tpu.memory_space<vmem>>, vector<64x16xf32>
    %cst_67 = arith.constant dense<0.000000e+00> : vector<1x16xf32>
    %68 = tpu.matmul %66, %67, %cst_67 {dimension_numbers = #tpu.dot_dimension_numbers<[1], [0], [0], [1], [0, 0, 1, 1], [], []>} : vector<1x64xf32>, vector<64x16xf32>, vector<1x16xf32> -> vector<1x16xf32>
    %69 = arith.addf %65, %68 : vector<1x16xf32>
    %c14 = arith.constant 14 : index
    %c0_68 = arith.constant 0 : index
    %70 = vector.load %arg17[%c14, %c0_68] : memref<16x64xf32, #tpu.memory_space<vmem>>, vector<1x64xf32>
    %c896 = arith.constant 896 : index
    %c0_69 = arith.constant 0 : index
    %71 = vector.load %arg10[%c896, %c0_69] : memref<1024x16xf32, #tpu.memory_space<vmem>>, vector<64x16xf32>
    %cst_70 = arith.constant dense<0.000000e+00> : vector<1x16xf32>
    %72 = tpu.matmul %70, %71, %cst_70 {dimension_numbers = #tpu.dot_dimension_numbers<[1], [0], [0], [1], [0, 0, 1, 1], [], []>} : vector<1x64xf32>, vector<64x16xf32>, vector<1x16xf32> -> vector<1x16xf32>
    %73 = arith.addf %69, %72 : vector<1x16xf32>
    %c15 = arith.constant 15 : index
    %c0_71 = arith.constant 0 : index
    %74 = vector.load %arg17[%c15, %c0_71] : memref<16x64xf32, #tpu.memory_space<vmem>>, vector<1x64xf32>
    %c960 = arith.constant 960 : index
    %c0_72 = arith.constant 0 : index
    %75 = vector.load %arg10[%c960, %c0_72] : memref<1024x16xf32, #tpu.memory_space<vmem>>, vector<64x16xf32>
    %cst_73 = arith.constant dense<0.000000e+00> : vector<1x16xf32>
    %76 = tpu.matmul %74, %75, %cst_73 {dimension_numbers = #tpu.dot_dimension_numbers<[1], [0], [0], [1], [0, 0, 1, 1], [], []>} : vector<1x64xf32>, vector<64x16xf32>, vector<1x16xf32> -> vector<1x16xf32>
    %77 = arith.addf %73, %76 : vector<1x16xf32>
    %c0_74 = arith.constant 0 : index
    %c0_75 = arith.constant 0 : index
    %78 = vector.load %arg11[%c0_74, %c0_75] : memref<1x16xf32, #tpu.memory_space<vmem>>, vector<1x16xf32>
    %79 = arith.addf %77, %78 : vector<1x16xf32>
    %cst_76 = arith.constant 0.000000e+00 : f32
    %80 = vector.broadcast %cst_76 : f32 to vector<1x16xf32>
    %81 = arith.maximumf %79, %80 : vector<1x16xf32>
    %c0_77 = arith.constant 0 : index
    %c0_78 = arith.constant 0 : index
    %c0_79 = arith.constant 0 : index
    %82 = vector.load %arg12[%c0_77, %c0_78, %c0_79] : memref<1x1x16xf32, #tpu.memory_space<vmem>>, vector<1x1x16xf32>
    %83 = vector.shape_cast %82 : vector<1x1x16xf32> to vector<1x16xf32>
    %84 = vector.shape_cast %81 : vector<1x16xf32> to vector<1x1x16xf32>
    tpu.vector_store %arg12[%c0_77, %c0_78, %c0_79], %84 {strides = array<i32>} : memref<1x1x16xf32, #tpu.memory_space<vmem>>, vector<1x1x16xf32>,
    return
  }
  func.func @transform_0(%arg0: i32) -> (i32, i32, i32) {
    %c0_i32 = arith.constant 0 : i32
    %c0_i32_0 = arith.constant 0 : i32
    %c0_i32_1 = arith.constant 0 : i32
    return %arg0, %c0_i32, %c0_i32_0 : i32, i32, i32
  }
  func.func @transform_1(%arg0: i32) -> (i32, i32) {
    %c0_i32 = arith.constant 0 : i32
    %c0_i32_0 = arith.constant 0 : i32
    %c0_i32_1 = arith.constant 0 : i32
    return %c0_i32, %c0_i32_0 : i32, i32
  }
  func.func @transform_2(%arg0: i32) -> (i32, i32) {
    %c0_i32 = arith.constant 0 : i32
    %c0_i32_0 = arith.constant 0 : i32
    %c0_i32_1 = arith.constant 0 : i32
    return %c0_i32, %c0_i32_0 : i32, i32
  }
  func.func @transform_3(%arg0: i32) -> (i32, i32) {
    %c0_i32 = arith.constant 0 : i32
    %c0_i32_0 = arith.constant 0 : i32
    %c0_i32_1 = arith.constant 0 : i32
    return %c0_i32, %c0_i32_0 : i32, i32
  }
  func.func @transform_4(%arg0: i32) -> (i32, i32) {
    %c0_i32 = arith.constant 0 : i32
    %c0_i32_0 = arith.constant 0 : i32
    %c0_i32_1 = arith.constant 0 : i32
    return %c0_i32, %c0_i32_0 : i32, i32
  }
  func.func @transform_5(%arg0: i32) -> (i32, i32) {
    %c0_i32 = arith.constant 0 : i32
    %c0_i32_0 = arith.constant 0 : i32
    %c0_i32_1 = arith.constant 0 : i32
    return %c0_i32, %c0_i32_0 : i32, i32
  }
  func.func @transform_6(%arg0: i32) -> (i32, i32) {
    %c0_i32 = arith.constant 0 : i32
    %c0_i32_0 = arith.constant 0 : i32
    %c0_i32_1 = arith.constant 0 : i32
    return %c0_i32, %c0_i32_0 : i32, i32
  }
  func.func @transform_7(%arg0: i32) -> (i32, i32) {
    %c0_i32 = arith.constant 0 : i32
    %c0_i32_0 = arith.constant 0 : i32
    %c0_i32_1 = arith.constant 0 : i32
    return %c0_i32, %c0_i32_0 : i32, i32
  }
  func.func @transform_8(%arg0: i32) -> (i32, i32) {
    %c0_i32 = arith.constant 0 : i32
    %c0_i32_0 = arith.constant 0 : i32
    %c0_i32_1 = arith.constant 0 : i32
    return %c0_i32, %c0_i32_0 : i32, i32
  }
  func.func @transform_9(%arg0: i32) -> (i32, i32) {
    %c0_i32 = arith.constant 0 : i32
    %c0_i32_0 = arith.constant 0 : i32
    %c0_i32_1 = arith.constant 0 : i32
    return %c0_i32, %c0_i32_0 : i32, i32
  }
  func.func @transform_10(%arg0: i32) -> (i32, i32) {
    %c0_i32 = arith.constant 0 : i32
    %c0_i32_0 = arith.constant 0 : i32
    %c0_i32_1 = arith.constant 0 : i32
    return %c0_i32, %c0_i32_0 : i32, i32
  }
  func.func @transform_11(%arg0: i32) -> (i32, i32, i32) {
    %c0_i32 = arith.constant 0 : i32
    %c0_i32_0 = arith.constant 0 : i32
    %c0_i32_1 = arith.constant 0 : i32
    return %arg0, %c0_i32, %c0_i32_0 : i32, i32, i32
  }
}

</mosaic_0001>

<llo_original>
// kernel: image_encoder_forward.2
$region0: #{image_encoder_forward.2}
  #allocation0 [shape = 'u32[]', space=smem, size = 0x4, offset = 0x4, fixed_abs, tag = 'smem constant byte address 0x4 - core index']
  #allocation1 [shape = 'u32[144,128]{1,0:T(1,128)}', space=vmem, size = 0x12000, scoped, tag = 'internal scratch']
  %s0 = inlined_call_operand.vmem [shape: bf16[2,4096,147], index: 0, kind: input, shape index: {}]
  %s1 = inlined_call_operand.vmem [shape: bf16[147,8], index: 1, kind: input, shape index: {}]
  %s2 = inlined_call_operand.vmem [shape: f32[1,8], index: 2, kind: input, shape index: {}]
  %s3 = inlined_call_operand.vmem [shape: f32[2,4096,8], index: 3, kind: output, shape index: {}]
  %s4 = sld [smem:[#allocation0]]
  $region45: #{image_encoder_forward.2} parent=0
    _
  %s6 = ssub.s32 1, %s4
  %s7 = scalar_select 0, %s6, %s4
  loop: start=0, step=1, limit=6
  $region2: #{image_encoder_forward.2} parent=0 // loop_pre_header
    _
  $region3: #{image_encoder_forward.2} parent=0 // loop_header
    %s9 = sphi 0, %s13
    %p10 = scmp.ge.s32.totalorder %s9, 6
    %s16 = sphi 0, %s28
    %s17 = sphi 0, %s24
    %s18 = sphi 0, %s16
    %s19 = sphi 0, %s17
    %s20 = sphi 0, %s18
    %s21 = sphi 0, %s19
    %s33 = sphi 0, %s35
    %s36 = sphi 0, %s33
    %s37 = sphi 0, %s36
    %s53 = sphi 0, %s37
    %s57 = sphi 0, %s57
    %s59 = sphi 0, %s57
    %s60 = sphi 0, %s59
    %s74 = sphi 0, %s60
    %s78 = sphi 0, %s78
    %s80 = sphi 0, %s78
    %s81 = sphi 0, %s80
    %s95 = sphi 0, %s81
    %s103 = sphi 0, %s105
    %s106 = sphi 0, %s103
    %s107 = sphi 0, %s106
    %s123 = sphi 0, %s107
  $region4: #{image_encoder_forward.2} parent=0 // loop_header_branch
    %12 = sbr.rel (%p10) target = $region8
  $region5: #{image_encoder_forward.2} parent=0 // loop_body
    %s14 = ssub.s32 %s9, 1
    %s15 = ssub.s32 %s9, 2
    %s22 = sadd.s32 1, %s17
    %p23 = scmp.ge.s32.totalorder %s22, 2
    %s24 = scalar_select %p23, 0, %s22
    %s25 = sadd.s32 1, %s16
    %s26 = scalar_select %p23, %s25, %s16
    %p27 = scmp.ge.s32.totalorder %s26, 2
    %s28 = scalar_select %p27, 0, %s26
    %s29 = ssub.s32 %s16, %s28
    %s30 = ssub.s32 %s17, %s24
    %s31 = sor.u32 %s29, %s30
    %p32 = scmp.eq.s32.totalorder %s31, 0
    %s34 = sadd.s32 %s33, 1
    %s35 = scalar_select %p32, %s33, %s34
    %p38 = pneg %p32
    %p39 = scmp.eq.s32.totalorder %s9, 3
    %p40 = por %p38, %p39
    %p41 = scmp.ne.s32.totalorder %s33, %s36
    %p42 = scmp.eq.s32.totalorder %s9, 0
    %p43 = por %p41, %p42
    %p44 = scmp.ne.s32.totalorder %s33, %s36
    %p45 = scmp.eq.s32.totalorder %s14, 3
    %p46 = por %p44, %p45
    %p47 = scmp.ne.s32.totalorder %s36, %s37
    %p48 = scmp.eq.s32.totalorder %s14, 0
    %p49 = por %p47, %p48
    %p50 = scmp.ne.s32.totalorder %s36, %s37
    %p51 = scmp.eq.s32.totalorder %s15, 3
    %p52 = por %p50, %p51
    %p54 = scmp.ne.s32.totalorder %s37, %s53
    %p55 = scmp.eq.s32.totalorder %s15, 0
    %p56 = por %p54, %p55
    %s58 = sadd.s32 %s57, 1
    %p61 = scmp.eq.s32.totalorder %s9, 3
    %p62 = scmp.ne.s32.totalorder %s57, %s59
    %p63 = scmp.eq.s32.totalorder %s9, 0
    %p64 = por %p62, %p63
    %p65 = scmp.ne.s32.totalorder %s57, %s59
    %p66 = scmp.eq.s32.totalorder %s14, 3
    %p67 = por %p65, %p66
    %p68 = scmp.ne.s32.totalorder %s59, %s60
    %p69 = scmp.eq.s32.totalorder %s14, 0
    %p70 = por %p68, %p69
    %p71 = scmp.ne.s32.totalorder %s59, %s60
    %p72 = scmp.eq.s32.totalorder %s15, 3
    %p73 = por %p71, %p72
    %p75 = scmp.ne.s32.totalorder %s60, %s74
    %p76 = scmp.eq.s32.totalorder %s15, 0
    %p77 = por %p75, %p76
    %s79 = sadd.s32 %s78, 1
    %p82 = scmp.eq.s32.totalorder %s9, 3
    %p83 = scmp.ne.s32.totalorder %s78, %s80
    %p84 = scmp.eq.s32.totalorder %s9, 0
    %p85 = por %p83, %p84
    %p86 = scmp.ne.s32.totalorder %s78, %s80
    %p87 = scmp.eq.s32.totalorder %s14, 3
    %p88 = por %p86, %p87
    %p89 = scmp.ne.s32.totalorder %s80, %s81
    %p90 = scmp.eq.s32.totalorder %s14, 0
    %p91 = por %p89, %p90
    %p92 = scmp.ne.s32.totalorder %s80, %s81
    %p93 = scmp.eq.s32.totalorder %s15, 3
    %p94 = por %p92, %p93
    %p96 = scmp.ne.s32.totalorder %s81, %s95
    %p97 = scmp.eq.s32.totalorder %s15, 0
    %p98 = por %p96, %p97
    %s99 = ssub.s32 %s16, %s28
    %s100 = ssub.s32 %s17, %s24
    %s101 = sor.u32 %s99, %s100
    %p102 = scmp.eq.s32.totalorder %s101, 0
    %s104 = sadd.s32 %s103, 1
    %s105 = scalar_select %p102, %s103, %s104
    %p108 = pneg %p102
    %p109 = scmp.eq.s32.totalorder %s9, 3
    %p110 = por %p108, %p109
    %p111 = scmp.ne.s32.totalorder %s103, %s106
    %p112 = scmp.eq.s32.totalorder %s9, 0
    %p113 = por %p111, %p112
    %p114 = scmp.ne.s32.totalorder %s103, %s106
    %p115 = scmp.eq.s32.totalorder %s14, 3
    %p116 = por %p114, %p115
    %p117 = scmp.ne.s32.totalorder %s106, %s107
    %p118 = scmp.eq.s32.totalorder %s14, 0
    %p119 = por %p117, %p118
    %p120 = scmp.ne.s32.totalorder %s106, %s107
    %p121 = scmp.eq.s32.totalorder %s15, 3
    %p122 = por %p120, %p121
    %p124 = scmp.ne.s32.totalorder %s107, %s123
    %p125 = scmp.eq.s32.totalorder %s15, 0
    %p126 = por %p124, %p125
    %p127 = scmp.le.s32.totalorder 1, %s9
    %p128 = scmp.lt.s32.totalorder %s9, 5
    %p129 = pnand %p127, %p128
    %p130 = pneg %p129
    // Predicated region
    $region9: #{image_encoder_forward.2} parent=5 // pred_check
      _
    $region10: #{image_encoder_forward.2} parent=5 // pred_check_branch
      %132 = sbr.rel (%p129) target = $region12
    $region11: #{image_encoder_forward.2} parent=5 // pred_region
      %s133 = ssub.s32 %s9, 1
      // Predicated region
      $region13: #{image_encoder_forward.2} parent=11 // pred_check
        %p134 = pneg %p70
      $region14: #{image_encoder_forward.2} parent=11 // pred_check_branch
        %136 = sbr.rel (%p134) target = $region16
      $region15: #{image_encoder_forward.2} parent=11 // pred_region
        _
      $region16: #{image_encoder_forward.2} parent=11 // pred_fallthru
        _
      // Predicated region
      $region17: #{image_encoder_forward.2} parent=11 // pred_check
        %p137 = pneg %p91
      $region18: #{image_encoder_forward.2} parent=11 // pred_check_branch
        %139 = sbr.rel (%p137) target = $region20
      $region19: #{image_encoder_forward.2} parent=11 // pred_region
        _
      $region20: #{image_encoder_forward.2} parent=11 // pred_fallthru
        _
    $region12: #{image_encoder_forward.2} parent=5 // pred_fallthru
      _
    %p140 = scmp.lt.s32.totalorder %s9, 4
    // Predicated region
    $region21: #{image_encoder_forward.2} parent=5 // pred_check
      %p141 = pneg %p140
    $region22: #{image_encoder_forward.2} parent=5 // pred_check_branch
      %143 = sbr.rel (%p141) target = $region24
    $region23: #{image_encoder_forward.2} parent=5 // pred_region
      // Predicated region
      $region25: #{image_encoder_forward.2} parent=23 // pred_check
        %p144 = pneg %p43
      $region26: #{image_encoder_forward.2} parent=23 // pred_check_branch
        %146 = sbr.rel (%p144) target = $region28
      $region27: #{image_encoder_forward.2} parent=23 // pred_region
        %s147 = smul.u32 256, %s17
        %p148 = scmp.lt.s32.totalorder %s16, 1
        %s149 = scalar_select %p148, %s16, 1
        %p150 = scmp.lt.s32.totalorder %s147, 511
        %s151 = scalar_select %p150, %s147, 511
        %s152 = smul.addr %s151, 2
        %s153 = smul.addr %s149, 1024
        %s154 = sadd.s32 %s152, %s153
        %s155 = smul.addr %s154, 4
        %s156 = scalar_lea.vmem %s0, %s155
        %s157 = smul.u32 256, %s17
      $region28: #{image_encoder_forward.2} parent=23 // pred_fallthru
        _
    $region24: #{image_encoder_forward.2} parent=5 // pred_fallthru
      _
    %p158 = scmp.le.s32.totalorder 1, %s9
    %p159 = scmp.lt.s32.totalorder %s9, 5
    %p160 = pnand %p158, %p159
    %p161 = pneg %p160
    // Predicated region
    $region29: #{image_encoder_forward.2} parent=5 // pred_check
      _
    $region30: #{image_encoder_forward.2} parent=5 // pred_check_branch
      %163 = sbr.rel (%p160) target = $region32
    $region31: #{image_encoder_forward.2} parent=5 // pred_region
      %s164 = ssub.s32 %s9, 1
      %s165 = smul.u32 256, %s19
      %p166 = scmp.lt.s32.totalorder %s18, 1
      %s167 = scalar_select %p166, %s18, 1
      %p168 = scmp.lt.s32.totalorder %s165, 511
      %s169 = scalar_select %p168, %s165, 511
      %s170 = smul.addr %s169, 2
      %s171 = smul.addr %s167, 1024
      %s172 = sadd.s32 %s170, %s171
      %s173 = smul.addr %s172, 4
      %s174 = scalar_lea.vmem %s0, %s173
      %p175 = pneg %p49
      %p176 = pneg %p46
      %p177 = pneg %p70
      %p178 = pneg %p67
      %p179 = pneg %p91
      %p180 = pneg %p88
      %p181 = pneg %p119
      %p182 = pneg %p116
      %s183 = smul.u32 256, %s19
      %p184 = scmp.lt.s32.totalorder %s18, 1
      %s185 = scalar_select %p184, %s18, 1
      %p186 = scmp.lt.s32.totalorder %s183, 511
      %s187 = scalar_select %p186, %s183, 511
      %s188 = smul.addr %s185, 512
      %s189 = sadd.s32 %s187, %s188
      %s190 = smul.addr %s189, 8
      %s191 = scalar_lea.vmem %s3, %s190
      %s192 = smul.u32 256, %s19
      %p193 = scmp.lt.s32.totalorder %s18, 1
      %s194 = scalar_select %p193, %s18, 1
      %p195 = scmp.lt.s32.totalorder %s192, 511
      %s196 = scalar_select %p195, %s192, 511
      %s197 = smul.addr %s196, 2
      %s198 = smul.addr %s194, 1024
      %s199 = sadd.s32 %s197, %s198
      %s200 = smul.addr %s199, 4
      %s201 = scalar_lea.vmem %s0, %s200
      %s202 = smul.u32 256, %s19
      %s203 = smul.u32 256, %s19
      %p204 = scmp.lt.s32.totalorder %s18, 1
      %s205 = scalar_select %p204, %s18, 1
      %p206 = scmp.lt.s32.totalorder %s203, 511
      %s207 = scalar_select %p206, %s203, 511
      %s208 = smul.addr %s205, 512
      %s209 = sadd.s32 %s207, %s208
      %s210 = smul.addr %s209, 8
      %s211 = scalar_lea.vmem %s3, %s210
      %s212 = smul.u32 256, %s19
      %v214 = vld [vmem:[%s201] sm:$0xff]
      %v215 = vld [vmem:[%s201 + $0x8] sm:$0xff]
      %v216 = vld [vmem:[%s201 + $0x10] sm:$0xff]
      %v217 = vld [vmem:[%s201 + $0x18] sm:$0xff]
      %v218 = vld [vmem:[%s201 + $0x20] sm:$0xff]
      %v219 = vld [vmem:[%s201 + $0x28] sm:$0xff]
      %v220 = vld [vmem:[%s201 + $0x30] sm:$0xff]
      %v221 = vld [vmem:[%s201 + $0x38] sm:$0xff]
      %v222 = vld [vmem:[%s201 + $0x40] sm:$0xff]
      %v223 = vld [vmem:[%s201 + $0x48] sm:$0xff]
      %v224 = vld [vmem:[%s201 + $0x50] sm:$0xff]
      %v225 = vld [vmem:[%s201 + $0x58] sm:$0xff]
      %v226 = vld [vmem:[%s201 + $0x60] sm:$0xff]
      %v227 = vld [vmem:[%s201 + $0x68] sm:$0xff]
      %v228 = vld [vmem:[%s201 + $0x70] sm:$0xff]
      %v229 = vld [vmem:[%s201 + $0x78] sm:$0xff]
      %v230 = vld [vmem:[%s201 + $0x80] sm:$0xff]
      %v231 = vld [vmem:[%s201 + $0x88] sm:$0xff]
      %v232 = vld [vmem:[%s201 + $0x90] sm:$0xff]
      %v233 = vld [vmem:[%s201 + $0x98] sm:$0xff]
      %v234 = vld [vmem:[%s201 + $0xa0] sm:$0xff]
      %v235 = vld [vmem:[%s201 + $0xa8] sm:$0xff]
      %v236 = vld [vmem:[%s201 + $0xb0] sm:$0xff]
      %v237 = vld [vmem:[%s201 + $0xb8] sm:$0xff]
      %v238 = vld [vmem:[%s201 + $0xc0] sm:$0xff]
      %v239 = vld [vmem:[%s201 + $0xc8] sm:$0xff]
      %v240 = vld [vmem:[%s201 + $0xd0] sm:$0xff]
      %v241 = vld [vmem:[%s201 + $0xd8] sm:$0xff]
      %v242 = vld [vmem:[%s201 + $0xe0] sm:$0xff]
      %v243 = vld [vmem:[%s201 + $0xe8] sm:$0xff]
      %v244 = vld [vmem:[%s201 + $0xf0] sm:$0xff]
      %v245 = vld [vmem:[%s201 + $0xf8] sm:$0xff]
      %v246 = vld [vmem:[%s201 + $0x100] sm:$0xff]
      %v247 = vld [vmem:[%s201 + $0x108] sm:$0xff]
      %v248 = vld [vmem:[%s201 + $0x110] sm:$0xff]
      %v249 = vld [vmem:[%s201 + $0x118] sm:$0xff]
      %v250 = vld [vmem:[%s201 + $0x120] sm:$0xff]
      %v251 = vld [vmem:[%s201 + $0x128] sm:$0xff]
      %v252 = vld [vmem:[%s201 + $0x130] sm:$0xff]
      %v253 = vld [vmem:[%s201 + $0x138] sm:$0xff]
      %v254 = vld [vmem:[%s201 + $0x140] sm:$0xff]
      %v255 = vld [vmem:[%s201 + $0x148] sm:$0xff]
      %v256 = vld [vmem:[%s201 + $0x150] sm:$0xff]
      %v257 = vld [vmem:[%s201 + $0x158] sm:$0xff]
      %v258 = vld [vmem:[%s201 + $0x160] sm:$0xff]
      %v259 = vld [vmem:[%s201 + $0x168] sm:$0xff]
      %v260 = vld [vmem:[%s201 + $0x170] sm:$0xff]
      %v261 = vld [vmem:[%s201 + $0x178] sm:$0xff]
      %v262 = vld [vmem:[%s201 + $0x180] sm:$0xff]
      %v263 = vld [vmem:[%s201 + $0x188] sm:$0xff]
      %v264 = vld [vmem:[%s201 + $0x190] sm:$0xff]
      %v265 = vld [vmem:[%s201 + $0x198] sm:$0xff]
      %v266 = vld [vmem:[%s201 + $0x1a0] sm:$0xff]
      %v267 = vld [vmem:[%s201 + $0x1a8] sm:$0xff]
      %v268 = vld [vmem:[%s201 + $0x1b0] sm:$0xff]
      %v269 = vld [vmem:[%s201 + $0x1b8] sm:$0xff]
      %v270 = vld [vmem:[%s201 + $0x1c0] sm:$0xff]
      %v271 = vld [vmem:[%s201 + $0x1c8] sm:$0xff]
      %v272 = vld [vmem:[%s201 + $0x1d0] sm:$0xff]
      %v273 = vld [vmem:[%s201 + $0x1d8] sm:$0xff]
      %v274 = vld [vmem:[%s201 + $0x1e0] sm:$0xff]
      %v275 = vld [vmem:[%s201 + $0x1e8] sm:$0xff]
      %v276 = vld [vmem:[%s201 + $0x1f0] sm:$0xff]
      %v277 = vld [vmem:[%s201 + $0x1f8] sm:$0xff]
      %v278 = vld [vmem:[%s201 + $0x200] sm:$0xff]
      %v279 = vld [vmem:[%s201 + $0x208] sm:$0xff]
      %v280 = vld [vmem:[%s201 + $0x210] sm:$0xff]
      %v281 = vld [vmem:[%s201 + $0x218] sm:$0xff]
      %v282 = vld [vmem:[%s201 + $0x220] sm:$0xff]
      %v283 = vld [vmem:[%s201 + $0x228] sm:$0xff]
      %v284 = vld [vmem:[%s201 + $0x230] sm:$0xff]
      %v285 = vld [vmem:[%s201 + $0x238] sm:$0xff]
      %v286 = vld [vmem:[%s201 + $0x240] sm:$0xff]
      %v287 = vld [vmem:[%s201 + $0x248] sm:$0xff]
      %v288 = vld [vmem:[%s201 + $0x250] sm:$0xff]
      %v289 = vld [vmem:[%s201 + $0x258] sm:$0xff]
      %v290 = vld [vmem:[%s201 + $0x260] sm:$0xff]
      %v291 = vld [vmem:[%s201 + $0x268] sm:$0xff]
      %v292 = vld [vmem:[%s201 + $0x270] sm:$0xff]
      %v293 = vld [vmem:[%s201 + $0x278] sm:$0xff]
      %v294 = vld [vmem:[%s201 + $0x280] sm:$0xff]
      %v295 = vld [vmem:[%s201 + $0x288] sm:$0xff]
      %v296 = vld [vmem:[%s201 + $0x290] sm:$0xff]
      %v297 = vld [vmem:[%s201 + $0x298] sm:$0xff]
      %v298 = vld [vmem:[%s201 + $0x2a0] sm:$0xff]
      %v299 = vld [vmem:[%s201 + $0x2a8] sm:$0xff]
      %v300 = vld [vmem:[%s201 + $0x2b0] sm:$0xff]
      %v301 = vld [vmem:[%s201 + $0x2b8] sm:$0xff]
      %v302 = vld [vmem:[%s201 + $0x2c0] sm:$0xff]
      %v303 = vld [vmem:[%s201 + $0x2c8] sm:$0xff]
      %v304 = vld [vmem:[%s201 + $0x2d0] sm:$0xff]
      %v305 = vld [vmem:[%s201 + $0x2d8] sm:$0xff]
      %v306 = vld [vmem:[%s201 + $0x2e0] sm:$0xff]
      %v307 = vld [vmem:[%s201 + $0x2e8] sm:$0xff]
      %v308 = vld [vmem:[%s201 + $0x2f0] sm:$0xff]
      %v309 = vld [vmem:[%s201 + $0x2f8] sm:$0xff]
      %v310 = vld [vmem:[%s201 + $0x300] sm:$0xff]
      %v311 = vld [vmem:[%s201 + $0x308] sm:$0xff]
      %v312 = vld [vmem:[%s201 + $0x310] sm:$0xff]
      %v313 = vld [vmem:[%s201 + $0x318] sm:$0xff]
      %v314 = vld [vmem:[%s201 + $0x320] sm:$0xff]
      %v315 = vld [vmem:[%s201 + $0x328] sm:$0xff]
      %v316 = vld [vmem:[%s201 + $0x330] sm:$0xff]
      %v317 = vld [vmem:[%s201 + $0x338] sm:$0xff]
      %v318 = vld [vmem:[%s201 + $0x340] sm:$0xff]
      %v319 = vld [vmem:[%s201 + $0x348] sm:$0xff]
      %v320 = vld [vmem:[%s201 + $0x350] sm:$0xff]
      %v321 = vld [vmem:[%s201 + $0x358] sm:$0xff]
      %v322 = vld [vmem:[%s201 + $0x360] sm:$0xff]
      %v323 = vld [vmem:[%s201 + $0x368] sm:$0xff]
      %v324 = vld [vmem:[%s201 + $0x370] sm:$0xff]
      %v325 = vld [vmem:[%s201 + $0x378] sm:$0xff]
      %v326 = vld [vmem:[%s201 + $0x380] sm:$0xff]
      %v327 = vld [vmem:[%s201 + $0x388] sm:$0xff]
      %v328 = vld [vmem:[%s201 + $0x390] sm:$0xff]
      %v329 = vld [vmem:[%s201 + $0x398] sm:$0xff]
      %v330 = vld [vmem:[%s201 + $0x3a0] sm:$0xff]
      %v331 = vld [vmem:[%s201 + $0x3a8] sm:$0xff]
      %v332 = vld [vmem:[%s201 + $0x3b0] sm:$0xff]
      %v333 = vld [vmem:[%s201 + $0x3b8] sm:$0xff]
      %v334 = vld [vmem:[%s201 + $0x3c0] sm:$0xff]
      %v335 = vld [vmem:[%s201 + $0x3c8] sm:$0xff]
      %v336 = vld [vmem:[%s201 + $0x3d0] sm:$0xff]
      %v337 = vld [vmem:[%s201 + $0x3d8] sm:$0xff]
      %v338 = vld [vmem:[%s201 + $0x3e0] sm:$0xff]
      %v339 = vld [vmem:[%s201 + $0x3e8] sm:$0xff]
      %v340 = vld [vmem:[%s201 + $0x3f0] sm:$0xff]
      %v341 = vld [vmem:[%s201 + $0x3f8] sm:$0xff]
      %v342 = vld [vmem:[%s201 + $0x400] sm:$0xff]
      %v343 = vld [vmem:[%s201 + $0x408] sm:$0xff]
      %v344 = vld [vmem:[%s201 + $0x410] sm:$0xff]
      %v345 = vld [vmem:[%s201 + $0x418] sm:$0xff]
      %v346 = vld [vmem:[%s201 + $0x420] sm:$0xff]
      %v347 = vld [vmem:[%s201 + $0x428] sm:$0xff]
      %v348 = vld [vmem:[%s201 + $0x430] sm:$0xff]
      %v349 = vld [vmem:[%s201 + $0x438] sm:$0xff]
      %v350 = vld [vmem:[%s201 + $0x440] sm:$0xff]
      %v351 = vld [vmem:[%s201 + $0x448] sm:$0xff]
      %v352 = vld [vmem:[%s201 + $0x450] sm:$0xff]
      %v353 = vld [vmem:[%s201 + $0x458] sm:$0xff]
      %v354 = vld [vmem:[%s201 + $0x460] sm:$0xff]
      %v355 = vld [vmem:[%s201 + $0x468] sm:$0xff]
      %v356 = vld [vmem:[%s201 + $0x470] sm:$0xff]
      %v357 = vld [vmem:[%s201 + $0x478] sm:$0xff]
      %v358 = vld [vmem:[%s201 + $0x480] sm:$0xff]
      %v359 = vld [vmem:[%s201 + $0x488] sm:$0xff]
      %v360 = vld [vmem:[%s201 + $0x490] sm:$0xff]
      %v361 = vld [vmem:[%s201 + $0x498] sm:$0xff]
      %v362 = vld [vmem:[%s201 + $0x4a0] sm:$0xff]
      %v363 = vld [vmem:[%s201 + $0x4a8] sm:$0xff]
      %v364 = vld [vmem:[%s201 + $0x4b0] sm:$0xff]
      %v365 = vld [vmem:[%s201 + $0x4b8] sm:$0xff]
      %v366 = vld [vmem:[%s201 + $0x4c0] sm:$0xff]
      %v367 = vld [vmem:[%s201 + $0x4c8] sm:$0xff]
      %v368 = vld [vmem:[%s201 + $0x4d0] sm:$0xff]
      %v369 = vld [vmem:[%s201 + $0x4d8] sm:$0xff]
      %v370 = vld [vmem:[%s201 + $0x4e0] sm:$0xff]
      %v371 = vld [vmem:[%s201 + $0x4e8] sm:$0xff]
      %v372 = vld [vmem:[%s201 + $0x4f0] sm:$0xff]
      %v373 = vld [vmem:[%s201 + $0x4f8] sm:$0xff]
      %v374 = vld [vmem:[%s201 + $0x500] sm:$0xff]
      %v375 = vld [vmem:[%s201 + $0x508] sm:$0xff]
      %v376 = vld [vmem:[%s201 + $0x510] sm:$0xff]
      %v377 = vld [vmem:[%s201 + $0x518] sm:$0xff]
      %v378 = vld [vmem:[%s201 + $0x520] sm:$0xff]
      %v379 = vld [vmem:[%s201 + $0x528] sm:$0xff]
      %v380 = vld [vmem:[%s201 + $0x530] sm:$0xff]
      %v381 = vld [vmem:[%s201 + $0x538] sm:$0xff]
      %v382 = vld [vmem:[%s201 + $0x540] sm:$0xff]
      %v383 = vld [vmem:[%s201 + $0x548] sm:$0xff]
      %v384 = vld [vmem:[%s201 + $0x550] sm:$0xff]
      %v385 = vld [vmem:[%s201 + $0x558] sm:$0xff]
      %v386 = vld [vmem:[%s201 + $0x560] sm:$0xff]
      %v387 = vld [vmem:[%s201 + $0x568] sm:$0xff]
      %v388 = vld [vmem:[%s201 + $0x570] sm:$0xff]
      %v389 = vld [vmem:[%s201 + $0x578] sm:$0xff]
      %v390 = vld [vmem:[%s201 + $0x580] sm:$0xff]
      %v391 = vld [vmem:[%s201 + $0x588] sm:$0xff]
      %v392 = vld [vmem:[%s201 + $0x590] sm:$0xff]
      %v393 = vld [vmem:[%s201 + $0x598] sm:$0xff]
      %v394 = vld [vmem:[%s201 + $0x5a0] sm:$0xff]
      %v395 = vld [vmem:[%s201 + $0x5a8] sm:$0xff]
      %v396 = vld [vmem:[%s201 + $0x5b0] sm:$0xff]
      %v397 = vld [vmem:[%s201 + $0x5b8] sm:$0xff]
      %v398 = vld [vmem:[%s201 + $0x5c0] sm:$0xff]
      %v399 = vld [vmem:[%s201 + $0x5c8] sm:$0xff]
      %v400 = vld [vmem:[%s201 + $0x5d0] sm:$0xff]
      %v401 = vld [vmem:[%s201 + $0x5d8] sm:$0xff]
      %v402 = vld [vmem:[%s201 + $0x5e0] sm:$0xff]
      %v403 = vld [vmem:[%s201 + $0x5e8] sm:$0xff]
      %v404 = vld [vmem:[%s201 + $0x5f0] sm:$0xff]
      %v405 = vld [vmem:[%s201 + $0x5f8] sm:$0xff]
      %v406 = vld [vmem:[%s201 + $0x600] sm:$0xff]
      %v407 = vld [vmem:[%s201 + $0x608] sm:$0xff]
      %v408 = vld [vmem:[%s201 + $0x610] sm:$0xff]
      %v409 = vld [vmem:[%s201 + $0x618] sm:$0xff]
      %v410 = vld [vmem:[%s201 + $0x620] sm:$0xff]
      %v411 = vld [vmem:[%s201 + $0x628] sm:$0xff]
      %v412 = vld [vmem:[%s201 + $0x630] sm:$0xff]
      %v413 = vld [vmem:[%s201 + $0x638] sm:$0xff]
      %v414 = vld [vmem:[%s201 + $0x640] sm:$0xff]
      %v415 = vld [vmem:[%s201 + $0x648] sm:$0xff]
      %v416 = vld [vmem:[%s201 + $0x650] sm:$0xff]
      %v417 = vld [vmem:[%s201 + $0x658] sm:$0xff]
      %v418 = vld [vmem:[%s201 + $0x660] sm:$0xff]
      %v419 = vld [vmem:[%s201 + $0x668] sm:$0xff]
      %v420 = vld [vmem:[%s201 + $0x670] sm:$0xff]
      %v421 = vld [vmem:[%s201 + $0x678] sm:$0xff]
      %v422 = vld [vmem:[%s201 + $0x680] sm:$0xff]
      %v423 = vld [vmem:[%s201 + $0x688] sm:$0xff]
      %v424 = vld [vmem:[%s201 + $0x690] sm:$0xff]
      %v425 = vld [vmem:[%s201 + $0x698] sm:$0xff]
      %v426 = vld [vmem:[%s201 + $0x6a0] sm:$0xff]
      %v427 = vld [vmem:[%s201 + $0x6a8] sm:$0xff]
      %v428 = vld [vmem:[%s201 + $0x6b0] sm:$0xff]
      %v429 = vld [vmem:[%s201 + $0x6b8] sm:$0xff]
      %v430 = vld [vmem:[%s201 + $0x6c0] sm:$0xff]
      %v431 = vld [vmem:[%s201 + $0x6c8] sm:$0xff]
      %v432 = vld [vmem:[%s201 + $0x6d0] sm:$0xff]
      %v433 = vld [vmem:[%s201 + $0x6d8] sm:$0xff]
      %v434 = vld [vmem:[%s201 + $0x6e0] sm:$0xff]
      %v435 = vld [vmem:[%s201 + $0x6e8] sm:$0xff]
      %v436 = vld [vmem:[%s201 + $0x6f0] sm:$0xff]
      %v437 = vld [vmem:[%s201 + $0x6f8] sm:$0xff]
      %v438 = vld [vmem:[%s201 + $0x700] sm:$0xff]
      %v439 = vld [vmem:[%s201 + $0x708] sm:$0xff]
      %v440 = vld [vmem:[%s201 + $0x710] sm:$0xff]
      %v441 = vld [vmem:[%s201 + $0x718] sm:$0xff]
      %v442 = vld [vmem:[%s201 + $0x720] sm:$0xff]
      %v443 = vld [vmem:[%s201 + $0x728] sm:$0xff]
      %v444 = vld [vmem:[%s201 + $0x730] sm:$0xff]
      %v445 = vld [vmem:[%s201 + $0x738] sm:$0xff]
      %v446 = vld [vmem:[%s201 + $0x740] sm:$0xff]
      %v447 = vld [vmem:[%s201 + $0x748] sm:$0xff]
      %v448 = vld [vmem:[%s201 + $0x750] sm:$0xff]
      %v449 = vld [vmem:[%s201 + $0x758] sm:$0xff]
      %v450 = vld [vmem:[%s201 + $0x760] sm:$0xff]
      %v451 = vld [vmem:[%s201 + $0x768] sm:$0xff]
      %v452 = vld [vmem:[%s201 + $0x770] sm:$0xff]
      %v453 = vld [vmem:[%s201 + $0x778] sm:$0xff]
      %v454 = vld [vmem:[%s201 + $0x780] sm:$0xff]
      %v455 = vld [vmem:[%s201 + $0x788] sm:$0xff]
      %v456 = vld [vmem:[%s201 + $0x790] sm:$0xff]
      %v457 = vld [vmem:[%s201 + $0x798] sm:$0xff]
      %v458 = vld [vmem:[%s201 + $0x7a0] sm:$0xff]
      %v459 = vld [vmem:[%s201 + $0x7a8] sm:$0xff]
      %v460 = vld [vmem:[%s201 + $0x7b0] sm:$0xff]
      %v461 = vld [vmem:[%s201 + $0x7b8] sm:$0xff]
      %v462 = vld [vmem:[%s201 + $0x7c0] sm:$0xff]
      %v463 = vld [vmem:[%s201 + $0x7c8] sm:$0xff]
      %v464 = vld [vmem:[%s201 + $0x7d0] sm:$0xff]
      %v465 = vld [vmem:[%s201 + $0x7d8] sm:$0xff]
      %v466 = vld [vmem:[%s201 + $0x7e0] sm:$0xff]
      %v467 = vld [vmem:[%s201 + $0x7e8] sm:$0xff]
      %v468 = vld [vmem:[%s201 + $0x7f0] sm:$0xff]
      %v469 = vld [vmem:[%s201 + $0x7f8] sm:$0xff]
      %v470 = vld [vmem:[%s1] sm:$0xf]
      %v471 = vld [vmem:[%s1 + $0x4] sm:$0xf]
      %v472 = vld [vmem:[%s1 + $0x8] sm:$0xf]
      %v473 = vld [vmem:[%s1 + $0xc] sm:$0xf]
      %v474 = vld [vmem:[%s1 + $0x10] sm:$0xf]
      %v475 = vld [vmem:[%s1 + $0x14] sm:$0xf]
      %v476 = vld [vmem:[%s1 + $0x18] sm:$0xf]
      %v477 = vld [vmem:[%s1 + $0x1c] sm:$0xf]
      %v478 = vld [vmem:[%s1 + $0x20] sm:$0xf]
      %v479 = vld [vmem:[%s1 + $0x24] sm:$0xf]
      %v480 = vld [vmem:[%s1 + $0x28] sm:$0xf]
      %v481 = vld [vmem:[%s1 + $0x2c] sm:$0xf]
      %v482 = vld [vmem:[%s1 + $0x30] sm:$0xf]
      %v483 = vld [vmem:[%s1 + $0x34] sm:$0xf]
      %v484 = vld [vmem:[%s1 + $0x38] sm:$0xf]
      %v485 = vld [vmem:[%s1 + $0x3c] sm:$0xf]
      %v486 = vld [vmem:[%s1 + $0x40] sm:$0xf]
      %v487 = vld [vmem:[%s1 + $0x44] sm:$0xf]
      %v488 = vld [vmem:[%s1 + $0x48] sm:$0x3]
      %v489 = vld [vmem:[%s2] sm:$0x1]
      %v491 = vlaneseq
      %v492 = vshrl.u32 %v491, 7
      %v493 = vsub.s32 0, %v492
      %v494 = vrot.slane %v489, %v493
      %v752 = vunpack.c.l.b16 %v214
      %v753 = vunpack.c.h.b16 %v214
      %v754 = vunpack.c.l.b16 %v215
      %v755 = vunpack.c.h.b16 %v215
      %v756 = vunpack.c.l.b16 %v216
      %v757 = vunpack.c.h.b16 %v216
      %v758 = vunpack.c.l.b16 %v217
      %v759 = vunpack.c.h.b16 %v217
      %v760 = vunpack.c.l.b16 %v218
      %v761 = vunpack.c.h.b16 %v218
      %v762 = vunpack.c.l.b16 %v219
      %v763 = vunpack.c.h.b16 %v219
      %v764 = vunpack.c.l.b16 %v220
      %v765 = vunpack.c.h.b16 %v220
      %v766 = vunpack.c.l.b16 %v221
      %v767 = vunpack.c.h.b16 %v221
      %v768 = vunpack.c.l.b16 %v222
      %v769 = vunpack.c.h.b16 %v222
      %v770 = vunpack.c.l.b16 %v223
      %v771 = vunpack.c.h.b16 %v223
      %v772 = vunpack.c.l.b16 %v224
      %v773 = vunpack.c.h.b16 %v224
      %v774 = vunpack.c.l.b16 %v225
      %v775 = vunpack.c.h.b16 %v225
      %v776 = vunpack.c.l.b16 %v226
      %v777 = vunpack.c.h.b16 %v226
      %v778 = vunpack.c.l.b16 %v227
      %v779 = vunpack.c.h.b16 %v227
      %v780 = vunpack.c.l.b16 %v228
      %v781 = vunpack.c.h.b16 %v228
      %v782 = vunpack.c.l.b16 %v229
      %v783 = vunpack.c.h.b16 %v229
      %v784 = vunpack.c.l.b16 %v230
      %v785 = vunpack.c.h.b16 %v230
      %v786 = vunpack.c.l.b16 %v231
      %v787 = vunpack.c.h.b16 %v231
      %v788 = vunpack.c.l.b16 %v232
      %v789 = vunpack.c.h.b16 %v232
      %v790 = vunpack.c.l.b16 %v233
      %v791 = vunpack.c.h.b16 %v233
      %v792 = vunpack.c.l.b16 %v234
      %v793 = vunpack.c.h.b16 %v234
      %v794 = vunpack.c.l.b16 %v235
      %v795 = vunpack.c.h.b16 %v235
      %v796 = vunpack.c.l.b16 %v236
      %v797 = vunpack.c.h.b16 %v236
      %v798 = vunpack.c.l.b16 %v237
      %v799 = vunpack.c.h.b16 %v237
      %v800 = vunpack.c.l.b16 %v238
      %v801 = vunpack.c.h.b16 %v238
      %v802 = vunpack.c.l.b16 %v239
      %v803 = vunpack.c.h.b16 %v239
      %v804 = vunpack.c.l.b16 %v240
      %v805 = vunpack.c.h.b16 %v240
      %v806 = vunpack.c.l.b16 %v241
      %v807 = vunpack.c.h.b16 %v241
      %v808 = vunpack.c.l.b16 %v242
      %v809 = vunpack.c.h.b16 %v242
      %v810 = vunpack.c.l.b16 %v243
      %v811 = vunpack.c.h.b16 %v243
      %v812 = vunpack.c.l.b16 %v244
      %v813 = vunpack.c.h.b16 %v244
      %v814 = vunpack.c.l.b16 %v245
      %v815 = vunpack.c.h.b16 %v245
      %v816 = vunpack.c.l.b16 %v246
      %v817 = vunpack.c.h.b16 %v246
      %v818 = vunpack.c.l.b16 %v247
      %v819 = vunpack.c.h.b16 %v247
      %v820 = vunpack.c.l.b16 %v248
      %v821 = vunpack.c.h.b16 %v248
      %v822 = vunpack.c.l.b16 %v249
      %v823 = vunpack.c.h.b16 %v249
      %v824 = vunpack.c.l.b16 %v250
      %v825 = vunpack.c.h.b16 %v250
      %v826 = vunpack.c.l.b16 %v251
      %v827 = vunpack.c.h.b16 %v251
      %v828 = vunpack.c.l.b16 %v252
      %v829 = vunpack.c.h.b16 %v252
      %v830 = vunpack.c.l.b16 %v253
      %v831 = vunpack.c.h.b16 %v253
      %v832 = vunpack.c.l.b16 %v254
      %v833 = vunpack.c.h.b16 %v254
      %v834 = vunpack.c.l.b16 %v255
      %v835 = vunpack.c.h.b16 %v255
      %v836 = vunpack.c.l.b16 %v256
      %v837 = vunpack.c.h.b16 %v256
      %v838 = vunpack.c.l.b16 %v257
      %v839 = vunpack.c.h.b16 %v257
      %v840 = vunpack.c.l.b16 %v258
      %v841 = vunpack.c.h.b16 %v258
      %v842 = vunpack.c.l.b16 %v259
      %v843 = vunpack.c.h.b16 %v259
      %v844 = vunpack.c.l.b16 %v260
      %v845 = vunpack.c.h.b16 %v260
      %v846 = vunpack.c.l.b16 %v261
      %v847 = vunpack.c.h.b16 %v261
      %v848 = vunpack.c.l.b16 %v262
      %v849 = vunpack.c.h.b16 %v262
      %v850 = vunpack.c.l.b16 %v263
      %v851 = vunpack.c.h.b16 %v263
      %v852 = vunpack.c.l.b16 %v264
      %v853 = vunpack.c.h.b16 %v264
      %v854 = vunpack.c.l.b16 %v265
      %v855 = vunpack.c.h.b16 %v265
      %v856 = vunpack.c.l.b16 %v266
      %v857 = vunpack.c.h.b16 %v266
      %v858 = vunpack.c.l.b16 %v267
      %v859 = vunpack.c.h.b16 %v267
      %v860 = vunpack.c.l.b16 %v268
      %v861 = vunpack.c.h.b16 %v268
      %v862 = vunpack.c.l.b16 %v269
      %v863 = vunpack.c.h.b16 %v269
      %v864 = vunpack.c.l.b16 %v270
      %v865 = vunpack.c.h.b16 %v270
      %v866 = vunpack.c.l.b16 %v271
      %v867 = vunpack.c.h.b16 %v271
      %v868 = vunpack.c.l.b16 %v272
      %v869 = vunpack.c.h.b16 %v272
      %v870 = vunpack.c.l.b16 %v273
      %v871 = vunpack.c.h.b16 %v273
      %v872 = vunpack.c.l.b16 %v274
      %v873 = vunpack.c.h.b16 %v274
      %v874 = vunpack.c.l.b16 %v275
      %v875 = vunpack.c.h.b16 %v275
      %v876 = vunpack.c.l.b16 %v276
      %v877 = vunpack.c.h.b16 %v276
      %v878 = vunpack.c.l.b16 %v277
      %v879 = vunpack.c.h.b16 %v277
      %v880 = vunpack.c.l.b16 %v278
      %v881 = vunpack.c.h.b16 %v278
      %v882 = vunpack.c.l.b16 %v279
      %v883 = vunpack.c.h.b16 %v279
      %v884 = vunpack.c.l.b16 %v280
      %v885 = vunpack.c.h.b16 %v280
      %v886 = vunpack.c.l.b16 %v281
      %v887 = vunpack.c.h.b16 %v281
      %v888 = vunpack.c.l.b16 %v282
      %v889 = vunpack.c.h.b16 %v282
      %v890 = vunpack.c.l.b16 %v283
      %v891 = vunpack.c.h.b16 %v283
      %v892 = vunpack.c.l.b16 %v284
      %v893 = vunpack.c.h.b16 %v284
      %v894 = vunpack.c.l.b16 %v285
      %v895 = vunpack.c.h.b16 %v285
      %v896 = vunpack.c.l.b16 %v286
      %v897 = vunpack.c.h.b16 %v286
      %v898 = vunpack.c.l.b16 %v287
      %v899 = vunpack.c.h.b16 %v287
      %v900 = vunpack.c.l.b16 %v288
      %v901 = vunpack.c.h.b16 %v288
      %v902 = vunpack.c.l.b16 %v289
      %v903 = vunpack.c.h.b16 %v289
      %v904 = vunpack.c.l.b16 %v290
      %v905 = vunpack.c.h.b16 %v290
      %v906 = vunpack.c.l.b16 %v291
      %v907 = vunpack.c.h.b16 %v291
      %v908 = vunpack.c.l.b16 %v292
      %v909 = vunpack.c.h.b16 %v292
      %v910 = vunpack.c.l.b16 %v293
      %v911 = vunpack.c.h.b16 %v293
      %v912 = vunpack.c.l.b16 %v294
      %v913 = vunpack.c.h.b16 %v294
      %v914 = vunpack.c.l.b16 %v295
      %v915 = vunpack.c.h.b16 %v295
      %v916 = vunpack.c.l.b16 %v296
      %v917 = vunpack.c.h.b16 %v296
      %v918 = vunpack.c.l.b16 %v297
      %v919 = vunpack.c.h.b16 %v297
      %v920 = vunpack.c.l.b16 %v298
      %v921 = vunpack.c.h.b16 %v298
      %v922 = vunpack.c.l.b16 %v299
      %v923 = vunpack.c.h.b16 %v299
      %v924 = vunpack.c.l.b16 %v300
      %v925 = vunpack.c.h.b16 %v300
      %v926 = vunpack.c.l.b16 %v301
      %v927 = vunpack.c.h.b16 %v301
      %v928 = vunpack.c.l.b16 %v302
      %v929 = vunpack.c.h.b16 %v302
      %v930 = vunpack.c.l.b16 %v303
      %v931 = vunpack.c.h.b16 %v303
      %v932 = vunpack.c.l.b16 %v304
      %v933 = vunpack.c.h.b16 %v304
      %v934 = vunpack.c.l.b16 %v305
      %v935 = vunpack.c.h.b16 %v305
      %v936 = vunpack.c.l.b16 %v306
      %v937 = vunpack.c.h.b16 %v306
      %v938 = vunpack.c.l.b16 %v307
      %v939 = vunpack.c.h.b16 %v307
      %v940 = vunpack.c.l.b16 %v308
      %v941 = vunpack.c.h.b16 %v308
      %v942 = vunpack.c.l.b16 %v309
      %v943 = vunpack.c.h.b16 %v309
      %v944 = vunpack.c.l.b16 %v310
      %v945 = vunpack.c.h.b16 %v310
      %v946 = vunpack.c.l.b16 %v311
      %v947 = vunpack.c.h.b16 %v311
      %v948 = vunpack.c.l.b16 %v312
      %v949 = vunpack.c.h.b16 %v312
      %v950 = vunpack.c.l.b16 %v313
      %v951 = vunpack.c.h.b16 %v313
      %v952 = vunpack.c.l.b16 %v314
      %v953 = vunpack.c.h.b16 %v314
      %v954 = vunpack.c.l.b16 %v315
      %v955 = vunpack.c.h.b16 %v315
      %v956 = vunpack.c.l.b16 %v316
      %v957 = vunpack.c.h.b16 %v316
      %v958 = vunpack.c.l.b16 %v317
      %v959 = vunpack.c.h.b16 %v317
      %v960 = vunpack.c.l.b16 %v318
      %v961 = vunpack.c.h.b16 %v318
      %v962 = vunpack.c.l.b16 %v319
      %v963 = vunpack.c.h.b16 %v319
      %v964 = vunpack.c.l.b16 %v320
      %v965 = vunpack.c.h.b16 %v320
      %v966 = vunpack.c.l.b16 %v321
      %v967 = vunpack.c.h.b16 %v321
      %v968 = vunpack.c.l.b16 %v322
      %v969 = vunpack.c.h.b16 %v322
      %v970 = vunpack.c.l.b16 %v323
      %v971 = vunpack.c.h.b16 %v323
      %v972 = vunpack.c.l.b16 %v324
      %v973 = vunpack.c.h.b16 %v324
      %v974 = vunpack.c.l.b16 %v325
      %v975 = vunpack.c.h.b16 %v325
      %v976 = vunpack.c.l.b16 %v326
      %v977 = vunpack.c.h.b16 %v326
      %v978 = vunpack.c.l.b16 %v327
      %v979 = vunpack.c.h.b16 %v327
      %v980 = vunpack.c.l.b16 %v328
      %v981 = vunpack.c.h.b16 %v328
      %v982 = vunpack.c.l.b16 %v329
      %v983 = vunpack.c.h.b16 %v329
      %v984 = vunpack.c.l.b16 %v330
      %v985 = vunpack.c.h.b16 %v330
      %v986 = vunpack.c.l.b16 %v331
      %v987 = vunpack.c.h.b16 %v331
      %v988 = vunpack.c.l.b16 %v332
      %v989 = vunpack.c.h.b16 %v332
      %v990 = vunpack.c.l.b16 %v333
      %v991 = vunpack.c.h.b16 %v333
      %v992 = vunpack.c.l.b16 %v334
      %v993 = vunpack.c.h.b16 %v334
      %v994 = vunpack.c.l.b16 %v335
      %v995 = vunpack.c.h.b16 %v335
      %v996 = vunpack.c.l.b16 %v336
      %v997 = vunpack.c.h.b16 %v336
      %v998 = vunpack.c.l.b16 %v337
      %v999 = vunpack.c.h.b16 %v337
      %v1000 = vunpack.c.l.b16 %v338
      %v1001 = vunpack.c.h.b16 %v338
      %v1002 = vunpack.c.l.b16 %v339
      %v1003 = vunpack.c.h.b16 %v339
      %v1004 = vunpack.c.l.b16 %v340
      %v1005 = vunpack.c.h.b16 %v340
      %v1006 = vunpack.c.l.b16 %v341
      %v1007 = vunpack.c.h.b16 %v341
      %v1008 = vunpack.c.l.b16 %v342
      %v1009 = vunpack.c.h.b16 %v342
      %v1010 = vunpack.c.l.b16 %v343
      %v1011 = vunpack.c.h.b16 %v343
      %v1012 = vunpack.c.l.b16 %v344
      %v1013 = vunpack.c.h.b16 %v344
      %v1014 = vunpack.c.l.b16 %v345
      %v1015 = vunpack.c.h.b16 %v345
      %v1016 = vunpack.c.l.b16 %v346
      %v1017 = vunpack.c.h.b16 %v346
      %v1018 = vunpack.c.l.b16 %v347
      %v1019 = vunpack.c.h.b16 %v347
      %v1020 = vunpack.c.l.b16 %v348
      %v1021 = vunpack.c.h.b16 %v348
      %v1022 = vunpack.c.l.b16 %v349
      %v1023 = vunpack.c.h.b16 %v349
      %v1024 = vunpack.c.l.b16 %v350
      %v1025 = vunpack.c.h.b16 %v350
      %v1026 = vunpack.c.l.b16 %v351
      %v1027 = vunpack.c.h.b16 %v351
      %v1028 = vunpack.c.l.b16 %v352
      %v1029 = vunpack.c.h.b16 %v352
      %v1030 = vunpack.c.l.b16 %v353
      %v1031 = vunpack.c.h.b16 %v353
      %v1032 = vunpack.c.l.b16 %v354
      %v1033 = vunpack.c.h.b16 %v354
      %v1034 = vunpack.c.l.b16 %v355
      %v1035 = vunpack.c.h.b16 %v355
      %v1036 = vunpack.c.l.b16 %v356
      %v1037 = vunpack.c.h.b16 %v356
      %v1038 = vunpack.c.l.b16 %v357
      %v1039 = vunpack.c.h.b16 %v357
      %v1040 = vunpack.c.l.b16 %v358
      %v1041 = vunpack.c.h.b16 %v358
      %v1042 = vunpack.c.l.b16 %v359
      %v1043 = vunpack.c.h.b16 %v359
      %v1044 = vunpack.c.l.b16 %v360
      %v1045 = vunpack.c.h.b16 %v360
      %v1046 = vunpack.c.l.b16 %v361
      %v1047 = vunpack.c.h.b16 %v361
      %v1048 = vunpack.c.l.b16 %v362
      %v1049 = vunpack.c.h.b16 %v362
      %v1050 = vunpack.c.l.b16 %v363
      %v1051 = vunpack.c.h.b16 %v363
      %v1052 = vunpack.c.l.b16 %v364
      %v1053 = vunpack.c.h.b16 %v364
      %v1054 = vunpack.c.l.b16 %v365
      %v1055 = vunpack.c.h.b16 %v365
      %v1056 = vunpack.c.l.b16 %v366
      %v1057 = vunpack.c.h.b16 %v366
      %v1058 = vunpack.c.l.b16 %v367
      %v1059 = vunpack.c.h.b16 %v367
      %v1060 = vunpack.c.l.b16 %v368
      %v1061 = vunpack.c.h.b16 %v368
      %v1062 = vunpack.c.l.b16 %v369
      %v1063 = vunpack.c.h.b16 %v369
      %v1064 = vunpack.c.l.b16 %v370
      %v1065 = vunpack.c.h.b16 %v370
      %v1066 = vunpack.c.l.b16 %v371
      %v1067 = vunpack.c.h.b16 %v371
      %v1068 = vunpack.c.l.b16 %v372
      %v1069 = vunpack.c.h.b16 %v372
      %v1070 = vunpack.c.l.b16 %v373
      %v1071 = vunpack.c.h.b16 %v373
      %v1072 = vunpack.c.l.b16 %v374
      %v1073 = vunpack.c.h.b16 %v374
      %v1074 = vunpack.c.l.b16 %v375
      %v1075 = vunpack.c.h.b16 %v375
      %v1076 = vunpack.c.l.b16 %v376
      %v1077 = vunpack.c.h.b16 %v376
      %v1078 = vunpack.c.l.b16 %v377
      %v1079 = vunpack.c.h.b16 %v377
      %v1080 = vunpack.c.l.b16 %v378
      %v1081 = vunpack.c.h.b16 %v378
      %v1082 = vunpack.c.l.b16 %v379
      %v1083 = vunpack.c.h.b16 %v379
      %v1084 = vunpack.c.l.b16 %v380
      %v1085 = vunpack.c.h.b16 %v380
      %v1086 = vunpack.c.l.b16 %v381
      %v1087 = vunpack.c.h.b16 %v381
      %v1088 = vunpack.c.l.b16 %v382
      %v1089 = vunpack.c.h.b16 %v382
      %v1090 = vunpack.c.l.b16 %v383
      %v1091 = vunpack.c.h.b16 %v383
      %v1092 = vunpack.c.l.b16 %v384
      %v1093 = vunpack.c.h.b16 %v384
      %v1094 = vunpack.c.l.b16 %v385
      %v1095 = vunpack.c.h.b16 %v385
      %v1096 = vunpack.c.l.b16 %v386
      %v1097 = vunpack.c.h.b16 %v386
      %v1098 = vunpack.c.l.b16 %v387
      %v1099 = vunpack.c.h.b16 %v387
      %v1100 = vunpack.c.l.b16 %v388
      %v1101 = vunpack.c.h.b16 %v388
      %v1102 = vunpack.c.l.b16 %v389
      %v1103 = vunpack.c.h.b16 %v389
      %v1104 = vunpack.c.l.b16 %v390
      %v1105 = vunpack.c.h.b16 %v390
      %v1106 = vunpack.c.l.b16 %v391
      %v1107 = vunpack.c.h.b16 %v391
      %v1108 = vunpack.c.l.b16 %v392
      %v1109 = vunpack.c.h.b16 %v392
      %v1110 = vunpack.c.l.b16 %v393
      %v1111 = vunpack.c.h.b16 %v393
      %v1112 = vunpack.c.l.b16 %v394
      %v1113 = vunpack.c.h.b16 %v394
      %v1114 = vunpack.c.l.b16 %v395
      %v1115 = vunpack.c.h.b16 %v395
      %v1116 = vunpack.c.l.b16 %v396
      %v1117 = vunpack.c.h.b16 %v396
      %v1118 = vunpack.c.l.b16 %v397
      %v1119 = vunpack.c.h.b16 %v397
      %v1120 = vunpack.c.l.b16 %v398
      %v1121 = vunpack.c.h.b16 %v398
      %v1122 = vunpack.c.l.b16 %v399
      %v1123 = vunpack.c.h.b16 %v399
      %v1124 = vunpack.c.l.b16 %v400
      %v1125 = vunpack.c.h.b16 %v400
      %v1126 = vunpack.c.l.b16 %v401
      %v1127 = vunpack.c.h.b16 %v401
      %v1128 = vunpack.c.l.b16 %v402
      %v1129 = vunpack.c.h.b16 %v402
      %v1130 = vunpack.c.l.b16 %v403
      %v1131 = vunpack.c.h.b16 %v403
      %v1132 = vunpack.c.l.b16 %v404
      %v1133 = vunpack.c.h.b16 %v404
      %v1134 = vunpack.c.l.b16 %v405
      %v1135 = vunpack.c.h.b16 %v405
      %v1136 = vunpack.c.l.b16 %v406
      %v1137 = vunpack.c.h.b16 %v406
      %v1138 = vunpack.c.l.b16 %v407
      %v1139 = vunpack.c.h.b16 %v407
      %v1140 = vunpack.c.l.b16 %v408
      %v1141 = vunpack.c.h.b16 %v408
      %v1142 = vunpack.c.l.b16 %v409
      %v1143 = vunpack.c.h.b16 %v409
      %v1144 = vunpack.c.l.b16 %v410
      %v1145 = vunpack.c.h.b16 %v410
      %v1146 = vunpack.c.l.b16 %v411
      %v1147 = vunpack.c.h.b16 %v411
      %v1148 = vunpack.c.l.b16 %v412
      %v1149 = vunpack.c.h.b16 %v412
      %v1150 = vunpack.c.l.b16 %v413
      %v1151 = vunpack.c.h.b16 %v413
      %v1152 = vunpack.c.l.b16 %v414
      %v1153 = vunpack.c.h.b16 %v414
      %v1154 = vunpack.c.l.b16 %v415
      %v1155 = vunpack.c.h.b16 %v415
      %v1156 = vunpack.c.l.b16 %v416
      %v1157 = vunpack.c.h.b16 %v416
      %v1158 = vunpack.c.l.b16 %v417
      %v1159 = vunpack.c.h.b16 %v417
      %v1160 = vunpack.c.l.b16 %v418
      %v1161 = vunpack.c.h.b16 %v418
      %v1162 = vunpack.c.l.b16 %v419
      %v1163 = vunpack.c.h.b16 %v419
      %v1164 = vunpack.c.l.b16 %v420
      %v1165 = vunpack.c.h.b16 %v420
      %v1166 = vunpack.c.l.b16 %v421
      %v1167 = vunpack.c.h.b16 %v421
      %v1168 = vunpack.c.l.b16 %v422
      %v1169 = vunpack.c.h.b16 %v422
      %v1170 = vunpack.c.l.b16 %v423
      %v1171 = vunpack.c.h.b16 %v423
      %v1172 = vunpack.c.l.b16 %v424
      %v1173 = vunpack.c.h.b16 %v424
      %v1174 = vunpack.c.l.b16 %v425
      %v1175 = vunpack.c.h.b16 %v425
      %v1176 = vunpack.c.l.b16 %v426
      %v1177 = vunpack.c.h.b16 %v426
      %v1178 = vunpack.c.l.b16 %v427
      %v1179 = vunpack.c.h.b16 %v427
      %v1180 = vunpack.c.l.b16 %v428
      %v1181 = vunpack.c.h.b16 %v428
      %v1182 = vunpack.c.l.b16 %v429
      %v1183 = vunpack.c.h.b16 %v429
      %v1184 = vunpack.c.l.b16 %v430
      %v1185 = vunpack.c.h.b16 %v430
      %v1186 = vunpack.c.l.b16 %v431
      %v1187 = vunpack.c.h.b16 %v431
      %v1188 = vunpack.c.l.b16 %v432
      %v1189 = vunpack.c.h.b16 %v432
      %v1190 = vunpack.c.l.b16 %v433
      %v1191 = vunpack.c.h.b16 %v433
      %v1192 = vunpack.c.l.b16 %v434
      %v1193 = vunpack.c.h.b16 %v434
      %v1194 = vunpack.c.l.b16 %v435
      %v1195 = vunpack.c.h.b16 %v435
      %v1196 = vunpack.c.l.b16 %v436
      %v1197 = vunpack.c.h.b16 %v436
      %v1198 = vunpack.c.l.b16 %v437
      %v1199 = vunpack.c.h.b16 %v437
      %v1200 = vunpack.c.l.b16 %v438
      %v1201 = vunpack.c.h.b16 %v438
      %v1202 = vunpack.c.l.b16 %v439
      %v1203 = vunpack.c.h.b16 %v439
      %v1204 = vunpack.c.l.b16 %v440
      %v1205 = vunpack.c.h.b16 %v440
      %v1206 = vunpack.c.l.b16 %v441
      %v1207 = vunpack.c.h.b16 %v441
      %v1208 = vunpack.c.l.b16 %v442
      %v1209 = vunpack.c.h.b16 %v442
      %v1210 = vunpack.c.l.b16 %v443
      %v1211 = vunpack.c.h.b16 %v443
      %v1212 = vunpack.c.l.b16 %v444
      %v1213 = vunpack.c.h.b16 %v444
      %v1214 = vunpack.c.l.b16 %v445
      %v1215 = vunpack.c.h.b16 %v445
      %v1216 = vunpack.c.l.b16 %v446
      %v1217 = vunpack.c.h.b16 %v446
      %v1218 = vunpack.c.l.b16 %v447
      %v1219 = vunpack.c.h.b16 %v447
      %v1220 = vunpack.c.l.b16 %v448
      %v1221 = vunpack.c.h.b16 %v448
      %v1222 = vunpack.c.l.b16 %v449
      %v1223 = vunpack.c.h.b16 %v449
      %v1224 = vunpack.c.l.b16 %v450
      %v1225 = vunpack.c.h.b16 %v450
      %v1226 = vunpack.c.l.b16 %v451
      %v1227 = vunpack.c.h.b16 %v451
      %v1228 = vunpack.c.l.b16 %v452
      %v1229 = vunpack.c.h.b16 %v452
      %v1230 = vunpack.c.l.b16 %v453
      %v1231 = vunpack.c.h.b16 %v453
      %v1232 = vunpack.c.l.b16 %v454
      %v1233 = vunpack.c.h.b16 %v454
      %v1234 = vunpack.c.l.b16 %v455
      %v1235 = vunpack.c.h.b16 %v455
      %v1236 = vunpack.c.l.b16 %v456
      %v1237 = vunpack.c.h.b16 %v456
      %v1238 = vunpack.c.l.b16 %v457
      %v1239 = vunpack.c.h.b16 %v457
      %v1240 = vunpack.c.l.b16 %v458
      %v1241 = vunpack.c.h.b16 %v458
      %v1242 = vunpack.c.l.b16 %v459
      %v1243 = vunpack.c.h.b16 %v459
      %v1244 = vunpack.c.l.b16 %v460
      %v1245 = vunpack.c.h.b16 %v460
      %v1246 = vunpack.c.l.b16 %v461
      %v1247 = vunpack.c.h.b16 %v461
      %v1248 = vunpack.c.l.b16 %v462
      %v1249 = vunpack.c.h.b16 %v462
      %v1250 = vunpack.c.l.b16 %v463
      %v1251 = vunpack.c.h.b16 %v463
      %v1252 = vunpack.c.l.b16 %v464
      %v1253 = vunpack.c.h.b16 %v464
      %v1254 = vunpack.c.l.b16 %v465
      %v1255 = vunpack.c.h.b16 %v465
      %v1256 = vunpack.c.l.b16 %v466
      %v1257 = vunpack.c.h.b16 %v466
      %v1258 = vunpack.c.l.b16 %v467
      %v1259 = vunpack.c.h.b16 %v467
      %v1260 = vunpack.c.l.b16 %v468
      %v1261 = vunpack.c.h.b16 %v468
      %v1262 = vunpack.c.l.b16 %v469
      %v1263 = vunpack.c.h.b16 %v469
      %v1264 = vpack.c.b16 %v754, %v752
      %v1265 = vpack.c.b16 %v755, %v753
      %v1266 = vpack.c.b16 %v758, %v756
      %v1267 = vpack.c.b16 %v759, %v757
      %v1268 = vpack.c.b16 %v762, %v760
      %v1269 = vpack.c.b16 %v763, %v761
      %v1270 = vpack.c.b16 %v766, %v764
      %v1271 = vpack.c.b16 %v767, %v765
      %v1272 = vpack.c.b16 %v770, %v768
      %v1273 = vpack.c.b16 %v771, %v769
      %v1274 = vpack.c.b16 %v774, %v772
      %v1275 = vpack.c.b16 %v775, %v773
      %v1276 = vpack.c.b16 %v778, %v776
      %v1277 = vpack.c.b16 %v779, %v777
      %v1278 = vpack.c.b16 %v782, %v780
      %v1279 = vpack.c.b16 %v783, %v781
      %v1280 = vpack.c.b16 %v786, %v784
      %v1281 = vpack.c.b16 %v787, %v785
      %v1282 = vpack.c.b16 %v790, %v788
      %v1283 = vpack.c.b16 %v791, %v789
      %v1284 = vpack.c.b16 %v794, %v792
      %v1285 = vpack.c.b16 %v795, %v793
      %v1286 = vpack.c.b16 %v798, %v796
      %v1287 = vpack.c.b16 %v799, %v797
      %v1288 = vpack.c.b16 %v802, %v800
      %v1289 = vpack.c.b16 %v803, %v801
      %v1290 = vpack.c.b16 %v806, %v804
      %v1291 = vpack.c.b16 %v807, %v805
      %v1292 = vpack.c.b16 %v810, %v808
      %v1293 = vpack.c.b16 %v811, %v809
      %v1294 = vpack.c.b16 %v814, %v812
      %v1295 = vpack.c.b16 %v815, %v813
      %v1296 = vpack.c.b16 %v818, %v816
      %v1297 = vpack.c.b16 %v819, %v817
      %v1298 = vpack.c.b16 %v822, %v820
      %v1299 = vpack.c.b16 %v823, %v821
      %v1300 = vpack.c.b16 %v826, %v824
      %v1301 = vpack.c.b16 %v827, %v825
      %v1302 = vpack.c.b16 %v830, %v828
      %v1303 = vpack.c.b16 %v831, %v829
      %v1304 = vpack.c.b16 %v834, %v832
      %v1305 = vpack.c.b16 %v835, %v833
      %v1306 = vpack.c.b16 %v838, %v836
      %v1307 = vpack.c.b16 %v839, %v837
      %v1308 = vpack.c.b16 %v842, %v840
      %v1309 = vpack.c.b16 %v843, %v841
      %v1310 = vpack.c.b16 %v846, %v844
      %v1311 = vpack.c.b16 %v847, %v845
      %v1312 = vpack.c.b16 %v850, %v848
      %v1313 = vpack.c.b16 %v851, %v849
      %v1314 = vpack.c.b16 %v854, %v852
      %v1315 = vpack.c.b16 %v855, %v853
      %v1316 = vpack.c.b16 %v858, %v856
      %v1317 = vpack.c.b16 %v859, %v857
      %v1318 = vpack.c.b16 %v862, %v860
      %v1319 = vpack.c.b16 %v863, %v861
      %v1320 = vpack.c.b16 %v866, %v864
      %v1321 = vpack.c.b16 %v867, %v865
      %v1322 = vpack.c.b16 %v870, %v868
      %v1323 = vpack.c.b16 %v871, %v869
      %v1324 = vpack.c.b16 %v874, %v872
      %v1325 = vpack.c.b16 %v875, %v873
      %v1326 = vpack.c.b16 %v878, %v876
      %v1327 = vpack.c.b16 %v879, %v877
      %v1328 = vpack.c.b16 %v882, %v880
      %v1329 = vpack.c.b16 %v883, %v881
      %v1330 = vpack.c.b16 %v886, %v884
      %v1331 = vpack.c.b16 %v887, %v885
      %v1332 = vpack.c.b16 %v890, %v888
      %v1333 = vpack.c.b16 %v891, %v889
      %v1334 = vpack.c.b16 %v894, %v892
      %v1335 = vpack.c.b16 %v895, %v893
      %v1336 = vpack.c.b16 %v898, %v896
      %v1337 = vpack.c.b16 %v899, %v897
      %v1338 = vpack.c.b16 %v902, %v900
      %v1339 = vpack.c.b16 %v903, %v901
      %v1340 = vpack.c.b16 %v906, %v904
      %v1341 = vpack.c.b16 %v907, %v905
      %v1342 = vpack.c.b16 %v910, %v908
      %v1343 = vpack.c.b16 %v911, %v909
      %v1344 = vpack.c.b16 %v914, %v912
      %v1345 = vpack.c.b16 %v915, %v913
      %v1346 = vpack.c.b16 %v918, %v916
      %v1347 = vpack.c.b16 %v919, %v917
      %v1348 = vpack.c.b16 %v922, %v920
      %v1349 = vpack.c.b16 %v923, %v921
      %v1350 = vpack.c.b16 %v926, %v924
      %v1351 = vpack.c.b16 %v927, %v925
      %v1352 = vpack.c.b16 %v930, %v928
      %v1353 = vpack.c.b16 %v931, %v929
      %v1354 = vpack.c.b16 %v934, %v932
      %v1355 = vpack.c.b16 %v935, %v933
      %v1356 = vpack.c.b16 %v938, %v936
      %v1357 = vpack.c.b16 %v939, %v937
      %v1358 = vpack.c.b16 %v942, %v940
      %v1359 = vpack.c.b16 %v943, %v941
      %v1360 = vpack.c.b16 %v946, %v944
      %v1361 = vpack.c.b16 %v947, %v945
      %v1362 = vpack.c.b16 %v950, %v948
      %v1363 = vpack.c.b16 %v951, %v949
      %v1364 = vpack.c.b16 %v954, %v952
      %v1365 = vpack.c.b16 %v955, %v953
      %v1366 = vpack.c.b16 %v958, %v956
      %v1367 = vpack.c.b16 %v959, %v957
      %v1368 = vpack.c.b16 %v962, %v960
      %v1369 = vpack.c.b16 %v963, %v961
      %v1370 = vpack.c.b16 %v966, %v964
      %v1371 = vpack.c.b16 %v967, %v965
      %v1372 = vpack.c.b16 %v970, %v968
      %v1373 = vpack.c.b16 %v971, %v969
      %v1374 = vpack.c.b16 %v974, %v972
      %v1375 = vpack.c.b16 %v975, %v973
      %v1376 = vpack.c.b16 %v978, %v976
      %v1377 = vpack.c.b16 %v979, %v977
      %v1378 = vpack.c.b16 %v982, %v980
      %v1379 = vpack.c.b16 %v983, %v981
      %v1380 = vpack.c.b16 %v986, %v984
      %v1381 = vpack.c.b16 %v987, %v985
      %v1382 = vpack.c.b16 %v990, %v988
      %v1383 = vpack.c.b16 %v991, %v989
      %v1384 = vpack.c.b16 %v994, %v992
      %v1385 = vpack.c.b16 %v995, %v993
      %v1386 = vpack.c.b16 %v998, %v996
      %v1387 = vpack.c.b16 %v999, %v997
      %v1388 = vpack.c.b16 %v1002, %v1000
      %v1389 = vpack.c.b16 %v1003, %v1001
      %v1390 = vpack.c.b16 %v1006, %v1004
      %v1391 = vpack.c.b16 %v1007, %v1005
      %v1392 = vpack.c.b16 %v1010, %v1008
      %v1393 = vpack.c.b16 %v1011, %v1009
      %v1394 = vpack.c.b16 %v1014, %v1012
      %v1395 = vpack.c.b16 %v1015, %v1013
      %v1396 = vpack.c.b16 %v1018, %v1016
      %v1397 = vpack.c.b16 %v1019, %v1017
      %v1398 = vpack.c.b16 %v1022, %v1020
      %v1399 = vpack.c.b16 %v1023, %v1021
      %v1400 = vpack.c.b16 %v1026, %v1024
      %v1401 = vpack.c.b16 %v1027, %v1025
      %v1402 = vpack.c.b16 %v1030, %v1028
      %v1403 = vpack.c.b16 %v1031, %v1029
      %v1404 = vpack.c.b16 %v1034, %v1032
      %v1405 = vpack.c.b16 %v1035, %v1033
      %v1406 = vpack.c.b16 %v1038, %v1036
      %v1407 = vpack.c.b16 %v1039, %v1037
      %v1408 = vpack.c.b16 %v1042, %v1040
      %v1409 = vpack.c.b16 %v1043, %v1041
      %v1410 = vpack.c.b16 %v1046, %v1044
      %v1411 = vpack.c.b16 %v1047, %v1045
      %v1412 = vpack.c.b16 %v1050, %v1048
      %v1413 = vpack.c.b16 %v1051, %v1049
      %v1414 = vpack.c.b16 %v1054, %v1052
      %v1415 = vpack.c.b16 %v1055, %v1053
      %v1416 = vpack.c.b16 %v1058, %v1056
      %v1417 = vpack.c.b16 %v1059, %v1057
      %v1418 = vpack.c.b16 %v1062, %v1060
      %v1419 = vpack.c.b16 %v1063, %v1061
      %v1420 = vpack.c.b16 %v1066, %v1064
      %v1421 = vpack.c.b16 %v1067, %v1065
      %v1422 = vpack.c.b16 %v1070, %v1068
      %v1423 = vpack.c.b16 %v1071, %v1069
      %v1424 = vpack.c.b16 %v1074, %v1072
      %v1425 = vpack.c.b16 %v1075, %v1073
      %v1426 = vpack.c.b16 %v1078, %v1076
      %v1427 = vpack.c.b16 %v1079, %v1077
      %v1428 = vpack.c.b16 %v1082, %v1080
      %v1429 = vpack.c.b16 %v1083, %v1081
      %v1430 = vpack.c.b16 %v1086, %v1084
      %v1431 = vpack.c.b16 %v1087, %v1085
      %v1432 = vpack.c.b16 %v1090, %v1088
      %v1433 = vpack.c.b16 %v1091, %v1089
      %v1434 = vpack.c.b16 %v1094, %v1092
      %v1435 = vpack.c.b16 %v1095, %v1093
      %v1436 = vpack.c.b16 %v1098, %v1096
      %v1437 = vpack.c.b16 %v1099, %v1097
      %v1438 = vpack.c.b16 %v1102, %v1100
      %v1439 = vpack.c.b16 %v1103, %v1101
      %v1440 = vpack.c.b16 %v1106, %v1104
      %v1441 = vpack.c.b16 %v1107, %v1105
      %v1442 = vpack.c.b16 %v1110, %v1108
      %v1443 = vpack.c.b16 %v1111, %v1109
      %v1444 = vpack.c.b16 %v1114, %v1112
      %v1445 = vpack.c.b16 %v1115, %v1113
      %v1446 = vpack.c.b16 %v1118, %v1116
      %v1447 = vpack.c.b16 %v1119, %v1117
      %v1448 = vpack.c.b16 %v1122, %v1120
      %v1449 = vpack.c.b16 %v1123, %v1121
      %v1450 = vpack.c.b16 %v1126, %v1124
      %v1451 = vpack.c.b16 %v1127, %v1125
      %v1452 = vpack.c.b16 %v1130, %v1128
      %v1453 = vpack.c.b16 %v1131, %v1129
      %v1454 = vpack.c.b16 %v1134, %v1132
      %v1455 = vpack.c.b16 %v1135, %v1133
      %v1456 = vpack.c.b16 %v1138, %v1136
      %v1457 = vpack.c.b16 %v1139, %v1137
      %v1458 = vpack.c.b16 %v1142, %v1140
      %v1459 = vpack.c.b16 %v1143, %v1141
      %v1460 = vpack.c.b16 %v1146, %v1144
      %v1461 = vpack.c.b16 %v1147, %v1145
      %v1462 = vpack.c.b16 %v1150, %v1148
      %v1463 = vpack.c.b16 %v1151, %v1149
      %v1464 = vpack.c.b16 %v1154, %v1152
      %v1465 = vpack.c.b16 %v1155, %v1153
      %v1466 = vpack.c.b16 %v1158, %v1156
      %v1467 = vpack.c.b16 %v1159, %v1157
      %v1468 = vpack.c.b16 %v1162, %v1160
      %v1469 = vpack.c.b16 %v1163, %v1161
      %v1470 = vpack.c.b16 %v1166, %v1164
      %v1471 = vpack.c.b16 %v1167, %v1165
      %v1472 = vpack.c.b16 %v1170, %v1168
      %v1473 = vpack.c.b16 %v1171, %v1169
      %v1474 = vpack.c.b16 %v1174, %v1172
      %v1475 = vpack.c.b16 %v1175, %v1173
      %v1476 = vpack.c.b16 %v1178, %v1176
      %v1477 = vpack.c.b16 %v1179, %v1177
      %v1478 = vpack.c.b16 %v1182, %v1180
      %v1479 = vpack.c.b16 %v1183, %v1181
      %v1480 = vpack.c.b16 %v1186, %v1184
      %v1481 = vpack.c.b16 %v1187, %v1185
      %v1482 = vpack.c.b16 %v1190, %v1188
      %v1483 = vpack.c.b16 %v1191, %v1189
      %v1484 = vpack.c.b16 %v1194, %v1192
      %v1485 = vpack.c.b16 %v1195, %v1193
      %v1486 = vpack.c.b16 %v1198, %v1196
      %v1487 = vpack.c.b16 %v1199, %v1197
      %v1488 = vpack.c.b16 %v1202, %v1200
      %v1489 = vpack.c.b16 %v1203, %v1201
      %v1490 = vpack.c.b16 %v1206, %v1204
      %v1491 = vpack.c.b16 %v1207, %v1205
      %v1492 = vpack.c.b16 %v1210, %v1208
      %v1493 = vpack.c.b16 %v1211, %v1209
      %v1494 = vpack.c.b16 %v1214, %v1212
      %v1495 = vpack.c.b16 %v1215, %v1213
      %v1496 = vpack.c.b16 %v1218, %v1216
      %v1497 = vpack.c.b16 %v1219, %v1217
      %v1498 = vpack.c.b16 %v1222, %v1220
      %v1499 = vpack.c.b16 %v1223, %v1221
      %v1500 = vpack.c.b16 %v1226, %v1224
      %v1501 = vpack.c.b16 %v1227, %v1225
      %v1502 = vpack.c.b16 %v1230, %v1228
      %v1503 = vpack.c.b16 %v1231, %v1229
      %v1504 = vpack.c.b16 %v1234, %v1232
      %v1505 = vpack.c.b16 %v1235, %v1233
      %v1506 = vpack.c.b16 %v1238, %v1236
      %v1507 = vpack.c.b16 %v1239, %v1237
      %v1508 = vpack.c.b16 %v1242, %v1240
      %v1509 = vpack.c.b16 %v1243, %v1241
      %v1510 = vpack.c.b16 %v1246, %v1244
      %v1511 = vpack.c.b16 %v1247, %v1245
      %v1512 = vpack.c.b16 %v1250, %v1248
      %v1513 = vpack.c.b16 %v1251, %v1249
      %v1514 = vpack.c.b16 %v1254, %v1252
      %v1515 = vpack.c.b16 %v1255, %v1253
      %v1516 = vpack.c.b16 %v1258, %v1256
      %v1517 = vpack.c.b16 %v1259, %v1257
      %v1518 = vpack.c.b16 %v1262, %v1260
      %v1519 = vpack.c.b16 %v1263, %v1261
      %v1667 = vunpack.c.l.b16 %v470
      %v1668 = vunpack.c.l.b16 %v471
      %v1669 = vunpack.c.l.b16 %v472
      %v1670 = vunpack.c.l.b16 %v473
      %v1671 = vunpack.c.l.b16 %v474
      %v1672 = vunpack.c.l.b16 %v475
      %v1673 = vunpack.c.l.b16 %v476
      %v1674 = vunpack.c.l.b16 %v477
      %v1675 = vunpack.c.l.b16 %v478
      %v1676 = vunpack.c.l.b16 %v479
      %v1677 = vunpack.c.l.b16 %v480
      %v1678 = vunpack.c.l.b16 %v481
      %v1679 = vunpack.c.l.b16 %v482
      %v1680 = vunpack.c.l.b16 %v483
      %v1681 = vunpack.c.l.b16 %v484
      %v1682 = vunpack.c.l.b16 %v485
      %v1683 = vunpack.c.l.b16 %v486
      %v1684 = vunpack.c.l.b16 %v487
      %v1685 = vunpack.c.l.b16 %v488
      %v1686 = vpack.c.b16 %v1668, %v1667
      %v1687 = vpack.c.b16 %v1670, %v1669
      %v1688 = vpack.c.b16 %v1672, %v1671
      %v1689 = vpack.c.b16 %v1674, %v1673
      %v1690 = vpack.c.b16 %v1676, %v1675
      %v1691 = vpack.c.b16 %v1678, %v1677
      %v1692 = vpack.c.b16 %v1680, %v1679
      %v1693 = vpack.c.b16 %v1682, %v1681
      %v1694 = vpack.c.b16 %v1684, %v1683
      %v1695 = vpack.c.b16 %v1685, %v1685
      %vm1705 = vcmask 154624
      %v1707 = vsel %vm1705, %v1265, 0
      %v1710 = vsel %vm1705, %v1267, 0
      %v1713 = vsel %vm1705, %v1269, 0
      %v1716 = vsel %vm1705, %v1271, 0
      %v1719 = vsel %vm1705, %v1273, 0
      %v1722 = vsel %vm1705, %v1275, 0
      %v1725 = vsel %vm1705, %v1277, 0
      %v1728 = vsel %vm1705, %v1279, 0
      %v1731 = vsel %vm1705, %v1281, 0
      %v1734 = vsel %vm1705, %v1283, 0
      %v1737 = vsel %vm1705, %v1285, 0
      %v1740 = vsel %vm1705, %v1287, 0
      %v1743 = vsel %vm1705, %v1289, 0
      %v1746 = vsel %vm1705, %v1291, 0
      %v1749 = vsel %vm1705, %v1293, 0
      %v1752 = vsel %vm1705, %v1295, 0
      %v1755 = vsel %vm1705, %v1297, 0
      %v1758 = vsel %vm1705, %v1299, 0
      %v1761 = vsel %vm1705, %v1301, 0
      %v1764 = vsel %vm1705, %v1303, 0
      %v1767 = vsel %vm1705, %v1305, 0
      %v1770 = vsel %vm1705, %v1307, 0
      %v1773 = vsel %vm1705, %v1309, 0
      %v1776 = vsel %vm1705, %v1311, 0
      %v1779 = vsel %vm1705, %v1313, 0
      %v1782 = vsel %vm1705, %v1315, 0
      %v1785 = vsel %vm1705, %v1317, 0
      %v1788 = vsel %vm1705, %v1319, 0
      %v1791 = vsel %vm1705, %v1321, 0
      %v1794 = vsel %vm1705, %v1323, 0
      %v1797 = vsel %vm1705, %v1325, 0
      %v1800 = vsel %vm1705, %v1327, 0
      %v1803 = vsel %vm1705, %v1329, 0
      %v1806 = vsel %vm1705, %v1331, 0
      %v1809 = vsel %vm1705, %v1333, 0
      %v1812 = vsel %vm1705, %v1335, 0
      %v1815 = vsel %vm1705, %v1337, 0
      %v1818 = vsel %vm1705, %v1339, 0
      %v1821 = vsel %vm1705, %v1341, 0
      %v1824 = vsel %vm1705, %v1343, 0
      %v1827 = vsel %vm1705, %v1345, 0
      %v1830 = vsel %vm1705, %v1347, 0
      %v1833 = vsel %vm1705, %v1349, 0
      %v1836 = vsel %vm1705, %v1351, 0
      %v1839 = vsel %vm1705, %v1353, 0
      %v1842 = vsel %vm1705, %v1355, 0
      %v1845 = vsel %vm1705, %v1357, 0
      %v1848 = vsel %vm1705, %v1359, 0
      %v1851 = vsel %vm1705, %v1361, 0
      %v1854 = vsel %vm1705, %v1363, 0
      %v1857 = vsel %vm1705, %v1365, 0
      %v1860 = vsel %vm1705, %v1367, 0
      %v1863 = vsel %vm1705, %v1369, 0
      %v1866 = vsel %vm1705, %v1371, 0
      %v1869 = vsel %vm1705, %v1373, 0
      %v1872 = vsel %vm1705, %v1375, 0
      %v1875 = vsel %vm1705, %v1377, 0
      %v1878 = vsel %vm1705, %v1379, 0
      %v1881 = vsel %vm1705, %v1381, 0
      %v1884 = vsel %vm1705, %v1383, 0
      %v1887 = vsel %vm1705, %v1385, 0
      %v1890 = vsel %vm1705, %v1387, 0
      %v1893 = vsel %vm1705, %v1389, 0
      %v1896 = vsel %vm1705, %v1391, 0
      %v1899 = vsel %vm1705, %v1393, 0
      %v1902 = vsel %vm1705, %v1395, 0
      %v1905 = vsel %vm1705, %v1397, 0
      %v1908 = vsel %vm1705, %v1399, 0
      %v1911 = vsel %vm1705, %v1401, 0
      %v1914 = vsel %vm1705, %v1403, 0
      %v1917 = vsel %vm1705, %v1405, 0
      %v1920 = vsel %vm1705, %v1407, 0
      %v1923 = vsel %vm1705, %v1409, 0
      %v1926 = vsel %vm1705, %v1411, 0
      %v1929 = vsel %vm1705, %v1413, 0
      %v1932 = vsel %vm1705, %v1415, 0
      %v1935 = vsel %vm1705, %v1417, 0
      %v1938 = vsel %vm1705, %v1419, 0
      %v1941 = vsel %vm1705, %v1421, 0
      %v1944 = vsel %vm1705, %v1423, 0
      %v1947 = vsel %vm1705, %v1425, 0
      %v1950 = vsel %vm1705, %v1427, 0
      %v1953 = vsel %vm1705, %v1429, 0
      %v1956 = vsel %vm1705, %v1431, 0
      %v1959 = vsel %vm1705, %v1433, 0
      %v1962 = vsel %vm1705, %v1435, 0
      %v1965 = vsel %vm1705, %v1437, 0
      %v1968 = vsel %vm1705, %v1439, 0
      %v1971 = vsel %vm1705, %v1441, 0
      %v1974 = vsel %vm1705, %v1443, 0
      %v1977 = vsel %vm1705, %v1445, 0
      %v1980 = vsel %vm1705, %v1447, 0
      %v1983 = vsel %vm1705, %v1449, 0
      %v1986 = vsel %vm1705, %v1451, 0
      %v1989 = vsel %vm1705, %v1453, 0
      %v1992 = vsel %vm1705, %v1455, 0
      %v1995 = vsel %vm1705, %v1457, 0
      %v1998 = vsel %vm1705, %v1459, 0
      %v2001 = vsel %vm1705, %v1461, 0
      %v2004 = vsel %vm1705, %v1463, 0
      %v2007 = vsel %vm1705, %v1465, 0
      %v2010 = vsel %vm1705, %v1467, 0
      %v2013 = vsel %vm1705, %v1469, 0
      %v2016 = vsel %vm1705, %v1471, 0
      %v2019 = vsel %vm1705, %v1473, 0
      %v2022 = vsel %vm1705, %v1475, 0
      %v2025 = vsel %vm1705, %v1477, 0
      %v2028 = vsel %vm1705, %v1479, 0
      %v2031 = vsel %vm1705, %v1481, 0
      %v2034 = vsel %vm1705, %v1483, 0
      %v2037 = vsel %vm1705, %v1485, 0
      %v2040 = vsel %vm1705, %v1487, 0
      %v2043 = vsel %vm1705, %v1489, 0
      %v2046 = vsel %vm1705, %v1491, 0
      %v2049 = vsel %vm1705, %v1493, 0
      %v2052 = vsel %vm1705, %v1495, 0
      %v2055 = vsel %vm1705, %v1497, 0
      %v2058 = vsel %vm1705, %v1499, 0
      %v2061 = vsel %vm1705, %v1501, 0
      %v2064 = vsel %vm1705, %v1503, 0
      %v2067 = vsel %vm1705, %v1505, 0
      %v2070 = vsel %vm1705, %v1507, 0
      %v2073 = vsel %vm1705, %v1509, 0
      %v2076 = vsel %vm1705, %v1511, 0
      %v2079 = vsel %vm1705, %v1513, 0
      %v2082 = vsel %vm1705, %v1515, 0
      %v2085 = vsel %vm1705, %v1517, 0
      %v2088 = vsel %vm1705, %v1519, 0
      %vm2090 = vcmask 1040384
      %vm2091 = vcmask 1041408
      %v2092 = vsel %vm2090, 4294967295, 65535
      %v2093 = vsel %vm2091, %v2092, 0
      %v2095 = vand.u32 %v1695, %v2093
      %2097 = vmatprep.subr.bf16.mxu0 0
      %2098 = vmatpush1.bf16.msra.mxu0 %v1686
      %2099 = vmatprep.subr.bf16.mxu0 0
      %2100 = vmatpush1.bf16.msra.mxu0 %v1687
      %2101 = vmatprep.subr.bf16.mxu0 0
      %2102 = vmatpush1.bf16.msra.mxu0 %v1688
      %2103 = vmatprep.subr.bf16.mxu0 0
      %2104 = vmatpush1.bf16.msra.mxu0 %v1689
      %2105 = vmatprep.subr.bf16.mxu0 0
      %2106 = vmatpush1.bf16.msra.mxu0 %v1690
      %2107 = vmatprep.subr.bf16.mxu0 0
      %2108 = vmatpush1.bf16.msra.mxu0 %v1691
      %2109 = vmatprep.subr.bf16.mxu0 0
      %2110 = vmatpush1.bf16.msra.mxu0 %v1692
      %2111 = vmatprep.subr.bf16.mxu0 0
      %2112 = vmatpush1.bf16.msra.mxu0 %v1693
      %2113 = vmatprep.subr.bf16.mxu0 0
      %2114 = vmatpush1.bf16.msra.mxu0 %v1694
      %2115 = vmatprep.subr.bf16.mxu0 0
      %2116 = vmatpush1.bf16.msra.mxu0 %v2095
      %2117 = vmatprep.subr.bf16.mxu0 0
      %2118 = vmatpush1.bf16.msra.mxu0 0
      %2119 = vmatprep.subr.bf16.mxu0 0
      %2120 = vmatpush1.bf16.msra.mxu0 0
      %2121 = vmatprep.subr.bf16.mxu0 0
      %2122 = vmatpush1.bf16.msra.mxu0 0
      %2123 = vmatprep.subr.bf16.mxu0 0
      %2124 = vmatpush1.bf16.msra.mxu0 0
      %2125 = vmatprep.subr.bf16.mxu0 0
      %2126 = vmatpush1.bf16.msra.mxu0 0
      %2127 = vmatprep.subr.bf16.mxu0 0
      %2128 = vmatpush1.bf16.msra.mxu0 0
      %2129 = vmatprep.mubr.bf16.mxu0 %v1707
      %2130 = vmatmul.mubr.bf16.gmra.mrb[0].mxu0 %v1264
      %v2131 = vpop.f32.mrb[0].mxu0
      %v2132 = vadd.f32 %v494, %v2131
      %v2133 = vpop.f32.mrb[0].mxu0
      %v2134 = vpop.f32.mrb[0].mxu0
      %v2135 = vadd.f32 %v494, %v2134
      %v2136 = vpop.f32.mrb[0].mxu0
      %2137 = vmatprep.mubr.bf16.mxu0 %v1710
      %2138 = vmatmul.mubr.bf16.gmra.mrb[0].mxu0 %v1266
      %v2139 = vpop.f32.mrb[0].mxu0
      %v2140 = vadd.f32 %v494, %v2139
      %v2141 = vpop.f32.mrb[0].mxu0
      %v2142 = vpop.f32.mrb[0].mxu0
      %v2143 = vadd.f32 %v494, %v2142
      %v2144 = vpop.f32.mrb[0].mxu0
      %2145 = vmatprep.mubr.bf16.mxu0 %v1713
      %2146 = vmatmul.mubr.bf16.gmra.mrb[0].mxu0 %v1268
      %v2147 = vpop.f32.mrb[0].mxu0
      %v2148 = vadd.f32 %v494, %v2147
      %v2149 = vpop.f32.mrb[0].mxu0
      %v2150 = vpop.f32.mrb[0].mxu0
      %v2151 = vadd.f32 %v494, %v2150
      %v2152 = vpop.f32.mrb[0].mxu0
      %2153 = vmatprep.mubr.bf16.mxu0 %v1716
      %2154 = vmatmul.mubr.bf16.gmra.mrb[0].mxu0 %v1270
      %v2155 = vpop.f32.mrb[0].mxu0
      %v2156 = vadd.f32 %v494, %v2155
      %v2157 = vpop.f32.mrb[0].mxu0
      %v2158 = vpop.f32.mrb[0].mxu0
      %v2159 = vadd.f32 %v494, %v2158
      %v2160 = vpop.f32.mrb[0].mxu0
      %2161 = vmatprep.mubr.bf16.mxu0 %v1719
      %2162 = vmatmul.mubr.bf16.gmra.mrb[0].mxu0 %v1272
      %v2163 = vpop.f32.mrb[0].mxu0
      %v2164 = vadd.f32 %v494, %v2163
      %v2165 = vpop.f32.mrb[0].mxu0
      %v2166 = vpop.f32.mrb[0].mxu0
      %v2167 = vadd.f32 %v494, %v2166
      %v2168 = vpop.f32.mrb[0].mxu0
      %2169 = vmatprep.mubr.bf16.mxu0 %v1722
      %2170 = vmatmul.mubr.bf16.gmra.mrb[0].mxu0 %v1274
      %v2171 = vpop.f32.mrb[0].mxu0
      %v2172 = vadd.f32 %v494, %v2171
      %v2173 = vpop.f32.mrb[0].mxu0
      %v2174 = vpop.f32.mrb[0].mxu0
      %v2175 = vadd.f32 %v494, %v2174
      %v2176 = vpop.f32.mrb[0].mxu0
      %2177 = vmatprep.mubr.bf16.mxu0 %v1725
      %2178 = vmatmul.mubr.bf16.gmra.mrb[0].mxu0 %v1276
      %v2179 = vpop.f32.mrb[0].mxu0
      %v2180 = vadd.f32 %v494, %v2179
      %v2181 = vpop.f32.mrb[0].mxu0
      %v2182 = vpop.f32.mrb[0].mxu0
      %v2183 = vadd.f32 %v494, %v2182
      %v2184 = vpop.f32.mrb[0].mxu0
      %2185 = vmatprep.mubr.bf16.mxu0 %v1728
      %2186 = vmatmul.mubr.bf16.gmra.mrb[0].mxu0 %v1278
      %v2187 = vpop.f32.mrb[0].mxu0
      %v2188 = vadd.f32 %v494, %v2187
      %v2189 = vpop.f32.mrb[0].mxu0
      %v2190 = vpop.f32.mrb[0].mxu0
      %v2191 = vadd.f32 %v494, %v2190
      %v2192 = vpop.f32.mrb[0].mxu0
      %2193 = vmatprep.mubr.bf16.mxu0 %v1731
      %2194 = vmatmul.mubr.bf16.gmra.mrb[0].mxu0 %v1280
      %v2195 = vpop.f32.mrb[0].mxu0
      %v2196 = vadd.f32 %v494, %v2195
      %v2197 = vpop.f32.mrb[0].mxu0
      %v2198 = vpop.f32.mrb[0].mxu0
      %v2199 = vadd.f32 %v494, %v2198
      %v2200 = vpop.f32.mrb[0].mxu0
      %2201 = vmatprep.mubr.bf16.mxu0 %v1734
      %2202 = vmatmul.mubr.bf16.gmra.mrb[0].mxu0 %v1282
      %v2203 = vpop.f32.mrb[0].mxu0
      %v2204 = vadd.f32 %v494, %v2203
      %v2205 = vpop.f32.mrb[0].mxu0
      %v2206 = vpop.f32.mrb[0].mxu0
      %v2207 = vadd.f32 %v494, %v2206
      %v2208 = vpop.f32.mrb[0].mxu0
      %2209 = vmatprep.mubr.bf16.mxu0 %v1737
      %2210 = vmatmul.mubr.bf16.gmra.mrb[0].mxu0 %v1284
      %v2211 = vpop.f32.mrb[0].mxu0
      %v2212 = vadd.f32 %v494, %v2211
      %v2213 = vpop.f32.mrb[0].mxu0
      %v2214 = vpop.f32.mrb[0].mxu0
      %v2215 = vadd.f32 %v494, %v2214
      %v2216 = vpop.f32.mrb[0].mxu0
      %2217 = vmatprep.mubr.bf16.mxu0 %v1740
      %2218 = vmatmul.mubr.bf16.gmra.mrb[0].mxu0 %v1286
      %v2219 = vpop.f32.mrb[0].mxu0
      %v2220 = vadd.f32 %v494, %v2219
      %v2221 = vpop.f32.mrb[0].mxu0
      %v2222 = vpop.f32.mrb[0].mxu0
      %v2223 = vadd.f32 %v494, %v2222
      %v2224 = vpop.f32.mrb[0].mxu0
      %2225 = vmatprep.mubr.bf16.mxu0 %v1743
      %2226 = vmatmul.mubr.bf16.gmra.mrb[0].mxu0 %v1288
      %v2227 = vpop.f32.mrb[0].mxu0
      %v2228 = vadd.f32 %v494, %v2227
      %v2229 = vpop.f32.mrb[0].mxu0
      %v2230 = vpop.f32.mrb[0].mxu0
      %v2231 = vadd.f32 %v494, %v2230
      %v2232 = vpop.f32.mrb[0].mxu0
      %2233 = vmatprep.mubr.bf16.mxu0 %v1746
      %2234 = vmatmul.mubr.bf16.gmra.mrb[0].mxu0 %v1290
      %v2235 = vpop.f32.mrb[0].mxu0
      %v2236 = vadd.f32 %v494, %v2235
      %v2237 = vpop.f32.mrb[0].mxu0
      %v2238 = vpop.f32.mrb[0].mxu0
      %v2239 = vadd.f32 %v494, %v2238
      %v2240 = vpop.f32.mrb[0].mxu0
      %2241 = vmatprep.mubr.bf16.mxu0 %v1749
      %2242 = vmatmul.mubr.bf16.gmra.mrb[0].mxu0 %v1292
      %v2243 = vpop.f32.mrb[0].mxu0
      %v2244 = vadd.f32 %v494, %v2243
      %v2245 = vpop.f32.mrb[0].mxu0
      %v2246 = vpop.f32.mrb[0].mxu0
      %v2247 = vadd.f32 %v494, %v2246
      %v2248 = vpop.f32.mrb[0].mxu0
      %2249 = vmatprep.mubr.bf16.mxu0 %v1752
      %2250 = vmatmul.mubr.bf16.gmra.mrb[0].mxu0 %v1294
      %v2251 = vpop.f32.mrb[0].mxu0
      %v2252 = vadd.f32 %v494, %v2251
      %v2253 = vpop.f32.mrb[0].mxu0
      %v2254 = vpop.f32.mrb[0].mxu0
      %v2255 = vadd.f32 %v494, %v2254
      %v2256 = vpop.f32.mrb[0].mxu0
      %2257 = vmatprep.mubr.bf16.mxu0 %v1755
      %2258 = vmatmul.mubr.bf16.gmra.mrb[0].mxu0 %v1296
      %v2259 = vpop.f32.mrb[0].mxu0
      %v2260 = vadd.f32 %v494, %v2259
      %v2261 = vpop.f32.mrb[0].mxu0
      %v2262 = vpop.f32.mrb[0].mxu0
      %v2263 = vadd.f32 %v494, %v2262
      %v2264 = vpop.f32.mrb[0].mxu0
      %2265 = vmatprep.mubr.bf16.mxu0 %v1758
      %2266 = vmatmul.mubr.bf16.gmra.mrb[0].mxu0 %v1298
      %v2267 = vpop.f32.mrb[0].mxu0
      %v2268 = vadd.f32 %v494, %v2267
      %v2269 = vpop.f32.mrb[0].mxu0
      %v2270 = vpop.f32.mrb[0].mxu0
      %v2271 = vadd.f32 %v494, %v2270
      %v2272 = vpop.f32.mrb[0].mxu0
      %2273 = vmatprep.mubr.bf16.mxu0 %v1761
      %2274 = vmatmul.mubr.bf16.gmra.mrb[0].mxu0 %v1300
      %v2275 = vpop.f32.mrb[0].mxu0
      %v2276 = vadd.f32 %v494, %v2275
      %v2277 = vpop.f32.mrb[0].mxu0
      %v2278 = vpop.f32.mrb[0].mxu0
      %v2279 = vadd.f32 %v494, %v2278
      %v2280 = vpop.f32.mrb[0].mxu0
      %2281 = vmatprep.mubr.bf16.mxu0 %v1764
      %2282 = vmatmul.mubr.bf16.gmra.mrb[0].mxu0 %v1302
      %v2283 = vpop.f32.mrb[0].mxu0
      %v2284 = vadd.f32 %v494, %v2283
      %v2285 = vpop.f32.mrb[0].mxu0
      %v2286 = vpop.f32.mrb[0].mxu0
      %v2287 = vadd.f32 %v494, %v2286
      %v2288 = vpop.f32.mrb[0].mxu0
      %2289 = vmatprep.mubr.bf16.mxu0 %v1767
      %2290 = vmatmul.mubr.bf16.gmra.mrb[0].mxu0 %v1304
      %v2291 = vpop.f32.mrb[0].mxu0
      %v2292 = vadd.f32 %v494, %v2291
      %v2293 = vpop.f32.mrb[0].mxu0
      %v2294 = vpop.f32.mrb[0].mxu0
      %v2295 = vadd.f32 %v494, %v2294
      %v2296 = vpop.f32.mrb[0].mxu0
      %2297 = vmatprep.mubr.bf16.mxu0 %v1770
      %2298 = vmatmul.mubr.bf16.gmra.mrb[0].mxu0 %v1306
      %v2299 = vpop.f32.mrb[0].mxu0
      %v2300 = vadd.f32 %v494, %v2299
      %v2301 = vpop.f32.mrb[0].mxu0
      %v2302 = vpop.f32.mrb[0].mxu0
      %v2303 = vadd.f32 %v494, %v2302
      %v2304 = vpop.f32.mrb[0].mxu0
      %2305 = vmatprep.mubr.bf16.mxu0 %v1773
      %2306 = vmatmul.mubr.bf16.gmra.mrb[0].mxu0 %v1308
      %v2307 = vpop.f32.mrb[0].mxu0
      %v2308 = vadd.f32 %v494, %v2307
      %v2309 = vpop.f32.mrb[0].mxu0
      %v2310 = vpop.f32.mrb[0].mxu0
      %v2311 = vadd.f32 %v494, %v2310
      %v2312 = vpop.f32.mrb[0].mxu0
      %2313 = vmatprep.mubr.bf16.mxu0 %v1776
      %2314 = vmatmul.mubr.bf16.gmra.mrb[0].mxu0 %v1310
      %v2315 = vpop.f32.mrb[0].mxu0
      %v2316 = vadd.f32 %v494, %v2315
      %v2317 = vpop.f32.mrb[0].mxu0
      %v2318 = vpop.f32.mrb[0].mxu0
      %v2319 = vadd.f32 %v494, %v2318
      %v2320 = vpop.f32.mrb[0].mxu0
      %2321 = vmatprep.mubr.bf16.mxu0 %v1779
      %2322 = vmatmul.mubr.bf16.gmra.mrb[0].mxu0 %v1312
      %v2323 = vpop.f32.mrb[0].mxu0
      %v2324 = vadd.f32 %v494, %v2323
      %v2325 = vpop.f32.mrb[0].mxu0
      %v2326 = vpop.f32.mrb[0].mxu0
      %v2327 = vadd.f32 %v494, %v2326
      %v2328 = vpop.f32.mrb[0].mxu0
      %2329 = vmatprep.mubr.bf16.mxu0 %v1782
      %2330 = vmatmul.mubr.bf16.gmra.mrb[0].mxu0 %v1314
      %v2331 = vpop.f32.mrb[0].mxu0
      %v2332 = vadd.f32 %v494, %v2331
      %v2333 = vpop.f32.mrb[0].mxu0
      %v2334 = vpop.f32.mrb[0].mxu0
      %v2335 = vadd.f32 %v494, %v2334
      %v2336 = vpop.f32.mrb[0].mxu0
      %2337 = vmatprep.mubr.bf16.mxu0 %v1785
      %2338 = vmatmul.mubr.bf16.gmra.mrb[0].mxu0 %v1316
      %v2339 = vpop.f32.mrb[0].mxu0
      %v2340 = vadd.f32 %v494, %v2339
      %v2341 = vpop.f32.mrb[0].mxu0
      %v2342 = vpop.f32.mrb[0].mxu0
      %v2343 = vadd.f32 %v494, %v2342
      %v2344 = vpop.f32.mrb[0].mxu0
      %2345 = vmatprep.mubr.bf16.mxu0 %v1788
      %2346 = vmatmul.mubr.bf16.gmra.mrb[0].mxu0 %v1318
      %v2347 = vpop.f32.mrb[0].mxu0
      %v2348 = vadd.f32 %v494, %v2347
      %v2349 = vpop.f32.mrb[0].mxu0
      %v2350 = vpop.f32.mrb[0].mxu0
      %v2351 = vadd.f32 %v494, %v2350
      %v2352 = vpop.f32.mrb[0].mxu0
      %2353 = vmatprep.mubr.bf16.mxu0 %v1791
      %2354 = vmatmul.mubr.bf16.gmra.mrb[0].mxu0 %v1320
      %v2355 = vpop.f32.mrb[0].mxu0
      %v2356 = vadd.f32 %v494, %v2355
      %v2357 = vpop.f32.mrb[0].mxu0
      %v2358 = vpop.f32.mrb[0].mxu0
      %v2359 = vadd.f32 %v494, %v2358
      %v2360 = vpop.f32.mrb[0].mxu0
      %2361 = vmatprep.mubr.bf16.mxu0 %v1794
      %2362 = vmatmul.mubr.bf16.gmra.mrb[0].mxu0 %v1322
      %v2363 = vpop.f32.mrb[0].mxu0
      %v2364 = vadd.f32 %v494, %v2363
      %v2365 = vpop.f32.mrb[0].mxu0
      %v2366 = vpop.f32.mrb[0].mxu0
      %v2367 = vadd.f32 %v494, %v2366
      %v2368 = vpop.f32.mrb[0].mxu0
      %2369 = vmatprep.mubr.bf16.mxu0 %v1797
      %2370 = vmatmul.mubr.bf16.gmra.mrb[0].mxu0 %v1324
      %v2371 = vpop.f32.mrb[0].mxu0
      %v2372 = vadd.f32 %v494, %v2371
      %v2373 = vpop.f32.mrb[0].mxu0
      %v2374 = vpop.f32.mrb[0].mxu0
      %v2375 = vadd.f32 %v494, %v2374
      %v2376 = vpop.f32.mrb[0].mxu0
      %2377 = vmatprep.mubr.bf16.mxu0 %v1800
      %2378 = vmatmul.mubr.bf16.gmra.mrb[0].mxu0 %v1326
      %v2379 = vpop.f32.mrb[0].mxu0
      %v2380 = vadd.f32 %v494, %v2379
      %v2381 = vpop.f32.mrb[0].mxu0
      %v2382 = vpop.f32.mrb[0].mxu0
      %v2383 = vadd.f32 %v494, %v2382
      %v2384 = vpop.f32.mrb[0].mxu0
      %2385 = vmatprep.mubr.bf16.mxu0 %v1803
      %2386 = vmatmul.mubr.bf16.gmra.mrb[0].mxu0 %v1328
      %v2387 = vpop.f32.mrb[0].mxu0
      %v2388 = vadd.f32 %v494, %v2387
      %v2389 = vpop.f32.mrb[0].mxu0
      %v2390 = vpop.f32.mrb[0].mxu0
      %v2391 = vadd.f32 %v494, %v2390
      %v2392 = vpop.f32.mrb[0].mxu0
      %2393 = vmatprep.mubr.bf16.mxu0 %v1806
      %2394 = vmatmul.mubr.bf16.gmra.mrb[0].mxu0 %v1330
      %v2395 = vpop.f32.mrb[0].mxu0
      %v2396 = vadd.f32 %v494, %v2395
      %v2397 = vpop.f32.mrb[0].mxu0
      %v2398 = vpop.f32.mrb[0].mxu0
      %v2399 = vadd.f32 %v494, %v2398
      %v2400 = vpop.f32.mrb[0].mxu0
      %2401 = vmatprep.mubr.bf16.mxu0 %v1809
      %2402 = vmatmul.mubr.bf16.gmra.mrb[0].mxu0 %v1332
      %v2403 = vpop.f32.mrb[0].mxu0
      %v2404 = vadd.f32 %v494, %v2403
      %v2405 = vpop.f32.mrb[0].mxu0
      %v2406 = vpop.f32.mrb[0].mxu0
      %v2407 = vadd.f32 %v494, %v2406
      %v2408 = vpop.f32.mrb[0].mxu0
      %2409 = vmatprep.mubr.bf16.mxu0 %v1812
      %2410 = vmatmul.mubr.bf16.gmra.mrb[0].mxu0 %v1334
      %v2411 = vpop.f32.mrb[0].mxu0
      %v2412 = vadd.f32 %v494, %v2411
      %v2413 = vpop.f32.mrb[0].mxu0
      %v2414 = vpop.f32.mrb[0].mxu0
      %v2415 = vadd.f32 %v494, %v2414
      %v2416 = vpop.f32.mrb[0].mxu0
      %2417 = vmatprep.mubr.bf16.mxu0 %v1815
      %2418 = vmatmul.mubr.bf16.gmra.mrb[0].mxu0 %v1336
      %v2419 = vpop.f32.mrb[0].mxu0
      %v2420 = vadd.f32 %v494, %v2419
      %v2421 = vpop.f32.mrb[0].mxu0
      %v2422 = vpop.f32.mrb[0].mxu0
      %v2423 = vadd.f32 %v494, %v2422
      %v2424 = vpop.f32.mrb[0].mxu0
      %2425 = vmatprep.mubr.bf16.mxu0 %v1818
      %2426 = vmatmul.mubr.bf16.gmra.mrb[0].mxu0 %v1338
      %v2427 = vpop.f32.mrb[0].mxu0
      %v2428 = vadd.f32 %v494, %v2427
      %v2429 = vpop.f32.mrb[0].mxu0
      %v2430 = vpop.f32.mrb[0].mxu0
      %v2431 = vadd.f32 %v494, %v2430
      %v2432 = vpop.f32.mrb[0].mxu0
      %2433 = vmatprep.mubr.bf16.mxu0 %v1821
      %2434 = vmatmul.mubr.bf16.gmra.mrb[0].mxu0 %v1340
      %v2435 = vpop.f32.mrb[0].mxu0
      %v2436 = vadd.f32 %v494, %v2435
      %v2437 = vpop.f32.mrb[0].mxu0
      %v2438 = vpop.f32.mrb[0].mxu0
      %v2439 = vadd.f32 %v494, %v2438
      %v2440 = vpop.f32.mrb[0].mxu0
      %2441 = vmatprep.mubr.bf16.mxu0 %v1824
      %2442 = vmatmul.mubr.bf16.gmra.mrb[0].mxu0 %v1342
      %v2443 = vpop.f32.mrb[0].mxu0
      %v2444 = vadd.f32 %v494, %v2443
      %v2445 = vpop.f32.mrb[0].mxu0
      %v2446 = vpop.f32.mrb[0].mxu0
      %v2447 = vadd.f32 %v494, %v2446
      %v2448 = vpop.f32.mrb[0].mxu0
      %2449 = vmatprep.mubr.bf16.mxu0 %v1827
      %2450 = vmatmul.mubr.bf16.gmra.mrb[0].mxu0 %v1344
      %v2451 = vpop.f32.mrb[0].mxu0
      %v2452 = vadd.f32 %v494, %v2451
      %v2453 = vpop.f32.mrb[0].mxu0
      %v2454 = vpop.f32.mrb[0].mxu0
      %v2455 = vadd.f32 %v494, %v2454
      %v2456 = vpop.f32.mrb[0].mxu0
      %2457 = vmatprep.mubr.bf16.mxu0 %v1830
      %2458 = vmatmul.mubr.bf16.gmra.mrb[0].mxu0 %v1346
      %v2459 = vpop.f32.mrb[0].mxu0
      %v2460 = vadd.f32 %v494, %v2459
      %v2461 = vpop.f32.mrb[0].mxu0
      %v2462 = vpop.f32.mrb[0].mxu0
      %v2463 = vadd.f32 %v494, %v2462
      %v2464 = vpop.f32.mrb[0].mxu0
      %2465 = vmatprep.mubr.bf16.mxu0 %v1833
      %2466 = vmatmul.mubr.bf16.gmra.mrb[0].mxu0 %v1348
      %v2467 = vpop.f32.mrb[0].mxu0
      %v2468 = vadd.f32 %v494, %v2467
      %v2469 = vpop.f32.mrb[0].mxu0
      %v2470 = vpop.f32.mrb[0].mxu0
      %v2471 = vadd.f32 %v494, %v2470
      %v2472 = vpop.f32.mrb[0].mxu0
      %2473 = vmatprep.mubr.bf16.mxu0 %v1836
      %2474 = vmatmul.mubr.bf16.gmra.mrb[0].mxu0 %v1350
      %v2475 = vpop.f32.mrb[0].mxu0
      %v2476 = vadd.f32 %v494, %v2475
      %v2477 = vpop.f32.mrb[0].mxu0
      %v2478 = vpop.f32.mrb[0].mxu0
      %v2479 = vadd.f32 %v494, %v2478
      %v2480 = vpop.f32.mrb[0].mxu0
      %2481 = vmatprep.mubr.bf16.mxu0 %v1839
      %2482 = vmatmul.mubr.bf16.gmra.mrb[0].mxu0 %v1352
      %v2483 = vpop.f32.mrb[0].mxu0
      %v2484 = vadd.f32 %v494, %v2483
      %v2485 = vpop.f32.mrb[0].mxu0
      %v2486 = vpop.f32.mrb[0].mxu0
      %v2487 = vadd.f32 %v494, %v2486
      %v2488 = vpop.f32.mrb[0].mxu0
      %2489 = vmatprep.mubr.bf16.mxu0 %v1842
      %2490 = vmatmul.mubr.bf16.gmra.mrb[0].mxu0 %v1354
      %v2491 = vpop.f32.mrb[0].mxu0
      %v2492 = vadd.f32 %v494, %v2491
      %v2493 = vpop.f32.mrb[0].mxu0
      %v2494 = vpop.f32.mrb[0].mxu0
      %v2495 = vadd.f32 %v494, %v2494
      %v2496 = vpop.f32.mrb[0].mxu0
      %2497 = vmatprep.mubr.bf16.mxu0 %v1845
      %2498 = vmatmul.mubr.bf16.gmra.mrb[0].mxu0 %v1356
      %v2499 = vpop.f32.mrb[0].mxu0
      %v2500 = vadd.f32 %v494, %v2499
      %v2501 = vpop.f32.mrb[0].mxu0
      %v2502 = vpop.f32.mrb[0].mxu0
      %v2503 = vadd.f32 %v494, %v2502
      %v2504 = vpop.f32.mrb[0].mxu0
      %2505 = vmatprep.mubr.bf16.mxu0 %v1848
      %2506 = vmatmul.mubr.bf16.gmra.mrb[0].mxu0 %v1358
      %v2507 = vpop.f32.mrb[0].mxu0
      %v2508 = vadd.f32 %v494, %v2507
      %v2509 = vpop.f32.mrb[0].mxu0
      %v2510 = vpop.f32.mrb[0].mxu0
      %v2511 = vadd.f32 %v494, %v2510
      %v2512 = vpop.f32.mrb[0].mxu0
      %2513 = vmatprep.mubr.bf16.mxu0 %v1851
      %2514 = vmatmul.mubr.bf16.gmra.mrb[0].mxu0 %v1360
      %v2515 = vpop.f32.mrb[0].mxu0
      %v2516 = vadd.f32 %v494, %v2515
      %v2517 = vpop.f32.mrb[0].mxu0
      %v2518 = vpop.f32.mrb[0].mxu0
      %v2519 = vadd.f32 %v494, %v2518
      %v2520 = vpop.f32.mrb[0].mxu0
      %2521 = vmatprep.mubr.bf16.mxu0 %v1854
      %2522 = vmatmul.mubr.bf16.gmra.mrb[0].mxu0 %v1362
      %v2523 = vpop.f32.mrb[0].mxu0
      %v2524 = vadd.f32 %v494, %v2523
      %v2525 = vpop.f32.mrb[0].mxu0
      %v2526 = vpop.f32.mrb[0].mxu0
      %v2527 = vadd.f32 %v494, %v2526
      %v2528 = vpop.f32.mrb[0].mxu0
      %2529 = vmatprep.mubr.bf16.mxu0 %v1857
      %2530 = vmatmul.mubr.bf16.gmra.mrb[0].mxu0 %v1364
      %v2531 = vpop.f32.mrb[0].mxu0
      %v2532 = vadd.f32 %v494, %v2531
      %v2533 = vpop.f32.mrb[0].mxu0
      %v2534 = vpop.f32.mrb[0].mxu0
      %v2535 = vadd.f32 %v494, %v2534
      %v2536 = vpop.f32.mrb[0].mxu0
      %2537 = vmatprep.mubr.bf16.mxu0 %v1860
      %2538 = vmatmul.mubr.bf16.gmra.mrb[0].mxu0 %v1366
      %v2539 = vpop.f32.mrb[0].mxu0
      %v2540 = vadd.f32 %v494, %v2539
      %v2541 = vpop.f32.mrb[0].mxu0
      %v2542 = vpop.f32.mrb[0].mxu0
      %v2543 = vadd.f32 %v494, %v2542
      %v2544 = vpop.f32.mrb[0].mxu0
      %2545 = vmatprep.mubr.bf16.mxu0 %v1863
      %2546 = vmatmul.mubr.bf16.gmra.mrb[0].mxu0 %v1368
      %v2547 = vpop.f32.mrb[0].mxu0
      %v2548 = vadd.f32 %v494, %v2547
      %v2549 = vpop.f32.mrb[0].mxu0
      %v2550 = vpop.f32.mrb[0].mxu0
      %v2551 = vadd.f32 %v494, %v2550
      %v2552 = vpop.f32.mrb[0].mxu0
      %2553 = vmatprep.mubr.bf16.mxu0 %v1866
      %2554 = vmatmul.mubr.bf16.gmra.mrb[0].mxu0 %v1370
      %v2555 = vpop.f32.mrb[0].mxu0
      %v2556 = vadd.f32 %v494, %v2555
      %v2557 = vpop.f32.mrb[0].mxu0
      %v2558 = vpop.f32.mrb[0].mxu0
      %v2559 = vadd.f32 %v494, %v2558
      %v2560 = vpop.f32.mrb[0].mxu0
      %2561 = vmatprep.mubr.bf16.mxu0 %v1869
      %2562 = vmatmul.mubr.bf16.gmra.mrb[0].mxu0 %v1372
      %v2563 = vpop.f32.mrb[0].mxu0
      %v2564 = vadd.f32 %v494, %v2563
      %v2565 = vpop.f32.mrb[0].mxu0
      %v2566 = vpop.f32.mrb[0].mxu0
      %v2567 = vadd.f32 %v494, %v2566
      %v2568 = vpop.f32.mrb[0].mxu0
      %2569 = vmatprep.mubr.bf16.mxu0 %v1872
      %2570 = vmatmul.mubr.bf16.gmra.mrb[0].mxu0 %v1374
      %v2571 = vpop.f32.mrb[0].mxu0
      %v2572 = vadd.f32 %v494, %v2571
      %v2573 = vpop.f32.mrb[0].mxu0
      %v2574 = vpop.f32.mrb[0].mxu0
      %v2575 = vadd.f32 %v494, %v2574
      %v2576 = vpop.f32.mrb[0].mxu0
      %2577 = vmatprep.mubr.bf16.mxu0 %v1875
      %2578 = vmatmul.mubr.bf16.gmra.mrb[0].mxu0 %v1376
      %v2579 = vpop.f32.mrb[0].mxu0
      %v2580 = vadd.f32 %v494, %v2579
      %v2581 = vpop.f32.mrb[0].mxu0
      %v2582 = vpop.f32.mrb[0].mxu0
      %v2583 = vadd.f32 %v494, %v2582
      %v2584 = vpop.f32.mrb[0].mxu0
      %2585 = vmatprep.mubr.bf16.mxu0 %v1878
      %2586 = vmatmul.mubr.bf16.gmra.mrb[0].mxu0 %v1378
      %v2587 = vpop.f32.mrb[0].mxu0
      %v2588 = vadd.f32 %v494, %v2587
      %v2589 = vpop.f32.mrb[0].mxu0
      %v2590 = vpop.f32.mrb[0].mxu0
      %v2591 = vadd.f32 %v494, %v2590
      %v2592 = vpop.f32.mrb[0].mxu0
      %2593 = vmatprep.mubr.bf16.mxu0 %v1881
      %2594 = vmatmul.mubr.bf16.gmra.mrb[0].mxu0 %v1380
      %v2595 = vpop.f32.mrb[0].mxu0
      %v2596 = vadd.f32 %v494, %v2595
      %v2597 = vpop.f32.mrb[0].mxu0
      %v2598 = vpop.f32.mrb[0].mxu0
      %v2599 = vadd.f32 %v494, %v2598
      %v2600 = vpop.f32.mrb[0].mxu0
      %2601 = vmatprep.mubr.bf16.mxu0 %v1884
      %2602 = vmatmul.mubr.bf16.gmra.mrb[0].mxu0 %v1382
      %v2603 = vpop.f32.mrb[0].mxu0
      %v2604 = vadd.f32 %v494, %v2603
      %v2605 = vpop.f32.mrb[0].mxu0
      %v2606 = vpop.f32.mrb[0].mxu0
      %v2607 = vadd.f32 %v494, %v2606
      %v2608 = vpop.f32.mrb[0].mxu0
      %2609 = vmatprep.mubr.bf16.mxu0 %v1887
      %2610 = vmatmul.mubr.bf16.gmra.mrb[0].mxu0 %v1384
      %v2611 = vpop.f32.mrb[0].mxu0
      %v2612 = vadd.f32 %v494, %v2611
      %v2613 = vpop.f32.mrb[0].mxu0
      %v2614 = vpop.f32.mrb[0].mxu0
      %v2615 = vadd.f32 %v494, %v2614
      %v2616 = vpop.f32.mrb[0].mxu0
      %2617 = vmatprep.mubr.bf16.mxu0 %v1890
      %2618 = vmatmul.mubr.bf16.gmra.mrb[0].mxu0 %v1386
      %v2619 = vpop.f32.mrb[0].mxu0
      %v2620 = vadd.f32 %v494, %v2619
      %v2621 = vpop.f32.mrb[0].mxu0
      %v2622 = vpop.f32.mrb[0].mxu0
      %v2623 = vadd.f32 %v494, %v2622
      %v2624 = vpop.f32.mrb[0].mxu0
      %2625 = vmatprep.mubr.bf16.mxu0 %v1893
      %2626 = vmatmul.mubr.bf16.gmra.mrb[0].mxu0 %v1388
      %v2627 = vpop.f32.mrb[0].mxu0
      %v2628 = vadd.f32 %v494, %v2627
      %v2629 = vpop.f32.mrb[0].mxu0
      %v2630 = vpop.f32.mrb[0].mxu0
      %v2631 = vadd.f32 %v494, %v2630
      %v2632 = vpop.f32.mrb[0].mxu0
      %2633 = vmatprep.mubr.bf16.mxu0 %v1896
      %2634 = vmatmul.mubr.bf16.gmra.mrb[0].mxu0 %v1390
      %v2635 = vpop.f32.mrb[0].mxu0
      %v2636 = vadd.f32 %v494, %v2635
      %v2637 = vpop.f32.mrb[0].mxu0
      %v2638 = vpop.f32.mrb[0].mxu0
      %v2639 = vadd.f32 %v494, %v2638
      %v2640 = vpop.f32.mrb[0].mxu0
      %2641 = vmatprep.mubr.bf16.mxu0 %v1899
      %2642 = vmatmul.mubr.bf16.gmra.mrb[0].mxu0 %v1392
      %v2643 = vpop.f32.mrb[0].mxu0
      %v2644 = vadd.f32 %v494, %v2643
      %v2645 = vpop.f32.mrb[0].mxu0
      %v2646 = vpop.f32.mrb[0].mxu0
      %v2647 = vadd.f32 %v494, %v2646
      %v2648 = vpop.f32.mrb[0].mxu0
      %2649 = vmatprep.mubr.bf16.mxu0 %v1902
      %2650 = vmatmul.mubr.bf16.gmra.mrb[0].mxu0 %v1394
      %v2651 = vpop.f32.mrb[0].mxu0
      %v2652 = vadd.f32 %v494, %v2651
      %v2653 = vpop.f32.mrb[0].mxu0
      %v2654 = vpop.f32.mrb[0].mxu0
      %v2655 = vadd.f32 %v494, %v2654
      %v2656 = vpop.f32.mrb[0].mxu0
      %2657 = vmatprep.mubr.bf16.mxu0 %v1905
      %2658 = vmatmul.mubr.bf16.gmra.mrb[0].mxu0 %v1396
      %v2659 = vpop.f32.mrb[0].mxu0
      %v2660 = vadd.f32 %v494, %v2659
      %v2661 = vpop.f32.mrb[0].mxu0
      %v2662 = vpop.f32.mrb[0].mxu0
      %v2663 = vadd.f32 %v494, %v2662
      %v2664 = vpop.f32.mrb[0].mxu0
      %2665 = vmatprep.mubr.bf16.mxu0 %v1908
      %2666 = vmatmul.mubr.bf16.gmra.mrb[0].mxu0 %v1398
      %v2667 = vpop.f32.mrb[0].mxu0
      %v2668 = vadd.f32 %v494, %v2667
      %v2669 = vpop.f32.mrb[0].mxu0
      %v2670 = vpop.f32.mrb[0].mxu0
      %v2671 = vadd.f32 %v494, %v2670
      %v2672 = vpop.f32.mrb[0].mxu0
      %2673 = vmatprep.mubr.bf16.mxu0 %v1911
      %2674 = vmatmul.mubr.bf16.gmra.mrb[0].mxu0 %v1400
      %v2675 = vpop.f32.mrb[0].mxu0
      %v2676 = vadd.f32 %v494, %v2675
      %v2677 = vpop.f32.mrb[0].mxu0
      %v2678 = vpop.f32.mrb[0].mxu0
      %v2679 = vadd.f32 %v494, %v2678
      %v2680 = vpop.f32.mrb[0].mxu0
      %2681 = vmatprep.mubr.bf16.mxu0 %v1914
      %2682 = vmatmul.mubr.bf16.gmra.mrb[0].mxu0 %v1402
      %v2683 = vpop.f32.mrb[0].mxu0
      %v2684 = vadd.f32 %v494, %v2683
      %v2685 = vpop.f32.mrb[0].mxu0
      %v2686 = vpop.f32.mrb[0].mxu0
      %v2687 = vadd.f32 %v494, %v2686
      %v2688 = vpop.f32.mrb[0].mxu0
      %2689 = vmatprep.mubr.bf16.mxu0 %v1917
      %2690 = vmatmul.mubr.bf16.gmra.mrb[0].mxu0 %v1404
      %v2691 = vpop.f32.mrb[0].mxu0
      %v2692 = vadd.f32 %v494, %v2691
      %v2693 = vpop.f32.mrb[0].mxu0
      %v2694 = vpop.f32.mrb[0].mxu0
      %v2695 = vadd.f32 %v494, %v2694
      %v2696 = vpop.f32.mrb[0].mxu0
      %2697 = vmatprep.mubr.bf16.mxu0 %v1920
      %2698 = vmatmul.mubr.bf16.gmra.mrb[0].mxu0 %v1406
      %v2699 = vpop.f32.mrb[0].mxu0
      %v2700 = vadd.f32 %v494, %v2699
      %v2701 = vpop.f32.mrb[0].mxu0
      %v2702 = vpop.f32.mrb[0].mxu0
      %v2703 = vadd.f32 %v494, %v2702
      %v2704 = vpop.f32.mrb[0].mxu0
      %2705 = vmatprep.mubr.bf16.mxu0 %v1923
      %2706 = vmatmul.mubr.bf16.gmra.mrb[0].mxu0 %v1408
      %v2707 = vpop.f32.mrb[0].mxu0
      %v2708 = vadd.f32 %v494, %v2707
      %v2709 = vpop.f32.mrb[0].mxu0
      %v2710 = vpop.f32.mrb[0].mxu0
      %v2711 = vadd.f32 %v494, %v2710
      %v2712 = vpop.f32.mrb[0].mxu0
      %2713 = vmatprep.mubr.bf16.mxu0 %v1926
      %2714 = vmatmul.mubr.bf16.gmra.mrb[0].mxu0 %v1410
      %v2715 = vpop.f32.mrb[0].mxu0
      %v2716 = vadd.f32 %v494, %v2715
      %v2717 = vpop.f32.mrb[0].mxu0
      %v2718 = vpop.f32.mrb[0].mxu0
      %v2719 = vadd.f32 %v494, %v2718
      %v2720 = vpop.f32.mrb[0].mxu0
      %2721 = vmatprep.mubr.bf16.mxu0 %v1929
      %2722 = vmatmul.mubr.bf16.gmra.mrb[0].mxu0 %v1412
      %v2723 = vpop.f32.mrb[0].mxu0
      %v2724 = vadd.f32 %v494, %v2723
      %v2725 = vpop.f32.mrb[0].mxu0
      %v2726 = vpop.f32.mrb[0].mxu0
      %v2727 = vadd.f32 %v494, %v2726
      %v2728 = vpop.f32.mrb[0].mxu0
      %2729 = vmatprep.mubr.bf16.mxu0 %v1932
      %2730 = vmatmul.mubr.bf16.gmra.mrb[0].mxu0 %v1414
      %v2731 = vpop.f32.mrb[0].mxu0
      %v2732 = vadd.f32 %v494, %v2731
      %v2733 = vpop.f32.mrb[0].mxu0
      %v2734 = vpop.f32.mrb[0].mxu0
      %v2735 = vadd.f32 %v494, %v2734
      %v2736 = vpop.f32.mrb[0].mxu0
      %2737 = vmatprep.mubr.bf16.mxu0 %v1935
      %2738 = vmatmul.mubr.bf16.gmra.mrb[0].mxu0 %v1416
      %v2739 = vpop.f32.mrb[0].mxu0
      %v2740 = vadd.f32 %v494, %v2739
      %v2741 = vpop.f32.mrb[0].mxu0
      %v2742 = vpop.f32.mrb[0].mxu0
      %v2743 = vadd.f32 %v494, %v2742
      %v2744 = vpop.f32.mrb[0].mxu0
      %2745 = vmatprep.mubr.bf16.mxu0 %v1938
      %2746 = vmatmul.mubr.bf16.gmra.mrb[0].mxu0 %v1418
      %v2747 = vpop.f32.mrb[0].mxu0
      %v2748 = vadd.f32 %v494, %v2747
      %v2749 = vpop.f32.mrb[0].mxu0
      %v2750 = vpop.f32.mrb[0].mxu0
      %v2751 = vadd.f32 %v494, %v2750
      %v2752 = vpop.f32.mrb[0].mxu0
      %2753 = vmatprep.mubr.bf16.mxu0 %v1941
      %2754 = vmatmul.mubr.bf16.gmra.mrb[0].mxu0 %v1420
      %v2755 = vpop.f32.mrb[0].mxu0
      %v2756 = vadd.f32 %v494, %v2755
      %v2757 = vpop.f32.mrb[0].mxu0
      %v2758 = vpop.f32.mrb[0].mxu0
      %v2759 = vadd.f32 %v494, %v2758
      %v2760 = vpop.f32.mrb[0].mxu0
      %2761 = vmatprep.mubr.bf16.mxu0 %v1944
      %2762 = vmatmul.mubr.bf16.gmra.mrb[0].mxu0 %v1422
      %v2763 = vpop.f32.mrb[0].mxu0
      %v2764 = vadd.f32 %v494, %v2763
      %v2765 = vpop.f32.mrb[0].mxu0
      %v2766 = vpop.f32.mrb[0].mxu0
      %v2767 = vadd.f32 %v494, %v2766
      %v2768 = vpop.f32.mrb[0].mxu0
      %2769 = vmatprep.mubr.bf16.mxu0 %v1947
      %2770 = vmatmul.mubr.bf16.gmra.mrb[0].mxu0 %v1424
      %v2771 = vpop.f32.mrb[0].mxu0
      %v2772 = vadd.f32 %v494, %v2771
      %v2773 = vpop.f32.mrb[0].mxu0
      %v2774 = vpop.f32.mrb[0].mxu0
      %v2775 = vadd.f32 %v494, %v2774
      %v2776 = vpop.f32.mrb[0].mxu0
      %2777 = vmatprep.mubr.bf16.mxu0 %v1950
      %2778 = vmatmul.mubr.bf16.gmra.mrb[0].mxu0 %v1426
      %v2779 = vpop.f32.mrb[0].mxu0
      %v2780 = vadd.f32 %v494, %v2779
      %v2781 = vpop.f32.mrb[0].mxu0
      %v2782 = vpop.f32.mrb[0].mxu0
      %v2783 = vadd.f32 %v494, %v2782
      %v2784 = vpop.f32.mrb[0].mxu0
      %2785 = vmatprep.mubr.bf16.mxu0 %v1953
      %2786 = vmatmul.mubr.bf16.gmra.mrb[0].mxu0 %v1428
      %v2787 = vpop.f32.mrb[0].mxu0
      %v2788 = vadd.f32 %v494, %v2787
      %v2789 = vpop.f32.mrb[0].mxu0
      %v2790 = vpop.f32.mrb[0].mxu0
      %v2791 = vadd.f32 %v494, %v2790
      %v2792 = vpop.f32.mrb[0].mxu0
      %2793 = vmatprep.mubr.bf16.mxu0 %v1956
      %2794 = vmatmul.mubr.bf16.gmra.mrb[0].mxu0 %v1430
      %v2795 = vpop.f32.mrb[0].mxu0
      %v2796 = vadd.f32 %v494, %v2795
      %v2797 = vpop.f32.mrb[0].mxu0
      %v2798 = vpop.f32.mrb[0].mxu0
      %v2799 = vadd.f32 %v494, %v2798
      %v2800 = vpop.f32.mrb[0].mxu0
      %2801 = vmatprep.mubr.bf16.mxu0 %v1959
      %2802 = vmatmul.mubr.bf16.gmra.mrb[0].mxu0 %v1432
      %v2803 = vpop.f32.mrb[0].mxu0
      %v2804 = vadd.f32 %v494, %v2803
      %v2805 = vpop.f32.mrb[0].mxu0
      %v2806 = vpop.f32.mrb[0].mxu0
      %v2807 = vadd.f32 %v494, %v2806
      %v2808 = vpop.f32.mrb[0].mxu0
      %2809 = vmatprep.mubr.bf16.mxu0 %v1962
      %2810 = vmatmul.mubr.bf16.gmra.mrb[0].mxu0 %v1434
      %v2811 = vpop.f32.mrb[0].mxu0
      %v2812 = vadd.f32 %v494, %v2811
      %v2813 = vpop.f32.mrb[0].mxu0
      %v2814 = vpop.f32.mrb[0].mxu0
      %v2815 = vadd.f32 %v494, %v2814
      %v2816 = vpop.f32.mrb[0].mxu0
      %2817 = vmatprep.mubr.bf16.mxu0 %v1965
      %2818 = vmatmul.mubr.bf16.gmra.mrb[0].mxu0 %v1436
      %v2819 = vpop.f32.mrb[0].mxu0
      %v2820 = vadd.f32 %v494, %v2819
      %v2821 = vpop.f32.mrb[0].mxu0
      %v2822 = vpop.f32.mrb[0].mxu0
      %v2823 = vadd.f32 %v494, %v2822
      %v2824 = vpop.f32.mrb[0].mxu0
      %2825 = vmatprep.mubr.bf16.mxu0 %v1968
      %2826 = vmatmul.mubr.bf16.gmra.mrb[0].mxu0 %v1438
      %v2827 = vpop.f32.mrb[0].mxu0
      %v2828 = vadd.f32 %v494, %v2827
      %v2829 = vpop.f32.mrb[0].mxu0
      %v2830 = vpop.f32.mrb[0].mxu0
      %v2831 = vadd.f32 %v494, %v2830
      %v2832 = vpop.f32.mrb[0].mxu0
      %2833 = vmatprep.mubr.bf16.mxu0 %v1971
      %2834 = vmatmul.mubr.bf16.gmra.mrb[0].mxu0 %v1440
      %v2835 = vpop.f32.mrb[0].mxu0
      %v2836 = vadd.f32 %v494, %v2835
      %v2837 = vpop.f32.mrb[0].mxu0
      %v2838 = vpop.f32.mrb[0].mxu0
      %v2839 = vadd.f32 %v494, %v2838
      %v2840 = vpop.f32.mrb[0].mxu0
      %2841 = vmatprep.mubr.bf16.mxu0 %v1974
      %2842 = vmatmul.mubr.bf16.gmra.mrb[0].mxu0 %v1442
      %v2843 = vpop.f32.mrb[0].mxu0
      %v2844 = vadd.f32 %v494, %v2843
      %v2845 = vpop.f32.mrb[0].mxu0
      %v2846 = vpop.f32.mrb[0].mxu0
      %v2847 = vadd.f32 %v494, %v2846
      %v2848 = vpop.f32.mrb[0].mxu0
      %2849 = vmatprep.mubr.bf16.mxu0 %v1977
      %2850 = vmatmul.mubr.bf16.gmra.mrb[0].mxu0 %v1444
      %v2851 = vpop.f32.mrb[0].mxu0
      %v2852 = vadd.f32 %v494, %v2851
      %v2853 = vpop.f32.mrb[0].mxu0
      %v2854 = vpop.f32.mrb[0].mxu0
      %v2855 = vadd.f32 %v494, %v2854
      %v2856 = vpop.f32.mrb[0].mxu0
      %2857 = vmatprep.mubr.bf16.mxu0 %v1980
      %2858 = vmatmul.mubr.bf16.gmra.mrb[0].mxu0 %v1446
      %v2859 = vpop.f32.mrb[0].mxu0
      %v2860 = vadd.f32 %v494, %v2859
      %v2861 = vpop.f32.mrb[0].mxu0
      %v2862 = vpop.f32.mrb[0].mxu0
      %v2863 = vadd.f32 %v494, %v2862
      %v2864 = vpop.f32.mrb[0].mxu0
      %2865 = vmatprep.mubr.bf16.mxu0 %v1983
      %2866 = vmatmul.mubr.bf16.gmra.mrb[0].mxu0 %v1448
      %v2867 = vpop.f32.mrb[0].mxu0
      %v2868 = vadd.f32 %v494, %v2867
      %v2869 = vpop.f32.mrb[0].mxu0
      %v2870 = vpop.f32.mrb[0].mxu0
      %v2871 = vadd.f32 %v494, %v2870
      %v2872 = vpop.f32.mrb[0].mxu0
      %2873 = vmatprep.mubr.bf16.mxu0 %v1986
      %2874 = vmatmul.mubr.bf16.gmra.mrb[0].mxu0 %v1450
      %v2875 = vpop.f32.mrb[0].mxu0
      %v2876 = vadd.f32 %v494, %v2875
      %v2877 = vpop.f32.mrb[0].mxu0
      %v2878 = vpop.f32.mrb[0].mxu0
      %v2879 = vadd.f32 %v494, %v2878
      %v2880 = vpop.f32.mrb[0].mxu0
      %2881 = vmatprep.mubr.bf16.mxu0 %v1989
      %2882 = vmatmul.mubr.bf16.gmra.mrb[0].mxu0 %v1452
      %v2883 = vpop.f32.mrb[0].mxu0
      %v2884 = vadd.f32 %v494, %v2883
      %v2885 = vpop.f32.mrb[0].mxu0
      %v2886 = vpop.f32.mrb[0].mxu0
      %v2887 = vadd.f32 %v494, %v2886
      %v2888 = vpop.f32.mrb[0].mxu0
      %2889 = vmatprep.mubr.bf16.mxu0 %v1992
      %2890 = vmatmul.mubr.bf16.gmra.mrb[0].mxu0 %v1454
      %v2891 = vpop.f32.mrb[0].mxu0
      %v2892 = vadd.f32 %v494, %v2891
      %v2893 = vpop.f32.mrb[0].mxu0
      %v2894 = vpop.f32.mrb[0].mxu0
      %v2895 = vadd.f32 %v494, %v2894
      %v2896 = vpop.f32.mrb[0].mxu0
      %2897 = vmatprep.mubr.bf16.mxu0 %v1995
      %2898 = vmatmul.mubr.bf16.gmra.mrb[0].mxu0 %v1456
      %v2899 = vpop.f32.mrb[0].mxu0
      %v2900 = vadd.f32 %v494, %v2899
      %v2901 = vpop.f32.mrb[0].mxu0
      %v2902 = vpop.f32.mrb[0].mxu0
      %v2903 = vadd.f32 %v494, %v2902
      %v2904 = vpop.f32.mrb[0].mxu0
      %2905 = vmatprep.mubr.bf16.mxu0 %v1998
      %2906 = vmatmul.mubr.bf16.gmra.mrb[0].mxu0 %v1458
      %v2907 = vpop.f32.mrb[0].mxu0
      %v2908 = vadd.f32 %v494, %v2907
      %v2909 = vpop.f32.mrb[0].mxu0
      %v2910 = vpop.f32.mrb[0].mxu0
      %v2911 = vadd.f32 %v494, %v2910
      %v2912 = vpop.f32.mrb[0].mxu0
      %2913 = vmatprep.mubr.bf16.mxu0 %v2001
      %2914 = vmatmul.mubr.bf16.gmra.mrb[0].mxu0 %v1460
      %v2915 = vpop.f32.mrb[0].mxu0
      %v2916 = vadd.f32 %v494, %v2915
      %v2917 = vpop.f32.mrb[0].mxu0
      %v2918 = vpop.f32.mrb[0].mxu0
      %v2919 = vadd.f32 %v494, %v2918
      %v2920 = vpop.f32.mrb[0].mxu0
      %2921 = vmatprep.mubr.bf16.mxu0 %v2004
      %2922 = vmatmul.mubr.bf16.gmra.mrb[0].mxu0 %v1462
      %v2923 = vpop.f32.mrb[0].mxu0
      %v2924 = vadd.f32 %v494, %v2923
      %v2925 = vpop.f32.mrb[0].mxu0
      %v2926 = vpop.f32.mrb[0].mxu0
      %v2927 = vadd.f32 %v494, %v2926
      %v2928 = vpop.f32.mrb[0].mxu0
      %2929 = vmatprep.mubr.bf16.mxu0 %v2007
      %2930 = vmatmul.mubr.bf16.gmra.mrb[0].mxu0 %v1464
      %v2931 = vpop.f32.mrb[0].mxu0
      %v2932 = vadd.f32 %v494, %v2931
      %v2933 = vpop.f32.mrb[0].mxu0
      %v2934 = vpop.f32.mrb[0].mxu0
      %v2935 = vadd.f32 %v494, %v2934
      %v2936 = vpop.f32.mrb[0].mxu0
      %2937 = vmatprep.mubr.bf16.mxu0 %v2010
      %2938 = vmatmul.mubr.bf16.gmra.mrb[0].mxu0 %v1466
      %v2939 = vpop.f32.mrb[0].mxu0
      %v2940 = vadd.f32 %v494, %v2939
      %v2941 = vpop.f32.mrb[0].mxu0
      %v2942 = vpop.f32.mrb[0].mxu0
      %v2943 = vadd.f32 %v494, %v2942
      %v2944 = vpop.f32.mrb[0].mxu0
      %2945 = vmatprep.mubr.bf16.mxu0 %v2013
      %2946 = vmatmul.mubr.bf16.gmra.mrb[0].mxu0 %v1468
      %v2947 = vpop.f32.mrb[0].mxu0
      %v2948 = vadd.f32 %v494, %v2947
      %v2949 = vpop.f32.mrb[0].mxu0
      %v2950 = vpop.f32.mrb[0].mxu0
      %v2951 = vadd.f32 %v494, %v2950
      %v2952 = vpop.f32.mrb[0].mxu0
      %2953 = vmatprep.mubr.bf16.mxu0 %v2016
      %2954 = vmatmul.mubr.bf16.gmra.mrb[0].mxu0 %v1470
      %v2955 = vpop.f32.mrb[0].mxu0
      %v2956 = vadd.f32 %v494, %v2955
      %v2957 = vpop.f32.mrb[0].mxu0
      %v2958 = vpop.f32.mrb[0].mxu0
      %v2959 = vadd.f32 %v494, %v2958
      %v2960 = vpop.f32.mrb[0].mxu0
      %2961 = vmatprep.mubr.bf16.mxu0 %v2019
      %2962 = vmatmul.mubr.bf16.gmra.mrb[0].mxu0 %v1472
      %v2963 = vpop.f32.mrb[0].mxu0
      %v2964 = vadd.f32 %v494, %v2963
      %v2965 = vpop.f32.mrb[0].mxu0
      %v2966 = vpop.f32.mrb[0].mxu0
      %v2967 = vadd.f32 %v494, %v2966
      %v2968 = vpop.f32.mrb[0].mxu0
      %2969 = vmatprep.mubr.bf16.mxu0 %v2022
      %2970 = vmatmul.mubr.bf16.gmra.mrb[0].mxu0 %v1474
      %v2971 = vpop.f32.mrb[0].mxu0
      %v2972 = vadd.f32 %v494, %v2971
      %v2973 = vpop.f32.mrb[0].mxu0
      %v2974 = vpop.f32.mrb[0].mxu0
      %v2975 = vadd.f32 %v494, %v2974
      %v2976 = vpop.f32.mrb[0].mxu0
      %2977 = vmatprep.mubr.bf16.mxu0 %v2025
      %2978 = vmatmul.mubr.bf16.gmra.mrb[0].mxu0 %v1476
      %v2979 = vpop.f32.mrb[0].mxu0
      %v2980 = vadd.f32 %v494, %v2979
      %v2981 = vpop.f32.mrb[0].mxu0
      %v2982 = vpop.f32.mrb[0].mxu0
      %v2983 = vadd.f32 %v494, %v2982
      %v2984 = vpop.f32.mrb[0].mxu0
      %2985 = vmatprep.mubr.bf16.mxu0 %v2028
      %2986 = vmatmul.mubr.bf16.gmra.mrb[0].mxu0 %v1478
      %v2987 = vpop.f32.mrb[0].mxu0
      %v2988 = vadd.f32 %v494, %v2987
      %v2989 = vpop.f32.mrb[0].mxu0
      %v2990 = vpop.f32.mrb[0].mxu0
      %v2991 = vadd.f32 %v494, %v2990
      %v2992 = vpop.f32.mrb[0].mxu0
      %2993 = vmatprep.mubr.bf16.mxu0 %v2031
      %2994 = vmatmul.mubr.bf16.gmra.mrb[0].mxu0 %v1480
      %v2995 = vpop.f32.mrb[0].mxu0
      %v2996 = vadd.f32 %v494, %v2995
      %v2997 = vpop.f32.mrb[0].mxu0
      %v2998 = vpop.f32.mrb[0].mxu0
      %v2999 = vadd.f32 %v494, %v2998
      %v3000 = vpop.f32.mrb[0].mxu0
      %3001 = vmatprep.mubr.bf16.mxu0 %v2034
      %3002 = vmatmul.mubr.bf16.gmra.mrb[0].mxu0 %v1482
      %v3003 = vpop.f32.mrb[0].mxu0
      %v3004 = vadd.f32 %v494, %v3003
      %v3005 = vpop.f32.mrb[0].mxu0
      %v3006 = vpop.f32.mrb[0].mxu0
      %v3007 = vadd.f32 %v494, %v3006
      %v3008 = vpop.f32.mrb[0].mxu0
      %3009 = vmatprep.mubr.bf16.mxu0 %v2037
      %3010 = vmatmul.mubr.bf16.gmra.mrb[0].mxu0 %v1484
      %v3011 = vpop.f32.mrb[0].mxu0
      %v3012 = vadd.f32 %v494, %v3011
      %v3013 = vpop.f32.mrb[0].mxu0
      %v3014 = vpop.f32.mrb[0].mxu0
      %v3015 = vadd.f32 %v494, %v3014
      %v3016 = vpop.f32.mrb[0].mxu0
      %3017 = vmatprep.mubr.bf16.mxu0 %v2040
      %3018 = vmatmul.mubr.bf16.gmra.mrb[0].mxu0 %v1486
      %v3019 = vpop.f32.mrb[0].mxu0
      %v3020 = vadd.f32 %v494, %v3019
      %v3021 = vpop.f32.mrb[0].mxu0
      %v3022 = vpop.f32.mrb[0].mxu0
      %v3023 = vadd.f32 %v494, %v3022
      %v3024 = vpop.f32.mrb[0].mxu0
      %3025 = vmatprep.mubr.bf16.mxu0 %v2043
      %3026 = vmatmul.mubr.bf16.gmra.mrb[0].mxu0 %v1488
      %v3027 = vpop.f32.mrb[0].mxu0
      %v3028 = vadd.f32 %v494, %v3027
      %v3029 = vpop.f32.mrb[0].mxu0
      %v3030 = vpop.f32.mrb[0].mxu0
      %v3031 = vadd.f32 %v494, %v3030
      %v3032 = vpop.f32.mrb[0].mxu0
      %3033 = vmatprep.mubr.bf16.mxu0 %v2046
      %3034 = vmatmul.mubr.bf16.gmra.mrb[0].mxu0 %v1490
      %v3035 = vpop.f32.mrb[0].mxu0
      %v3036 = vadd.f32 %v494, %v3035
      %v3037 = vpop.f32.mrb[0].mxu0
      %v3038 = vpop.f32.mrb[0].mxu0
      %v3039 = vadd.f32 %v494, %v3038
      %v3040 = vpop.f32.mrb[0].mxu0
      %3041 = vmatprep.mubr.bf16.mxu0 %v2049
      %3042 = vmatmul.mubr.bf16.gmra.mrb[0].mxu0 %v1492
      %v3043 = vpop.f32.mrb[0].mxu0
      %v3044 = vadd.f32 %v494, %v3043
      %v3045 = vpop.f32.mrb[0].mxu0
      %v3046 = vpop.f32.mrb[0].mxu0
      %v3047 = vadd.f32 %v494, %v3046
      %v3048 = vpop.f32.mrb[0].mxu0
      %3049 = vmatprep.mubr.bf16.mxu0 %v2052
      %3050 = vmatmul.mubr.bf16.gmra.mrb[0].mxu0 %v1494
      %v3051 = vpop.f32.mrb[0].mxu0
      %v3052 = vadd.f32 %v494, %v3051
      %v3053 = vpop.f32.mrb[0].mxu0
      %v3054 = vpop.f32.mrb[0].mxu0
      %v3055 = vadd.f32 %v494, %v3054
      %v3056 = vpop.f32.mrb[0].mxu0
      %3057 = vmatprep.mubr.bf16.mxu0 %v2055
      %3058 = vmatmul.mubr.bf16.gmra.mrb[0].mxu0 %v1496
      %v3059 = vpop.f32.mrb[0].mxu0
      %v3060 = vadd.f32 %v494, %v3059
      %v3061 = vpop.f32.mrb[0].mxu0
      %v3062 = vpop.f32.mrb[0].mxu0
      %v3063 = vadd.f32 %v494, %v3062
      %v3064 = vpop.f32.mrb[0].mxu0
      %3065 = vmatprep.mubr.bf16.mxu0 %v2058
      %3066 = vmatmul.mubr.bf16.gmra.mrb[0].mxu0 %v1498
      %v3067 = vpop.f32.mrb[0].mxu0
      %v3068 = vadd.f32 %v494, %v3067
      %v3069 = vpop.f32.mrb[0].mxu0
      %v3070 = vpop.f32.mrb[0].mxu0
      %v3071 = vadd.f32 %v494, %v3070
      %v3072 = vpop.f32.mrb[0].mxu0
      %3073 = vmatprep.mubr.bf16.mxu0 %v2061
      %3074 = vmatmul.mubr.bf16.gmra.mrb[0].mxu0 %v1500
      %v3075 = vpop.f32.mrb[0].mxu0
      %v3076 = vadd.f32 %v494, %v3075
      %v3077 = vpop.f32.mrb[0].mxu0
      %v3078 = vpop.f32.mrb[0].mxu0
      %v3079 = vadd.f32 %v494, %v3078
      %v3080 = vpop.f32.mrb[0].mxu0
      %3081 = vmatprep.mubr.bf16.mxu0 %v2064
      %3082 = vmatmul.mubr.bf16.gmra.mrb[0].mxu0 %v1502
      %v3083 = vpop.f32.mrb[0].mxu0
      %v3084 = vadd.f32 %v494, %v3083
      %v3085 = vpop.f32.mrb[0].mxu0
      %v3086 = vpop.f32.mrb[0].mxu0
      %v3087 = vadd.f32 %v494, %v3086
      %v3088 = vpop.f32.mrb[0].mxu0
      %3089 = vmatprep.mubr.bf16.mxu0 %v2067
      %3090 = vmatmul.mubr.bf16.gmra.mrb[0].mxu0 %v1504
      %v3091 = vpop.f32.mrb[0].mxu0
      %v3092 = vadd.f32 %v494, %v3091
      %v3093 = vpop.f32.mrb[0].mxu0
      %v3094 = vpop.f32.mrb[0].mxu0
      %v3095 = vadd.f32 %v494, %v3094
      %v3096 = vpop.f32.mrb[0].mxu0
      %3097 = vmatprep.mubr.bf16.mxu0 %v2070
      %3098 = vmatmul.mubr.bf16.gmra.mrb[0].mxu0 %v1506
      %v3099 = vpop.f32.mrb[0].mxu0
      %v3100 = vadd.f32 %v494, %v3099
      %v3101 = vpop.f32.mrb[0].mxu0
      %v3102 = vpop.f32.mrb[0].mxu0
      %v3103 = vadd.f32 %v494, %v3102
      %v3104 = vpop.f32.mrb[0].mxu0
      %3105 = vmatprep.mubr.bf16.mxu0 %v2073
      %3106 = vmatmul.mubr.bf16.gmra.mrb[0].mxu0 %v1508
      %v3107 = vpop.f32.mrb[0].mxu0
      %v3108 = vadd.f32 %v494, %v3107
      %v3109 = vpop.f32.mrb[0].mxu0
      %v3110 = vpop.f32.mrb[0].mxu0
      %v3111 = vadd.f32 %v494, %v3110
      %v3112 = vpop.f32.mrb[0].mxu0
      %3113 = vmatprep.mubr.bf16.mxu0 %v2076
      %3114 = vmatmul.mubr.bf16.gmra.mrb[0].mxu0 %v1510
      %v3115 = vpop.f32.mrb[0].mxu0
      %v3116 = vadd.f32 %v494, %v3115
      %v3117 = vpop.f32.mrb[0].mxu0
      %v3118 = vpop.f32.mrb[0].mxu0
      %v3119 = vadd.f32 %v494, %v3118
      %v3120 = vpop.f32.mrb[0].mxu0
      %3121 = vmatprep.mubr.bf16.mxu0 %v2079
      %3122 = vmatmul.mubr.bf16.gmra.mrb[0].mxu0 %v1512
      %v3123 = vpop.f32.mrb[0].mxu0
      %v3124 = vadd.f32 %v494, %v3123
      %v3125 = vpop.f32.mrb[0].mxu0
      %v3126 = vpop.f32.mrb[0].mxu0
      %v3127 = vadd.f32 %v494, %v3126
      %v3128 = vpop.f32.mrb[0].mxu0
      %3129 = vmatprep.mubr.bf16.mxu0 %v2082
      %3130 = vmatmul.mubr.bf16.gmra.mrb[0].mxu0 %v1514
      %v3131 = vpop.f32.mrb[0].mxu0
      %v3132 = vadd.f32 %v494, %v3131
      %v3133 = vpop.f32.mrb[0].mxu0
      %v3134 = vpop.f32.mrb[0].mxu0
      %v3135 = vadd.f32 %v494, %v3134
      %v3136 = vpop.f32.mrb[0].mxu0
      %3137 = vmatprep.mubr.bf16.mxu0 %v2085
      %3138 = vmatmul.mubr.bf16.gmra.mrb[0].mxu0 %v1516
      %v3139 = vpop.f32.mrb[0].mxu0
      %v3140 = vadd.f32 %v494, %v3139
      %v3141 = vpop.f32.mrb[0].mxu0
      %v3142 = vpop.f32.mrb[0].mxu0
      %v3143 = vadd.f32 %v494, %v3142
      %v3144 = vpop.f32.mrb[0].mxu0
      %3145 = vmatprep.mubr.bf16.mxu0 %v2088
      %3146 = vmatmul.mubr.bf16.gmra.mrb[0].mxu0 %v1518
      %v3147 = vpop.f32.mrb[0].mxu0
      %v3148 = vadd.f32 %v494, %v3147
      %v3149 = vpop.f32.mrb[0].mxu0
      %v3150 = vpop.f32.mrb[0].mxu0
      %v3151 = vadd.f32 %v494, %v3150
      %v3152 = vpop.f32.mrb[0].mxu0
      %3153 = vdwg.mxu0
      %v3154 = vmax.f32 %v2132, 0.0
      %v3155 = vmax.f32 %v2135, 0.0
      %v3156 = vmax.f32 %v2140, 0.0
      %v3157 = vmax.f32 %v2143, 0.0
      %v3158 = vmax.f32 %v2148, 0.0
      %v3159 = vmax.f32 %v2151, 0.0
      %v3160 = vmax.f32 %v2156, 0.0
      %v3161 = vmax.f32 %v2159, 0.0
      %v3162 = vmax.f32 %v2164, 0.0
      %v3163 = vmax.f32 %v2167, 0.0
      %v3164 = vmax.f32 %v2172, 0.0
      %v3165 = vmax.f32 %v2175, 0.0
      %v3166 = vmax.f32 %v2180, 0.0
      %v3167 = vmax.f32 %v2183, 0.0
      %v3168 = vmax.f32 %v2188, 0.0
      %v3169 = vmax.f32 %v2191, 0.0
      %v3170 = vmax.f32 %v2196, 0.0
      %v3171 = vmax.f32 %v2199, 0.0
      %v3172 = vmax.f32 %v2204, 0.0
      %v3173 = vmax.f32 %v2207, 0.0
      %v3174 = vmax.f32 %v2212, 0.0
      %v3175 = vmax.f32 %v2215, 0.0
      %v3176 = vmax.f32 %v2220, 0.0
      %v3177 = vmax.f32 %v2223, 0.0
      %v3178 = vmax.f32 %v2228, 0.0
      %v3179 = vmax.f32 %v2231, 0.0
      %v3180 = vmax.f32 %v2236, 0.0
      %v3181 = vmax.f32 %v2239, 0.0
      %v3182 = vmax.f32 %v2244, 0.0
      %v3183 = vmax.f32 %v2247, 0.0
      %v3184 = vmax.f32 %v2252, 0.0
      %v3185 = vmax.f32 %v2255, 0.0
      %v3186 = vmax.f32 %v2260, 0.0
      %v3187 = vmax.f32 %v2263, 0.0
      %v3188 = vmax.f32 %v2268, 0.0
      %v3189 = vmax.f32 %v2271, 0.0
      %v3190 = vmax.f32 %v2276, 0.0
      %v3191 = vmax.f32 %v2279, 0.0
      %v3192 = vmax.f32 %v2284, 0.0
      %v3193 = vmax.f32 %v2287, 0.0
      %v3194 = vmax.f32 %v2292, 0.0
      %v3195 = vmax.f32 %v2295, 0.0
      %v3196 = vmax.f32 %v2300, 0.0
      %v3197 = vmax.f32 %v2303, 0.0
      %v3198 = vmax.f32 %v2308, 0.0
      %v3199 = vmax.f32 %v2311, 0.0
      %v3200 = vmax.f32 %v2316, 0.0
      %v3201 = vmax.f32 %v2319, 0.0
      %v3202 = vmax.f32 %v2324, 0.0
      %v3203 = vmax.f32 %v2327, 0.0
      %v3204 = vmax.f32 %v2332, 0.0
      %v3205 = vmax.f32 %v2335, 0.0
      %v3206 = vmax.f32 %v2340, 0.0
      %v3207 = vmax.f32 %v2343, 0.0
      %v3208 = vmax.f32 %v2348, 0.0
      %v3209 = vmax.f32 %v2351, 0.0
      %v3210 = vmax.f32 %v2356, 0.0
      %v3211 = vmax.f32 %v2359, 0.0
      %v3212 = vmax.f32 %v2364, 0.0
      %v3213 = vmax.f32 %v2367, 0.0
      %v3214 = vmax.f32 %v2372, 0.0
      %v3215 = vmax.f32 %v2375, 0.0
      %v3216 = vmax.f32 %v2380, 0.0
      %v3217 = vmax.f32 %v2383, 0.0
      %v3218 = vmax.f32 %v2388, 0.0
      %v3219 = vmax.f32 %v2391, 0.0
      %v3220 = vmax.f32 %v2396, 0.0
      %v3221 = vmax.f32 %v2399, 0.0
      %v3222 = vmax.f32 %v2404, 0.0
      %v3223 = vmax.f32 %v2407, 0.0
      %v3224 = vmax.f32 %v2412, 0.0
      %v3225 = vmax.f32 %v2415, 0.0
      %v3226 = vmax.f32 %v2420, 0.0
      %v3227 = vmax.f32 %v2423, 0.0
      %v3228 = vmax.f32 %v2428, 0.0
      %v3229 = vmax.f32 %v2431, 0.0
      %v3230 = vmax.f32 %v2436, 0.0
      %v3231 = vmax.f32 %v2439, 0.0
      %v3232 = vmax.f32 %v2444, 0.0
      %v3233 = vmax.f32 %v2447, 0.0
      %v3234 = vmax.f32 %v2452, 0.0
      %v3235 = vmax.f32 %v2455, 0.0
      %v3236 = vmax.f32 %v2460, 0.0
      %v3237 = vmax.f32 %v2463, 0.0
      %v3238 = vmax.f32 %v2468, 0.0
      %v3239 = vmax.f32 %v2471, 0.0
      %v3240 = vmax.f32 %v2476, 0.0
      %v3241 = vmax.f32 %v2479, 0.0
      %v3242 = vmax.f32 %v2484, 0.0
      %v3243 = vmax.f32 %v2487, 0.0
      %v3244 = vmax.f32 %v2492, 0.0
      %v3245 = vmax.f32 %v2495, 0.0
      %v3246 = vmax.f32 %v2500, 0.0
      %v3247 = vmax.f32 %v2503, 0.0
      %v3248 = vmax.f32 %v2508, 0.0
      %v3249 = vmax.f32 %v2511, 0.0
      %v3250 = vmax.f32 %v2516, 0.0
      %v3251 = vmax.f32 %v2519, 0.0
      %v3252 = vmax.f32 %v2524, 0.0
      %v3253 = vmax.f32 %v2527, 0.0
      %v3254 = vmax.f32 %v2532, 0.0
      %v3255 = vmax.f32 %v2535, 0.0
      %v3256 = vmax.f32 %v2540, 0.0
      %v3257 = vmax.f32 %v2543, 0.0
      %v3258 = vmax.f32 %v2548, 0.0
      %v3259 = vmax.f32 %v2551, 0.0
      %v3260 = vmax.f32 %v2556, 0.0
      %v3261 = vmax.f32 %v2559, 0.0
      %v3262 = vmax.f32 %v2564, 0.0
      %v3263 = vmax.f32 %v2567, 0.0
      %v3264 = vmax.f32 %v2572, 0.0
      %v3265 = vmax.f32 %v2575, 0.0
      %v3266 = vmax.f32 %v2580, 0.0
      %v3267 = vmax.f32 %v2583, 0.0
      %v3268 = vmax.f32 %v2588, 0.0
      %v3269 = vmax.f32 %v2591, 0.0
      %v3270 = vmax.f32 %v2596, 0.0
      %v3271 = vmax.f32 %v2599, 0.0
      %v3272 = vmax.f32 %v2604, 0.0
      %v3273 = vmax.f32 %v2607, 0.0
      %v3274 = vmax.f32 %v2612, 0.0
      %v3275 = vmax.f32 %v2615, 0.0
      %v3276 = vmax.f32 %v2620, 0.0
      %v3277 = vmax.f32 %v2623, 0.0
      %v3278 = vmax.f32 %v2628, 0.0
      %v3279 = vmax.f32 %v2631, 0.0
      %v3280 = vmax.f32 %v2636, 0.0
      %v3281 = vmax.f32 %v2639, 0.0
      %v3282 = vmax.f32 %v2644, 0.0
      %v3283 = vmax.f32 %v2647, 0.0
      %v3284 = vmax.f32 %v2652, 0.0
      %v3285 = vmax.f32 %v2655, 0.0
      %v3286 = vmax.f32 %v2660, 0.0
      %v3287 = vmax.f32 %v2663, 0.0
      %v3288 = vmax.f32 %v2668, 0.0
      %v3289 = vmax.f32 %v2671, 0.0
      %v3290 = vmax.f32 %v2676, 0.0
      %v3291 = vmax.f32 %v2679, 0.0
      %v3292 = vmax.f32 %v2684, 0.0
      %v3293 = vmax.f32 %v2687, 0.0
      %v3294 = vmax.f32 %v2692, 0.0
      %v3295 = vmax.f32 %v2695, 0.0
      %v3296 = vmax.f32 %v2700, 0.0
      %v3297 = vmax.f32 %v2703, 0.0
      %v3298 = vmax.f32 %v2708, 0.0
      %v3299 = vmax.f32 %v2711, 0.0
      %v3300 = vmax.f32 %v2716, 0.0
      %v3301 = vmax.f32 %v2719, 0.0
      %v3302 = vmax.f32 %v2724, 0.0
      %v3303 = vmax.f32 %v2727, 0.0
      %v3304 = vmax.f32 %v2732, 0.0
      %v3305 = vmax.f32 %v2735, 0.0
      %v3306 = vmax.f32 %v2740, 0.0
      %v3307 = vmax.f32 %v2743, 0.0
      %v3308 = vmax.f32 %v2748, 0.0
      %v3309 = vmax.f32 %v2751, 0.0
      %v3310 = vmax.f32 %v2756, 0.0
      %v3311 = vmax.f32 %v2759, 0.0
      %v3312 = vmax.f32 %v2764, 0.0
      %v3313 = vmax.f32 %v2767, 0.0
      %v3314 = vmax.f32 %v2772, 0.0
      %v3315 = vmax.f32 %v2775, 0.0
      %v3316 = vmax.f32 %v2780, 0.0
      %v3317 = vmax.f32 %v2783, 0.0
      %v3318 = vmax.f32 %v2788, 0.0
      %v3319 = vmax.f32 %v2791, 0.0
      %v3320 = vmax.f32 %v2796, 0.0
      %v3321 = vmax.f32 %v2799, 0.0
      %v3322 = vmax.f32 %v2804, 0.0
      %v3323 = vmax.f32 %v2807, 0.0
      %v3324 = vmax.f32 %v2812, 0.0
      %v3325 = vmax.f32 %v2815, 0.0
      %v3326 = vmax.f32 %v2820, 0.0
      %v3327 = vmax.f32 %v2823, 0.0
      %v3328 = vmax.f32 %v2828, 0.0
      %v3329 = vmax.f32 %v2831, 0.0
      %v3330 = vmax.f32 %v2836, 0.0
      %v3331 = vmax.f32 %v2839, 0.0
      %v3332 = vmax.f32 %v2844, 0.0
      %v3333 = vmax.f32 %v2847, 0.0
      %v3334 = vmax.f32 %v2852, 0.0
      %v3335 = vmax.f32 %v2855, 0.0
      %v3336 = vmax.f32 %v2860, 0.0
      %v3337 = vmax.f32 %v2863, 0.0
      %v3338 = vmax.f32 %v2868, 0.0
      %v3339 = vmax.f32 %v2871, 0.0
      %v3340 = vmax.f32 %v2876, 0.0
      %v3341 = vmax.f32 %v2879, 0.0
      %v3342 = vmax.f32 %v2884, 0.0
      %v3343 = vmax.f32 %v2887, 0.0
      %v3344 = vmax.f32 %v2892, 0.0
      %v3345 = vmax.f32 %v2895, 0.0
      %v3346 = vmax.f32 %v2900, 0.0
      %v3347 = vmax.f32 %v2903, 0.0
      %v3348 = vmax.f32 %v2908, 0.0
      %v3349 = vmax.f32 %v2911, 0.0
      %v3350 = vmax.f32 %v2916, 0.0
      %v3351 = vmax.f32 %v2919, 0.0
      %v3352 = vmax.f32 %v2924, 0.0
      %v3353 = vmax.f32 %v2927, 0.0
      %v3354 = vmax.f32 %v2932, 0.0
      %v3355 = vmax.f32 %v2935, 0.0
      %v3356 = vmax.f32 %v2940, 0.0
      %v3357 = vmax.f32 %v2943, 0.0
      %v3358 = vmax.f32 %v2948, 0.0
      %v3359 = vmax.f32 %v2951, 0.0
      %v3360 = vmax.f32 %v2956, 0.0
      %v3361 = vmax.f32 %v2959, 0.0
      %v3362 = vmax.f32 %v2964, 0.0
      %v3363 = vmax.f32 %v2967, 0.0
      %v3364 = vmax.f32 %v2972, 0.0
      %v3365 = vmax.f32 %v2975, 0.0
      %v3366 = vmax.f32 %v2980, 0.0
      %v3367 = vmax.f32 %v2983, 0.0
      %v3368 = vmax.f32 %v2988, 0.0
      %v3369 = vmax.f32 %v2991, 0.0
      %v3370 = vmax.f32 %v2996, 0.0
      %v3371 = vmax.f32 %v2999, 0.0
      %v3372 = vmax.f32 %v3004, 0.0
      %v3373 = vmax.f32 %v3007, 0.0
      %v3374 = vmax.f32 %v3012, 0.0
      %v3375 = vmax.f32 %v3015, 0.0
      %v3376 = vmax.f32 %v3020, 0.0
      %v3377 = vmax.f32 %v3023, 0.0
      %v3378 = vmax.f32 %v3028, 0.0
      %v3379 = vmax.f32 %v3031, 0.0
      %v3380 = vmax.f32 %v3036, 0.0
      %v3381 = vmax.f32 %v3039, 0.0
      %v3382 = vmax.f32 %v3044, 0.0
      %v3383 = vmax.f32 %v3047, 0.0
      %v3384 = vmax.f32 %v3052, 0.0
      %v3385 = vmax.f32 %v3055, 0.0
      %v3386 = vmax.f32 %v3060, 0.0
      %v3387 = vmax.f32 %v3063, 0.0
      %v3388 = vmax.f32 %v3068, 0.0
      %v3389 = vmax.f32 %v3071, 0.0
      %v3390 = vmax.f32 %v3076, 0.0
      %v3391 = vmax.f32 %v3079, 0.0
      %v3392 = vmax.f32 %v3084, 0.0
      %v3393 = vmax.f32 %v3087, 0.0
      %v3394 = vmax.f32 %v3092, 0.0
      %v3395 = vmax.f32 %v3095, 0.0
      %v3396 = vmax.f32 %v3100, 0.0
      %v3397 = vmax.f32 %v3103, 0.0
      %v3398 = vmax.f32 %v3108, 0.0
      %v3399 = vmax.f32 %v3111, 0.0
      %v3400 = vmax.f32 %v3116, 0.0
      %v3401 = vmax.f32 %v3119, 0.0
      %v3402 = vmax.f32 %v3124, 0.0
      %v3403 = vmax.f32 %v3127, 0.0
      %v3404 = vmax.f32 %v3132, 0.0
      %v3405 = vmax.f32 %v3135, 0.0
      %v3406 = vmax.f32 %v3140, 0.0
      %v3407 = vmax.f32 %v3143, 0.0
      %v3408 = vmax.f32 %v3148, 0.0
      %v3409 = vmax.f32 %v3151, 0.0
      %vm3410 = vcmask 64512
      %3411 = vst.msk [vmem:[%s211] sm:$0xff] %vm3410, %v3154
      %3412 = vst.msk [vmem:[%s211 + $0x8] sm:$0xff] %vm3410, %v3155
      %3413 = vst.msk [vmem:[%s211 + $0x10] sm:$0xff] %vm3410, %v3156
      %3414 = vst.msk [vmem:[%s211 + $0x18] sm:$0xff] %vm3410, %v3157
      %3415 = vst.msk [vmem:[%s211 + $0x20] sm:$0xff] %vm3410, %v3158
      %3416 = vst.msk [vmem:[%s211 + $0x28] sm:$0xff] %vm3410, %v3159
      %3417 = vst.msk [vmem:[%s211 + $0x30] sm:$0xff] %vm3410, %v3160
      %3418 = vst.msk [vmem:[%s211 + $0x38] sm:$0xff] %vm3410, %v3161
      %3419 = vst.msk [vmem:[%s211 + $0x40] sm:$0xff] %vm3410, %v3162
      %3420 = vst.msk [vmem:[%s211 + $0x48] sm:$0xff] %vm3410, %v3163
      %3421 = vst.msk [vmem:[%s211 + $0x50] sm:$0xff] %vm3410, %v3164
      %3422 = vst.msk [vmem:[%s211 + $0x58] sm:$0xff] %vm3410, %v3165
      %3423 = vst.msk [vmem:[%s211 + $0x60] sm:$0xff] %vm3410, %v3166
      %3424 = vst.msk [vmem:[%s211 + $0x68] sm:$0xff] %vm3410, %v3167
      %3425 = vst.msk [vmem:[%s211 + $0x70] sm:$0xff] %vm3410, %v3168
      %3426 = vst.msk [vmem:[%s211 + $0x78] sm:$0xff] %vm3410, %v3169
      %3427 = vst.msk [vmem:[%s211 + $0x80] sm:$0xff] %vm3410, %v3170
      %3428 = vst.msk [vmem:[%s211 + $0x88] sm:$0xff] %vm3410, %v3171
      %3429 = vst.msk [vmem:[%s211 + $0x90] sm:$0xff] %vm3410, %v3172
      %3430 = vst.msk [vmem:[%s211 + $0x98] sm:$0xff] %vm3410, %v3173
      %3431 = vst.msk [vmem:[%s211 + $0xa0] sm:$0xff] %vm3410, %v3174
      %3432 = vst.msk [vmem:[%s211 + $0xa8] sm:$0xff] %vm3410, %v3175
      %3433 = vst.msk [vmem:[%s211 + $0xb0] sm:$0xff] %vm3410, %v3176
      %3434 = vst.msk [vmem:[%s211 + $0xb8] sm:$0xff] %vm3410, %v3177
      %3435 = vst.msk [vmem:[%s211 + $0xc0] sm:$0xff] %vm3410, %v3178
      %3436 = vst.msk [vmem:[%s211 + $0xc8] sm:$0xff] %vm3410, %v3179
      %3437 = vst.msk [vmem:[%s211 + $0xd0] sm:$0xff] %vm3410, %v3180
      %3438 = vst.msk [vmem:[%s211 + $0xd8] sm:$0xff] %vm3410, %v3181
      %3439 = vst.msk [vmem:[%s211 + $0xe0] sm:$0xff] %vm3410, %v3182
      %3440 = vst.msk [vmem:[%s211 + $0xe8] sm:$0xff] %vm3410, %v3183
      %3441 = vst.msk [vmem:[%s211 + $0xf0] sm:$0xff] %vm3410, %v3184
      %3442 = vst.msk [vmem:[%s211 + $0xf8] sm:$0xff] %vm3410, %v3185
      %3443 = vst.msk [vmem:[%s211 + $0x100] sm:$0xff] %vm3410, %v3186
      %3444 = vst.msk [vmem:[%s211 + $0x108] sm:$0xff] %vm3410, %v3187
      %3445 = vst.msk [vmem:[%s211 + $0x110] sm:$0xff] %vm3410, %v3188
      %3446 = vst.msk [vmem:[%s211 + $0x118] sm:$0xff] %vm3410, %v3189
      %3447 = vst.msk [vmem:[%s211 + $0x120] sm:$0xff] %vm3410, %v3190
      %3448 = vst.msk [vmem:[%s211 + $0x128] sm:$0xff] %vm3410, %v3191
      %3449 = vst.msk [vmem:[%s211 + $0x130] sm:$0xff] %vm3410, %v3192
      %3450 = vst.msk [vmem:[%s211 + $0x138] sm:$0xff] %vm3410, %v3193
      %3451 = vst.msk [vmem:[%s211 + $0x140] sm:$0xff] %vm3410, %v3194
      %3452 = vst.msk [vmem:[%s211 + $0x148] sm:$0xff] %vm3410, %v3195
      %3453 = vst.msk [vmem:[%s211 + $0x150] sm:$0xff] %vm3410, %v3196
      %3454 = vst.msk [vmem:[%s211 + $0x158] sm:$0xff] %vm3410, %v3197
      %3455 = vst.msk [vmem:[%s211 + $0x160] sm:$0xff] %vm3410, %v3198
      %3456 = vst.msk [vmem:[%s211 + $0x168] sm:$0xff] %vm3410, %v3199
      %3457 = vst.msk [vmem:[%s211 + $0x170] sm:$0xff] %vm3410, %v3200
      %3458 = vst.msk [vmem:[%s211 + $0x178] sm:$0xff] %vm3410, %v3201
      %3459 = vst.msk [vmem:[%s211 + $0x180] sm:$0xff] %vm3410, %v3202
      %3460 = vst.msk [vmem:[%s211 + $0x188] sm:$0xff] %vm3410, %v3203
      %3461 = vst.msk [vmem:[%s211 + $0x190] sm:$0xff] %vm3410, %v3204
      %3462 = vst.msk [vmem:[%s211 + $0x198] sm:$0xff] %vm3410, %v3205
      %3463 = vst.msk [vmem:[%s211 + $0x1a0] sm:$0xff] %vm3410, %v3206
      %3464 = vst.msk [vmem:[%s211 + $0x1a8] sm:$0xff] %vm3410, %v3207
      %3465 = vst.msk [vmem:[%s211 + $0x1b0] sm:$0xff] %vm3410, %v3208
      %3466 = vst.msk [vmem:[%s211 + $0x1b8] sm:$0xff] %vm3410, %v3209
      %3467 = vst.msk [vmem:[%s211 + $0x1c0] sm:$0xff] %vm3410, %v3210
      %3468 = vst.msk [vmem:[%s211 + $0x1c8] sm:$0xff] %vm3410, %v3211
      %3469 = vst.msk [vmem:[%s211 + $0x1d0] sm:$0xff] %vm3410, %v3212
      %3470 = vst.msk [vmem:[%s211 + $0x1d8] sm:$0xff] %vm3410, %v3213
      %3471 = vst.msk [vmem:[%s211 + $0x1e0] sm:$0xff] %vm3410, %v3214
      %3472 = vst.msk [vmem:[%s211 + $0x1e8] sm:$0xff] %vm3410, %v3215
      %3473 = vst.msk [vmem:[%s211 + $0x1f0] sm:$0xff] %vm3410, %v3216
      %3474 = vst.msk [vmem:[%s211 + $0x1f8] sm:$0xff] %vm3410, %v3217
      %3475 = vst.msk [vmem:[%s211 + $0x200] sm:$0xff] %vm3410, %v3218
      %3476 = vst.msk [vmem:[%s211 + $0x208] sm:$0xff] %vm3410, %v3219
      %3477 = vst.msk [vmem:[%s211 + $0x210] sm:$0xff] %vm3410, %v3220
      %3478 = vst.msk [vmem:[%s211 + $0x218] sm:$0xff] %vm3410, %v3221
      %3479 = vst.msk [vmem:[%s211 + $0x220] sm:$0xff] %vm3410, %v3222
      %3480 = vst.msk [vmem:[%s211 + $0x228] sm:$0xff] %vm3410, %v3223
      %3481 = vst.msk [vmem:[%s211 + $0x230] sm:$0xff] %vm3410, %v3224
      %3482 = vst.msk [vmem:[%s211 + $0x238] sm:$0xff] %vm3410, %v3225
      %3483 = vst.msk [vmem:[%s211 + $0x240] sm:$0xff] %vm3410, %v3226
      %3484 = vst.msk [vmem:[%s211 + $0x248] sm:$0xff] %vm3410, %v3227
      %3485 = vst.msk [vmem:[%s211 + $0x250] sm:$0xff] %vm3410, %v3228
      %3486 = vst.msk [vmem:[%s211 + $0x258] sm:$0xff] %vm3410, %v3229
      %3487 = vst.msk [vmem:[%s211 + $0x260] sm:$0xff] %vm3410, %v3230
      %3488 = vst.msk [vmem:[%s211 + $0x268] sm:$0xff] %vm3410, %v3231
      %3489 = vst.msk [vmem:[%s211 + $0x270] sm:$0xff] %vm3410, %v3232
      %3490 = vst.msk [vmem:[%s211 + $0x278] sm:$0xff] %vm3410, %v3233
      %3491 = vst.msk [vmem:[%s211 + $0x280] sm:$0xff] %vm3410, %v3234
      %3492 = vst.msk [vmem:[%s211 + $0x288] sm:$0xff] %vm3410, %v3235
      %3493 = vst.msk [vmem:[%s211 + $0x290] sm:$0xff] %vm3410, %v3236
      %3494 = vst.msk [vmem:[%s211 + $0x298] sm:$0xff] %vm3410, %v3237
      %3495 = vst.msk [vmem:[%s211 + $0x2a0] sm:$0xff] %vm3410, %v3238
      %3496 = vst.msk [vmem:[%s211 + $0x2a8] sm:$0xff] %vm3410, %v3239
      %3497 = vst.msk [vmem:[%s211 + $0x2b0] sm:$0xff] %vm3410, %v3240
      %3498 = vst.msk [vmem:[%s211 + $0x2b8] sm:$0xff] %vm3410, %v3241
      %3499 = vst.msk [vmem:[%s211 + $0x2c0] sm:$0xff] %vm3410, %v3242
      %3500 = vst.msk [vmem:[%s211 + $0x2c8] sm:$0xff] %vm3410, %v3243
      %3501 = vst.msk [vmem:[%s211 + $0x2d0] sm:$0xff] %vm3410, %v3244
      %3502 = vst.msk [vmem:[%s211 + $0x2d8] sm:$0xff] %vm3410, %v3245
      %3503 = vst.msk [vmem:[%s211 + $0x2e0] sm:$0xff] %vm3410, %v3246
      %3504 = vst.msk [vmem:[%s211 + $0x2e8] sm:$0xff] %vm3410, %v3247
      %3505 = vst.msk [vmem:[%s211 + $0x2f0] sm:$0xff] %vm3410, %v3248
      %3506 = vst.msk [vmem:[%s211 + $0x2f8] sm:$0xff] %vm3410, %v3249
      %3507 = vst.msk [vmem:[%s211 + $0x300] sm:$0xff] %vm3410, %v3250
      %3508 = vst.msk [vmem:[%s211 + $0x308] sm:$0xff] %vm3410, %v3251
      %3509 = vst.msk [vmem:[%s211 + $0x310] sm:$0xff] %vm3410, %v3252
      %3510 = vst.msk [vmem:[%s211 + $0x318] sm:$0xff] %vm3410, %v3253
      %3511 = vst.msk [vmem:[%s211 + $0x320] sm:$0xff] %vm3410, %v3254
      %3512 = vst.msk [vmem:[%s211 + $0x328] sm:$0xff] %vm3410, %v3255
      %3513 = vst.msk [vmem:[%s211 + $0x330] sm:$0xff] %vm3410, %v3256
      %3514 = vst.msk [vmem:[%s211 + $0x338] sm:$0xff] %vm3410, %v3257
      %3515 = vst.msk [vmem:[%s211 + $0x340] sm:$0xff] %vm3410, %v3258
      %3516 = vst.msk [vmem:[%s211 + $0x348] sm:$0xff] %vm3410, %v3259
      %3517 = vst.msk [vmem:[%s211 + $0x350] sm:$0xff] %vm3410, %v3260
      %3518 = vst.msk [vmem:[%s211 + $0x358] sm:$0xff] %vm3410, %v3261
      %3519 = vst.msk [vmem:[%s211 + $0x360] sm:$0xff] %vm3410, %v3262
      %3520 = vst.msk [vmem:[%s211 + $0x368] sm:$0xff] %vm3410, %v3263
      %3521 = vst.msk [vmem:[%s211 + $0x370] sm:$0xff] %vm3410, %v3264
      %3522 = vst.msk [vmem:[%s211 + $0x378] sm:$0xff] %vm3410, %v3265
      %3523 = vst.msk [vmem:[%s211 + $0x380] sm:$0xff] %vm3410, %v3266
      %3524 = vst.msk [vmem:[%s211 + $0x388] sm:$0xff] %vm3410, %v3267
      %3525 = vst.msk [vmem:[%s211 + $0x390] sm:$0xff] %vm3410, %v3268
      %3526 = vst.msk [vmem:[%s211 + $0x398] sm:$0xff] %vm3410, %v3269
      %3527 = vst.msk [vmem:[%s211 + $0x3a0] sm:$0xff] %vm3410, %v3270
      %3528 = vst.msk [vmem:[%s211 + $0x3a8] sm:$0xff] %vm3410, %v3271
      %3529 = vst.msk [vmem:[%s211 + $0x3b0] sm:$0xff] %vm3410, %v3272
      %3530 = vst.msk [vmem:[%s211 + $0x3b8] sm:$0xff] %vm3410, %v3273
      %3531 = vst.msk [vmem:[%s211 + $0x3c0] sm:$0xff] %vm3410, %v3274
      %3532 = vst.msk [vmem:[%s211 + $0x3c8] sm:$0xff] %vm3410, %v3275
      %3533 = vst.msk [vmem:[%s211 + $0x3d0] sm:$0xff] %vm3410, %v3276
      %3534 = vst.msk [vmem:[%s211 + $0x3d8] sm:$0xff] %vm3410, %v3277
      %3535 = vst.msk [vmem:[%s211 + $0x3e0] sm:$0xff] %vm3410, %v3278
      %3536 = vst.msk [vmem:[%s211 + $0x3e8] sm:$0xff] %vm3410, %v3279
      %3537 = vst.msk [vmem:[%s211 + $0x3f0] sm:$0xff] %vm3410, %v3280
      %3538 = vst.msk [vmem:[%s211 + $0x3f8] sm:$0xff] %vm3410, %v3281
      %3539 = vst.msk [vmem:[%s211 + $0x400] sm:$0xff] %vm3410, %v3282
      %3540 = vst.msk [vmem:[%s211 + $0x408] sm:$0xff] %vm3410, %v3283
      %3541 = vst.msk [vmem:[%s211 + $0x410] sm:$0xff] %vm3410, %v3284
      %3542 = vst.msk [vmem:[%s211 + $0x418] sm:$0xff] %vm3410, %v3285
      %3543 = vst.msk [vmem:[%s211 + $0x420] sm:$0xff] %vm3410, %v3286
      %3544 = vst.msk [vmem:[%s211 + $0x428] sm:$0xff] %vm3410, %v3287
      %3545 = vst.msk [vmem:[%s211 + $0x430] sm:$0xff] %vm3410, %v3288
      %3546 = vst.msk [vmem:[%s211 + $0x438] sm:$0xff] %vm3410, %v3289
      %3547 = vst.msk [vmem:[%s211 + $0x440] sm:$0xff] %vm3410, %v3290
      %3548 = vst.msk [vmem:[%s211 + $0x448] sm:$0xff] %vm3410, %v3291
      %3549 = vst.msk [vmem:[%s211 + $0x450] sm:$0xff] %vm3410, %v3292
      %3550 = vst.msk [vmem:[%s211 + $0x458] sm:$0xff] %vm3410, %v3293
      %3551 = vst.msk [vmem:[%s211 + $0x460] sm:$0xff] %vm3410, %v3294
      %3552 = vst.msk [vmem:[%s211 + $0x468] sm:$0xff] %vm3410, %v3295
      %3553 = vst.msk [vmem:[%s211 + $0x470] sm:$0xff] %vm3410, %v3296
      %3554 = vst.msk [vmem:[%s211 + $0x478] sm:$0xff] %vm3410, %v3297
      %3555 = vst.msk [vmem:[%s211 + $0x480] sm:$0xff] %vm3410, %v3298
      %3556 = vst.msk [vmem:[%s211 + $0x488] sm:$0xff] %vm3410, %v3299
      %3557 = vst.msk [vmem:[%s211 + $0x490] sm:$0xff] %vm3410, %v3300
      %3558 = vst.msk [vmem:[%s211 + $0x498] sm:$0xff] %vm3410, %v3301
      %3559 = vst.msk [vmem:[%s211 + $0x4a0] sm:$0xff] %vm3410, %v3302
      %3560 = vst.msk [vmem:[%s211 + $0x4a8] sm:$0xff] %vm3410, %v3303
      %3561 = vst.msk [vmem:[%s211 + $0x4b0] sm:$0xff] %vm3410, %v3304
      %3562 = vst.msk [vmem:[%s211 + $0x4b8] sm:$0xff] %vm3410, %v3305
      %3563 = vst.msk [vmem:[%s211 + $0x4c0] sm:$0xff] %vm3410, %v3306
      %3564 = vst.msk [vmem:[%s211 + $0x4c8] sm:$0xff] %vm3410, %v3307
      %3565 = vst.msk [vmem:[%s211 + $0x4d0] sm:$0xff] %vm3410, %v3308
      %3566 = vst.msk [vmem:[%s211 + $0x4d8] sm:$0xff] %vm3410, %v3309
      %3567 = vst.msk [vmem:[%s211 + $0x4e0] sm:$0xff] %vm3410, %v3310
      %3568 = vst.msk [vmem:[%s211 + $0x4e8] sm:$0xff] %vm3410, %v3311
      %3569 = vst.msk [vmem:[%s211 + $0x4f0] sm:$0xff] %vm3410, %v3312
      %3570 = vst.msk [vmem:[%s211 + $0x4f8] sm:$0xff] %vm3410, %v3313
      %3571 = vst.msk [vmem:[%s211 + $0x500] sm:$0xff] %vm3410, %v3314
      %3572 = vst.msk [vmem:[%s211 + $0x508] sm:$0xff] %vm3410, %v3315
      %3573 = vst.msk [vmem:[%s211 + $0x510] sm:$0xff] %vm3410, %v3316
      %3574 = vst.msk [vmem:[%s211 + $0x518] sm:$0xff] %vm3410, %v3317
      %3575 = vst.msk [vmem:[%s211 + $0x520] sm:$0xff] %vm3410, %v3318
      %3576 = vst.msk [vmem:[%s211 + $0x528] sm:$0xff] %vm3410, %v3319
      %3577 = vst.msk [vmem:[%s211 + $0x530] sm:$0xff] %vm3410, %v3320
      %3578 = vst.msk [vmem:[%s211 + $0x538] sm:$0xff] %vm3410, %v3321
      %3579 = vst.msk [vmem:[%s211 + $0x540] sm:$0xff] %vm3410, %v3322
      %3580 = vst.msk [vmem:[%s211 + $0x548] sm:$0xff] %vm3410, %v3323
      %3581 = vst.msk [vmem:[%s211 + $0x550] sm:$0xff] %vm3410, %v3324
      %3582 = vst.msk [vmem:[%s211 + $0x558] sm:$0xff] %vm3410, %v3325
      %3583 = vst.msk [vmem:[%s211 + $0x560] sm:$0xff] %vm3410, %v3326
      %3584 = vst.msk [vmem:[%s211 + $0x568] sm:$0xff] %vm3410, %v3327
      %3585 = vst.msk [vmem:[%s211 + $0x570] sm:$0xff] %vm3410, %v3328
      %3586 = vst.msk [vmem:[%s211 + $0x578] sm:$0xff] %vm3410, %v3329
      %3587 = vst.msk [vmem:[%s211 + $0x580] sm:$0xff] %vm3410, %v3330
      %3588 = vst.msk [vmem:[%s211 + $0x588] sm:$0xff] %vm3410, %v3331
      %3589 = vst.msk [vmem:[%s211 + $0x590] sm:$0xff] %vm3410, %v3332
      %3590 = vst.msk [vmem:[%s211 + $0x598] sm:$0xff] %vm3410, %v3333
      %3591 = vst.msk [vmem:[%s211 + $0x5a0] sm:$0xff] %vm3410, %v3334
      %3592 = vst.msk [vmem:[%s211 + $0x5a8] sm:$0xff] %vm3410, %v3335
      %3593 = vst.msk [vmem:[%s211 + $0x5b0] sm:$0xff] %vm3410, %v3336
      %3594 = vst.msk [vmem:[%s211 + $0x5b8] sm:$0xff] %vm3410, %v3337
      %3595 = vst.msk [vmem:[%s211 + $0x5c0] sm:$0xff] %vm3410, %v3338
      %3596 = vst.msk [vmem:[%s211 + $0x5c8] sm:$0xff] %vm3410, %v3339
      %3597 = vst.msk [vmem:[%s211 + $0x5d0] sm:$0xff] %vm3410, %v3340
      %3598 = vst.msk [vmem:[%s211 + $0x5d8] sm:$0xff] %vm3410, %v3341
      %3599 = vst.msk [vmem:[%s211 + $0x5e0] sm:$0xff] %vm3410, %v3342
      %3600 = vst.msk [vmem:[%s211 + $0x5e8] sm:$0xff] %vm3410, %v3343
      %3601 = vst.msk [vmem:[%s211 + $0x5f0] sm:$0xff] %vm3410, %v3344
      %3602 = vst.msk [vmem:[%s211 + $0x5f8] sm:$0xff] %vm3410, %v3345
      %3603 = vst.msk [vmem:[%s211 + $0x600] sm:$0xff] %vm3410, %v3346
      %3604 = vst.msk [vmem:[%s211 + $0x608] sm:$0xff] %vm3410, %v3347
      %3605 = vst.msk [vmem:[%s211 + $0x610] sm:$0xff] %vm3410, %v3348
      %3606 = vst.msk [vmem:[%s211 + $0x618] sm:$0xff] %vm3410, %v3349
      %3607 = vst.msk [vmem:[%s211 + $0x620] sm:$0xff] %vm3410, %v3350
      %3608 = vst.msk [vmem:[%s211 + $0x628] sm:$0xff] %vm3410, %v3351
      %3609 = vst.msk [vmem:[%s211 + $0x630] sm:$0xff] %vm3410, %v3352
      %3610 = vst.msk [vmem:[%s211 + $0x638] sm:$0xff] %vm3410, %v3353
      %3611 = vst.msk [vmem:[%s211 + $0x640] sm:$0xff] %vm3410, %v3354
      %3612 = vst.msk [vmem:[%s211 + $0x648] sm:$0xff] %vm3410, %v3355
      %3613 = vst.msk [vmem:[%s211 + $0x650] sm:$0xff] %vm3410, %v3356
      %3614 = vst.msk [vmem:[%s211 + $0x658] sm:$0xff] %vm3410, %v3357
      %3615 = vst.msk [vmem:[%s211 + $0x660] sm:$0xff] %vm3410, %v3358
      %3616 = vst.msk [vmem:[%s211 + $0x668] sm:$0xff] %vm3410, %v3359
      %3617 = vst.msk [vmem:[%s211 + $0x670] sm:$0xff] %vm3410, %v3360
      %3618 = vst.msk [vmem:[%s211 + $0x678] sm:$0xff] %vm3410, %v3361
      %3619 = vst.msk [vmem:[%s211 + $0x680] sm:$0xff] %vm3410, %v3362
      %3620 = vst.msk [vmem:[%s211 + $0x688] sm:$0xff] %vm3410, %v3363
      %3621 = vst.msk [vmem:[%s211 + $0x690] sm:$0xff] %vm3410, %v3364
      %3622 = vst.msk [vmem:[%s211 + $0x698] sm:$0xff] %vm3410, %v3365
      %3623 = vst.msk [vmem:[%s211 + $0x6a0] sm:$0xff] %vm3410, %v3366
      %3624 = vst.msk [vmem:[%s211 + $0x6a8] sm:$0xff] %vm3410, %v3367
      %3625 = vst.msk [vmem:[%s211 + $0x6b0] sm:$0xff] %vm3410, %v3368
      %3626 = vst.msk [vmem:[%s211 + $0x6b8] sm:$0xff] %vm3410, %v3369
      %3627 = vst.msk [vmem:[%s211 + $0x6c0] sm:$0xff] %vm3410, %v3370
      %3628 = vst.msk [vmem:[%s211 + $0x6c8] sm:$0xff] %vm3410, %v3371
      %3629 = vst.msk [vmem:[%s211 + $0x6d0] sm:$0xff] %vm3410, %v3372
      %3630 = vst.msk [vmem:[%s211 + $0x6d8] sm:$0xff] %vm3410, %v3373
      %3631 = vst.msk [vmem:[%s211 + $0x6e0] sm:$0xff] %vm3410, %v3374
      %3632 = vst.msk [vmem:[%s211 + $0x6e8] sm:$0xff] %vm3410, %v3375
      %3633 = vst.msk [vmem:[%s211 + $0x6f0] sm:$0xff] %vm3410, %v3376
      %3634 = vst.msk [vmem:[%s211 + $0x6f8] sm:$0xff] %vm3410, %v3377
      %3635 = vst.msk [vmem:[%s211 + $0x700] sm:$0xff] %vm3410, %v3378
      %3636 = vst.msk [vmem:[%s211 + $0x708] sm:$0xff] %vm3410, %v3379
      %3637 = vst.msk [vmem:[%s211 + $0x710] sm:$0xff] %vm3410, %v3380
      %3638 = vst.msk [vmem:[%s211 + $0x718] sm:$0xff] %vm3410, %v3381
      %3639 = vst.msk [vmem:[%s211 + $0x720] sm:$0xff] %vm3410, %v3382
      %3640 = vst.msk [vmem:[%s211 + $0x728] sm:$0xff] %vm3410, %v3383
      %3641 = vst.msk [vmem:[%s211 + $0x730] sm:$0xff] %vm3410, %v3384
      %3642 = vst.msk [vmem:[%s211 + $0x738] sm:$0xff] %vm3410, %v3385
      %3643 = vst.msk [vmem:[%s211 + $0x740] sm:$0xff] %vm3410, %v3386
      %3644 = vst.msk [vmem:[%s211 + $0x748] sm:$0xff] %vm3410, %v3387
      %3645 = vst.msk [vmem:[%s211 + $0x750] sm:$0xff] %vm3410, %v3388
      %3646 = vst.msk [vmem:[%s211 + $0x758] sm:$0xff] %vm3410, %v3389
      %3647 = vst.msk [vmem:[%s211 + $0x760] sm:$0xff] %vm3410, %v3390
      %3648 = vst.msk [vmem:[%s211 + $0x768] sm:$0xff] %vm3410, %v3391
      %3649 = vst.msk [vmem:[%s211 + $0x770] sm:$0xff] %vm3410, %v3392
      %3650 = vst.msk [vmem:[%s211 + $0x778] sm:$0xff] %vm3410, %v3393
      %3651 = vst.msk [vmem:[%s211 + $0x780] sm:$0xff] %vm3410, %v3394
      %3652 = vst.msk [vmem:[%s211 + $0x788] sm:$0xff] %vm3410, %v3395
      %3653 = vst.msk [vmem:[%s211 + $0x790] sm:$0xff] %vm3410, %v3396
      %3654 = vst.msk [vmem:[%s211 + $0x798] sm:$0xff] %vm3410, %v3397
      %3655 = vst.msk [vmem:[%s211 + $0x7a0] sm:$0xff] %vm3410, %v3398
      %3656 = vst.msk [vmem:[%s211 + $0x7a8] sm:$0xff] %vm3410, %v3399
      %3657 = vst.msk [vmem:[%s211 + $0x7b0] sm:$0xff] %vm3410, %v3400
      %3658 = vst.msk [vmem:[%s211 + $0x7b8] sm:$0xff] %vm3410, %v3401
      %3659 = vst.msk [vmem:[%s211 + $0x7c0] sm:$0xff] %vm3410, %v3402
      %3660 = vst.msk [vmem:[%s211 + $0x7c8] sm:$0xff] %vm3410, %v3403
      %3661 = vst.msk [vmem:[%s211 + $0x7d0] sm:$0xff] %vm3410, %v3404
      %3662 = vst.msk [vmem:[%s211 + $0x7d8] sm:$0xff] %vm3410, %v3405
      %3663 = vst.msk [vmem:[%s211 + $0x7e0] sm:$0xff] %vm3410, %v3406
      %3664 = vst.msk [vmem:[%s211 + $0x7e8] sm:$0xff] %vm3410, %v3407
      %3665 = vst.msk [vmem:[%s211 + $0x7f0] sm:$0xff] %vm3410, %v3408
      %3666 = vst.msk [vmem:[%s211 + $0x7f8] sm:$0xff] %vm3410, %v3409
      %s3667 = smul.u32 256, %s19
      %p3668 = scmp.lt.s32.totalorder %s18, 1
      %s3669 = scalar_select %p3668, %s18, 1
      %p3670 = scmp.lt.s32.totalorder %s3667, 511
      %s3671 = scalar_select %p3670, %s3667, 511
      %s3672 = smul.addr %s3669, 512
      %s3673 = sadd.s32 %s3671, %s3672
      %s3674 = smul.addr %s3673, 8
      %s3675 = scalar_lea.vmem %s3, %s3674
      // Predicated region
      $region33: #{image_encoder_forward.2} parent=31 // pred_check
        %p3676 = pneg %p116
      $region34: #{image_encoder_forward.2} parent=31 // pred_check_branch
        %3678 = sbr.rel (%p3676) target = $region36
      $region35: #{image_encoder_forward.2} parent=31 // pred_region
        %s3679 = smul.u32 256, %s19
      $region36: #{image_encoder_forward.2} parent=31 // pred_fallthru
        _
    $region32: #{image_encoder_forward.2} parent=5 // pred_fallthru
      _
    %p3680 = scmp.le.s32.totalorder 2, %s9
    // Predicated region
    $region37: #{image_encoder_forward.2} parent=5 // pred_check
      %p3681 = pneg %p3680
    $region38: #{image_encoder_forward.2} parent=5 // pred_check_branch
      %3683 = sbr.rel (%p3681) target = $region40
    $region39: #{image_encoder_forward.2} parent=5 // pred_region
      %s3684 = ssub.s32 %s9, 2
      // Predicated region
      $region41: #{image_encoder_forward.2} parent=39 // pred_check
        %p3685 = pneg %p122
      $region42: #{image_encoder_forward.2} parent=39 // pred_check_branch
        %3687 = sbr.rel (%p3685) target = $region44
      $region43: #{image_encoder_forward.2} parent=39 // pred_region
        %s3688 = smul.u32 256, %s21
        %p3689 = scmp.lt.s32.totalorder %s20, 1
        %s3690 = scalar_select %p3689, %s20, 1
        %p3691 = scmp.lt.s32.totalorder %s3688, 511
        %s3692 = scalar_select %p3691, %s3688, 511
        %s3693 = smul.addr %s3690, 512
        %s3694 = sadd.s32 %s3692, %s3693
        %s3695 = smul.addr %s3694, 8
        %s3696 = scalar_lea.vmem %s3, %s3695
      $region44: #{image_encoder_forward.2} parent=39 // pred_fallthru
        _
    $region40: #{image_encoder_forward.2} parent=5 // pred_fallthru
      _
  $region6: #{image_encoder_forward.2} parent=0 // loop_footer
    %s13 = sadd.s32 1, %s9
  $region7: #{image_encoder_forward.2} parent=0 // loop_footer_branch
    %8 = sbr.rel target = $region3
  $region8: #{image_encoder_forward.2} parent=0 // loop_exit
    _

// kernel: image_encoder_forward.3
$region0: #{image_encoder_forward.3}
  #allocation0 [shape = 'u32[]', space=smem, size = 0x4, offset = 0x4, fixed_abs, tag = 'smem constant byte address 0x4 - core index']
  #allocation1 [shape = 'u32[144,128]{1,0:T(1,128)}', space=vmem, size = 0x12000, scoped, tag = 'internal scratch']
  #allocation2 [shape = 'f32[4356,8]{1,0:T(8,128)}', space=vmem, size = 0x221000, scoped, tag = 'scratch operand']
  #allocation3 [shape = 'f32[1156,16]{1,0:T(8,128)}', space=vmem, size = 0x91000, scoped, tag = 'scratch operand']
  #allocation4 [shape = 'f32[324,32]{1,0:T(8,128)}', space=vmem, size = 0x29000, scoped, tag = 'scratch operand']
  #allocation5 [shape = 'f32[100,64]{1,0:T(8,128)}', space=vmem, size = 0xd000, scoped, tag = 'scratch operand']
  #allocation6 [shape = 'f32[16,64]{1,0:T(8,128)}', space=vmem, size = 0x2000, scoped, tag = 'scratch operand']
  %s0 = inlined_call_operand.vmem [shape: f32[2,4096,8], index: 0, kind: input, shape index: {}]
  %s1 = inlined_call_operand.vmem [shape: f32[72,16], index: 1, kind: input, shape index: {}]
  %s2 = inlined_call_operand.vmem [shape: f32[1,16], index: 2, kind: input, shape index: {}]
  %s3 = inlined_call_operand.vmem [shape: f32[144,32], index: 3, kind: input, shape index: {}]
  %s4 = inlined_call_operand.vmem [shape: f32[1,32], index: 4, kind: input, shape index: {}]
  %s5 = inlined_call_operand.vmem [shape: f32[288,64], index: 5, kind: input, shape index: {}]
  %s6 = inlined_call_operand.vmem [shape: f32[1,64], index: 6, kind: input, shape index: {}]
  %s7 = inlined_call_operand.vmem [shape: f32[576,64], index: 7, kind: input, shape index: {}]
  %s8 = inlined_call_operand.vmem [shape: f32[1,64], index: 8, kind: input, shape index: {}]
  %s9 = inlined_call_operand.vmem [shape: f32[1024,16], index: 9, kind: input, shape index: {}]
  %s10 = inlined_call_operand.vmem [shape: f32[1,16], index: 10, kind: input, shape index: {}]
  %s11 = inlined_call_operand.hbm [shape: f32[2,1,16], index: 11, kind: output, shape index: {}]
  %s12 = sld [smem:[#allocation0]]
  $region112: #{image_encoder_forward.3} parent=0
    _
  %s14 = ssub.s32 1, %s12
  %s15 = scalar_select 0, %s14, %s12
  $region1: #{image_encoder_forward.3} parent=0
    #allocation7 [shape = 'u8[1024]{0}', space=vmem, size = 0x400, scoped, tag = 'output window, operand 0']
    #allocation8 [shape = 's32[2]{0}', space=sflag, size = 0x8, scoped, tag = 'scoped memory for image_encoder_forward.3']
    %16 = vsyncpa [#allocation8], 0
    %s17 = scalar_lea.sflag [#allocation8], 1
    %18 = vsyncpa %s17, 0
    loop: start=0, step=1, limit=4
    $region2: #{image_encoder_forward.3} parent=1 // loop_pre_header
      _
    $region3: #{image_encoder_forward.3} parent=1 // loop_header
      %s20 = sphi 0, %s24
      %p21 = scmp.ge.s32.totalorder %s20, 4
      %s30 = sphi 0, %s32
      %s33 = sphi 0, %s30
      %s34 = sphi 0, %s33
      %s50 = sphi 0, %s34
      %s54 = sphi 0, %s54
      %s56 = sphi 0, %s54
      %s57 = sphi 0, %s56
      %s71 = sphi 0, %s57
      %s75 = sphi 0, %s75
      %s77 = sphi 0, %s75
      %s78 = sphi 0, %s77
      %s92 = sphi 0, %s78
      %s96 = sphi 0, %s96
      %s98 = sphi 0, %s96
      %s99 = sphi 0, %s98
      %s113 = sphi 0, %s99
      %s117 = sphi 0, %s117
      %s119 = sphi 0, %s117
      %s120 = sphi 0, %s119
      %s134 = sphi 0, %s120
      %s138 = sphi 0, %s138
      %s140 = sphi 0, %s138
      %s141 = sphi 0, %s140
      %s155 = sphi 0, %s141
      %s159 = sphi 0, %s159
      %s161 = sphi 0, %s159
      %s162 = sphi 0, %s161
      %s176 = sphi 0, %s162
      %s180 = sphi 0, %s180
      %s182 = sphi 0, %s180
      %s183 = sphi 0, %s182
      %s197 = sphi 0, %s183
      %s201 = sphi 0, %s201
      %s203 = sphi 0, %s201
      %s204 = sphi 0, %s203
      %s218 = sphi 0, %s204
      %s222 = sphi 0, %s222
      %s224 = sphi 0, %s222
      %s225 = sphi 0, %s224
      %s239 = sphi 0, %s225
      %s243 = sphi 0, %s243
      %s245 = sphi 0, %s243
      %s246 = sphi 0, %s245
      %s260 = sphi 0, %s246
      %s266 = sphi 0, %s268
      %s269 = sphi 0, %s266
      %s270 = sphi 0, %s269
      %s286 = sphi 0, %s270
    $region4: #{image_encoder_forward.3} parent=1 // loop_header_branch
      %23 = sbr.rel (%p21) target = $region8
    $region5: #{image_encoder_forward.3} parent=1 // loop_body
      %s25 = ssub.s32 %s20, 1
      %s26 = ssub.s32 %s20, 2
      %s27 = sadd.s32 %s20, 1
      %s28 = ssub.s32 %s20, %s27
      %p29 = scmp.eq.s32.totalorder %s28, 0
      %s31 = sadd.s32 %s30, 1
      %s32 = scalar_select %p29, %s30, %s31
      %p35 = pneg %p29
      %p36 = scmp.eq.s32.totalorder %s20, 1
      %p37 = por %p35, %p36
      %p38 = scmp.ne.s32.totalorder %s30, %s33
      %p39 = scmp.eq.s32.totalorder %s20, 0
      %p40 = por %p38, %p39
      %p41 = scmp.ne.s32.totalorder %s30, %s33
      %p42 = scmp.eq.s32.totalorder %s25, 1
      %p43 = por %p41, %p42
      %p44 = scmp.ne.s32.totalorder %s33, %s34
      %p45 = scmp.eq.s32.totalorder %s25, 0
      %p46 = por %p44, %p45
      %p47 = scmp.ne.s32.totalorder %s33, %s34
      %p48 = scmp.eq.s32.totalorder %s26, 1
      %p49 = por %p47, %p48
      %p51 = scmp.ne.s32.totalorder %s34, %s50
      %p52 = scmp.eq.s32.totalorder %s26, 0
      %p53 = por %p51, %p52
      %s55 = sadd.s32 %s54, 1
      %p58 = scmp.eq.s32.totalorder %s20, 1
      %p59 = scmp.ne.s32.totalorder %s54, %s56
      %p60 = scmp.eq.s32.totalorder %s20, 0
      %p61 = por %p59, %p60
      %p62 = scmp.ne.s32.totalorder %s54, %s56
      %p63 = scmp.eq.s32.totalorder %s25, 1
      %p64 = por %p62, %p63
      %p65 = scmp.ne.s32.totalorder %s56, %s57
      %p66 = scmp.eq.s32.totalorder %s25, 0
      %p67 = por %p65, %p66
      %p68 = scmp.ne.s32.totalorder %s56, %s57
      %p69 = scmp.eq.s32.totalorder %s26, 1
      %p70 = por %p68, %p69
      %p72 = scmp.ne.s32.totalorder %s57, %s71
      %p73 = scmp.eq.s32.totalorder %s26, 0
      %p74 = por %p72, %p73
      %s76 = sadd.s32 %s75, 1
      %p79 = scmp.eq.s32.totalorder %s20, 1
      %p80 = scmp.ne.s32.totalorder %s75, %s77
      %p81 = scmp.eq.s32.totalorder %s20, 0
      %p82 = por %p80, %p81
      %p83 = scmp.ne.s32.totalorder %s75, %s77
      %p84 = scmp.eq.s32.totalorder %s25, 1
      %p85 = por %p83, %p84
      %p86 = scmp.ne.s32.totalorder %s77, %s78
      %p87 = scmp.eq.s32.totalorder %s25, 0
      %p88 = por %p86, %p87
      %p89 = scmp.ne.s32.totalorder %s77, %s78
      %p90 = scmp.eq.s32.totalorder %s26, 1
      %p91 = por %p89, %p90
      %p93 = scmp.ne.s32.totalorder %s78, %s92
      %p94 = scmp.eq.s32.totalorder %s26, 0
      %p95 = por %p93, %p94
      %s97 = sadd.s32 %s96, 1
      %p100 = scmp.eq.s32.totalorder %s20, 1
      %p101 = scmp.ne.s32.totalorder %s96, %s98
      %p102 = scmp.eq.s32.totalorder %s20, 0
      %p103 = por %p101, %p102
      %p104 = scmp.ne.s32.totalorder %s96, %s98
      %p105 = scmp.eq.s32.totalorder %s25, 1
      %p106 = por %p104, %p105
      %p107 = scmp.ne.s32.totalorder %s98, %s99
      %p108 = scmp.eq.s32.totalorder %s25, 0
      %p109 = por %p107, %p108
      %p110 = scmp.ne.s32.totalorder %s98, %s99
      %p111 = scmp.eq.s32.totalorder %s26, 1
      %p112 = por %p110, %p111
      %p114 = scmp.ne.s32.totalorder %s99, %s113
      %p115 = scmp.eq.s32.totalorder %s26, 0
      %p116 = por %p114, %p115
      %s118 = sadd.s32 %s117, 1
      %p121 = scmp.eq.s32.totalorder %s20, 1
      %p122 = scmp.ne.s32.totalorder %s117, %s119
      %p123 = scmp.eq.s32.totalorder %s20, 0
      %p124 = por %p122, %p123
      %p125 = scmp.ne.s32.totalorder %s117, %s119
      %p126 = scmp.eq.s32.totalorder %s25, 1
      %p127 = por %p125, %p126
      %p128 = scmp.ne.s32.totalorder %s119, %s120
      %p129 = scmp.eq.s32.totalorder %s25, 0
      %p130 = por %p128, %p129
      %p131 = scmp.ne.s32.totalorder %s119, %s120
      %p132 = scmp.eq.s32.totalorder %s26, 1
      %p133 = por %p131, %p132
      %p135 = scmp.ne.s32.totalorder %s120, %s134
      %p136 = scmp.eq.s32.totalorder %s26, 0
      %p137 = por %p135, %p136
      %s139 = sadd.s32 %s138, 1
      %p142 = scmp.eq.s32.totalorder %s20, 1
      %p143 = scmp.ne.s32.totalorder %s138, %s140
      %p144 = scmp.eq.s32.totalorder %s20, 0
      %p145 = por %p143, %p144
      %p146 = scmp.ne.s32.totalorder %s138, %s140
      %p147 = scmp.eq.s32.totalorder %s25, 1
      %p148 = por %p146, %p147
      %p149 = scmp.ne.s32.totalorder %s140, %s141
      %p150 = scmp.eq.s32.totalorder %s25, 0
      %p151 = por %p149, %p150
      %p152 = scmp.ne.s32.totalorder %s140, %s141
      %p153 = scmp.eq.s32.totalorder %s26, 1
      %p154 = por %p152, %p153
      %p156 = scmp.ne.s32.totalorder %s141, %s155
      %p157 = scmp.eq.s32.totalorder %s26, 0
      %p158 = por %p156, %p157
      %s160 = sadd.s32 %s159, 1
      %p163 = scmp.eq.s32.totalorder %s20, 1
      %p164 = scmp.ne.s32.totalorder %s159, %s161
      %p165 = scmp.eq.s32.totalorder %s20, 0
      %p166 = por %p164, %p165
      %p167 = scmp.ne.s32.totalorder %s159, %s161
      %p168 = scmp.eq.s32.totalorder %s25, 1
      %p169 = por %p167, %p168
      %p170 = scmp.ne.s32.totalorder %s161, %s162
      %p171 = scmp.eq.s32.totalorder %s25, 0
      %p172 = por %p170, %p171
      %p173 = scmp.ne.s32.totalorder %s161, %s162
      %p174 = scmp.eq.s32.totalorder %s26, 1
      %p175 = por %p173, %p174
      %p177 = scmp.ne.s32.totalorder %s162, %s176
      %p178 = scmp.eq.s32.totalorder %s26, 0
      %p179 = por %p177, %p178
      %s181 = sadd.s32 %s180, 1
      %p184 = scmp.eq.s32.totalorder %s20, 1
      %p185 = scmp.ne.s32.totalorder %s180, %s182
      %p186 = scmp.eq.s32.totalorder %s20, 0
      %p187 = por %p185, %p186
      %p188 = scmp.ne.s32.totalorder %s180, %s182
      %p189 = scmp.eq.s32.totalorder %s25, 1
      %p190 = por %p188, %p189
      %p191 = scmp.ne.s32.totalorder %s182, %s183
      %p192 = scmp.eq.s32.totalorder %s25, 0
      %p193 = por %p191, %p192
      %p194 = scmp.ne.s32.totalorder %s182, %s183
      %p195 = scmp.eq.s32.totalorder %s26, 1
      %p196 = por %p194, %p195
      %p198 = scmp.ne.s32.totalorder %s183, %s197
      %p199 = scmp.eq.s32.totalorder %s26, 0
      %p200 = por %p198, %p199
      %s202 = sadd.s32 %s201, 1
      %p205 = scmp.eq.s32.totalorder %s20, 1
      %p206 = scmp.ne.s32.totalorder %s201, %s203
      %p207 = scmp.eq.s32.totalorder %s20, 0
      %p208 = por %p206, %p207
      %p209 = scmp.ne.s32.totalorder %s201, %s203
      %p210 = scmp.eq.s32.totalorder %s25, 1
      %p211 = por %p209, %p210
      %p212 = scmp.ne.s32.totalorder %s203, %s204
      %p213 = scmp.eq.s32.totalorder %s25, 0
      %p214 = por %p212, %p213
      %p215 = scmp.ne.s32.totalorder %s203, %s204
      %p216 = scmp.eq.s32.totalorder %s26, 1
      %p217 = por %p215, %p216
      %p219 = scmp.ne.s32.totalorder %s204, %s218
      %p220 = scmp.eq.s32.totalorder %s26, 0
      %p221 = por %p219, %p220
      %s223 = sadd.s32 %s222, 1
      %p226 = scmp.eq.s32.totalorder %s20, 1
      %p227 = scmp.ne.s32.totalorder %s222, %s224
      %p228 = scmp.eq.s32.totalorder %s20, 0
      %p229 = por %p227, %p228
      %p230 = scmp.ne.s32.totalorder %s222, %s224
      %p231 = scmp.eq.s32.totalorder %s25, 1
      %p232 = por %p230, %p231
      %p233 = scmp.ne.s32.totalorder %s224, %s225
      %p234 = scmp.eq.s32.totalorder %s25, 0
      %p235 = por %p233, %p234
      %p236 = scmp.ne.s32.totalorder %s224, %s225
      %p237 = scmp.eq.s32.totalorder %s26, 1
      %p238 = por %p236, %p237
      %p240 = scmp.ne.s32.totalorder %s225, %s239
      %p241 = scmp.eq.s32.totalorder %s26, 0
      %p242 = por %p240, %p241
      %s244 = sadd.s32 %s243, 1
      %p247 = scmp.eq.s32.totalorder %s20, 1
      %p248 = scmp.ne.s32.totalorder %s243, %s245
      %p249 = scmp.eq.s32.totalorder %s20, 0
      %p250 = por %p248, %p249
      %p251 = scmp.ne.s32.totalorder %s243, %s245
      %p252 = scmp.eq.s32.totalorder %s25, 1
      %p253 = por %p251, %p252
      %p254 = scmp.ne.s32.totalorder %s245, %s246
      %p255 = scmp.eq.s32.totalorder %s25, 0
      %p256 = por %p254, %p255
      %p257 = scmp.ne.s32.totalorder %s245, %s246
      %p258 = scmp.eq.s32.totalorder %s26, 1
      %p259 = por %p257, %p258
      %p261 = scmp.ne.s32.totalorder %s246, %s260
      %p262 = scmp.eq.s32.totalorder %s26, 0
      %p263 = por %p261, %p262
      %s264 = ssub.s32 %s20, %s27
      %p265 = scmp.eq.s32.totalorder %s264, 0
      %s267 = sadd.s32 %s266, 1
      %s268 = scalar_select %p265, %s266, %s267
      %p271 = pneg %p265
      %p272 = scmp.eq.s32.totalorder %s20, 1
      %p273 = por %p271, %p272
      %p274 = scmp.ne.s32.totalorder %s266, %s269
      %p275 = scmp.eq.s32.totalorder %s20, 0
      %p276 = por %p274, %p275
      %p277 = scmp.ne.s32.totalorder %s266, %s269
      %p278 = scmp.eq.s32.totalorder %s25, 1
      %p279 = por %p277, %p278
      %p280 = scmp.ne.s32.totalorder %s269, %s270
      %p281 = scmp.eq.s32.totalorder %s25, 0
      %p282 = por %p280, %p281
      %p283 = scmp.ne.s32.totalorder %s269, %s270
      %p284 = scmp.eq.s32.totalorder %s26, 1
      %p285 = por %p283, %p284
      %p287 = scmp.ne.s32.totalorder %s270, %s286
      %p288 = scmp.eq.s32.totalorder %s26, 0
      %p289 = por %p287, %p288
      %p290 = scmp.le.s32.totalorder 1, %s20
      %p291 = scmp.lt.s32.totalorder %s20, 3
      %p292 = pnand %p290, %p291
      %p293 = pneg %p292
      // Predicated region
      $region9: #{image_encoder_forward.3} parent=5 // pred_check
        _
      $region10: #{image_encoder_forward.3} parent=5 // pred_check_branch
        %295 = sbr.rel (%p292) target = $region12
      $region11: #{image_encoder_forward.3} parent=5 // pred_region
        %s296 = ssub.s32 %s20, 1
        // Predicated region
        $region13: #{image_encoder_forward.3} parent=11 // pred_check
          %p297 = pneg %p67
        $region14: #{image_encoder_forward.3} parent=11 // pred_check_branch
          %299 = sbr.rel (%p297) target = $region16
        $region15: #{image_encoder_forward.3} parent=11 // pred_region
          _
        $region16: #{image_encoder_forward.3} parent=11 // pred_fallthru
          _
        // Predicated region
        $region17: #{image_encoder_forward.3} parent=11 // pred_check
          %p300 = pneg %p88
        $region18: #{image_encoder_forward.3} parent=11 // pred_check_branch
          %302 = sbr.rel (%p300) target = $region20
        $region19: #{image_encoder_forward.3} parent=11 // pred_region
          _
        $region20: #{image_encoder_forward.3} parent=11 // pred_fallthru
          _
        // Predicated region
        $region21: #{image_encoder_forward.3} parent=11 // pred_check
          %p303 = pneg %p109
        $region22: #{image_encoder_forward.3} parent=11 // pred_check_branch
          %305 = sbr.rel (%p303) target = $region24
        $region23: #{image_encoder_forward.3} parent=11 // pred_region
          _
        $region24: #{image_encoder_forward.3} parent=11 // pred_fallthru
          _
        // Predicated region
        $region25: #{image_encoder_forward.3} parent=11 // pred_check
          %p306 = pneg %p130
        $region26: #{image_encoder_forward.3} parent=11 // pred_check_branch
          %308 = sbr.rel (%p306) target = $region28
        $region27: #{image_encoder_forward.3} parent=11 // pred_region
          _
        $region28: #{image_encoder_forward.3} parent=11 // pred_fallthru
          _
        // Predicated region
        $region29: #{image_encoder_forward.3} parent=11 // pred_check
          %p309 = pneg %p151
        $region30: #{image_encoder_forward.3} parent=11 // pred_check_branch
          %311 = sbr.rel (%p309) target = $region32
        $region31: #{image_encoder_forward.3} parent=11 // pred_region
          _
        $region32: #{image_encoder_forward.3} parent=11 // pred_fallthru
          _
        // Predicated region
        $region33: #{image_encoder_forward.3} parent=11 // pred_check
          %p312 = pneg %p172
        $region34: #{image_encoder_forward.3} parent=11 // pred_check_branch
          %314 = sbr.rel (%p312) target = $region36
        $region35: #{image_encoder_forward.3} parent=11 // pred_region
          _
        $region36: #{image_encoder_forward.3} parent=11 // pred_fallthru
          _
        // Predicated region
        $region37: #{image_encoder_forward.3} parent=11 // pred_check
          %p315 = pneg %p193
        $region38: #{image_encoder_forward.3} parent=11 // pred_check_branch
          %317 = sbr.rel (%p315) target = $region40
        $region39: #{image_encoder_forward.3} parent=11 // pred_region
          _
        $region40: #{image_encoder_forward.3} parent=11 // pred_fallthru
          _
        // Predicated region
        $region41: #{image_encoder_forward.3} parent=11 // pred_check
          %p318 = pneg %p214
        $region42: #{image_encoder_forward.3} parent=11 // pred_check_branch
          %320 = sbr.rel (%p318) target = $region44
        $region43: #{image_encoder_forward.3} parent=11 // pred_region
          _
        $region44: #{image_encoder_forward.3} parent=11 // pred_fallthru
          _
        // Predicated region
        $region45: #{image_encoder_forward.3} parent=11 // pred_check
          %p321 = pneg %p235
        $region46: #{image_encoder_forward.3} parent=11 // pred_check_branch
          %323 = sbr.rel (%p321) target = $region48
        $region47: #{image_encoder_forward.3} parent=11 // pred_region
          _
        $region48: #{image_encoder_forward.3} parent=11 // pred_fallthru
          _
        // Predicated region
        $region49: #{image_encoder_forward.3} parent=11 // pred_check
          %p324 = pneg %p256
        $region50: #{image_encoder_forward.3} parent=11 // pred_check_branch
          %326 = sbr.rel (%p324) target = $region52
        $region51: #{image_encoder_forward.3} parent=11 // pred_region
          _
        $region52: #{image_encoder_forward.3} parent=11 // pred_fallthru
          _
      $region12: #{image_encoder_forward.3} parent=5 // pred_fallthru
        _
      %p327 = scmp.lt.s32.totalorder %s20, 2
      // Predicated region
      $region53: #{image_encoder_forward.3} parent=5 // pred_check
        %p328 = pneg %p327
      $region54: #{image_encoder_forward.3} parent=5 // pred_check_branch
        %330 = sbr.rel (%p328) target = $region56
      $region55: #{image_encoder_forward.3} parent=5 // pred_region
        // Predicated region
        $region57: #{image_encoder_forward.3} parent=55 // pred_check
          %p331 = pneg %p40
        $region58: #{image_encoder_forward.3} parent=55 // pred_check_branch
          %333 = sbr.rel (%p331) target = $region60
        $region59: #{image_encoder_forward.3} parent=55 // pred_region
          %p334 = scmp.lt.s32.totalorder %s20, 1
          %s335 = scalar_select %p334, %s20, 1
          %s336 = smul.addr %s335, 512
          %s337 = smul.addr %s336, 8
          %s338 = scalar_lea.vmem %s0, %s337
        $region60: #{image_encoder_forward.3} parent=55 // pred_fallthru
          _
      $region56: #{image_encoder_forward.3} parent=5 // pred_fallthru
        _
      %p339 = scmp.le.s32.totalorder 1, %s20
      %p340 = scmp.lt.s32.totalorder %s20, 3
      %p341 = pnand %p339, %p340
      %p342 = pneg %p341
      // Predicated region
      $region61: #{image_encoder_forward.3} parent=5 // pred_check
        _
      $region62: #{image_encoder_forward.3} parent=5 // pred_check_branch
        %344 = sbr.rel (%p341) target = $region64
      $region63: #{image_encoder_forward.3} parent=5 // pred_region
        %s345 = ssub.s32 %s20, 1
        %p346 = scmp.lt.s32.totalorder %s25, 1
        %s347 = scalar_select %p346, %s25, 1
        %s348 = smul.addr %s347, 512
        %s349 = smul.addr %s348, 8
        %s350 = scalar_lea.vmem %s0, %s349
        %p351 = pneg %p46
        %p352 = pneg %p43
        %p353 = pneg %p67
        %p354 = pneg %p64
        %p355 = pneg %p88
        %p356 = pneg %p85
        %p357 = pneg %p109
        %p358 = pneg %p106
        %p359 = pneg %p130
        %p360 = pneg %p127
        %p361 = pneg %p151
        %p362 = pneg %p148
        %p363 = pneg %p172
        %p364 = pneg %p169
        %p365 = pneg %p193
        %p366 = pneg %p190
        %p367 = pneg %p214
        %p368 = pneg %p211
        %p369 = pneg %p235
        %p370 = pneg %p232
        %p371 = pneg %p256
        %p372 = pneg %p253
        %p373 = pneg %p282
        %p374 = pneg %p279
        %s375 = sand.u32 %s269, 1
        %s376 = scalar_lea.sflag [#allocation8], %s375
        %s377 = sand.u32 %s269, 1
        %s378 = scalar_lea.vmem [#allocation7], %s377
        %p379 = scmp.lt.s32.totalorder %s25, 1
        %s380 = scalar_select %p379, %s25, 1
        %s381 = smul.addr %s380, 512
        %s382 = smul.addr %s381, 8
        %s383 = scalar_lea.vmem %s0, %s382
        %vm384 = vcmask 64512
        %385 = vst.msk [vmem:[#allocation2] sm:$0xff] %vm384, 0.0
        %386 = vst.msk [vmem:[#allocation2 + $0x8] sm:$0xff] %vm384, 0.0
        %387 = vst.msk [vmem:[#allocation2 + $0x10] sm:$0xff] %vm384, 0.0
        %388 = vst.msk [vmem:[#allocation2 + $0x18] sm:$0xff] %vm384, 0.0
        %389 = vst.msk [vmem:[#allocation2 + $0x20] sm:$0xff] %vm384, 0.0
        %390 = vst.msk [vmem:[#allocation2 + $0x28] sm:$0xff] %vm384, 0.0
        %391 = vst.msk [vmem:[#allocation2 + $0x30] sm:$0xff] %vm384, 0.0
        %392 = vst.msk [vmem:[#allocation2 + $0x38] sm:$0xff] %vm384, 0.0
        %393 = vst.msk [vmem:[#allocation2 + $0x40] sm:$0xff] %vm384, 0.0
        %394 = vst.msk [vmem:[#allocation2 + $0x48] sm:$0xff] %vm384, 0.0
        %395 = vst.msk [vmem:[#allocation2 + $0x50] sm:$0xff] %vm384, 0.0
        %396 = vst.msk [vmem:[#allocation2 + $0x58] sm:$0xff] %vm384, 0.0
        %397 = vst.msk [vmem:[#allocation2 + $0x60] sm:$0xff] %vm384, 0.0
        %398 = vst.msk [vmem:[#allocation2 + $0x68] sm:$0xff] %vm384, 0.0
        %399 = vst.msk [vmem:[#allocation2 + $0x70] sm:$0xff] %vm384, 0.0
        %400 = vst.msk [vmem:[#allocation2 + $0x78] sm:$0xff] %vm384, 0.0
        %401 = vst.msk [vmem:[#allocation2 + $0x80] sm:$0xff] %vm384, 0.0
        %402 = vst.msk [vmem:[#allocation2 + $0x88] sm:$0xff] %vm384, 0.0
        %403 = vst.msk [vmem:[#allocation2 + $0x90] sm:$0xff] %vm384, 0.0
        %404 = vst.msk [vmem:[#allocation2 + $0x98] sm:$0xff] %vm384, 0.0
        %405 = vst.msk [vmem:[#allocation2 + $0xa0] sm:$0xff] %vm384, 0.0
        %406 = vst.msk [vmem:[#allocation2 + $0xa8] sm:$0xff] %vm384, 0.0
        %407 = vst.msk [vmem:[#allocation2 + $0xb0] sm:$0xff] %vm384, 0.0
        %408 = vst.msk [vmem:[#allocation2 + $0xb8] sm:$0xff] %vm384, 0.0
        %409 = vst.msk [vmem:[#allocation2 + $0xc0] sm:$0xff] %vm384, 0.0
        %410 = vst.msk [vmem:[#allocation2 + $0xc8] sm:$0xff] %vm384, 0.0
        %411 = vst.msk [vmem:[#allocation2 + $0xd0] sm:$0xff] %vm384, 0.0
        %412 = vst.msk [vmem:[#allocation2 + $0xd8] sm:$0xff] %vm384, 0.0
        %413 = vst.msk [vmem:[#allocation2 + $0xe0] sm:$0xff] %vm384, 0.0
        %414 = vst.msk [vmem:[#allocation2 + $0xe8] sm:$0xff] %vm384, 0.0
        %415 = vst.msk [vmem:[#allocation2 + $0xf0] sm:$0xff] %vm384, 0.0
        %416 = vst.msk [vmem:[#allocation2 + $0xf8] sm:$0xff] %vm384, 0.0
        %417 = vst.msk [vmem:[#allocation2 + $0x100] sm:$0xff] %vm384, 0.0
        %418 = vst.msk [vmem:[#allocation2 + $0x108] sm:$0xff] %vm384, 0.0
        %419 = vst.msk [vmem:[#allocation2 + $0x110] sm:$0xff] %vm384, 0.0
        %420 = vst.msk [vmem:[#allocation2 + $0x118] sm:$0xff] %vm384, 0.0
        %421 = vst.msk [vmem:[#allocation2 + $0x120] sm:$0xff] %vm384, 0.0
        %422 = vst.msk [vmem:[#allocation2 + $0x128] sm:$0xff] %vm384, 0.0
        %423 = vst.msk [vmem:[#allocation2 + $0x130] sm:$0xff] %vm384, 0.0
        %424 = vst.msk [vmem:[#allocation2 + $0x138] sm:$0xff] %vm384, 0.0
        %425 = vst.msk [vmem:[#allocation2 + $0x140] sm:$0xff] %vm384, 0.0
        %426 = vst.msk [vmem:[#allocation2 + $0x148] sm:$0xff] %vm384, 0.0
        %427 = vst.msk [vmem:[#allocation2 + $0x150] sm:$0xff] %vm384, 0.0
        %428 = vst.msk [vmem:[#allocation2 + $0x158] sm:$0xff] %vm384, 0.0
        %429 = vst.msk [vmem:[#allocation2 + $0x160] sm:$0xff] %vm384, 0.0
        %430 = vst.msk [vmem:[#allocation2 + $0x168] sm:$0xff] %vm384, 0.0
        %431 = vst.msk [vmem:[#allocation2 + $0x170] sm:$0xff] %vm384, 0.0
        %432 = vst.msk [vmem:[#allocation2 + $0x178] sm:$0xff] %vm384, 0.0
        %433 = vst.msk [vmem:[#allocation2 + $0x180] sm:$0xff] %vm384, 0.0
        %434 = vst.msk [vmem:[#allocation2 + $0x188] sm:$0xff] %vm384, 0.0
        %435 = vst.msk [vmem:[#allocation2 + $0x190] sm:$0xff] %vm384, 0.0
        %436 = vst.msk [vmem:[#allocation2 + $0x198] sm:$0xff] %vm384, 0.0
        %437 = vst.msk [vmem:[#allocation2 + $0x1a0] sm:$0xff] %vm384, 0.0
        %438 = vst.msk [vmem:[#allocation2 + $0x1a8] sm:$0xff] %vm384, 0.0
        %439 = vst.msk [vmem:[#allocation2 + $0x1b0] sm:$0xff] %vm384, 0.0
        %440 = vst.msk [vmem:[#allocation2 + $0x1b8] sm:$0xff] %vm384, 0.0
        %441 = vst.msk [vmem:[#allocation2 + $0x1c0] sm:$0xff] %vm384, 0.0
        %442 = vst.msk [vmem:[#allocation2 + $0x1c8] sm:$0xff] %vm384, 0.0
        %443 = vst.msk [vmem:[#allocation2 + $0x1d0] sm:$0xff] %vm384, 0.0
        %444 = vst.msk [vmem:[#allocation2 + $0x1d8] sm:$0xff] %vm384, 0.0
        %445 = vst.msk [vmem:[#allocation2 + $0x1e0] sm:$0xff] %vm384, 0.0
        %446 = vst.msk [vmem:[#allocation2 + $0x1e8] sm:$0xff] %vm384, 0.0
        %447 = vst.msk [vmem:[#allocation2 + $0x1f0] sm:$0xff] %vm384, 0.0
        %448 = vst.msk [vmem:[#allocation2 + $0x1f8] sm:$0xff] %vm384, 0.0
        %449 = vst.msk [vmem:[#allocation2 + $0x200] sm:$0xff] %vm384, 0.0
        %450 = vst.msk [vmem:[#allocation2 + $0x208] sm:$0xff] %vm384, 0.0
        %451 = vst.msk [vmem:[#allocation2 + $0x210] sm:$0xff] %vm384, 0.0
        %452 = vst.msk [vmem:[#allocation2 + $0x218] sm:$0xff] %vm384, 0.0
        %453 = vst.msk [vmem:[#allocation2 + $0x220] sm:$0xff] %vm384, 0.0
        %454 = vst.msk [vmem:[#allocation2 + $0x228] sm:$0xff] %vm384, 0.0
        %455 = vst.msk [vmem:[#allocation2 + $0x230] sm:$0xff] %vm384, 0.0
        %456 = vst.msk [vmem:[#allocation2 + $0x238] sm:$0xff] %vm384, 0.0
        %457 = vst.msk [vmem:[#allocation2 + $0x240] sm:$0xff] %vm384, 0.0
        %458 = vst.msk [vmem:[#allocation2 + $0x248] sm:$0xff] %vm384, 0.0
        %459 = vst.msk [vmem:[#allocation2 + $0x250] sm:$0xff] %vm384, 0.0
        %460 = vst.msk [vmem:[#allocation2 + $0x258] sm:$0xff] %vm384, 0.0
        %461 = vst.msk [vmem:[#allocation2 + $0x260] sm:$0xff] %vm384, 0.0
        %462 = vst.msk [vmem:[#allocation2 + $0x268] sm:$0xff] %vm384, 0.0
        %463 = vst.msk [vmem:[#allocation2 + $0x270] sm:$0xff] %vm384, 0.0
        %464 = vst.msk [vmem:[#allocation2 + $0x278] sm:$0xff] %vm384, 0.0
        %465 = vst.msk [vmem:[#allocation2 + $0x280] sm:$0xff] %vm384, 0.0
        %466 = vst.msk [vmem:[#allocation2 + $0x288] sm:$0xff] %vm384, 0.0
        %467 = vst.msk [vmem:[#allocation2 + $0x290] sm:$0xff] %vm384, 0.0
        %468 = vst.msk [vmem:[#allocation2 + $0x298] sm:$0xff] %vm384, 0.0
        %469 = vst.msk [vmem:[#allocation2 + $0x2a0] sm:$0xff] %vm384, 0.0
        %470 = vst.msk [vmem:[#allocation2 + $0x2a8] sm:$0xff] %vm384, 0.0
        %471 = vst.msk [vmem:[#allocation2 + $0x2b0] sm:$0xff] %vm384, 0.0
        %472 = vst.msk [vmem:[#allocation2 + $0x2b8] sm:$0xff] %vm384, 0.0
        %473 = vst.msk [vmem:[#allocation2 + $0x2c0] sm:$0xff] %vm384, 0.0
        %474 = vst.msk [vmem:[#allocation2 + $0x2c8] sm:$0xff] %vm384, 0.0
        %475 = vst.msk [vmem:[#allocation2 + $0x2d0] sm:$0xff] %vm384, 0.0
        %476 = vst.msk [vmem:[#allocation2 + $0x2d8] sm:$0xff] %vm384, 0.0
        %477 = vst.msk [vmem:[#allocation2 + $0x2e0] sm:$0xff] %vm384, 0.0
        %478 = vst.msk [vmem:[#allocation2 + $0x2e8] sm:$0xff] %vm384, 0.0
        %479 = vst.msk [vmem:[#allocation2 + $0x2f0] sm:$0xff] %vm384, 0.0
        %480 = vst.msk [vmem:[#allocation2 + $0x2f8] sm:$0xff] %vm384, 0.0
        %481 = vst.msk [vmem:[#allocation2 + $0x300] sm:$0xff] %vm384, 0.0
        %482 = vst.msk [vmem:[#allocation2 + $0x308] sm:$0xff] %vm384, 0.0
        %483 = vst.msk [vmem:[#allocation2 + $0x310] sm:$0xff] %vm384, 0.0
        %484 = vst.msk [vmem:[#allocation2 + $0x318] sm:$0xff] %vm384, 0.0
        %485 = vst.msk [vmem:[#allocation2 + $0x320] sm:$0xff] %vm384, 0.0
        %486 = vst.msk [vmem:[#allocation2 + $0x328] sm:$0xff] %vm384, 0.0
        %487 = vst.msk [vmem:[#allocation2 + $0x330] sm:$0xff] %vm384, 0.0
        %488 = vst.msk [vmem:[#allocation2 + $0x338] sm:$0xff] %vm384, 0.0
        %489 = vst.msk [vmem:[#allocation2 + $0x340] sm:$0xff] %vm384, 0.0
        %490 = vst.msk [vmem:[#allocation2 + $0x348] sm:$0xff] %vm384, 0.0
        %491 = vst.msk [vmem:[#allocation2 + $0x350] sm:$0xff] %vm384, 0.0
        %492 = vst.msk [vmem:[#allocation2 + $0x358] sm:$0xff] %vm384, 0.0
        %493 = vst.msk [vmem:[#allocation2 + $0x360] sm:$0xff] %vm384, 0.0
        %494 = vst.msk [vmem:[#allocation2 + $0x368] sm:$0xff] %vm384, 0.0
        %495 = vst.msk [vmem:[#allocation2 + $0x370] sm:$0xff] %vm384, 0.0
        %496 = vst.msk [vmem:[#allocation2 + $0x378] sm:$0xff] %vm384, 0.0
        %497 = vst.msk [vmem:[#allocation2 + $0x380] sm:$0xff] %vm384, 0.0
        %498 = vst.msk [vmem:[#allocation2 + $0x388] sm:$0xff] %vm384, 0.0
        %499 = vst.msk [vmem:[#allocation2 + $0x390] sm:$0xff] %vm384, 0.0
        %500 = vst.msk [vmem:[#allocation2 + $0x398] sm:$0xff] %vm384, 0.0
        %501 = vst.msk [vmem:[#allocation2 + $0x3a0] sm:$0xff] %vm384, 0.0
        %502 = vst.msk [vmem:[#allocation2 + $0x3a8] sm:$0xff] %vm384, 0.0
        %503 = vst.msk [vmem:[#allocation2 + $0x3b0] sm:$0xff] %vm384, 0.0
        %504 = vst.msk [vmem:[#allocation2 + $0x3b8] sm:$0xff] %vm384, 0.0
        %505 = vst.msk [vmem:[#allocation2 + $0x3c0] sm:$0xff] %vm384, 0.0
        %506 = vst.msk [vmem:[#allocation2 + $0x3c8] sm:$0xff] %vm384, 0.0
        %507 = vst.msk [vmem:[#allocation2 + $0x3d0] sm:$0xff] %vm384, 0.0
        %508 = vst.msk [vmem:[#allocation2 + $0x3d8] sm:$0xff] %vm384, 0.0
        %509 = vst.msk [vmem:[#allocation2 + $0x3e0] sm:$0xff] %vm384, 0.0
        %510 = vst.msk [vmem:[#allocation2 + $0x3e8] sm:$0xff] %vm384, 0.0
        %511 = vst.msk [vmem:[#allocation2 + $0x3f0] sm:$0xff] %vm384, 0.0
        %512 = vst.msk [vmem:[#allocation2 + $0x3f8] sm:$0xff] %vm384, 0.0
        %513 = vst.msk [vmem:[#allocation2 + $0x400] sm:$0xff] %vm384, 0.0
        %514 = vst.msk [vmem:[#allocation2 + $0x408] sm:$0xff] %vm384, 0.0
        %515 = vst.msk [vmem:[#allocation2 + $0x410] sm:$0xff] %vm384, 0.0
        %516 = vst.msk [vmem:[#allocation2 + $0x418] sm:$0xff] %vm384, 0.0
        %517 = vst.msk [vmem:[#allocation2 + $0x420] sm:$0xff] %vm384, 0.0
        %518 = vst.msk [vmem:[#allocation2 + $0x428] sm:$0xff] %vm384, 0.0
        %519 = vst.msk [vmem:[#allocation2 + $0x430] sm:$0xff] %vm384, 0.0
        %520 = vst.msk [vmem:[#allocation2 + $0x438] sm:$0xff] %vm384, 0.0
        %521 = vst.msk [vmem:[#allocation2 + $0x440] sm:$0xff] %vm384, 0.0
        %522 = vst.msk [vmem:[#allocation2 + $0x448] sm:$0xff] %vm384, 0.0
        %523 = vst.msk [vmem:[#allocation2 + $0x450] sm:$0xff] %vm384, 0.0
        %524 = vst.msk [vmem:[#allocation2 + $0x458] sm:$0xff] %vm384, 0.0
        %525 = vst.msk [vmem:[#allocation2 + $0x460] sm:$0xff] %vm384, 0.0
        %526 = vst.msk [vmem:[#allocation2 + $0x468] sm:$0xff] %vm384, 0.0
        %527 = vst.msk [vmem:[#allocation2 + $0x470] sm:$0xff] %vm384, 0.0
        %528 = vst.msk [vmem:[#allocation2 + $0x478] sm:$0xff] %vm384, 0.0
        %529 = vst.msk [vmem:[#allocation2 + $0x480] sm:$0xff] %vm384, 0.0
        %530 = vst.msk [vmem:[#allocation2 + $0x488] sm:$0xff] %vm384, 0.0
        %531 = vst.msk [vmem:[#allocation2 + $0x490] sm:$0xff] %vm384, 0.0
        %532 = vst.msk [vmem:[#allocation2 + $0x498] sm:$0xff] %vm384, 0.0
        %533 = vst.msk [vmem:[#allocation2 + $0x4a0] sm:$0xff] %vm384, 0.0
        %534 = vst.msk [vmem:[#allocation2 + $0x4a8] sm:$0xff] %vm384, 0.0
        %535 = vst.msk [vmem:[#allocation2 + $0x4b0] sm:$0xff] %vm384, 0.0
        %536 = vst.msk [vmem:[#allocation2 + $0x4b8] sm:$0xff] %vm384, 0.0
        %537 = vst.msk [vmem:[#allocation2 + $0x4c0] sm:$0xff] %vm384, 0.0
        %538 = vst.msk [vmem:[#allocation2 + $0x4c8] sm:$0xff] %vm384, 0.0
        %539 = vst.msk [vmem:[#allocation2 + $0x4d0] sm:$0xff] %vm384, 0.0
        %540 = vst.msk [vmem:[#allocation2 + $0x4d8] sm:$0xff] %vm384, 0.0
        %541 = vst.msk [vmem:[#allocation2 + $0x4e0] sm:$0xff] %vm384, 0.0
        %542 = vst.msk [vmem:[#allocation2 + $0x4e8] sm:$0xff] %vm384, 0.0
        %543 = vst.msk [vmem:[#allocation2 + $0x4f0] sm:$0xff] %vm384, 0.0
        %544 = vst.msk [vmem:[#allocation2 + $0x4f8] sm:$0xff] %vm384, 0.0
        %545 = vst.msk [vmem:[#allocation2 + $0x500] sm:$0xff] %vm384, 0.0
        %546 = vst.msk [vmem:[#allocation2 + $0x508] sm:$0xff] %vm384, 0.0
        %547 = vst.msk [vmem:[#allocation2 + $0x510] sm:$0xff] %vm384, 0.0
        %548 = vst.msk [vmem:[#allocation2 + $0x518] sm:$0xff] %vm384, 0.0
        %549 = vst.msk [vmem:[#allocation2 + $0x520] sm:$0xff] %vm384, 0.0
        %550 = vst.msk [vmem:[#allocation2 + $0x528] sm:$0xff] %vm384, 0.0
        %551 = vst.msk [vmem:[#allocation2 + $0x530] sm:$0xff] %vm384, 0.0
        %552 = vst.msk [vmem:[#allocation2 + $0x538] sm:$0xff] %vm384, 0.0
        %553 = vst.msk [vmem:[#allocation2 + $0x540] sm:$0xff] %vm384, 0.0
        %554 = vst.msk [vmem:[#allocation2 + $0x548] sm:$0xff] %vm384, 0.0
        %555 = vst.msk [vmem:[#allocation2 + $0x550] sm:$0xff] %vm384, 0.0
        %556 = vst.msk [vmem:[#allocation2 + $0x558] sm:$0xff] %vm384, 0.0
        %557 = vst.msk [vmem:[#allocation2 + $0x560] sm:$0xff] %vm384, 0.0
        %558 = vst.msk [vmem:[#allocation2 + $0x568] sm:$0xff] %vm384, 0.0
        %559 = vst.msk [vmem:[#allocation2 + $0x570] sm:$0xff] %vm384, 0.0
        %560 = vst.msk [vmem:[#allocation2 + $0x578] sm:$0xff] %vm384, 0.0
        %561 = vst.msk [vmem:[#allocation2 + $0x580] sm:$0xff] %vm384, 0.0
        %562 = vst.msk [vmem:[#allocation2 + $0x588] sm:$0xff] %vm384, 0.0
        %563 = vst.msk [vmem:[#allocation2 + $0x590] sm:$0xff] %vm384, 0.0
        %564 = vst.msk [vmem:[#allocation2 + $0x598] sm:$0xff] %vm384, 0.0
        %565 = vst.msk [vmem:[#allocation2 + $0x5a0] sm:$0xff] %vm384, 0.0
        %566 = vst.msk [vmem:[#allocation2 + $0x5a8] sm:$0xff] %vm384, 0.0
        %567 = vst.msk [vmem:[#allocation2 + $0x5b0] sm:$0xff] %vm384, 0.0
        %568 = vst.msk [vmem:[#allocation2 + $0x5b8] sm:$0xff] %vm384, 0.0
        %569 = vst.msk [vmem:[#allocation2 + $0x5c0] sm:$0xff] %vm384, 0.0
        %570 = vst.msk [vmem:[#allocation2 + $0x5c8] sm:$0xff] %vm384, 0.0
        %571 = vst.msk [vmem:[#allocation2 + $0x5d0] sm:$0xff] %vm384, 0.0
        %572 = vst.msk [vmem:[#allocation2 + $0x5d8] sm:$0xff] %vm384, 0.0
        %573 = vst.msk [vmem:[#allocation2 + $0x5e0] sm:$0xff] %vm384, 0.0
        %574 = vst.msk [vmem:[#allocation2 + $0x5e8] sm:$0xff] %vm384, 0.0
        %575 = vst.msk [vmem:[#allocation2 + $0x5f0] sm:$0xff] %vm384, 0.0
        %576 = vst.msk [vmem:[#allocation2 + $0x5f8] sm:$0xff] %vm384, 0.0
        %577 = vst.msk [vmem:[#allocation2 + $0x600] sm:$0xff] %vm384, 0.0
        %578 = vst.msk [vmem:[#allocation2 + $0x608] sm:$0xff] %vm384, 0.0
        %579 = vst.msk [vmem:[#allocation2 + $0x610] sm:$0xff] %vm384, 0.0
        %580 = vst.msk [vmem:[#allocation2 + $0x618] sm:$0xff] %vm384, 0.0
        %581 = vst.msk [vmem:[#allocation2 + $0x620] sm:$0xff] %vm384, 0.0
        %582 = vst.msk [vmem:[#allocation2 + $0x628] sm:$0xff] %vm384, 0.0
        %583 = vst.msk [vmem:[#allocation2 + $0x630] sm:$0xff] %vm384, 0.0
        %584 = vst.msk [vmem:[#allocation2 + $0x638] sm:$0xff] %vm384, 0.0
        %585 = vst.msk [vmem:[#allocation2 + $0x640] sm:$0xff] %vm384, 0.0
        %586 = vst.msk [vmem:[#allocation2 + $0x648] sm:$0xff] %vm384, 0.0
        %587 = vst.msk [vmem:[#allocation2 + $0x650] sm:$0xff] %vm384, 0.0
        %588 = vst.msk [vmem:[#allocation2 + $0x658] sm:$0xff] %vm384, 0.0
        %589 = vst.msk [vmem:[#allocation2 + $0x660] sm:$0xff] %vm384, 0.0
        %590 = vst.msk [vmem:[#allocation2 + $0x668] sm:$0xff] %vm384, 0.0
        %591 = vst.msk [vmem:[#allocation2 + $0x670] sm:$0xff] %vm384, 0.0
        %592 = vst.msk [vmem:[#allocation2 + $0x678] sm:$0xff] %vm384, 0.0
        %593 = vst.msk [vmem:[#allocation2 + $0x680] sm:$0xff] %vm384, 0.0
        %594 = vst.msk [vmem:[#allocation2 + $0x688] sm:$0xff] %vm384, 0.0
        %595 = vst.msk [vmem:[#allocation2 + $0x690] sm:$0xff] %vm384, 0.0
        %596 = vst.msk [vmem:[#allocation2 + $0x698] sm:$0xff] %vm384, 0.0
        %597 = vst.msk [vmem:[#allocation2 + $0x6a0] sm:$0xff] %vm384, 0.0
        %598 = vst.msk [vmem:[#allocation2 + $0x6a8] sm:$0xff] %vm384, 0.0
        %599 = vst.msk [vmem:[#allocation2 + $0x6b0] sm:$0xff] %vm384, 0.0
        %600 = vst.msk [vmem:[#allocation2 + $0x6b8] sm:$0xff] %vm384, 0.0
        %601 = vst.msk [vmem:[#allocation2 + $0x6c0] sm:$0xff] %vm384, 0.0
        %602 = vst.msk [vmem:[#allocation2 + $0x6c8] sm:$0xff] %vm384, 0.0
        %603 = vst.msk [vmem:[#allocation2 + $0x6d0] sm:$0xff] %vm384, 0.0
        %604 = vst.msk [vmem:[#allocation2 + $0x6d8] sm:$0xff] %vm384, 0.0
        %605 = vst.msk [vmem:[#allocation2 + $0x6e0] sm:$0xff] %vm384, 0.0
        %606 = vst.msk [vmem:[#allocation2 + $0x6e8] sm:$0xff] %vm384, 0.0
        %607 = vst.msk [vmem:[#allocation2 + $0x6f0] sm:$0xff] %vm384, 0.0
        %608 = vst.msk [vmem:[#allocation2 + $0x6f8] sm:$0xff] %vm384, 0.0
        %609 = vst.msk [vmem:[#allocation2 + $0x700] sm:$0xff] %vm384, 0.0
        %610 = vst.msk [vmem:[#allocation2 + $0x708] sm:$0xff] %vm384, 0.0
        %611 = vst.msk [vmem:[#allocation2 + $0x710] sm:$0xff] %vm384, 0.0
        %612 = vst.msk [vmem:[#allocation2 + $0x718] sm:$0xff] %vm384, 0.0
        %613 = vst.msk [vmem:[#allocation2 + $0x720] sm:$0xff] %vm384, 0.0
        %614 = vst.msk [vmem:[#allocation2 + $0x728] sm:$0xff] %vm384, 0.0
        %615 = vst.msk [vmem:[#allocation2 + $0x730] sm:$0xff] %vm384, 0.0
        %616 = vst.msk [vmem:[#allocation2 + $0x738] sm:$0xff] %vm384, 0.0
        %617 = vst.msk [vmem:[#allocation2 + $0x740] sm:$0xff] %vm384, 0.0
        %618 = vst.msk [vmem:[#allocation2 + $0x748] sm:$0xff] %vm384, 0.0
        %619 = vst.msk [vmem:[#allocation2 + $0x750] sm:$0xff] %vm384, 0.0
        %620 = vst.msk [vmem:[#allocation2 + $0x758] sm:$0xff] %vm384, 0.0
        %621 = vst.msk [vmem:[#allocation2 + $0x760] sm:$0xff] %vm384, 0.0
        %622 = vst.msk [vmem:[#allocation2 + $0x768] sm:$0xff] %vm384, 0.0
        %623 = vst.msk [vmem:[#allocation2 + $0x770] sm:$0xff] %vm384, 0.0
        %624 = vst.msk [vmem:[#allocation2 + $0x778] sm:$0xff] %vm384, 0.0
        %625 = vst.msk [vmem:[#allocation2 + $0x780] sm:$0xff] %vm384, 0.0
        %626 = vst.msk [vmem:[#allocation2 + $0x788] sm:$0xff] %vm384, 0.0
        %627 = vst.msk [vmem:[#allocation2 + $0x790] sm:$0xff] %vm384, 0.0
        %628 = vst.msk [vmem:[#allocation2 + $0x798] sm:$0xff] %vm384, 0.0
        %629 = vst.msk [vmem:[#allocation2 + $0x7a0] sm:$0xff] %vm384, 0.0
        %630 = vst.msk [vmem:[#allocation2 + $0x7a8] sm:$0xff] %vm384, 0.0
        %631 = vst.msk [vmem:[#allocation2 + $0x7b0] sm:$0xff] %vm384, 0.0
        %632 = vst.msk [vmem:[#allocation2 + $0x7b8] sm:$0xff] %vm384, 0.0
        %633 = vst.msk [vmem:[#allocation2 + $0x7c0] sm:$0xff] %vm384, 0.0
        %634 = vst.msk [vmem:[#allocation2 + $0x7c8] sm:$0xff] %vm384, 0.0
        %635 = vst.msk [vmem:[#allocation2 + $0x7d0] sm:$0xff] %vm384, 0.0
        %636 = vst.msk [vmem:[#allocation2 + $0x7d8] sm:$0xff] %vm384, 0.0
        %637 = vst.msk [vmem:[#allocation2 + $0x7e0] sm:$0xff] %vm384, 0.0
        %638 = vst.msk [vmem:[#allocation2 + $0x7e8] sm:$0xff] %vm384, 0.0
        %639 = vst.msk [vmem:[#allocation2 + $0x7f0] sm:$0xff] %vm384, 0.0
        %640 = vst.msk [vmem:[#allocation2 + $0x7f8] sm:$0xff] %vm384, 0.0
        %641 = vst.msk [vmem:[#allocation2 + $0x800] sm:$0xff] %vm384, 0.0
        %642 = vst.msk [vmem:[#allocation2 + $0x808] sm:$0xff] %vm384, 0.0
        %643 = vst.msk [vmem:[#allocation2 + $0x810] sm:$0xff] %vm384, 0.0
        %644 = vst.msk [vmem:[#allocation2 + $0x818] sm:$0xff] %vm384, 0.0
        %645 = vst.msk [vmem:[#allocation2 + $0x820] sm:$0xff] %vm384, 0.0
        %646 = vst.msk [vmem:[#allocation2 + $0x828] sm:$0xff] %vm384, 0.0
        %647 = vst.msk [vmem:[#allocation2 + $0x830] sm:$0xff] %vm384, 0.0
        %648 = vst.msk [vmem:[#allocation2 + $0x838] sm:$0xff] %vm384, 0.0
        %649 = vst.msk [vmem:[#allocation2 + $0x840] sm:$0xff] %vm384, 0.0
        %650 = vst.msk [vmem:[#allocation2 + $0x848] sm:$0xff] %vm384, 0.0
        %651 = vst.msk [vmem:[#allocation2 + $0x850] sm:$0xff] %vm384, 0.0
        %652 = vst.msk [vmem:[#allocation2 + $0x858] sm:$0xff] %vm384, 0.0
        %653 = vst.msk [vmem:[#allocation2 + $0x860] sm:$0xff] %vm384, 0.0
        %654 = vst.msk [vmem:[#allocation2 + $0x868] sm:$0xff] %vm384, 0.0
        %655 = vst.msk [vmem:[#allocation2 + $0x870] sm:$0xff] %vm384, 0.0
        %656 = vst.msk [vmem:[#allocation2 + $0x878] sm:$0xff] %vm384, 0.0
        %657 = vst.msk [vmem:[#allocation2 + $0x880] sm:$0xff] %vm384, 0.0
        %658 = vst.msk [vmem:[#allocation2 + $0x888] sm:$0xff] %vm384, 0.0
        %659 = vst.msk [vmem:[#allocation2 + $0x890] sm:$0xff] %vm384, 0.0
        %660 = vst.msk [vmem:[#allocation2 + $0x898] sm:$0xff] %vm384, 0.0
        %661 = vst.msk [vmem:[#allocation2 + $0x8a0] sm:$0xff] %vm384, 0.0
        %662 = vst.msk [vmem:[#allocation2 + $0x8a8] sm:$0xff] %vm384, 0.0
        %663 = vst.msk [vmem:[#allocation2 + $0x8b0] sm:$0xff] %vm384, 0.0
        %664 = vst.msk [vmem:[#allocation2 + $0x8b8] sm:$0xff] %vm384, 0.0
        %665 = vst.msk [vmem:[#allocation2 + $0x8c0] sm:$0xff] %vm384, 0.0
        %666 = vst.msk [vmem:[#allocation2 + $0x8c8] sm:$0xff] %vm384, 0.0
        %667 = vst.msk [vmem:[#allocation2 + $0x8d0] sm:$0xff] %vm384, 0.0
        %668 = vst.msk [vmem:[#allocation2 + $0x8d8] sm:$0xff] %vm384, 0.0
        %669 = vst.msk [vmem:[#allocation2 + $0x8e0] sm:$0xff] %vm384, 0.0
        %670 = vst.msk [vmem:[#allocation2 + $0x8e8] sm:$0xff] %vm384, 0.0
        %671 = vst.msk [vmem:[#allocation2 + $0x8f0] sm:$0xff] %vm384, 0.0
        %672 = vst.msk [vmem:[#allocation2 + $0x8f8] sm:$0xff] %vm384, 0.0
        %673 = vst.msk [vmem:[#allocation2 + $0x900] sm:$0xff] %vm384, 0.0
        %674 = vst.msk [vmem:[#allocation2 + $0x908] sm:$0xff] %vm384, 0.0
        %675 = vst.msk [vmem:[#allocation2 + $0x910] sm:$0xff] %vm384, 0.0
        %676 = vst.msk [vmem:[#allocation2 + $0x918] sm:$0xff] %vm384, 0.0
        %677 = vst.msk [vmem:[#allocation2 + $0x920] sm:$0xff] %vm384, 0.0
        %678 = vst.msk [vmem:[#allocation2 + $0x928] sm:$0xff] %vm384, 0.0
        %679 = vst.msk [vmem:[#allocation2 + $0x930] sm:$0xff] %vm384, 0.0
        %680 = vst.msk [vmem:[#allocation2 + $0x938] sm:$0xff] %vm384, 0.0
        %681 = vst.msk [vmem:[#allocation2 + $0x940] sm:$0xff] %vm384, 0.0
        %682 = vst.msk [vmem:[#allocation2 + $0x948] sm:$0xff] %vm384, 0.0
        %683 = vst.msk [vmem:[#allocation2 + $0x950] sm:$0xff] %vm384, 0.0
        %684 = vst.msk [vmem:[#allocation2 + $0x958] sm:$0xff] %vm384, 0.0
        %685 = vst.msk [vmem:[#allocation2 + $0x960] sm:$0xff] %vm384, 0.0
        %686 = vst.msk [vmem:[#allocation2 + $0x968] sm:$0xff] %vm384, 0.0
        %687 = vst.msk [vmem:[#allocation2 + $0x970] sm:$0xff] %vm384, 0.0
        %688 = vst.msk [vmem:[#allocation2 + $0x978] sm:$0xff] %vm384, 0.0
        %689 = vst.msk [vmem:[#allocation2 + $0x980] sm:$0xff] %vm384, 0.0
        %690 = vst.msk [vmem:[#allocation2 + $0x988] sm:$0xff] %vm384, 0.0
        %691 = vst.msk [vmem:[#allocation2 + $0x990] sm:$0xff] %vm384, 0.0
        %692 = vst.msk [vmem:[#allocation2 + $0x998] sm:$0xff] %vm384, 0.0
        %693 = vst.msk [vmem:[#allocation2 + $0x9a0] sm:$0xff] %vm384, 0.0
        %694 = vst.msk [vmem:[#allocation2 + $0x9a8] sm:$0xff] %vm384, 0.0
        %695 = vst.msk [vmem:[#allocation2 + $0x9b0] sm:$0xff] %vm384, 0.0
        %696 = vst.msk [vmem:[#allocation2 + $0x9b8] sm:$0xff] %vm384, 0.0
        %697 = vst.msk [vmem:[#allocation2 + $0x9c0] sm:$0xff] %vm384, 0.0
        %698 = vst.msk [vmem:[#allocation2 + $0x9c8] sm:$0xff] %vm384, 0.0
        %699 = vst.msk [vmem:[#allocation2 + $0x9d0] sm:$0xff] %vm384, 0.0
        %700 = vst.msk [vmem:[#allocation2 + $0x9d8] sm:$0xff] %vm384, 0.0
        %701 = vst.msk [vmem:[#allocation2 + $0x9e0] sm:$0xff] %vm384, 0.0
        %702 = vst.msk [vmem:[#allocation2 + $0x9e8] sm:$0xff] %vm384, 0.0
        %703 = vst.msk [vmem:[#allocation2 + $0x9f0] sm:$0xff] %vm384, 0.0
        %704 = vst.msk [vmem:[#allocation2 + $0x9f8] sm:$0xff] %vm384, 0.0
        %705 = vst.msk [vmem:[#allocation2 + $0xa00] sm:$0xff] %vm384, 0.0
        %706 = vst.msk [vmem:[#allocation2 + $0xa08] sm:$0xff] %vm384, 0.0
        %707 = vst.msk [vmem:[#allocation2 + $0xa10] sm:$0xff] %vm384, 0.0
        %708 = vst.msk [vmem:[#allocation2 + $0xa18] sm:$0xff] %vm384, 0.0
        %709 = vst.msk [vmem:[#allocation2 + $0xa20] sm:$0xff] %vm384, 0.0
        %710 = vst.msk [vmem:[#allocation2 + $0xa28] sm:$0xff] %vm384, 0.0
        %711 = vst.msk [vmem:[#allocation2 + $0xa30] sm:$0xff] %vm384, 0.0
        %712 = vst.msk [vmem:[#allocation2 + $0xa38] sm:$0xff] %vm384, 0.0
        %713 = vst.msk [vmem:[#allocation2 + $0xa40] sm:$0xff] %vm384, 0.0
        %714 = vst.msk [vmem:[#allocation2 + $0xa48] sm:$0xff] %vm384, 0.0
        %715 = vst.msk [vmem:[#allocation2 + $0xa50] sm:$0xff] %vm384, 0.0
        %716 = vst.msk [vmem:[#allocation2 + $0xa58] sm:$0xff] %vm384, 0.0
        %717 = vst.msk [vmem:[#allocation2 + $0xa60] sm:$0xff] %vm384, 0.0
        %718 = vst.msk [vmem:[#allocation2 + $0xa68] sm:$0xff] %vm384, 0.0
        %719 = vst.msk [vmem:[#allocation2 + $0xa70] sm:$0xff] %vm384, 0.0
        %720 = vst.msk [vmem:[#allocation2 + $0xa78] sm:$0xff] %vm384, 0.0
        %721 = vst.msk [vmem:[#allocation2 + $0xa80] sm:$0xff] %vm384, 0.0
        %722 = vst.msk [vmem:[#allocation2 + $0xa88] sm:$0xff] %vm384, 0.0
        %723 = vst.msk [vmem:[#allocation2 + $0xa90] sm:$0xff] %vm384, 0.0
        %724 = vst.msk [vmem:[#allocation2 + $0xa98] sm:$0xff] %vm384, 0.0
        %725 = vst.msk [vmem:[#allocation2 + $0xaa0] sm:$0xff] %vm384, 0.0
        %726 = vst.msk [vmem:[#allocation2 + $0xaa8] sm:$0xff] %vm384, 0.0
        %727 = vst.msk [vmem:[#allocation2 + $0xab0] sm:$0xff] %vm384, 0.0
        %728 = vst.msk [vmem:[#allocation2 + $0xab8] sm:$0xff] %vm384, 0.0
        %729 = vst.msk [vmem:[#allocation2 + $0xac0] sm:$0xff] %vm384, 0.0
        %730 = vst.msk [vmem:[#allocation2 + $0xac8] sm:$0xff] %vm384, 0.0
        %731 = vst.msk [vmem:[#allocation2 + $0xad0] sm:$0xff] %vm384, 0.0
        %732 = vst.msk [vmem:[#allocation2 + $0xad8] sm:$0xff] %vm384, 0.0
        %733 = vst.msk [vmem:[#allocation2 + $0xae0] sm:$0xff] %vm384, 0.0
        %734 = vst.msk [vmem:[#allocation2 + $0xae8] sm:$0xff] %vm384, 0.0
        %735 = vst.msk [vmem:[#allocation2 + $0xaf0] sm:$0xff] %vm384, 0.0
        %736 = vst.msk [vmem:[#allocation2 + $0xaf8] sm:$0xff] %vm384, 0.0
        %737 = vst.msk [vmem:[#allocation2 + $0xb00] sm:$0xff] %vm384, 0.0
        %738 = vst.msk [vmem:[#allocation2 + $0xb08] sm:$0xff] %vm384, 0.0
        %739 = vst.msk [vmem:[#allocation2 + $0xb10] sm:$0xff] %vm384, 0.0
        %740 = vst.msk [vmem:[#allocation2 + $0xb18] sm:$0xff] %vm384, 0.0
        %741 = vst.msk [vmem:[#allocation2 + $0xb20] sm:$0xff] %vm384, 0.0
        %742 = vst.msk [vmem:[#allocation2 + $0xb28] sm:$0xff] %vm384, 0.0
        %743 = vst.msk [vmem:[#allocation2 + $0xb30] sm:$0xff] %vm384, 0.0
        %744 = vst.msk [vmem:[#allocation2 + $0xb38] sm:$0xff] %vm384, 0.0
        %745 = vst.msk [vmem:[#allocation2 + $0xb40] sm:$0xff] %vm384, 0.0
        %746 = vst.msk [vmem:[#allocation2 + $0xb48] sm:$0xff] %vm384, 0.0
        %747 = vst.msk [vmem:[#allocation2 + $0xb50] sm:$0xff] %vm384, 0.0
        %748 = vst.msk [vmem:[#allocation2 + $0xb58] sm:$0xff] %vm384, 0.0
        %749 = vst.msk [vmem:[#allocation2 + $0xb60] sm:$0xff] %vm384, 0.0
        %750 = vst.msk [vmem:[#allocation2 + $0xb68] sm:$0xff] %vm384, 0.0
        %751 = vst.msk [vmem:[#allocation2 + $0xb70] sm:$0xff] %vm384, 0.0
        %752 = vst.msk [vmem:[#allocation2 + $0xb78] sm:$0xff] %vm384, 0.0
        %753 = vst.msk [vmem:[#allocation2 + $0xb80] sm:$0xff] %vm384, 0.0
        %754 = vst.msk [vmem:[#allocation2 + $0xb88] sm:$0xff] %vm384, 0.0
        %755 = vst.msk [vmem:[#allocation2 + $0xb90] sm:$0xff] %vm384, 0.0
        %756 = vst.msk [vmem:[#allocation2 + $0xb98] sm:$0xff] %vm384, 0.0
        %757 = vst.msk [vmem:[#allocation2 + $0xba0] sm:$0xff] %vm384, 0.0
        %758 = vst.msk [vmem:[#allocation2 + $0xba8] sm:$0xff] %vm384, 0.0
        %759 = vst.msk [vmem:[#allocation2 + $0xbb0] sm:$0xff] %vm384, 0.0
        %760 = vst.msk [vmem:[#allocation2 + $0xbb8] sm:$0xff] %vm384, 0.0
        %761 = vst.msk [vmem:[#allocation2 + $0xbc0] sm:$0xff] %vm384, 0.0
        %762 = vst.msk [vmem:[#allocation2 + $0xbc8] sm:$0xff] %vm384, 0.0
        %763 = vst.msk [vmem:[#allocation2 + $0xbd0] sm:$0xff] %vm384, 0.0
        %764 = vst.msk [vmem:[#allocation2 + $0xbd8] sm:$0xff] %vm384, 0.0
        %765 = vst.msk [vmem:[#allocation2 + $0xbe0] sm:$0xff] %vm384, 0.0
        %766 = vst.msk [vmem:[#allocation2 + $0xbe8] sm:$0xff] %vm384, 0.0
        %767 = vst.msk [vmem:[#allocation2 + $0xbf0] sm:$0xff] %vm384, 0.0
        %768 = vst.msk [vmem:[#allocation2 + $0xbf8] sm:$0xff] %vm384, 0.0
        %769 = vst.msk [vmem:[#allocation2 + $0xc00] sm:$0xff] %vm384, 0.0
        %770 = vst.msk [vmem:[#allocation2 + $0xc08] sm:$0xff] %vm384, 0.0
        %771 = vst.msk [vmem:[#allocation2 + $0xc10] sm:$0xff] %vm384, 0.0
        %772 = vst.msk [vmem:[#allocation2 + $0xc18] sm:$0xff] %vm384, 0.0
        %773 = vst.msk [vmem:[#allocation2 + $0xc20] sm:$0xff] %vm384, 0.0
        %774 = vst.msk [vmem:[#allocation2 + $0xc28] sm:$0xff] %vm384, 0.0
        %775 = vst.msk [vmem:[#allocation2 + $0xc30] sm:$0xff] %vm384, 0.0
        %776 = vst.msk [vmem:[#allocation2 + $0xc38] sm:$0xff] %vm384, 0.0
        %777 = vst.msk [vmem:[#allocation2 + $0xc40] sm:$0xff] %vm384, 0.0
        %778 = vst.msk [vmem:[#allocation2 + $0xc48] sm:$0xff] %vm384, 0.0
        %779 = vst.msk [vmem:[#allocation2 + $0xc50] sm:$0xff] %vm384, 0.0
        %780 = vst.msk [vmem:[#allocation2 + $0xc58] sm:$0xff] %vm384, 0.0
        %781 = vst.msk [vmem:[#allocation2 + $0xc60] sm:$0xff] %vm384, 0.0
        %782 = vst.msk [vmem:[#allocation2 + $0xc68] sm:$0xff] %vm384, 0.0
        %783 = vst.msk [vmem:[#allocation2 + $0xc70] sm:$0xff] %vm384, 0.0
        %784 = vst.msk [vmem:[#allocation2 + $0xc78] sm:$0xff] %vm384, 0.0
        %785 = vst.msk [vmem:[#allocation2 + $0xc80] sm:$0xff] %vm384, 0.0
        %786 = vst.msk [vmem:[#allocation2 + $0xc88] sm:$0xff] %vm384, 0.0
        %787 = vst.msk [vmem:[#allocation2 + $0xc90] sm:$0xff] %vm384, 0.0
        %788 = vst.msk [vmem:[#allocation2 + $0xc98] sm:$0xff] %vm384, 0.0
        %789 = vst.msk [vmem:[#allocation2 + $0xca0] sm:$0xff] %vm384, 0.0
        %790 = vst.msk [vmem:[#allocation2 + $0xca8] sm:$0xff] %vm384, 0.0
        %791 = vst.msk [vmem:[#allocation2 + $0xcb0] sm:$0xff] %vm384, 0.0
        %792 = vst.msk [vmem:[#allocation2 + $0xcb8] sm:$0xff] %vm384, 0.0
        %793 = vst.msk [vmem:[#allocation2 + $0xcc0] sm:$0xff] %vm384, 0.0
        %794 = vst.msk [vmem:[#allocation2 + $0xcc8] sm:$0xff] %vm384, 0.0
        %795 = vst.msk [vmem:[#allocation2 + $0xcd0] sm:$0xff] %vm384, 0.0
        %796 = vst.msk [vmem:[#allocation2 + $0xcd8] sm:$0xff] %vm384, 0.0
        %797 = vst.msk [vmem:[#allocation2 + $0xce0] sm:$0xff] %vm384, 0.0
        %798 = vst.msk [vmem:[#allocation2 + $0xce8] sm:$0xff] %vm384, 0.0
        %799 = vst.msk [vmem:[#allocation2 + $0xcf0] sm:$0xff] %vm384, 0.0
        %800 = vst.msk [vmem:[#allocation2 + $0xcf8] sm:$0xff] %vm384, 0.0
        %801 = vst.msk [vmem:[#allocation2 + $0xd00] sm:$0xff] %vm384, 0.0
        %802 = vst.msk [vmem:[#allocation2 + $0xd08] sm:$0xff] %vm384, 0.0
        %803 = vst.msk [vmem:[#allocation2 + $0xd10] sm:$0xff] %vm384, 0.0
        %804 = vst.msk [vmem:[#allocation2 + $0xd18] sm:$0xff] %vm384, 0.0
        %805 = vst.msk [vmem:[#allocation2 + $0xd20] sm:$0xff] %vm384, 0.0
        %806 = vst.msk [vmem:[#allocation2 + $0xd28] sm:$0xff] %vm384, 0.0
        %807 = vst.msk [vmem:[#allocation2 + $0xd30] sm:$0xff] %vm384, 0.0
        %808 = vst.msk [vmem:[#allocation2 + $0xd38] sm:$0xff] %vm384, 0.0
        %809 = vst.msk [vmem:[#allocation2 + $0xd40] sm:$0xff] %vm384, 0.0
        %810 = vst.msk [vmem:[#allocation2 + $0xd48] sm:$0xff] %vm384, 0.0
        %811 = vst.msk [vmem:[#allocation2 + $0xd50] sm:$0xff] %vm384, 0.0
        %812 = vst.msk [vmem:[#allocation2 + $0xd58] sm:$0xff] %vm384, 0.0
        %813 = vst.msk [vmem:[#allocation2 + $0xd60] sm:$0xff] %vm384, 0.0
        %814 = vst.msk [vmem:[#allocation2 + $0xd68] sm:$0xff] %vm384, 0.0
        %815 = vst.msk [vmem:[#allocation2 + $0xd70] sm:$0xff] %vm384, 0.0
        %816 = vst.msk [vmem:[#allocation2 + $0xd78] sm:$0xff] %vm384, 0.0
        %817 = vst.msk [vmem:[#allocation2 + $0xd80] sm:$0xff] %vm384, 0.0
        %818 = vst.msk [vmem:[#allocation2 + $0xd88] sm:$0xff] %vm384, 0.0
        %819 = vst.msk [vmem:[#allocation2 + $0xd90] sm:$0xff] %vm384, 0.0
        %820 = vst.msk [vmem:[#allocation2 + $0xd98] sm:$0xff] %vm384, 0.0
        %821 = vst.msk [vmem:[#allocation2 + $0xda0] sm:$0xff] %vm384, 0.0
        %822 = vst.msk [vmem:[#allocation2 + $0xda8] sm:$0xff] %vm384, 0.0
        %823 = vst.msk [vmem:[#allocation2 + $0xdb0] sm:$0xff] %vm384, 0.0
        %824 = vst.msk [vmem:[#allocation2 + $0xdb8] sm:$0xff] %vm384, 0.0
        %825 = vst.msk [vmem:[#allocation2 + $0xdc0] sm:$0xff] %vm384, 0.0
        %826 = vst.msk [vmem:[#allocation2 + $0xdc8] sm:$0xff] %vm384, 0.0
        %827 = vst.msk [vmem:[#allocation2 + $0xdd0] sm:$0xff] %vm384, 0.0
        %828 = vst.msk [vmem:[#allocation2 + $0xdd8] sm:$0xff] %vm384, 0.0
        %829 = vst.msk [vmem:[#allocation2 + $0xde0] sm:$0xff] %vm384, 0.0
        %830 = vst.msk [vmem:[#allocation2 + $0xde8] sm:$0xff] %vm384, 0.0
        %831 = vst.msk [vmem:[#allocation2 + $0xdf0] sm:$0xff] %vm384, 0.0
        %832 = vst.msk [vmem:[#allocation2 + $0xdf8] sm:$0xff] %vm384, 0.0
        %833 = vst.msk [vmem:[#allocation2 + $0xe00] sm:$0xff] %vm384, 0.0
        %834 = vst.msk [vmem:[#allocation2 + $0xe08] sm:$0xff] %vm384, 0.0
        %835 = vst.msk [vmem:[#allocation2 + $0xe10] sm:$0xff] %vm384, 0.0
        %836 = vst.msk [vmem:[#allocation2 + $0xe18] sm:$0xff] %vm384, 0.0
        %837 = vst.msk [vmem:[#allocation2 + $0xe20] sm:$0xff] %vm384, 0.0
        %838 = vst.msk [vmem:[#allocation2 + $0xe28] sm:$0xff] %vm384, 0.0
        %839 = vst.msk [vmem:[#allocation2 + $0xe30] sm:$0xff] %vm384, 0.0
        %840 = vst.msk [vmem:[#allocation2 + $0xe38] sm:$0xff] %vm384, 0.0
        %841 = vst.msk [vmem:[#allocation2 + $0xe40] sm:$0xff] %vm384, 0.0
        %842 = vst.msk [vmem:[#allocation2 + $0xe48] sm:$0xff] %vm384, 0.0
        %843 = vst.msk [vmem:[#allocation2 + $0xe50] sm:$0xff] %vm384, 0.0
        %844 = vst.msk [vmem:[#allocation2 + $0xe58] sm:$0xff] %vm384, 0.0
        %845 = vst.msk [vmem:[#allocation2 + $0xe60] sm:$0xff] %vm384, 0.0
        %846 = vst.msk [vmem:[#allocation2 + $0xe68] sm:$0xff] %vm384, 0.0
        %847 = vst.msk [vmem:[#allocation2 + $0xe70] sm:$0xff] %vm384, 0.0
        %848 = vst.msk [vmem:[#allocation2 + $0xe78] sm:$0xff] %vm384, 0.0
        %849 = vst.msk [vmem:[#allocation2 + $0xe80] sm:$0xff] %vm384, 0.0
        %850 = vst.msk [vmem:[#allocation2 + $0xe88] sm:$0xff] %vm384, 0.0
        %851 = vst.msk [vmem:[#allocation2 + $0xe90] sm:$0xff] %vm384, 0.0
        %852 = vst.msk [vmem:[#allocation2 + $0xe98] sm:$0xff] %vm384, 0.0
        %853 = vst.msk [vmem:[#allocation2 + $0xea0] sm:$0xff] %vm384, 0.0
        %854 = vst.msk [vmem:[#allocation2 + $0xea8] sm:$0xff] %vm384, 0.0
        %855 = vst.msk [vmem:[#allocation2 + $0xeb0] sm:$0xff] %vm384, 0.0
        %856 = vst.msk [vmem:[#allocation2 + $0xeb8] sm:$0xff] %vm384, 0.0
        %857 = vst.msk [vmem:[#allocation2 + $0xec0] sm:$0xff] %vm384, 0.0
        %858 = vst.msk [vmem:[#allocation2 + $0xec8] sm:$0xff] %vm384, 0.0
        %859 = vst.msk [vmem:[#allocation2 + $0xed0] sm:$0xff] %vm384, 0.0
        %860 = vst.msk [vmem:[#allocation2 + $0xed8] sm:$0xff] %vm384, 0.0
        %861 = vst.msk [vmem:[#allocation2 + $0xee0] sm:$0xff] %vm384, 0.0
        %862 = vst.msk [vmem:[#allocation2 + $0xee8] sm:$0xff] %vm384, 0.0
        %863 = vst.msk [vmem:[#allocation2 + $0xef0] sm:$0xff] %vm384, 0.0
        %864 = vst.msk [vmem:[#allocation2 + $0xef8] sm:$0xff] %vm384, 0.0
        %865 = vst.msk [vmem:[#allocation2 + $0xf00] sm:$0xff] %vm384, 0.0
        %866 = vst.msk [vmem:[#allocation2 + $0xf08] sm:$0xff] %vm384, 0.0
        %867 = vst.msk [vmem:[#allocation2 + $0xf10] sm:$0xff] %vm384, 0.0
        %868 = vst.msk [vmem:[#allocation2 + $0xf18] sm:$0xff] %vm384, 0.0
        %869 = vst.msk [vmem:[#allocation2 + $0xf20] sm:$0xff] %vm384, 0.0
        %870 = vst.msk [vmem:[#allocation2 + $0xf28] sm:$0xff] %vm384, 0.0
        %871 = vst.msk [vmem:[#allocation2 + $0xf30] sm:$0xff] %vm384, 0.0
        %872 = vst.msk [vmem:[#allocation2 + $0xf38] sm:$0xff] %vm384, 0.0
        %873 = vst.msk [vmem:[#allocation2 + $0xf40] sm:$0xff] %vm384, 0.0
        %874 = vst.msk [vmem:[#allocation2 + $0xf48] sm:$0xff] %vm384, 0.0
        %875 = vst.msk [vmem:[#allocation2 + $0xf50] sm:$0xff] %vm384, 0.0
        %876 = vst.msk [vmem:[#allocation2 + $0xf58] sm:$0xff] %vm384, 0.0
        %877 = vst.msk [vmem:[#allocation2 + $0xf60] sm:$0xff] %vm384, 0.0
        %878 = vst.msk [vmem:[#allocation2 + $0xf68] sm:$0xff] %vm384, 0.0
        %879 = vst.msk [vmem:[#allocation2 + $0xf70] sm:$0xff] %vm384, 0.0
        %880 = vst.msk [vmem:[#allocation2 + $0xf78] sm:$0xff] %vm384, 0.0
        %881 = vst.msk [vmem:[#allocation2 + $0xf80] sm:$0xff] %vm384, 0.0
        %882 = vst.msk [vmem:[#allocation2 + $0xf88] sm:$0xff] %vm384, 0.0
        %883 = vst.msk [vmem:[#allocation2 + $0xf90] sm:$0xff] %vm384, 0.0
        %884 = vst.msk [vmem:[#allocation2 + $0xf98] sm:$0xff] %vm384, 0.0
        %885 = vst.msk [vmem:[#allocation2 + $0xfa0] sm:$0xff] %vm384, 0.0
        %886 = vst.msk [vmem:[#allocation2 + $0xfa8] sm:$0xff] %vm384, 0.0
        %887 = vst.msk [vmem:[#allocation2 + $0xfb0] sm:$0xff] %vm384, 0.0
        %888 = vst.msk [vmem:[#allocation2 + $0xfb8] sm:$0xff] %vm384, 0.0
        %889 = vst.msk [vmem:[#allocation2 + $0xfc0] sm:$0xff] %vm384, 0.0
        %890 = vst.msk [vmem:[#allocation2 + $0xfc8] sm:$0xff] %vm384, 0.0
        %891 = vst.msk [vmem:[#allocation2 + $0xfd0] sm:$0xff] %vm384, 0.0
        %892 = vst.msk [vmem:[#allocation2 + $0xfd8] sm:$0xff] %vm384, 0.0
        %893 = vst.msk [vmem:[#allocation2 + $0xfe0] sm:$0xff] %vm384, 0.0
        %894 = vst.msk [vmem:[#allocation2 + $0xfe8] sm:$0xff] %vm384, 0.0
        %895 = vst.msk [vmem:[#allocation2 + $0xff0] sm:$0xff] %vm384, 0.0
        %896 = vst.msk [vmem:[#allocation2 + $0xff8] sm:$0xff] %vm384, 0.0
        %897 = vst.msk [vmem:[#allocation2 + $0x1000] sm:$0xff] %vm384, 0.0
        %898 = vst.msk [vmem:[#allocation2 + $0x1008] sm:$0xff] %vm384, 0.0
        %899 = vst.msk [vmem:[#allocation2 + $0x1010] sm:$0xff] %vm384, 0.0
        %900 = vst.msk [vmem:[#allocation2 + $0x1018] sm:$0xff] %vm384, 0.0
        %901 = vst.msk [vmem:[#allocation2 + $0x1020] sm:$0xff] %vm384, 0.0
        %902 = vst.msk [vmem:[#allocation2 + $0x1028] sm:$0xff] %vm384, 0.0
        %903 = vst.msk [vmem:[#allocation2 + $0x1030] sm:$0xff] %vm384, 0.0
        %904 = vst.msk [vmem:[#allocation2 + $0x1038] sm:$0xff] %vm384, 0.0
        %905 = vst.msk [vmem:[#allocation2 + $0x1040] sm:$0xff] %vm384, 0.0
        %906 = vst.msk [vmem:[#allocation2 + $0x1048] sm:$0xff] %vm384, 0.0
        %907 = vst.msk [vmem:[#allocation2 + $0x1050] sm:$0xff] %vm384, 0.0
        %908 = vst.msk [vmem:[#allocation2 + $0x1058] sm:$0xff] %vm384, 0.0
        %909 = vst.msk [vmem:[#allocation2 + $0x1060] sm:$0xff] %vm384, 0.0
        %910 = vst.msk [vmem:[#allocation2 + $0x1068] sm:$0xff] %vm384, 0.0
        %911 = vst.msk [vmem:[#allocation2 + $0x1070] sm:$0xff] %vm384, 0.0
        %912 = vst.msk [vmem:[#allocation2 + $0x1078] sm:$0xff] %vm384, 0.0
        %913 = vst.msk [vmem:[#allocation2 + $0x1080] sm:$0xff] %vm384, 0.0
        %914 = vst.msk [vmem:[#allocation2 + $0x1088] sm:$0xff] %vm384, 0.0
        %915 = vst.msk [vmem:[#allocation2 + $0x1090] sm:$0xff] %vm384, 0.0
        %916 = vst.msk [vmem:[#allocation2 + $0x1098] sm:$0xff] %vm384, 0.0
        %917 = vst.msk [vmem:[#allocation2 + $0x10a0] sm:$0xff] %vm384, 0.0
        %918 = vst.msk [vmem:[#allocation2 + $0x10a8] sm:$0xff] %vm384, 0.0
        %919 = vst.msk [vmem:[#allocation2 + $0x10b0] sm:$0xff] %vm384, 0.0
        %920 = vst.msk [vmem:[#allocation2 + $0x10b8] sm:$0xff] %vm384, 0.0
        %921 = vst.msk [vmem:[#allocation2 + $0x10c0] sm:$0xff] %vm384, 0.0
        %922 = vst.msk [vmem:[#allocation2 + $0x10c8] sm:$0xff] %vm384, 0.0
        %923 = vst.msk [vmem:[#allocation2 + $0x10d0] sm:$0xff] %vm384, 0.0
        %924 = vst.msk [vmem:[#allocation2 + $0x10d8] sm:$0xff] %vm384, 0.0
        %925 = vst.msk [vmem:[#allocation2 + $0x10e0] sm:$0xff] %vm384, 0.0
        %926 = vst.msk [vmem:[#allocation2 + $0x10e8] sm:$0xff] %vm384, 0.0
        %927 = vst.msk [vmem:[#allocation2 + $0x10f0] sm:$0xff] %vm384, 0.0
        %928 = vst.msk [vmem:[#allocation2 + $0x10f8] sm:$0xff] %vm384, 0.0
        %vm929 = vcmask 60416
        %930 = vst.msk [vmem:[#allocation2 + $0x1100] sm:$0xf] %vm929, 0.0
        %vm931 = vcmask 130048
        %932 = vst.msk [vmem:[#allocation3] sm:$0xff] %vm931, 0.0
        %933 = vst.msk [vmem:[#allocation3 + $0x8] sm:$0xff] %vm931, 0.0
        %934 = vst.msk [vmem:[#allocation3 + $0x10] sm:$0xff] %vm931, 0.0
        %935 = vst.msk [vmem:[#allocation3 + $0x18] sm:$0xff] %vm931, 0.0
        %936 = vst.msk [vmem:[#allocation3 + $0x20] sm:$0xff] %vm931, 0.0
        %937 = vst.msk [vmem:[#allocation3 + $0x28] sm:$0xff] %vm931, 0.0
        %938 = vst.msk [vmem:[#allocation3 + $0x30] sm:$0xff] %vm931, 0.0
        %939 = vst.msk [vmem:[#allocation3 + $0x38] sm:$0xff] %vm931, 0.0
        %940 = vst.msk [vmem:[#allocation3 + $0x40] sm:$0xff] %vm931, 0.0
        %941 = vst.msk [vmem:[#allocation3 + $0x48] sm:$0xff] %vm931, 0.0
        %942 = vst.msk [vmem:[#allocation3 + $0x50] sm:$0xff] %vm931, 0.0
        %943 = vst.msk [vmem:[#allocation3 + $0x58] sm:$0xff] %vm931, 0.0
        %944 = vst.msk [vmem:[#allocation3 + $0x60] sm:$0xff] %vm931, 0.0
        %945 = vst.msk [vmem:[#allocation3 + $0x68] sm:$0xff] %vm931, 0.0
        %946 = vst.msk [vmem:[#allocation3 + $0x70] sm:$0xff] %vm931, 0.0
        %947 = vst.msk [vmem:[#allocation3 + $0x78] sm:$0xff] %vm931, 0.0
        %948 = vst.msk [vmem:[#allocation3 + $0x80] sm:$0xff] %vm931, 0.0
        %949 = vst.msk [vmem:[#allocation3 + $0x88] sm:$0xff] %vm931, 0.0
        %950 = vst.msk [vmem:[#allocation3 + $0x90] sm:$0xff] %vm931, 0.0
        %951 = vst.msk [vmem:[#allocation3 + $0x98] sm:$0xff] %vm931, 0.0
        %952 = vst.msk [vmem:[#allocation3 + $0xa0] sm:$0xff] %vm931, 0.0
        %953 = vst.msk [vmem:[#allocation3 + $0xa8] sm:$0xff] %vm931, 0.0
        %954 = vst.msk [vmem:[#allocation3 + $0xb0] sm:$0xff] %vm931, 0.0
        %955 = vst.msk [vmem:[#allocation3 + $0xb8] sm:$0xff] %vm931, 0.0
        %956 = vst.msk [vmem:[#allocation3 + $0xc0] sm:$0xff] %vm931, 0.0
        %957 = vst.msk [vmem:[#allocation3 + $0xc8] sm:$0xff] %vm931, 0.0
        %958 = vst.msk [vmem:[#allocation3 + $0xd0] sm:$0xff] %vm931, 0.0
        %959 = vst.msk [vmem:[#allocation3 + $0xd8] sm:$0xff] %vm931, 0.0
        %960 = vst.msk [vmem:[#allocation3 + $0xe0] sm:$0xff] %vm931, 0.0
        %961 = vst.msk [vmem:[#allocation3 + $0xe8] sm:$0xff] %vm931, 0.0
        %962 = vst.msk [vmem:[#allocation3 + $0xf0] sm:$0xff] %vm931, 0.0
        %963 = vst.msk [vmem:[#allocation3 + $0xf8] sm:$0xff] %vm931, 0.0
        %964 = vst.msk [vmem:[#allocation3 + $0x100] sm:$0xff] %vm931, 0.0
        %965 = vst.msk [vmem:[#allocation3 + $0x108] sm:$0xff] %vm931, 0.0
        %966 = vst.msk [vmem:[#allocation3 + $0x110] sm:$0xff] %vm931, 0.0
        %967 = vst.msk [vmem:[#allocation3 + $0x118] sm:$0xff] %vm931, 0.0
        %968 = vst.msk [vmem:[#allocation3 + $0x120] sm:$0xff] %vm931, 0.0
        %969 = vst.msk [vmem:[#allocation3 + $0x128] sm:$0xff] %vm931, 0.0
        %970 = vst.msk [vmem:[#allocation3 + $0x130] sm:$0xff] %vm931, 0.0
        %971 = vst.msk [vmem:[#allocation3 + $0x138] sm:$0xff] %vm931, 0.0
        %972 = vst.msk [vmem:[#allocation3 + $0x140] sm:$0xff] %vm931, 0.0
        %973 = vst.msk [vmem:[#allocation3 + $0x148] sm:$0xff] %vm931, 0.0
        %974 = vst.msk [vmem:[#allocation3 + $0x150] sm:$0xff] %vm931, 0.0
        %975 = vst.msk [vmem:[#allocation3 + $0x158] sm:$0xff] %vm931, 0.0
        %976 = vst.msk [vmem:[#allocation3 + $0x160] sm:$0xff] %vm931, 0.0
        %977 = vst.msk [vmem:[#allocation3 + $0x168] sm:$0xff] %vm931, 0.0
        %978 = vst.msk [vmem:[#allocation3 + $0x170] sm:$0xff] %vm931, 0.0
        %979 = vst.msk [vmem:[#allocation3 + $0x178] sm:$0xff] %vm931, 0.0
        %980 = vst.msk [vmem:[#allocation3 + $0x180] sm:$0xff] %vm931, 0.0
        %981 = vst.msk [vmem:[#allocation3 + $0x188] sm:$0xff] %vm931, 0.0
        %982 = vst.msk [vmem:[#allocation3 + $0x190] sm:$0xff] %vm931, 0.0
        %983 = vst.msk [vmem:[#allocation3 + $0x198] sm:$0xff] %vm931, 0.0
        %984 = vst.msk [vmem:[#allocation3 + $0x1a0] sm:$0xff] %vm931, 0.0
        %985 = vst.msk [vmem:[#allocation3 + $0x1a8] sm:$0xff] %vm931, 0.0
        %986 = vst.msk [vmem:[#allocation3 + $0x1b0] sm:$0xff] %vm931, 0.0
        %987 = vst.msk [vmem:[#allocation3 + $0x1b8] sm:$0xff] %vm931, 0.0
        %988 = vst.msk [vmem:[#allocation3 + $0x1c0] sm:$0xff] %vm931, 0.0
        %989 = vst.msk [vmem:[#allocation3 + $0x1c8] sm:$0xff] %vm931, 0.0
        %990 = vst.msk [vmem:[#allocation3 + $0x1d0] sm:$0xff] %vm931, 0.0
        %991 = vst.msk [vmem:[#allocation3 + $0x1d8] sm:$0xff] %vm931, 0.0
        %992 = vst.msk [vmem:[#allocation3 + $0x1e0] sm:$0xff] %vm931, 0.0
        %993 = vst.msk [vmem:[#allocation3 + $0x1e8] sm:$0xff] %vm931, 0.0
        %994 = vst.msk [vmem:[#allocation3 + $0x1f0] sm:$0xff] %vm931, 0.0
        %995 = vst.msk [vmem:[#allocation3 + $0x1f8] sm:$0xff] %vm931, 0.0
        %996 = vst.msk [vmem:[#allocation3 + $0x200] sm:$0xff] %vm931, 0.0
        %997 = vst.msk [vmem:[#allocation3 + $0x208] sm:$0xff] %vm931, 0.0
        %998 = vst.msk [vmem:[#allocation3 + $0x210] sm:$0xff] %vm931, 0.0
        %999 = vst.msk [vmem:[#allocation3 + $0x218] sm:$0xff] %vm931, 0.0
        %1000 = vst.msk [vmem:[#allocation3 + $0x220] sm:$0xff] %vm931, 0.0
        %1001 = vst.msk [vmem:[#allocation3 + $0x228] sm:$0xff] %vm931, 0.0
        %1002 = vst.msk [vmem:[#allocation3 + $0x230] sm:$0xff] %vm931, 0.0
        %1003 = vst.msk [vmem:[#allocation3 + $0x238] sm:$0xff] %vm931, 0.0
        %1004 = vst.msk [vmem:[#allocation3 + $0x240] sm:$0xff] %vm931, 0.0
        %1005 = vst.msk [vmem:[#allocation3 + $0x248] sm:$0xff] %vm931, 0.0
        %1006 = vst.msk [vmem:[#allocation3 + $0x250] sm:$0xff] %vm931, 0.0
        %1007 = vst.msk [vmem:[#allocation3 + $0x258] sm:$0xff] %vm931, 0.0
        %1008 = vst.msk [vmem:[#allocation3 + $0x260] sm:$0xff] %vm931, 0.0
        %1009 = vst.msk [vmem:[#allocation3 + $0x268] sm:$0xff] %vm931, 0.0
        %1010 = vst.msk [vmem:[#allocation3 + $0x270] sm:$0xff] %vm931, 0.0
        %1011 = vst.msk [vmem:[#allocation3 + $0x278] sm:$0xff] %vm931, 0.0
        %1012 = vst.msk [vmem:[#allocation3 + $0x280] sm:$0xff] %vm931, 0.0
        %1013 = vst.msk [vmem:[#allocation3 + $0x288] sm:$0xff] %vm931, 0.0
        %1014 = vst.msk [vmem:[#allocation3 + $0x290] sm:$0xff] %vm931, 0.0
        %1015 = vst.msk [vmem:[#allocation3 + $0x298] sm:$0xff] %vm931, 0.0
        %1016 = vst.msk [vmem:[#allocation3 + $0x2a0] sm:$0xff] %vm931, 0.0
        %1017 = vst.msk [vmem:[#allocation3 + $0x2a8] sm:$0xff] %vm931, 0.0
        %1018 = vst.msk [vmem:[#allocation3 + $0x2b0] sm:$0xff] %vm931, 0.0
        %1019 = vst.msk [vmem:[#allocation3 + $0x2b8] sm:$0xff] %vm931, 0.0
        %1020 = vst.msk [vmem:[#allocation3 + $0x2c0] sm:$0xff] %vm931, 0.0
        %1021 = vst.msk [vmem:[#allocation3 + $0x2c8] sm:$0xff] %vm931, 0.0
        %1022 = vst.msk [vmem:[#allocation3 + $0x2d0] sm:$0xff] %vm931, 0.0
        %1023 = vst.msk [vmem:[#allocation3 + $0x2d8] sm:$0xff] %vm931, 0.0
        %1024 = vst.msk [vmem:[#allocation3 + $0x2e0] sm:$0xff] %vm931, 0.0
        %1025 = vst.msk [vmem:[#allocation3 + $0x2e8] sm:$0xff] %vm931, 0.0
        %1026 = vst.msk [vmem:[#allocation3 + $0x2f0] sm:$0xff] %vm931, 0.0
        %1027 = vst.msk [vmem:[#allocation3 + $0x2f8] sm:$0xff] %vm931, 0.0
        %1028 = vst.msk [vmem:[#allocation3 + $0x300] sm:$0xff] %vm931, 0.0
        %1029 = vst.msk [vmem:[#allocation3 + $0x308] sm:$0xff] %vm931, 0.0
        %1030 = vst.msk [vmem:[#allocation3 + $0x310] sm:$0xff] %vm931, 0.0
        %1031 = vst.msk [vmem:[#allocation3 + $0x318] sm:$0xff] %vm931, 0.0
        %1032 = vst.msk [vmem:[#allocation3 + $0x320] sm:$0xff] %vm931, 0.0
        %1033 = vst.msk [vmem:[#allocation3 + $0x328] sm:$0xff] %vm931, 0.0
        %1034 = vst.msk [vmem:[#allocation3 + $0x330] sm:$0xff] %vm931, 0.0
        %1035 = vst.msk [vmem:[#allocation3 + $0x338] sm:$0xff] %vm931, 0.0
        %1036 = vst.msk [vmem:[#allocation3 + $0x340] sm:$0xff] %vm931, 0.0
        %1037 = vst.msk [vmem:[#allocation3 + $0x348] sm:$0xff] %vm931, 0.0
        %1038 = vst.msk [vmem:[#allocation3 + $0x350] sm:$0xff] %vm931, 0.0
        %1039 = vst.msk [vmem:[#allocation3 + $0x358] sm:$0xff] %vm931, 0.0
        %1040 = vst.msk [vmem:[#allocation3 + $0x360] sm:$0xff] %vm931, 0.0
        %1041 = vst.msk [vmem:[#allocation3 + $0x368] sm:$0xff] %vm931, 0.0
        %1042 = vst.msk [vmem:[#allocation3 + $0x370] sm:$0xff] %vm931, 0.0
        %1043 = vst.msk [vmem:[#allocation3 + $0x378] sm:$0xff] %vm931, 0.0
        %1044 = vst.msk [vmem:[#allocation3 + $0x380] sm:$0xff] %vm931, 0.0
        %1045 = vst.msk [vmem:[#allocation3 + $0x388] sm:$0xff] %vm931, 0.0
        %1046 = vst.msk [vmem:[#allocation3 + $0x390] sm:$0xff] %vm931, 0.0
        %1047 = vst.msk [vmem:[#allocation3 + $0x398] sm:$0xff] %vm931, 0.0
        %1048 = vst.msk [vmem:[#allocation3 + $0x3a0] sm:$0xff] %vm931, 0.0
        %1049 = vst.msk [vmem:[#allocation3 + $0x3a8] sm:$0xff] %vm931, 0.0
        %1050 = vst.msk [vmem:[#allocation3 + $0x3b0] sm:$0xff] %vm931, 0.0
        %1051 = vst.msk [vmem:[#allocation3 + $0x3b8] sm:$0xff] %vm931, 0.0
        %1052 = vst.msk [vmem:[#allocation3 + $0x3c0] sm:$0xff] %vm931, 0.0
        %1053 = vst.msk [vmem:[#allocation3 + $0x3c8] sm:$0xff] %vm931, 0.0
        %1054 = vst.msk [vmem:[#allocation3 + $0x3d0] sm:$0xff] %vm931, 0.0
        %1055 = vst.msk [vmem:[#allocation3 + $0x3d8] sm:$0xff] %vm931, 0.0
        %1056 = vst.msk [vmem:[#allocation3 + $0x3e0] sm:$0xff] %vm931, 0.0
        %1057 = vst.msk [vmem:[#allocation3 + $0x3e8] sm:$0xff] %vm931, 0.0
        %1058 = vst.msk [vmem:[#allocation3 + $0x3f0] sm:$0xff] %vm931, 0.0
        %1059 = vst.msk [vmem:[#allocation3 + $0x3f8] sm:$0xff] %vm931, 0.0
        %1060 = vst.msk [vmem:[#allocation3 + $0x400] sm:$0xff] %vm931, 0.0
        %1061 = vst.msk [vmem:[#allocation3 + $0x408] sm:$0xff] %vm931, 0.0
        %1062 = vst.msk [vmem:[#allocation3 + $0x410] sm:$0xff] %vm931, 0.0
        %1063 = vst.msk [vmem:[#allocation3 + $0x418] sm:$0xff] %vm931, 0.0
        %1064 = vst.msk [vmem:[#allocation3 + $0x420] sm:$0xff] %vm931, 0.0
        %1065 = vst.msk [vmem:[#allocation3 + $0x428] sm:$0xff] %vm931, 0.0
        %1066 = vst.msk [vmem:[#allocation3 + $0x430] sm:$0xff] %vm931, 0.0
        %1067 = vst.msk [vmem:[#allocation3 + $0x438] sm:$0xff] %vm931, 0.0
        %1068 = vst.msk [vmem:[#allocation3 + $0x440] sm:$0xff] %vm931, 0.0
        %1069 = vst.msk [vmem:[#allocation3 + $0x448] sm:$0xff] %vm931, 0.0
        %1070 = vst.msk [vmem:[#allocation3 + $0x450] sm:$0xff] %vm931, 0.0
        %1071 = vst.msk [vmem:[#allocation3 + $0x458] sm:$0xff] %vm931, 0.0
        %1072 = vst.msk [vmem:[#allocation3 + $0x460] sm:$0xff] %vm931, 0.0
        %1073 = vst.msk [vmem:[#allocation3 + $0x468] sm:$0xff] %vm931, 0.0
        %1074 = vst.msk [vmem:[#allocation3 + $0x470] sm:$0xff] %vm931, 0.0
        %1075 = vst.msk [vmem:[#allocation3 + $0x478] sm:$0xff] %vm931, 0.0
        %vm1076 = vcmask 125952
        %1077 = vst.msk [vmem:[#allocation3 + $0x480] sm:$0xf] %vm1076, 0.0
        %vm1078 = vcmask 261120
        %1079 = vst.msk [vmem:[#allocation4] sm:$0xff] %vm1078, 0.0
        %1080 = vst.msk [vmem:[#allocation4 + $0x8] sm:$0xff] %vm1078, 0.0
        %1081 = vst.msk [vmem:[#allocation4 + $0x10] sm:$0xff] %vm1078, 0.0
        %1082 = vst.msk [vmem:[#allocation4 + $0x18] sm:$0xff] %vm1078, 0.0
        %1083 = vst.msk [vmem:[#allocation4 + $0x20] sm:$0xff] %vm1078, 0.0
        %1084 = vst.msk [vmem:[#allocation4 + $0x28] sm:$0xff] %vm1078, 0.0
        %1085 = vst.msk [vmem:[#allocation4 + $0x30] sm:$0xff] %vm1078, 0.0
        %1086 = vst.msk [vmem:[#allocation4 + $0x38] sm:$0xff] %vm1078, 0.0
        %1087 = vst.msk [vmem:[#allocation4 + $0x40] sm:$0xff] %vm1078, 0.0
        %1088 = vst.msk [vmem:[#allocation4 + $0x48] sm:$0xff] %vm1078, 0.0
        %1089 = vst.msk [vmem:[#allocation4 + $0x50] sm:$0xff] %vm1078, 0.0
        %1090 = vst.msk [vmem:[#allocation4 + $0x58] sm:$0xff] %vm1078, 0.0
        %1091 = vst.msk [vmem:[#allocation4 + $0x60] sm:$0xff] %vm1078, 0.0
        %1092 = vst.msk [vmem:[#allocation4 + $0x68] sm:$0xff] %vm1078, 0.0
        %1093 = vst.msk [vmem:[#allocation4 + $0x70] sm:$0xff] %vm1078, 0.0
        %1094 = vst.msk [vmem:[#allocation4 + $0x78] sm:$0xff] %vm1078, 0.0
        %1095 = vst.msk [vmem:[#allocation4 + $0x80] sm:$0xff] %vm1078, 0.0
        %1096 = vst.msk [vmem:[#allocation4 + $0x88] sm:$0xff] %vm1078, 0.0
        %1097 = vst.msk [vmem:[#allocation4 + $0x90] sm:$0xff] %vm1078, 0.0
        %1098 = vst.msk [vmem:[#allocation4 + $0x98] sm:$0xff] %vm1078, 0.0
        %1099 = vst.msk [vmem:[#allocation4 + $0xa0] sm:$0xff] %vm1078, 0.0
        %1100 = vst.msk [vmem:[#allocation4 + $0xa8] sm:$0xff] %vm1078, 0.0
        %1101 = vst.msk [vmem:[#allocation4 + $0xb0] sm:$0xff] %vm1078, 0.0
        %1102 = vst.msk [vmem:[#allocation4 + $0xb8] sm:$0xff] %vm1078, 0.0
        %1103 = vst.msk [vmem:[#allocation4 + $0xc0] sm:$0xff] %vm1078, 0.0
        %1104 = vst.msk [vmem:[#allocation4 + $0xc8] sm:$0xff] %vm1078, 0.0
        %1105 = vst.msk [vmem:[#allocation4 + $0xd0] sm:$0xff] %vm1078, 0.0
        %1106 = vst.msk [vmem:[#allocation4 + $0xd8] sm:$0xff] %vm1078, 0.0
        %1107 = vst.msk [vmem:[#allocation4 + $0xe0] sm:$0xff] %vm1078, 0.0
        %1108 = vst.msk [vmem:[#allocation4 + $0xe8] sm:$0xff] %vm1078, 0.0
        %1109 = vst.msk [vmem:[#allocation4 + $0xf0] sm:$0xff] %vm1078, 0.0
        %1110 = vst.msk [vmem:[#allocation4 + $0xf8] sm:$0xff] %vm1078, 0.0
        %1111 = vst.msk [vmem:[#allocation4 + $0x100] sm:$0xff] %vm1078, 0.0
        %1112 = vst.msk [vmem:[#allocation4 + $0x108] sm:$0xff] %vm1078, 0.0
        %1113 = vst.msk [vmem:[#allocation4 + $0x110] sm:$0xff] %vm1078, 0.0
        %1114 = vst.msk [vmem:[#allocation4 + $0x118] sm:$0xff] %vm1078, 0.0
        %1115 = vst.msk [vmem:[#allocation4 + $0x120] sm:$0xff] %vm1078, 0.0
        %1116 = vst.msk [vmem:[#allocation4 + $0x128] sm:$0xff] %vm1078, 0.0
        %1117 = vst.msk [vmem:[#allocation4 + $0x130] sm:$0xff] %vm1078, 0.0
        %1118 = vst.msk [vmem:[#allocation4 + $0x138] sm:$0xff] %vm1078, 0.0
        %vm1119 = vcmask 257024
        %1120 = vst.msk [vmem:[#allocation4 + $0x140] sm:$0xf] %vm1119, 0.0
        %vm1121 = vcmask 523264
        %1122 = vst.msk [vmem:[#allocation5] sm:$0xff] %vm1121, 0.0
        %1123 = vst.msk [vmem:[#allocation5 + $0x8] sm:$0xff] %vm1121, 0.0
        %1124 = vst.msk [vmem:[#allocation5 + $0x10] sm:$0xff] %vm1121, 0.0
        %1125 = vst.msk [vmem:[#allocation5 + $0x18] sm:$0xff] %vm1121, 0.0
        %1126 = vst.msk [vmem:[#allocation5 + $0x20] sm:$0xff] %vm1121, 0.0
        %1127 = vst.msk [vmem:[#allocation5 + $0x28] sm:$0xff] %vm1121, 0.0
        %1128 = vst.msk [vmem:[#allocation5 + $0x30] sm:$0xff] %vm1121, 0.0
        %1129 = vst.msk [vmem:[#allocation5 + $0x38] sm:$0xff] %vm1121, 0.0
        %1130 = vst.msk [vmem:[#allocation5 + $0x40] sm:$0xff] %vm1121, 0.0
        %1131 = vst.msk [vmem:[#allocation5 + $0x48] sm:$0xff] %vm1121, 0.0
        %1132 = vst.msk [vmem:[#allocation5 + $0x50] sm:$0xff] %vm1121, 0.0
        %1133 = vst.msk [vmem:[#allocation5 + $0x58] sm:$0xff] %vm1121, 0.0
        %vm1134 = vcmask 519168
        %1135 = vst.msk [vmem:[#allocation5 + $0x60] sm:$0xf] %vm1134, 0.0
        loop: start=0, step=1, limit=64
        $region65: #{image_encoder_forward.3} parent=63 // loop_pre_header
          _
        $region66: #{image_encoder_forward.3} parent=63 // loop_header
          %s1137 = sphi 0, %s1141
          %p1138 = scmp.ge.s32.totalorder %s1137, 64
        $region67: #{image_encoder_forward.3} parent=63 // loop_header_branch
          %1140 = sbr.rel (%p1138) target = $region71
        $region68: #{image_encoder_forward.3} parent=63 // loop_body
          %s1142 = smul.u32 %s1137, 64
          %s1143 = scalar_lea.vmem %s383, %s1142
          %v1144 = vld [vmem:[%s1143] sm:$0xff]
          %v1145 = vld [vmem:[%s1143 + $0x8] sm:$0xff]
          %v1146 = vld [vmem:[%s1143 + $0x10] sm:$0xff]
          %v1147 = vld [vmem:[%s1143 + $0x18] sm:$0xff]
          %v1148 = vld [vmem:[%s1143 + $0x20] sm:$0xff]
          %v1149 = vld [vmem:[%s1143 + $0x28] sm:$0xff]
          %v1150 = vld [vmem:[%s1143 + $0x30] sm:$0xff]
          %v1151 = vld [vmem:[%s1143 + $0x38] sm:$0xff]
          %s1152 = sadd.s32 %s1137, 1
          %s1153 = smul.u32 %s1152, 66
          %s1154 = sadd.s32 %s1153, 1
          %s1155 = scalar_lea.vmem [#allocation2], %s1154
          %1156 = vst.msk [vmem:[%s1155] sm:$0xff] %vm384, %v1144
          %1157 = vst.msk [vmem:[%s1155 + $0x8] sm:$0xff] %vm384, %v1145
          %1158 = vst.msk [vmem:[%s1155 + $0x10] sm:$0xff] %vm384, %v1146
          %1159 = vst.msk [vmem:[%s1155 + $0x18] sm:$0xff] %vm384, %v1147
          %1160 = vst.msk [vmem:[%s1155 + $0x20] sm:$0xff] %vm384, %v1148
          %1161 = vst.msk [vmem:[%s1155 + $0x28] sm:$0xff] %vm384, %v1149
          %1162 = vst.msk [vmem:[%s1155 + $0x30] sm:$0xff] %vm384, %v1150
          %1163 = vst.msk [vmem:[%s1155 + $0x38] sm:$0xff] %vm384, %v1151
        $region69: #{image_encoder_forward.3} parent=63 // loop_footer
          %s1141 = sadd.s32 1, %s1137
        $region70: #{image_encoder_forward.3} parent=63 // loop_footer_branch
          %1136 = sbr.rel target = $region66
        $region71: #{image_encoder_forward.3} parent=63 // loop_exit
          _
        loop: start=0, step=1, limit=32
        $region72: #{image_encoder_forward.3} parent=63 // loop_pre_header
          _
        $region73: #{image_encoder_forward.3} parent=63 // loop_header
          %s1165 = sphi 0, %s1169
          %p1166 = scmp.ge.s32.totalorder %s1165, 32
        $region74: #{image_encoder_forward.3} parent=63 // loop_header_branch
          %1168 = sbr.rel (%p1166) target = $region78
        $region75: #{image_encoder_forward.3} parent=63 // loop_body
          %s1170 = smul.u32 %s1165, 132
          %s1171 = scalar_lea.vmem [#allocation2], %s1170
          %v1172 = vld [vmem:[%s1171] ss:$2 sm:$0xff]
          %s1173 = scalar_lea.vmem %s1171, 16 [#allocation2]
          %v1174 = vld [vmem:[%s1173] ss:$2 sm:$0xff]
          %s1175 = scalar_lea.vmem %s1171, 32 [#allocation2]
          %v1176 = vld [vmem:[%s1175] ss:$2 sm:$0xff]
          %s1177 = scalar_lea.vmem %s1171, 48 [#allocation2]
          %v1178 = vld [vmem:[%s1177] ss:$2 sm:$0xff]
          %v1179 = vld [vmem:[%s1] sm:$0xff]
          %s1180 = sadd.s32 %s1170, 1
          %s1181 = scalar_lea.vmem [#allocation2], %s1180
          %v1182 = vld [vmem:[%s1181] ss:$2 sm:$0xff]
          %s1183 = scalar_lea.vmem %s1181, 16 [#allocation2]
          %v1184 = vld [vmem:[%s1183] ss:$2 sm:$0xff]
          %s1185 = scalar_lea.vmem %s1181, 32 [#allocation2]
          %v1186 = vld [vmem:[%s1185] ss:$2 sm:$0xff]
          %s1187 = scalar_lea.vmem %s1181, 48 [#allocation2]
          %v1188 = vld [vmem:[%s1187] ss:$2 sm:$0xff]
          %v1189 = vld [vmem:[%s1 + $0x8] sm:$0xff]
          %v1191 = vsel %vm384, %v1182, 0
          %v1194 = vsel %vm384, %v1184, 0
          %v1197 = vsel %vm384, %v1186, 0
          %v1200 = vsel %vm384, %v1188, 0
          %1202 = vmatprep.subr.mxu0 0.0
          %1203 = vmatpush1.msra.mxu0 %v1189
          %1204 = vmatprep.subr.mxu0 0.0
          %1205 = vmatpush1.msra.mxu0 0.0
          %1206 = vmatprep.subr.mxu0 0.0
          %1207 = vmatpush1.msra.mxu0 0.0
          %1208 = vmatprep.subr.mxu0 0.0
          %1209 = vmatpush1.msra.mxu0 0.0
          %1210 = vmatprep.subr.mxu0 0.0
          %1211 = vmatpush1.msra.mxu0 0.0
          %1212 = vmatprep.subr.mxu0 0.0
          %1213 = vmatpush1.msra.mxu0 0.0
          %1214 = vmatprep.subr.mxu0 0.0
          %1215 = vmatpush1.msra.mxu0 0.0
          %1216 = vmatprep.subr.mxu0 0.0
          %1217 = vmatpush1.msra.mxu0 0.0
          %1218 = vmatprep.subr.mxu0 0.0
          %1219 = vmatpush1.msra.mxu0 0.0
          %1220 = vmatprep.subr.mxu0 0.0
          %1221 = vmatpush1.msra.mxu0 0.0
          %1222 = vmatprep.subr.mxu0 0.0
          %1223 = vmatpush1.msra.mxu0 0.0
          %1224 = vmatprep.subr.mxu0 0.0
          %1225 = vmatpush1.msra.mxu0 0.0
          %1226 = vmatprep.subr.mxu0 0.0
          %1227 = vmatpush1.msra.mxu0 0.0
          %1228 = vmatprep.subr.mxu0 0.0
          %1229 = vmatpush1.msra.mxu0 0.0
          %1230 = vmatprep.subr.mxu0 0.0
          %1231 = vmatpush1.msra.mxu0 0.0
          %1232 = vmatprep.subr.mxu0 0.0
          %1233 = vmatpush1.msra.mxu0 0.0
          %1234 = vmatprep.subr.mxu0 0.0
          %1235 = vmatpush1.msra.mxu0 0.0
          %1236 = vmatprep.subr.mxu0 0.0
          %1237 = vmatpush1.msra.mxu0 0.0
          %1238 = vmatprep.subr.mxu0 0.0
          %1239 = vmatpush1.msra.mxu0 0.0
          %1240 = vmatprep.subr.mxu0 0.0
          %1241 = vmatpush1.msra.mxu0 0.0
          %1242 = vmatprep.subr.mxu0 0.0
          %1243 = vmatpush1.msra.mxu0 0.0
          %1244 = vmatprep.subr.mxu0 0.0
          %1245 = vmatpush1.msra.mxu0 0.0
          %1246 = vmatprep.subr.mxu0 0.0
          %1247 = vmatpush1.msra.mxu0 0.0
          %1248 = vmatprep.subr.mxu0 0.0
          %1249 = vmatpush1.msra.mxu0 0.0
          %1250 = vmatprep.subr.mxu0 0.0
          %1251 = vmatpush1.msra.mxu0 0.0
          %1252 = vmatprep.subr.mxu0 0.0
          %1253 = vmatpush1.msra.mxu0 0.0
          %1254 = vmatprep.subr.mxu0 0.0
          %1255 = vmatpush1.msra.mxu0 0.0
          %1256 = vmatprep.subr.mxu0 0.0
          %1257 = vmatpush1.msra.mxu0 0.0
          %1258 = vmatprep.subr.mxu0 0.0
          %1259 = vmatpush1.msra.mxu0 0.0
          %1260 = vmatprep.subr.mxu0 0.0
          %1261 = vmatpush1.msra.mxu0 0.0
          %1262 = vmatprep.subr.mxu0 0.0
          %1263 = vmatpush1.msra.mxu0 0.0
          %1264 = vmatprep.subr.mxu0 0.0
          %1265 = vmatpush1.msra.mxu0 0.0
          %1266 = vmatprep.mubr.f32.mxu0 0.0
          %1267 = vmatmul.mubr.f32.gmra.mrb[0].mxu0 %v1191
          %v1268 = vpop.f32.mrb[0].mxu0
          %v1269 = vadd.f32 0.0, %v1268
          %v1270 = vpop.f32.mrb[0].mxu0
          %1271 = vmatprep.mubr.f32.mxu0 0.0
          %1272 = vmatmul.mubr.f32.gmra.mrb[0].mxu0 %v1194
          %v1273 = vpop.f32.mrb[0].mxu0
          %v1274 = vadd.f32 0.0, %v1273
          %v1275 = vpop.f32.mrb[0].mxu0
          %1276 = vmatprep.mubr.f32.mxu0 0.0
          %1277 = vmatmul.mubr.f32.gmra.mrb[0].mxu0 %v1197
          %v1278 = vpop.f32.mrb[0].mxu0
          %v1279 = vadd.f32 0.0, %v1278
          %v1280 = vpop.f32.mrb[0].mxu0
          %1281 = vmatprep.mubr.f32.mxu0 0.0
          %1282 = vmatmul.mubr.f32.gmra.mrb[0].mxu0 %v1200
          %v1283 = vpop.f32.mrb[0].mxu0
          %v1284 = vadd.f32 0.0, %v1283
          %v1285 = vpop.f32.mrb[0].mxu0
          %1286 = vdwg.mxu0
          %v1288 = vsel %vm384, %v1172, 0
          %v1291 = vsel %vm384, %v1174, 0
          %v1294 = vsel %vm384, %v1176, 0
          %v1297 = vsel %vm384, %v1178, 0
          %1299 = vmatprep.subr.mxu0 0.0
          %1300 = vmatpush1.msra.mxu0 %v1179
          %1301 = vmatprep.subr.mxu0 0.0
          %1302 = vmatpush1.msra.mxu0 0.0
          %1303 = vmatprep.subr.mxu0 0.0
          %1304 = vmatpush1.msra.mxu0 0.0
          %1305 = vmatprep.subr.mxu0 0.0
          %1306 = vmatpush1.msra.mxu0 0.0
          %1307 = vmatprep.subr.mxu0 0.0
          %1308 = vmatpush1.msra.mxu0 0.0
          %1309 = vmatprep.subr.mxu0 0.0
          %1310 = vmatpush1.msra.mxu0 0.0
          %1311 = vmatprep.subr.mxu0 0.0
          %1312 = vmatpush1.msra.mxu0 0.0
          %1313 = vmatprep.subr.mxu0 0.0
          %1314 = vmatpush1.msra.mxu0 0.0
          %1315 = vmatprep.subr.mxu0 0.0
          %1316 = vmatpush1.msra.mxu0 0.0
          %1317 = vmatprep.subr.mxu0 0.0
          %1318 = vmatpush1.msra.mxu0 0.0
          %1319 = vmatprep.subr.mxu0 0.0
          %1320 = vmatpush1.msra.mxu0 0.0
          %1321 = vmatprep.subr.mxu0 0.0
          %1322 = vmatpush1.msra.mxu0 0.0
          %1323 = vmatprep.subr.mxu0 0.0
          %1324 = vmatpush1.msra.mxu0 0.0
          %1325 = vmatprep.subr.mxu0 0.0
          %1326 = vmatpush1.msra.mxu0 0.0
          %1327 = vmatprep.subr.mxu0 0.0
          %1328 = vmatpush1.msra.mxu0 0.0
          %1329 = vmatprep.subr.mxu0 0.0
          %1330 = vmatpush1.msra.mxu0 0.0
          %1331 = vmatprep.subr.mxu0 0.0
          %1332 = vmatpush1.msra.mxu0 0.0
          %1333 = vmatprep.subr.mxu0 0.0
          %1334 = vmatpush1.msra.mxu0 0.0
          %1335 = vmatprep.subr.mxu0 0.0
          %1336 = vmatpush1.msra.mxu0 0.0
          %1337 = vmatprep.subr.mxu0 0.0
          %1338 = vmatpush1.msra.mxu0 0.0
          %1339 = vmatprep.subr.mxu0 0.0
          %1340 = vmatpush1.msra.mxu0 0.0
          %1341 = vmatprep.subr.mxu0 0.0
          %1342 = vmatpush1.msra.mxu0 0.0
          %1343 = vmatprep.subr.mxu0 0.0
          %1344 = vmatpush1.msra.mxu0 0.0
          %1345 = vmatprep.subr.mxu0 0.0
          %1346 = vmatpush1.msra.mxu0 0.0
          %1347 = vmatprep.subr.mxu0 0.0
          %1348 = vmatpush1.msra.mxu0 0.0
          %1349 = vmatprep.subr.mxu0 0.0
          %1350 = vmatpush1.msra.mxu0 0.0
          %1351 = vmatprep.subr.mxu0 0.0
          %1352 = vmatpush1.msra.mxu0 0.0
          %1353 = vmatprep.subr.mxu0 0.0
          %1354 = vmatpush1.msra.mxu0 0.0
          %1355 = vmatprep.subr.mxu0 0.0
          %1356 = vmatpush1.msra.mxu0 0.0
          %1357 = vmatprep.subr.mxu0 0.0
          %1358 = vmatpush1.msra.mxu0 0.0
          %1359 = vmatprep.subr.mxu0 0.0
          %1360 = vmatpush1.msra.mxu0 0.0
          %1361 = vmatprep.subr.mxu0 0.0
          %1362 = vmatpush1.msra.mxu0 0.0
          %1363 = vmatprep.mubr.f32.mxu0 0.0
          %1364 = vmatmul.mubr.f32.gmra.mrb[0].mxu0 %v1288
          %v1365 = vpop.f32.mrb[0].mxu0
          %v1366 = vadd.f32 %v1269, %v1365
          %v1367 = vpop.f32.mrb[0].mxu0
          %1368 = vmatprep.mubr.f32.mxu0 0.0
          %1369 = vmatmul.mubr.f32.gmra.mrb[0].mxu0 %v1291
          %v1370 = vpop.f32.mrb[0].mxu0
          %v1371 = vadd.f32 %v1274, %v1370
          %v1372 = vpop.f32.mrb[0].mxu0
          %1373 = vmatprep.mubr.f32.mxu0 0.0
          %1374 = vmatmul.mubr.f32.gmra.mrb[0].mxu0 %v1294
          %v1375 = vpop.f32.mrb[0].mxu0
          %v1376 = vadd.f32 %v1279, %v1375
          %v1377 = vpop.f32.mrb[0].mxu0
          %1378 = vmatprep.mubr.f32.mxu0 0.0
          %1379 = vmatmul.mubr.f32.gmra.mrb[0].mxu0 %v1297
          %v1380 = vpop.f32.mrb[0].mxu0
          %v1381 = vadd.f32 %v1284, %v1380
          %v1382 = vpop.f32.mrb[0].mxu0
          %1383 = vdwg.mxu0
          %s1384 = sadd.s32 %s1170, 2
          %s1385 = scalar_lea.vmem [#allocation2], %s1384
          %v1386 = vld [vmem:[%s1385] ss:$2 sm:$0xff]
          %s1387 = scalar_lea.vmem %s1385, 16 [#allocation2]
          %v1388 = vld [vmem:[%s1387] ss:$2 sm:$0xff]
          %s1389 = scalar_lea.vmem %s1385, 32 [#allocation2]
          %v1390 = vld [vmem:[%s1389] ss:$2 sm:$0xff]
          %s1391 = scalar_lea.vmem %s1385, 48 [#allocation2]
          %v1392 = vld [vmem:[%s1391] ss:$2 sm:$0xff]
          %v1393 = vld [vmem:[%s1 + $0x10] sm:$0xff]
          %v1395 = vsel %vm384, %v1386, 0
          %v1398 = vsel %vm384, %v1388, 0
          %v1401 = vsel %vm384, %v1390, 0
          %v1404 = vsel %vm384, %v1392, 0
          %1406 = vmatprep.subr.mxu0 0.0
          %1407 = vmatpush1.msra.mxu0 %v1393
          %1408 = vmatprep.subr.mxu0 0.0
          %1409 = vmatpush1.msra.mxu0 0.0
          %1410 = vmatprep.subr.mxu0 0.0
          %1411 = vmatpush1.msra.mxu0 0.0
          %1412 = vmatprep.subr.mxu0 0.0
          %1413 = vmatpush1.msra.mxu0 0.0
          %1414 = vmatprep.subr.mxu0 0.0
          %1415 = vmatpush1.msra.mxu0 0.0
          %1416 = vmatprep.subr.mxu0 0.0
          %1417 = vmatpush1.msra.mxu0 0.0
          %1418 = vmatprep.subr.mxu0 0.0
          %1419 = vmatpush1.msra.mxu0 0.0
          %1420 = vmatprep.subr.mxu0 0.0
          %1421 = vmatpush1.msra.mxu0 0.0
          %1422 = vmatprep.subr.mxu0 0.0
          %1423 = vmatpush1.msra.mxu0 0.0
          %1424 = vmatprep.subr.mxu0 0.0
          %1425 = vmatpush1.msra.mxu0 0.0
          %1426 = vmatprep.subr.mxu0 0.0
          %1427 = vmatpush1.msra.mxu0 0.0
          %1428 = vmatprep.subr.mxu0 0.0
          %1429 = vmatpush1.msra.mxu0 0.0
          %1430 = vmatprep.subr.mxu0 0.0
          %1431 = vmatpush1.msra.mxu0 0.0
          %1432 = vmatprep.subr.mxu0 0.0
          %1433 = vmatpush1.msra.mxu0 0.0
          %1434 = vmatprep.subr.mxu0 0.0
          %1435 = vmatpush1.msra.mxu0 0.0
          %1436 = vmatprep.subr.mxu0 0.0
          %1437 = vmatpush1.msra.mxu0 0.0
          %1438 = vmatprep.subr.mxu0 0.0
          %1439 = vmatpush1.msra.mxu0 0.0
          %1440 = vmatprep.subr.mxu0 0.0
          %1441 = vmatpush1.msra.mxu0 0.0
          %1442 = vmatprep.subr.mxu0 0.0
          %1443 = vmatpush1.msra.mxu0 0.0
          %1444 = vmatprep.subr.mxu0 0.0
          %1445 = vmatpush1.msra.mxu0 0.0
          %1446 = vmatprep.subr.mxu0 0.0
          %1447 = vmatpush1.msra.mxu0 0.0
          %1448 = vmatprep.subr.mxu0 0.0
          %1449 = vmatpush1.msra.mxu0 0.0
          %1450 = vmatprep.subr.mxu0 0.0
          %1451 = vmatpush1.msra.mxu0 0.0
          %1452 = vmatprep.subr.mxu0 0.0
          %1453 = vmatpush1.msra.mxu0 0.0
          %1454 = vmatprep.subr.mxu0 0.0
          %1455 = vmatpush1.msra.mxu0 0.0
          %1456 = vmatprep.subr.mxu0 0.0
          %1457 = vmatpush1.msra.mxu0 0.0
          %1458 = vmatprep.subr.mxu0 0.0
          %1459 = vmatpush1.msra.mxu0 0.0
          %1460 = vmatprep.subr.mxu0 0.0
          %1461 = vmatpush1.msra.mxu0 0.0
          %1462 = vmatprep.subr.mxu0 0.0
          %1463 = vmatpush1.msra.mxu0 0.0
          %1464 = vmatprep.subr.mxu0 0.0
          %1465 = vmatpush1.msra.mxu0 0.0
          %1466 = vmatprep.subr.mxu0 0.0
          %1467 = vmatpush1.msra.mxu0 0.0
          %1468 = vmatprep.subr.mxu0 0.0
          %1469 = vmatpush1.msra.mxu0 0.0
          %1470 = vmatprep.mubr.f32.mxu0 0.0
          %1471 = vmatmul.mubr.f32.gmra.mrb[0].mxu0 %v1395
          %v1472 = vpop.f32.mrb[0].mxu0
          %v1473 = vadd.f32 0.0, %v1472
          %v1474 = vpop.f32.mrb[0].mxu0
          %1475 = vmatprep.mubr.f32.mxu0 0.0
          %1476 = vmatmul.mubr.f32.gmra.mrb[0].mxu0 %v1398
          %v1477 = vpop.f32.mrb[0].mxu0
          %v1478 = vadd.f32 0.0, %v1477
          %v1479 = vpop.f32.mrb[0].mxu0
          %1480 = vmatprep.mubr.f32.mxu0 0.0
          %1481 = vmatmul.mubr.f32.gmra.mrb[0].mxu0 %v1401
          %v1482 = vpop.f32.mrb[0].mxu0
          %v1483 = vadd.f32 0.0, %v1482
          %v1484 = vpop.f32.mrb[0].mxu0
          %1485 = vmatprep.mubr.f32.mxu0 0.0
          %1486 = vmatmul.mubr.f32.gmra.mrb[0].mxu0 %v1404
          %v1487 = vpop.f32.mrb[0].mxu0
          %v1488 = vadd.f32 0.0, %v1487
          %v1489 = vpop.f32.mrb[0].mxu0
          %1490 = vdwg.mxu0
          %v1491 = vadd.f32 %v1366, %v1473
          %v1492 = vadd.f32 %v1371, %v1478
          %v1493 = vadd.f32 %v1376, %v1483
          %v1494 = vadd.f32 %v1381, %v1488
          %s1495 = smul.u32 %s1165, 2
          %s1496 = sadd.s32 %s1495, 1
          %s1497 = smul.u32 %s1496, 66
          %s1498 = scalar_lea.vmem [#allocation2], %s1497
          %v1499 = vld [vmem:[%s1498] ss:$2 sm:$0xff]
          %s1500 = scalar_lea.vmem %s1498, 16 [#allocation2]
          %v1501 = vld [vmem:[%s1500] ss:$2 sm:$0xff]
          %s1502 = scalar_lea.vmem %s1498, 32 [#allocation2]
          %v1503 = vld [vmem:[%s1502] ss:$2 sm:$0xff]
          %s1504 = scalar_lea.vmem %s1498, 48 [#allocation2]
          %v1505 = vld [vmem:[%s1504] ss:$2 sm:$0xff]
          %v1506 = vld [vmem:[%s1 + $0x18] sm:$0xff]
          %v1508 = vsel %vm384, %v1499, 0
          %v1511 = vsel %vm384, %v1501, 0
          %v1514 = vsel %vm384, %v1503, 0
          %v1517 = vsel %vm384, %v1505, 0
          %1519 = vmatprep.subr.mxu0 0.0
          %1520 = vmatpush1.msra.mxu0 %v1506
          %1521 = vmatprep.subr.mxu0 0.0
          %1522 = vmatpush1.msra.mxu0 0.0
          %1523 = vmatprep.subr.mxu0 0.0
          %1524 = vmatpush1.msra.mxu0 0.0
          %1525 = vmatprep.subr.mxu0 0.0
          %1526 = vmatpush1.msra.mxu0 0.0
          %1527 = vmatprep.subr.mxu0 0.0
          %1528 = vmatpush1.msra.mxu0 0.0
          %1529 = vmatprep.subr.mxu0 0.0
          %1530 = vmatpush1.msra.mxu0 0.0
          %1531 = vmatprep.subr.mxu0 0.0
          %1532 = vmatpush1.msra.mxu0 0.0
          %1533 = vmatprep.subr.mxu0 0.0
          %1534 = vmatpush1.msra.mxu0 0.0
          %1535 = vmatprep.subr.mxu0 0.0
          %1536 = vmatpush1.msra.mxu0 0.0
          %1537 = vmatprep.subr.mxu0 0.0
          %1538 = vmatpush1.msra.mxu0 0.0
          %1539 = vmatprep.subr.mxu0 0.0
          %1540 = vmatpush1.msra.mxu0 0.0
          %1541 = vmatprep.subr.mxu0 0.0
          %1542 = vmatpush1.msra.mxu0 0.0
          %1543 = vmatprep.subr.mxu0 0.0
          %1544 = vmatpush1.msra.mxu0 0.0
          %1545 = vmatprep.subr.mxu0 0.0
          %1546 = vmatpush1.msra.mxu0 0.0
          %1547 = vmatprep.subr.mxu0 0.0
          %1548 = vmatpush1.msra.mxu0 0.0
          %1549 = vmatprep.subr.mxu0 0.0
          %1550 = vmatpush1.msra.mxu0 0.0
          %1551 = vmatprep.subr.mxu0 0.0
          %1552 = vmatpush1.msra.mxu0 0.0
          %1553 = vmatprep.subr.mxu0 0.0
          %1554 = vmatpush1.msra.mxu0 0.0
          %1555 = vmatprep.subr.mxu0 0.0
          %1556 = vmatpush1.msra.mxu0 0.0
          %1557 = vmatprep.subr.mxu0 0.0
          %1558 = vmatpush1.msra.mxu0 0.0
          %1559 = vmatprep.subr.mxu0 0.0
          %1560 = vmatpush1.msra.mxu0 0.0
          %1561 = vmatprep.subr.mxu0 0.0
          %1562 = vmatpush1.msra.mxu0 0.0
          %1563 = vmatprep.subr.mxu0 0.0
          %1564 = vmatpush1.msra.mxu0 0.0
          %1565 = vmatprep.subr.mxu0 0.0
          %1566 = vmatpush1.msra.mxu0 0.0
          %1567 = vmatprep.subr.mxu0 0.0
          %1568 = vmatpush1.msra.mxu0 0.0
          %1569 = vmatprep.subr.mxu0 0.0
          %1570 = vmatpush1.msra.mxu0 0.0
          %1571 = vmatprep.subr.mxu0 0.0
          %1572 = vmatpush1.msra.mxu0 0.0
          %1573 = vmatprep.subr.mxu0 0.0
          %1574 = vmatpush1.msra.mxu0 0.0
          %1575 = vmatprep.subr.mxu0 0.0
          %1576 = vmatpush1.msra.mxu0 0.0
          %1577 = vmatprep.subr.mxu0 0.0
          %1578 = vmatpush1.msra.mxu0 0.0
          %1579 = vmatprep.subr.mxu0 0.0
          %1580 = vmatpush1.msra.mxu0 0.0
          %1581 = vmatprep.subr.mxu0 0.0
          %1582 = vmatpush1.msra.mxu0 0.0
          %1583 = vmatprep.mubr.f32.mxu0 0.0
          %1584 = vmatmul.mubr.f32.gmra.mrb[0].mxu0 %v1508
          %v1585 = vpop.f32.mrb[0].mxu0
          %v1586 = vadd.f32 0.0, %v1585
          %v1587 = vpop.f32.mrb[0].mxu0
          %1588 = vmatprep.mubr.f32.mxu0 0.0
          %1589 = vmatmul.mubr.f32.gmra.mrb[0].mxu0 %v1511
          %v1590 = vpop.f32.mrb[0].mxu0
          %v1591 = vadd.f32 0.0, %v1590
          %v1592 = vpop.f32.mrb[0].mxu0
          %1593 = vmatprep.mubr.f32.mxu0 0.0
          %1594 = vmatmul.mubr.f32.gmra.mrb[0].mxu0 %v1514
          %v1595 = vpop.f32.mrb[0].mxu0
          %v1596 = vadd.f32 0.0, %v1595
          %v1597 = vpop.f32.mrb[0].mxu0
          %1598 = vmatprep.mubr.f32.mxu0 0.0
          %1599 = vmatmul.mubr.f32.gmra.mrb[0].mxu0 %v1517
          %v1600 = vpop.f32.mrb[0].mxu0
          %v1601 = vadd.f32 0.0, %v1600
          %v1602 = vpop.f32.mrb[0].mxu0
          %1603 = vdwg.mxu0
          %v1604 = vadd.f32 %v1491, %v1586
          %v1605 = vadd.f32 %v1492, %v1591
          %v1606 = vadd.f32 %v1493, %v1596
          %v1607 = vadd.f32 %v1494, %v1601
          %s1608 = sadd.s32 %s1497, 1
          %s1609 = scalar_lea.vmem [#allocation2], %s1608
          %v1610 = vld [vmem:[%s1609] ss:$2 sm:$0xff]
          %s1611 = scalar_lea.vmem %s1609, 16 [#allocation2]
          %v1612 = vld [vmem:[%s1611] ss:$2 sm:$0xff]
          %s1613 = scalar_lea.vmem %s1609, 32 [#allocation2]
          %v1614 = vld [vmem:[%s1613] ss:$2 sm:$0xff]
          %s1615 = scalar_lea.vmem %s1609, 48 [#allocation2]
          %v1616 = vld [vmem:[%s1615] ss:$2 sm:$0xff]
          %v1617 = vld [vmem:[%s1 + $0x20] sm:$0xff]
          %v1619 = vsel %vm384, %v1610, 0
          %v1622 = vsel %vm384, %v1612, 0
          %v1625 = vsel %vm384, %v1614, 0
          %v1628 = vsel %vm384, %v1616, 0
          %1630 = vmatprep.subr.mxu0 0.0
          %1631 = vmatpush1.msra.mxu0 %v1617
          %1632 = vmatprep.subr.mxu0 0.0
          %1633 = vmatpush1.msra.mxu0 0.0
          %1634 = vmatprep.subr.mxu0 0.0
          %1635 = vmatpush1.msra.mxu0 0.0
          %1636 = vmatprep.subr.mxu0 0.0
          %1637 = vmatpush1.msra.mxu0 0.0
          %1638 = vmatprep.subr.mxu0 0.0
          %1639 = vmatpush1.msra.mxu0 0.0
          %1640 = vmatprep.subr.mxu0 0.0
          %1641 = vmatpush1.msra.mxu0 0.0
          %1642 = vmatprep.subr.mxu0 0.0
          %1643 = vmatpush1.msra.mxu0 0.0
          %1644 = vmatprep.subr.mxu0 0.0
          %1645 = vmatpush1.msra.mxu0 0.0
          %1646 = vmatprep.subr.mxu0 0.0
          %1647 = vmatpush1.msra.mxu0 0.0
          %1648 = vmatprep.subr.mxu0 0.0
          %1649 = vmatpush1.msra.mxu0 0.0
          %1650 = vmatprep.subr.mxu0 0.0
          %1651 = vmatpush1.msra.mxu0 0.0
          %1652 = vmatprep.subr.mxu0 0.0
          %1653 = vmatpush1.msra.mxu0 0.0
          %1654 = vmatprep.subr.mxu0 0.0
          %1655 = vmatpush1.msra.mxu0 0.0
          %1656 = vmatprep.subr.mxu0 0.0
          %1657 = vmatpush1.msra.mxu0 0.0
          %1658 = vmatprep.subr.mxu0 0.0
          %1659 = vmatpush1.msra.mxu0 0.0
          %1660 = vmatprep.subr.mxu0 0.0
          %1661 = vmatpush1.msra.mxu0 0.0
          %1662 = vmatprep.subr.mxu0 0.0
          %1663 = vmatpush1.msra.mxu0 0.0
          %1664 = vmatprep.subr.mxu0 0.0
          %1665 = vmatpush1.msra.mxu0 0.0
          %1666 = vmatprep.subr.mxu0 0.0
          %1667 = vmatpush1.msra.mxu0 0.0
          %1668 = vmatprep.subr.mxu0 0.0
          %1669 = vmatpush1.msra.mxu0 0.0
          %1670 = vmatprep.subr.mxu0 0.0
          %1671 = vmatpush1.msra.mxu0 0.0
          %1672 = vmatprep.subr.mxu0 0.0
          %1673 = vmatpush1.msra.mxu0 0.0
          %1674 = vmatprep.subr.mxu0 0.0
          %1675 = vmatpush1.msra.mxu0 0.0
          %1676 = vmatprep.subr.mxu0 0.0
          %1677 = vmatpush1.msra.mxu0 0.0
          %1678 = vmatprep.subr.mxu0 0.0
          %1679 = vmatpush1.msra.mxu0 0.0
          %1680 = vmatprep.subr.mxu0 0.0
          %1681 = vmatpush1.msra.mxu0 0.0
          %1682 = vmatprep.subr.mxu0 0.0
          %1683 = vmatpush1.msra.mxu0 0.0
          %1684 = vmatprep.subr.mxu0 0.0
          %1685 = vmatpush1.msra.mxu0 0.0
          %1686 = vmatprep.subr.mxu0 0.0
          %1687 = vmatpush1.msra.mxu0 0.0
          %1688 = vmatprep.subr.mxu0 0.0
          %1689 = vmatpush1.msra.mxu0 0.0
          %1690 = vmatprep.subr.mxu0 0.0
          %1691 = vmatpush1.msra.mxu0 0.0
          %1692 = vmatprep.subr.mxu0 0.0
          %1693 = vmatpush1.msra.mxu0 0.0
          %1694 = vmatprep.mubr.f32.mxu0 0.0
          %1695 = vmatmul.mubr.f32.gmra.mrb[0].mxu0 %v1619
          %v1696 = vpop.f32.mrb[0].mxu0
          %v1697 = vadd.f32 0.0, %v1696
          %v1698 = vpop.f32.mrb[0].mxu0
          %1699 = vmatprep.mubr.f32.mxu0 0.0
          %1700 = vmatmul.mubr.f32.gmra.mrb[0].mxu0 %v1622
          %v1701 = vpop.f32.mrb[0].mxu0
          %v1702 = vadd.f32 0.0, %v1701
          %v1703 = vpop.f32.mrb[0].mxu0
          %1704 = vmatprep.mubr.f32.mxu0 0.0
          %1705 = vmatmul.mubr.f32.gmra.mrb[0].mxu0 %v1625
          %v1706 = vpop.f32.mrb[0].mxu0
          %v1707 = vadd.f32 0.0, %v1706
          %v1708 = vpop.f32.mrb[0].mxu0
          %1709 = vmatprep.mubr.f32.mxu0 0.0
          %1710 = vmatmul.mubr.f32.gmra.mrb[0].mxu0 %v1628
          %v1711 = vpop.f32.mrb[0].mxu0
          %v1712 = vadd.f32 0.0, %v1711
          %v1713 = vpop.f32.mrb[0].mxu0
          %1714 = vdwg.mxu0
          %v1715 = vadd.f32 %v1604, %v1697
          %v1716 = vadd.f32 %v1605, %v1702
          %v1717 = vadd.f32 %v1606, %v1707
          %v1718 = vadd.f32 %v1607, %v1712
          %s1719 = sadd.s32 %s1497, 2
          %s1720 = scalar_lea.vmem [#allocation2], %s1719
          %v1721 = vld [vmem:[%s1720] ss:$2 sm:$0xff]
          %s1722 = scalar_lea.vmem %s1720, 16 [#allocation2]
          %v1723 = vld [vmem:[%s1722] ss:$2 sm:$0xff]
          %s1724 = scalar_lea.vmem %s1720, 32 [#allocation2]
          %v1725 = vld [vmem:[%s1724] ss:$2 sm:$0xff]
          %s1726 = scalar_lea.vmem %s1720, 48 [#allocation2]
          %v1727 = vld [vmem:[%s1726] ss:$2 sm:$0xff]
          %v1728 = vld [vmem:[%s1 + $0x28] sm:$0xff]
          %v1730 = vsel %vm384, %v1721, 0
          %v1733 = vsel %vm384, %v1723, 0
          %v1736 = vsel %vm384, %v1725, 0
          %v1739 = vsel %vm384, %v1727, 0
          %1741 = vmatprep.subr.mxu0 0.0
          %1742 = vmatpush1.msra.mxu0 %v1728
          %1743 = vmatprep.subr.mxu0 0.0
          %1744 = vmatpush1.msra.mxu0 0.0
          %1745 = vmatprep.subr.mxu0 0.0
          %1746 = vmatpush1.msra.mxu0 0.0
          %1747 = vmatprep.subr.mxu0 0.0
          %1748 = vmatpush1.msra.mxu0 0.0
          %1749 = vmatprep.subr.mxu0 0.0
          %1750 = vmatpush1.msra.mxu0 0.0
          %1751 = vmatprep.subr.mxu0 0.0
          %1752 = vmatpush1.msra.mxu0 0.0
          %1753 = vmatprep.subr.mxu0 0.0
          %1754 = vmatpush1.msra.mxu0 0.0
          %1755 = vmatprep.subr.mxu0 0.0
          %1756 = vmatpush1.msra.mxu0 0.0
          %1757 = vmatprep.subr.mxu0 0.0
          %1758 = vmatpush1.msra.mxu0 0.0
          %1759 = vmatprep.subr.mxu0 0.0
          %1760 = vmatpush1.msra.mxu0 0.0
          %1761 = vmatprep.subr.mxu0 0.0
          %1762 = vmatpush1.msra.mxu0 0.0
          %1763 = vmatprep.subr.mxu0 0.0
          %1764 = vmatpush1.msra.mxu0 0.0
          %1765 = vmatprep.subr.mxu0 0.0
          %1766 = vmatpush1.msra.mxu0 0.0
          %1767 = vmatprep.subr.mxu0 0.0
          %1768 = vmatpush1.msra.mxu0 0.0
          %1769 = vmatprep.subr.mxu0 0.0
          %1770 = vmatpush1.msra.mxu0 0.0
          %1771 = vmatprep.subr.mxu0 0.0
          %1772 = vmatpush1.msra.mxu0 0.0
          %1773 = vmatprep.subr.mxu0 0.0
          %1774 = vmatpush1.msra.mxu0 0.0
          %1775 = vmatprep.subr.mxu0 0.0
          %1776 = vmatpush1.msra.mxu0 0.0
          %1777 = vmatprep.subr.mxu0 0.0
          %1778 = vmatpush1.msra.mxu0 0.0
          %1779 = vmatprep.subr.mxu0 0.0
          %1780 = vmatpush1.msra.mxu0 0.0
          %1781 = vmatprep.subr.mxu0 0.0
          %1782 = vmatpush1.msra.mxu0 0.0
          %1783 = vmatprep.subr.mxu0 0.0
          %1784 = vmatpush1.msra.mxu0 0.0
          %1785 = vmatprep.subr.mxu0 0.0
          %1786 = vmatpush1.msra.mxu0 0.0
          %1787 = vmatprep.subr.mxu0 0.0
          %1788 = vmatpush1.msra.mxu0 0.0
          %1789 = vmatprep.subr.mxu0 0.0
          %1790 = vmatpush1.msra.mxu0 0.0
          %1791 = vmatprep.subr.mxu0 0.0
          %1792 = vmatpush1.msra.mxu0 0.0
          %1793 = vmatprep.subr.mxu0 0.0
          %1794 = vmatpush1.msra.mxu0 0.0
          %1795 = vmatprep.subr.mxu0 0.0
          %1796 = vmatpush1.msra.mxu0 0.0
          %1797 = vmatprep.subr.mxu0 0.0
          %1798 = vmatpush1.msra.mxu0 0.0
          %1799 = vmatprep.subr.mxu0 0.0
          %1800 = vmatpush1.msra.mxu0 0.0
          %1801 = vmatprep.subr.mxu0 0.0
          %1802 = vmatpush1.msra.mxu0 0.0
          %1803 = vmatprep.subr.mxu0 0.0
          %1804 = vmatpush1.msra.mxu0 0.0
          %1805 = vmatprep.mubr.f32.mxu0 0.0
          %1806 = vmatmul.mubr.f32.gmra.mrb[0].mxu0 %v1730
          %v1807 = vpop.f32.mrb[0].mxu0
          %v1808 = vadd.f32 0.0, %v1807
          %v1809 = vpop.f32.mrb[0].mxu0
          %1810 = vmatprep.mubr.f32.mxu0 0.0
          %1811 = vmatmul.mubr.f32.gmra.mrb[0].mxu0 %v1733
          %v1812 = vpop.f32.mrb[0].mxu0
          %v1813 = vadd.f32 0.0, %v1812
          %v1814 = vpop.f32.mrb[0].mxu0
          %1815 = vmatprep.mubr.f32.mxu0 0.0
          %1816 = vmatmul.mubr.f32.gmra.mrb[0].mxu0 %v1736
          %v1817 = vpop.f32.mrb[0].mxu0
          %v1818 = vadd.f32 0.0, %v1817
          %v1819 = vpop.f32.mrb[0].mxu0
          %1820 = vmatprep.mubr.f32.mxu0 0.0
          %1821 = vmatmul.mubr.f32.gmra.mrb[0].mxu0 %v1739
          %v1822 = vpop.f32.mrb[0].mxu0
          %v1823 = vadd.f32 0.0, %v1822
          %v1824 = vpop.f32.mrb[0].mxu0
          %1825 = vdwg.mxu0
          %v1826 = vadd.f32 %v1715, %v1808
          %v1827 = vadd.f32 %v1716, %v1813
          %v1828 = vadd.f32 %v1717, %v1818
          %v1829 = vadd.f32 %v1718, %v1823
          %s1830 = sadd.s32 %s1495, 2
          %s1831 = smul.u32 %s1830, 66
          %s1832 = scalar_lea.vmem [#allocation2], %s1831
          %v1833 = vld [vmem:[%s1832] ss:$2 sm:$0xff]
          %s1834 = scalar_lea.vmem %s1832, 16 [#allocation2]
          %v1835 = vld [vmem:[%s1834] ss:$2 sm:$0xff]
          %s1836 = scalar_lea.vmem %s1832, 32 [#allocation2]
          %v1837 = vld [vmem:[%s1836] ss:$2 sm:$0xff]
          %s1838 = scalar_lea.vmem %s1832, 48 [#allocation2]
          %v1839 = vld [vmem:[%s1838] ss:$2 sm:$0xff]
          %v1840 = vld [vmem:[%s1 + $0x30] sm:$0xff]
          %v1842 = vsel %vm384, %v1833, 0
          %v1845 = vsel %vm384, %v1835, 0
          %v1848 = vsel %vm384, %v1837, 0
          %v1851 = vsel %vm384, %v1839, 0
          %1853 = vmatprep.subr.mxu0 0.0
          %1854 = vmatpush1.msra.mxu0 %v1840
          %1855 = vmatprep.subr.mxu0 0.0
          %1856 = vmatpush1.msra.mxu0 0.0
          %1857 = vmatprep.subr.mxu0 0.0
          %1858 = vmatpush1.msra.mxu0 0.0
          %1859 = vmatprep.subr.mxu0 0.0
          %1860 = vmatpush1.msra.mxu0 0.0
          %1861 = vmatprep.subr.mxu0 0.0
          %1862 = vmatpush1.msra.mxu0 0.0
          %1863 = vmatprep.subr.mxu0 0.0
          %1864 = vmatpush1.msra.mxu0 0.0
          %1865 = vmatprep.subr.mxu0 0.0
          %1866 = vmatpush1.msra.mxu0 0.0
          %1867 = vmatprep.subr.mxu0 0.0
          %1868 = vmatpush1.msra.mxu0 0.0
          %1869 = vmatprep.subr.mxu0 0.0
          %1870 = vmatpush1.msra.mxu0 0.0
          %1871 = vmatprep.subr.mxu0 0.0
          %1872 = vmatpush1.msra.mxu0 0.0
          %1873 = vmatprep.subr.mxu0 0.0
          %1874 = vmatpush1.msra.mxu0 0.0
          %1875 = vmatprep.subr.mxu0 0.0
          %1876 = vmatpush1.msra.mxu0 0.0
          %1877 = vmatprep.subr.mxu0 0.0
          %1878 = vmatpush1.msra.mxu0 0.0
          %1879 = vmatprep.subr.mxu0 0.0
          %1880 = vmatpush1.msra.mxu0 0.0
          %1881 = vmatprep.subr.mxu0 0.0
          %1882 = vmatpush1.msra.mxu0 0.0
          %1883 = vmatprep.subr.mxu0 0.0
          %1884 = vmatpush1.msra.mxu0 0.0
          %1885 = vmatprep.subr.mxu0 0.0
          %1886 = vmatpush1.msra.mxu0 0.0
          %1887 = vmatprep.subr.mxu0 0.0
          %1888 = vmatpush1.msra.mxu0 0.0
          %1889 = vmatprep.subr.mxu0 0.0
          %1890 = vmatpush1.msra.mxu0 0.0
          %1891 = vmatprep.subr.mxu0 0.0
          %1892 = vmatpush1.msra.mxu0 0.0
          %1893 = vmatprep.subr.mxu0 0.0
          %1894 = vmatpush1.msra.mxu0 0.0
          %1895 = vmatprep.subr.mxu0 0.0
          %1896 = vmatpush1.msra.mxu0 0.0
          %1897 = vmatprep.subr.mxu0 0.0
          %1898 = vmatpush1.msra.mxu0 0.0
          %1899 = vmatprep.subr.mxu0 0.0
          %1900 = vmatpush1.msra.mxu0 0.0
          %1901 = vmatprep.subr.mxu0 0.0
          %1902 = vmatpush1.msra.mxu0 0.0
          %1903 = vmatprep.subr.mxu0 0.0
          %1904 = vmatpush1.msra.mxu0 0.0
          %1905 = vmatprep.subr.mxu0 0.0
          %1906 = vmatpush1.msra.mxu0 0.0
          %1907 = vmatprep.subr.mxu0 0.0
          %1908 = vmatpush1.msra.mxu0 0.0
          %1909 = vmatprep.subr.mxu0 0.0
          %1910 = vmatpush1.msra.mxu0 0.0
          %1911 = vmatprep.subr.mxu0 0.0
          %1912 = vmatpush1.msra.mxu0 0.0
          %1913 = vmatprep.subr.mxu0 0.0
          %1914 = vmatpush1.msra.mxu0 0.0
          %1915 = vmatprep.subr.mxu0 0.0
          %1916 = vmatpush1.msra.mxu0 0.0
          %1917 = vmatprep.mubr.f32.mxu0 0.0
          %1918 = vmatmul.mubr.f32.gmra.mrb[0].mxu0 %v1842
          %v1919 = vpop.f32.mrb[0].mxu0
          %v1920 = vadd.f32 0.0, %v1919
          %v1921 = vpop.f32.mrb[0].mxu0
          %1922 = vmatprep.mubr.f32.mxu0 0.0
          %1923 = vmatmul.mubr.f32.gmra.mrb[0].mxu0 %v1845
          %v1924 = vpop.f32.mrb[0].mxu0
          %v1925 = vadd.f32 0.0, %v1924
          %v1926 = vpop.f32.mrb[0].mxu0
          %1927 = vmatprep.mubr.f32.mxu0 0.0
          %1928 = vmatmul.mubr.f32.gmra.mrb[0].mxu0 %v1848
          %v1929 = vpop.f32.mrb[0].mxu0
          %v1930 = vadd.f32 0.0, %v1929
          %v1931 = vpop.f32.mrb[0].mxu0
          %1932 = vmatprep.mubr.f32.mxu0 0.0
          %1933 = vmatmul.mubr.f32.gmra.mrb[0].mxu0 %v1851
          %v1934 = vpop.f32.mrb[0].mxu0
          %v1935 = vadd.f32 0.0, %v1934
          %v1936 = vpop.f32.mrb[0].mxu0
          %1937 = vdwg.mxu0
          %v1938 = vadd.f32 %v1826, %v1920
          %v1939 = vadd.f32 %v1827, %v1925
          %v1940 = vadd.f32 %v1828, %v1930
          %v1941 = vadd.f32 %v1829, %v1935
          %s1942 = sadd.s32 %s1831, 1
          %s1943 = scalar_lea.vmem [#allocation2], %s1942
          %v1944 = vld [vmem:[%s1943] ss:$2 sm:$0xff]
          %s1945 = scalar_lea.vmem %s1943, 16 [#allocation2]
          %v1946 = vld [vmem:[%s1945] ss:$2 sm:$0xff]
          %s1947 = scalar_lea.vmem %s1943, 32 [#allocation2]
          %v1948 = vld [vmem:[%s1947] ss:$2 sm:$0xff]
          %s1949 = scalar_lea.vmem %s1943, 48 [#allocation2]
          %v1950 = vld [vmem:[%s1949] ss:$2 sm:$0xff]
          %v1951 = vld [vmem:[%s1 + $0x38] sm:$0xff]
          %v1953 = vsel %vm384, %v1944, 0
          %v1956 = vsel %vm384, %v1946, 0
          %v1959 = vsel %vm384, %v1948, 0
          %v1962 = vsel %vm384, %v1950, 0
          %1964 = vmatprep.subr.mxu0 0.0
          %1965 = vmatpush1.msra.mxu0 %v1951
          %1966 = vmatprep.subr.mxu0 0.0
          %1967 = vmatpush1.msra.mxu0 0.0
          %1968 = vmatprep.subr.mxu0 0.0
          %1969 = vmatpush1.msra.mxu0 0.0
          %1970 = vmatprep.subr.mxu0 0.0
          %1971 = vmatpush1.msra.mxu0 0.0
          %1972 = vmatprep.subr.mxu0 0.0
          %1973 = vmatpush1.msra.mxu0 0.0
          %1974 = vmatprep.subr.mxu0 0.0
          %1975 = vmatpush1.msra.mxu0 0.0
          %1976 = vmatprep.subr.mxu0 0.0
          %1977 = vmatpush1.msra.mxu0 0.0
          %1978 = vmatprep.subr.mxu0 0.0
          %1979 = vmatpush1.msra.mxu0 0.0
          %1980 = vmatprep.subr.mxu0 0.0
          %1981 = vmatpush1.msra.mxu0 0.0
          %1982 = vmatprep.subr.mxu0 0.0
          %1983 = vmatpush1.msra.mxu0 0.0
          %1984 = vmatprep.subr.mxu0 0.0
          %1985 = vmatpush1.msra.mxu0 0.0
          %1986 = vmatprep.subr.mxu0 0.0
          %1987 = vmatpush1.msra.mxu0 0.0
          %1988 = vmatprep.subr.mxu0 0.0
          %1989 = vmatpush1.msra.mxu0 0.0
          %1990 = vmatprep.subr.mxu0 0.0
          %1991 = vmatpush1.msra.mxu0 0.0
          %1992 = vmatprep.subr.mxu0 0.0
          %1993 = vmatpush1.msra.mxu0 0.0
          %1994 = vmatprep.subr.mxu0 0.0
          %1995 = vmatpush1.msra.mxu0 0.0
          %1996 = vmatprep.subr.mxu0 0.0
          %1997 = vmatpush1.msra.mxu0 0.0
          %1998 = vmatprep.subr.mxu0 0.0
          %1999 = vmatpush1.msra.mxu0 0.0
          %2000 = vmatprep.subr.mxu0 0.0
          %2001 = vmatpush1.msra.mxu0 0.0
          %2002 = vmatprep.subr.mxu0 0.0
          %2003 = vmatpush1.msra.mxu0 0.0
          %2004 = vmatprep.subr.mxu0 0.0
          %2005 = vmatpush1.msra.mxu0 0.0
          %2006 = vmatprep.subr.mxu0 0.0
          %2007 = vmatpush1.msra.mxu0 0.0
          %2008 = vmatprep.subr.mxu0 0.0
          %2009 = vmatpush1.msra.mxu0 0.0
          %2010 = vmatprep.subr.mxu0 0.0
          %2011 = vmatpush1.msra.mxu0 0.0
          %2012 = vmatprep.subr.mxu0 0.0
          %2013 = vmatpush1.msra.mxu0 0.0
          %2014 = vmatprep.subr.mxu0 0.0
          %2015 = vmatpush1.msra.mxu0 0.0
          %2016 = vmatprep.subr.mxu0 0.0
          %2017 = vmatpush1.msra.mxu0 0.0
          %2018 = vmatprep.subr.mxu0 0.0
          %2019 = vmatpush1.msra.mxu0 0.0
          %2020 = vmatprep.subr.mxu0 0.0
          %2021 = vmatpush1.msra.mxu0 0.0
          %2022 = vmatprep.subr.mxu0 0.0
          %2023 = vmatpush1.msra.mxu0 0.0
          %2024 = vmatprep.subr.mxu0 0.0
          %2025 = vmatpush1.msra.mxu0 0.0
          %2026 = vmatprep.subr.mxu0 0.0
          %2027 = vmatpush1.msra.mxu0 0.0
          %2028 = vmatprep.mubr.f32.mxu0 0.0
          %2029 = vmatmul.mubr.f32.gmra.mrb[0].mxu0 %v1953
          %v2030 = vpop.f32.mrb[0].mxu0
          %v2031 = vadd.f32 0.0, %v2030
          %v2032 = vpop.f32.mrb[0].mxu0
          %2033 = vmatprep.mubr.f32.mxu0 0.0
          %2034 = vmatmul.mubr.f32.gmra.mrb[0].mxu0 %v1956
          %v2035 = vpop.f32.mrb[0].mxu0
          %v2036 = vadd.f32 0.0, %v2035
          %v2037 = vpop.f32.mrb[0].mxu0
          %2038 = vmatprep.mubr.f32.mxu0 0.0
          %2039 = vmatmul.mubr.f32.gmra.mrb[0].mxu0 %v1959
          %v2040 = vpop.f32.mrb[0].mxu0
          %v2041 = vadd.f32 0.0, %v2040
          %v2042 = vpop.f32.mrb[0].mxu0
          %2043 = vmatprep.mubr.f32.mxu0 0.0
          %2044 = vmatmul.mubr.f32.gmra.mrb[0].mxu0 %v1962
          %v2045 = vpop.f32.mrb[0].mxu0
          %v2046 = vadd.f32 0.0, %v2045
          %v2047 = vpop.f32.mrb[0].mxu0
          %2048 = vdwg.mxu0
          %v2049 = vadd.f32 %v1938, %v2031
          %v2050 = vadd.f32 %v1939, %v2036
          %v2051 = vadd.f32 %v1940, %v2041
          %v2052 = vadd.f32 %v1941, %v2046
          %s2053 = sadd.s32 %s1831, 2
          %s2054 = scalar_lea.vmem [#allocation2], %s2053
          %v2055 = vld [vmem:[%s2054] ss:$2 sm:$0xff]
          %s2056 = scalar_lea.vmem %s2054, 16 [#allocation2]
          %v2057 = vld [vmem:[%s2056] ss:$2 sm:$0xff]
          %s2058 = scalar_lea.vmem %s2054, 32 [#allocation2]
          %v2059 = vld [vmem:[%s2058] ss:$2 sm:$0xff]
          %s2060 = scalar_lea.vmem %s2054, 48 [#allocation2]
          %v2061 = vld [vmem:[%s2060] ss:$2 sm:$0xff]
          %v2062 = vld [vmem:[%s1 + $0x40] sm:$0xff]
          %v2064 = vsel %vm384, %v2055, 0
          %v2067 = vsel %vm384, %v2057, 0
          %v2070 = vsel %vm384, %v2059, 0
          %v2073 = vsel %vm384, %v2061, 0
          %2075 = vmatprep.subr.mxu0 0.0
          %2076 = vmatpush1.msra.mxu0 %v2062
          %2077 = vmatprep.subr.mxu0 0.0
          %2078 = vmatpush1.msra.mxu0 0.0
          %2079 = vmatprep.subr.mxu0 0.0
          %2080 = vmatpush1.msra.mxu0 0.0
          %2081 = vmatprep.subr.mxu0 0.0
          %2082 = vmatpush1.msra.mxu0 0.0
          %2083 = vmatprep.subr.mxu0 0.0
          %2084 = vmatpush1.msra.mxu0 0.0
          %2085 = vmatprep.subr.mxu0 0.0
          %2086 = vmatpush1.msra.mxu0 0.0
          %2087 = vmatprep.subr.mxu0 0.0
          %2088 = vmatpush1.msra.mxu0 0.0
          %2089 = vmatprep.subr.mxu0 0.0
          %2090 = vmatpush1.msra.mxu0 0.0
          %2091 = vmatprep.subr.mxu0 0.0
          %2092 = vmatpush1.msra.mxu0 0.0
          %2093 = vmatprep.subr.mxu0 0.0
          %2094 = vmatpush1.msra.mxu0 0.0
          %2095 = vmatprep.subr.mxu0 0.0
          %2096 = vmatpush1.msra.mxu0 0.0
          %2097 = vmatprep.subr.mxu0 0.0
          %2098 = vmatpush1.msra.mxu0 0.0
          %2099 = vmatprep.subr.mxu0 0.0
          %2100 = vmatpush1.msra.mxu0 0.0
          %2101 = vmatprep.subr.mxu0 0.0
          %2102 = vmatpush1.msra.mxu0 0.0
          %2103 = vmatprep.subr.mxu0 0.0
          %2104 = vmatpush1.msra.mxu0 0.0
          %2105 = vmatprep.subr.mxu0 0.0
          %2106 = vmatpush1.msra.mxu0 0.0
          %2107 = vmatprep.subr.mxu0 0.0
          %2108 = vmatpush1.msra.mxu0 0.0
          %2109 = vmatprep.subr.mxu0 0.0
          %2110 = vmatpush1.msra.mxu0 0.0
          %2111 = vmatprep.subr.mxu0 0.0
          %2112 = vmatpush1.msra.mxu0 0.0
          %2113 = vmatprep.subr.mxu0 0.0
          %2114 = vmatpush1.msra.mxu0 0.0
          %2115 = vmatprep.subr.mxu0 0.0
          %2116 = vmatpush1.msra.mxu0 0.0
          %2117 = vmatprep.subr.mxu0 0.0
          %2118 = vmatpush1.msra.mxu0 0.0
          %2119 = vmatprep.subr.mxu0 0.0
          %2120 = vmatpush1.msra.mxu0 0.0
          %2121 = vmatprep.subr.mxu0 0.0
          %2122 = vmatpush1.msra.mxu0 0.0
          %2123 = vmatprep.subr.mxu0 0.0
          %2124 = vmatpush1.msra.mxu0 0.0
          %2125 = vmatprep.subr.mxu0 0.0
          %2126 = vmatpush1.msra.mxu0 0.0
          %2127 = vmatprep.subr.mxu0 0.0
          %2128 = vmatpush1.msra.mxu0 0.0
          %2129 = vmatprep.subr.mxu0 0.0
          %2130 = vmatpush1.msra.mxu0 0.0
          %2131 = vmatprep.subr.mxu0 0.0
          %2132 = vmatpush1.msra.mxu0 0.0
          %2133 = vmatprep.subr.mxu0 0.0
          %2134 = vmatpush1.msra.mxu0 0.0
          %2135 = vmatprep.subr.mxu0 0.0
          %2136 = vmatpush1.msra.mxu0 0.0
          %2137 = vmatprep.subr.mxu0 0.0
          %2138 = vmatpush1.msra.mxu0 0.0
          %2139 = vmatprep.mubr.f32.mxu0 0.0
          %2140 = vmatmul.mubr.f32.gmra.mrb[0].mxu0 %v2064
          %v2141 = vpop.f32.mrb[0].mxu0
          %v2142 = vadd.f32 0.0, %v2141
          %v2143 = vpop.f32.mrb[0].mxu0
          %2144 = vmatprep.mubr.f32.mxu0 0.0
          %2145 = vmatmul.mubr.f32.gmra.mrb[0].mxu0 %v2067
          %v2146 = vpop.f32.mrb[0].mxu0
          %v2147 = vadd.f32 0.0, %v2146
          %v2148 = vpop.f32.mrb[0].mxu0
          %2149 = vmatprep.mubr.f32.mxu0 0.0
          %2150 = vmatmul.mubr.f32.gmra.mrb[0].mxu0 %v2070
          %v2151 = vpop.f32.mrb[0].mxu0
          %v2152 = vadd.f32 0.0, %v2151
          %v2153 = vpop.f32.mrb[0].mxu0
          %2154 = vmatprep.mubr.f32.mxu0 0.0
          %2155 = vmatmul.mubr.f32.gmra.mrb[0].mxu0 %v2073
          %v2156 = vpop.f32.mrb[0].mxu0
          %v2157 = vadd.f32 0.0, %v2156
          %v2158 = vpop.f32.mrb[0].mxu0
          %2159 = vdwg.mxu0
          %v2160 = vadd.f32 %v2049, %v2142
          %v2161 = vadd.f32 %v2050, %v2147
          %v2162 = vadd.f32 %v2051, %v2152
          %v2163 = vadd.f32 %v2052, %v2157
          %v2164 = vld [vmem:[%s2] sm:$0x1]
          %v2166 = vlaneseq
          %v2167 = vshrl.u32 %v2166, 7
          %v2168 = vsub.s32 0, %v2167
          %v2169 = vrot.slane %v2164, %v2168
          %v2171 = vadd.f32 %v2160, %v2169
          %v2172 = vadd.f32 %v2161, %v2169
          %v2173 = vadd.f32 %v2162, %v2169
          %v2174 = vadd.f32 %v2163, %v2169
          %v2175 = vmax.f32 %v2171, 0.0
          %v2176 = vmax.f32 %v2172, 0.0
          %v2177 = vmax.f32 %v2173, 0.0
          %v2178 = vmax.f32 %v2174, 0.0
          %s2179 = sadd.s32 %s1165, 1
          %s2180 = smul.u32 %s2179, 34
          %s2181 = sadd.s32 %s2180, 1
          %s2182 = scalar_lea.vmem [#allocation3], %s2181
          %2183 = vst.msk [vmem:[%s2182] sm:$0xff] %vm931, %v2175
          %2184 = vst.msk [vmem:[%s2182 + $0x8] sm:$0xff] %vm931, %v2176
          %2185 = vst.msk [vmem:[%s2182 + $0x10] sm:$0xff] %vm931, %v2177
          %2186 = vst.msk [vmem:[%s2182 + $0x18] sm:$0xff] %vm931, %v2178
        $region76: #{image_encoder_forward.3} parent=63 // loop_footer
          %s1169 = sadd.s32 1, %s1165
        $region77: #{image_encoder_forward.3} parent=63 // loop_footer_branch
          %1164 = sbr.rel target = $region73
        $region78: #{image_encoder_forward.3} parent=63 // loop_exit
          _
        loop: start=0, step=1, limit=16
        $region79: #{image_encoder_forward.3} parent=63 // loop_pre_header
          _
        $region80: #{image_encoder_forward.3} parent=63 // loop_header
          %s2188 = sphi 0, %s2192
          %p2189 = scmp.ge.s32.totalorder %s2188, 16
        $region81: #{image_encoder_forward.3} parent=63 // loop_header_branch
          %2191 = sbr.rel (%p2189) target = $region85
        $region82: #{image_encoder_forward.3} parent=63 // loop_body
          %s2193 = smul.u32 %s2188, 68
          %s2194 = scalar_lea.vmem [#allocation3], %s2193
          %v2195 = vld [vmem:[%s2194] ss:$2 sm:$0xff]
          %s2196 = scalar_lea.vmem %s2194, 16 [#allocation3]
          %v2197 = vld [vmem:[%s2196] ss:$2 sm:$0xff]
          %v2198 = vld [vmem:[%s3] sm:$0xff]
          %v2199 = vld [vmem:[%s3 + $0x8] sm:$0xff]
          %s2200 = sadd.s32 %s2193, 1
          %s2201 = scalar_lea.vmem [#allocation3], %s2200
          %v2202 = vld [vmem:[%s2201] ss:$2 sm:$0xff]
          %s2203 = scalar_lea.vmem %s2201, 16 [#allocation3]
          %v2204 = vld [vmem:[%s2203] ss:$2 sm:$0xff]
          %v2205 = vld [vmem:[%s3 + $0x10] sm:$0xff]
          %v2206 = vld [vmem:[%s3 + $0x18] sm:$0xff]
          %v2208 = vsel %vm931, %v2202, 0
          %v2211 = vsel %vm931, %v2204, 0
          %2213 = vmatprep.subr.mxu0 0.0
          %2214 = vmatpush1.msra.mxu0 %v2205
          %2215 = vmatprep.subr.mxu0 0.0
          %2216 = vmatpush1.msra.mxu0 %v2206
          %2217 = vmatprep.subr.mxu0 0.0
          %2218 = vmatpush1.msra.mxu0 0.0
          %2219 = vmatprep.subr.mxu0 0.0
          %2220 = vmatpush1.msra.mxu0 0.0
          %2221 = vmatprep.subr.mxu0 0.0
          %2222 = vmatpush1.msra.mxu0 0.0
          %2223 = vmatprep.subr.mxu0 0.0
          %2224 = vmatpush1.msra.mxu0 0.0
          %2225 = vmatprep.subr.mxu0 0.0
          %2226 = vmatpush1.msra.mxu0 0.0
          %2227 = vmatprep.subr.mxu0 0.0
          %2228 = vmatpush1.msra.mxu0 0.0
          %2229 = vmatprep.subr.mxu0 0.0
          %2230 = vmatpush1.msra.mxu0 0.0
          %2231 = vmatprep.subr.mxu0 0.0
          %2232 = vmatpush1.msra.mxu0 0.0
          %2233 = vmatprep.subr.mxu0 0.0
          %2234 = vmatpush1.msra.mxu0 0.0
          %2235 = vmatprep.subr.mxu0 0.0
          %2236 = vmatpush1.msra.mxu0 0.0
          %2237 = vmatprep.subr.mxu0 0.0
          %2238 = vmatpush1.msra.mxu0 0.0
          %2239 = vmatprep.subr.mxu0 0.0
          %2240 = vmatpush1.msra.mxu0 0.0
          %2241 = vmatprep.subr.mxu0 0.0
          %2242 = vmatpush1.msra.mxu0 0.0
          %2243 = vmatprep.subr.mxu0 0.0
          %2244 = vmatpush1.msra.mxu0 0.0
          %2245 = vmatprep.subr.mxu0 0.0
          %2246 = vmatpush1.msra.mxu0 0.0
          %2247 = vmatprep.subr.mxu0 0.0
          %2248 = vmatpush1.msra.mxu0 0.0
          %2249 = vmatprep.subr.mxu0 0.0
          %2250 = vmatpush1.msra.mxu0 0.0
          %2251 = vmatprep.subr.mxu0 0.0
          %2252 = vmatpush1.msra.mxu0 0.0
          %2253 = vmatprep.subr.mxu0 0.0
          %2254 = vmatpush1.msra.mxu0 0.0
          %2255 = vmatprep.subr.mxu0 0.0
          %2256 = vmatpush1.msra.mxu0 0.0
          %2257 = vmatprep.subr.mxu0 0.0
          %2258 = vmatpush1.msra.mxu0 0.0
          %2259 = vmatprep.subr.mxu0 0.0
          %2260 = vmatpush1.msra.mxu0 0.0
          %2261 = vmatprep.subr.mxu0 0.0
          %2262 = vmatpush1.msra.mxu0 0.0
          %2263 = vmatprep.subr.mxu0 0.0
          %2264 = vmatpush1.msra.mxu0 0.0
          %2265 = vmatprep.subr.mxu0 0.0
          %2266 = vmatpush1.msra.mxu0 0.0
          %2267 = vmatprep.subr.mxu0 0.0
          %2268 = vmatpush1.msra.mxu0 0.0
          %2269 = vmatprep.subr.mxu0 0.0
          %2270 = vmatpush1.msra.mxu0 0.0
          %2271 = vmatprep.subr.mxu0 0.0
          %2272 = vmatpush1.msra.mxu0 0.0
          %2273 = vmatprep.subr.mxu0 0.0
          %2274 = vmatpush1.msra.mxu0 0.0
          %2275 = vmatprep.subr.mxu0 0.0
          %2276 = vmatpush1.msra.mxu0 0.0
          %2277 = vmatprep.mubr.f32.mxu0 0.0
          %2278 = vmatmul.mubr.f32.gmra.mrb[0].mxu0 %v2208
          %v2279 = vpop.f32.mrb[0].mxu0
          %v2280 = vadd.f32 0.0, %v2279
          %v2281 = vpop.f32.mrb[0].mxu0
          %2282 = vmatprep.mubr.f32.mxu0 0.0
          %2283 = vmatmul.mubr.f32.gmra.mrb[0].mxu0 %v2211
          %v2284 = vpop.f32.mrb[0].mxu0
          %v2285 = vadd.f32 0.0, %v2284
          %v2286 = vpop.f32.mrb[0].mxu0
          %2287 = vdwg.mxu0
          %v2289 = vsel %vm931, %v2195, 0
          %v2292 = vsel %vm931, %v2197, 0
          %2294 = vmatprep.subr.mxu0 0.0
          %2295 = vmatpush1.msra.mxu0 %v2198
          %2296 = vmatprep.subr.mxu0 0.0
          %2297 = vmatpush1.msra.mxu0 %v2199
          %2298 = vmatprep.subr.mxu0 0.0
          %2299 = vmatpush1.msra.mxu0 0.0
          %2300 = vmatprep.subr.mxu0 0.0
          %2301 = vmatpush1.msra.mxu0 0.0
          %2302 = vmatprep.subr.mxu0 0.0
          %2303 = vmatpush1.msra.mxu0 0.0
          %2304 = vmatprep.subr.mxu0 0.0
          %2305 = vmatpush1.msra.mxu0 0.0
          %2306 = vmatprep.subr.mxu0 0.0
          %2307 = vmatpush1.msra.mxu0 0.0
          %2308 = vmatprep.subr.mxu0 0.0
          %2309 = vmatpush1.msra.mxu0 0.0
          %2310 = vmatprep.subr.mxu0 0.0
          %2311 = vmatpush1.msra.mxu0 0.0
          %2312 = vmatprep.subr.mxu0 0.0
          %2313 = vmatpush1.msra.mxu0 0.0
          %2314 = vmatprep.subr.mxu0 0.0
          %2315 = vmatpush1.msra.mxu0 0.0
          %2316 = vmatprep.subr.mxu0 0.0
          %2317 = vmatpush1.msra.mxu0 0.0
          %2318 = vmatprep.subr.mxu0 0.0
          %2319 = vmatpush1.msra.mxu0 0.0
          %2320 = vmatprep.subr.mxu0 0.0
          %2321 = vmatpush1.msra.mxu0 0.0
          %2322 = vmatprep.subr.mxu0 0.0
          %2323 = vmatpush1.msra.mxu0 0.0
          %2324 = vmatprep.subr.mxu0 0.0
          %2325 = vmatpush1.msra.mxu0 0.0
          %2326 = vmatprep.subr.mxu0 0.0
          %2327 = vmatpush1.msra.mxu0 0.0
          %2328 = vmatprep.subr.mxu0 0.0
          %2329 = vmatpush1.msra.mxu0 0.0
          %2330 = vmatprep.subr.mxu0 0.0
          %2331 = vmatpush1.msra.mxu0 0.0
          %2332 = vmatprep.subr.mxu0 0.0
          %2333 = vmatpush1.msra.mxu0 0.0
          %2334 = vmatprep.subr.mxu0 0.0
          %2335 = vmatpush1.msra.mxu0 0.0
          %2336 = vmatprep.subr.mxu0 0.0
          %2337 = vmatpush1.msra.mxu0 0.0
          %2338 = vmatprep.subr.mxu0 0.0
          %2339 = vmatpush1.msra.mxu0 0.0
          %2340 = vmatprep.subr.mxu0 0.0
          %2341 = vmatpush1.msra.mxu0 0.0
          %2342 = vmatprep.subr.mxu0 0.0
          %2343 = vmatpush1.msra.mxu0 0.0
          %2344 = vmatprep.subr.mxu0 0.0
          %2345 = vmatpush1.msra.mxu0 0.0
          %2346 = vmatprep.subr.mxu0 0.0
          %2347 = vmatpush1.msra.mxu0 0.0
          %2348 = vmatprep.subr.mxu0 0.0
          %2349 = vmatpush1.msra.mxu0 0.0
          %2350 = vmatprep.subr.mxu0 0.0
          %2351 = vmatpush1.msra.mxu0 0.0
          %2352 = vmatprep.subr.mxu0 0.0
          %2353 = vmatpush1.msra.mxu0 0.0
          %2354 = vmatprep.subr.mxu0 0.0
          %2355 = vmatpush1.msra.mxu0 0.0
          %2356 = vmatprep.subr.mxu0 0.0
          %2357 = vmatpush1.msra.mxu0 0.0
          %2358 = vmatprep.mubr.f32.mxu0 0.0
          %2359 = vmatmul.mubr.f32.gmra.mrb[0].mxu0 %v2289
          %v2360 = vpop.f32.mrb[0].mxu0
          %v2361 = vadd.f32 %v2280, %v2360
          %v2362 = vpop.f32.mrb[0].mxu0
          %2363 = vmatprep.mubr.f32.mxu0 0.0
          %2364 = vmatmul.mubr.f32.gmra.mrb[0].mxu0 %v2292
          %v2365 = vpop.f32.mrb[0].mxu0
          %v2366 = vadd.f32 %v2285, %v2365
          %v2367 = vpop.f32.mrb[0].mxu0
          %2368 = vdwg.mxu0
          %s2369 = sadd.s32 %s2193, 2
          %s2370 = scalar_lea.vmem [#allocation3], %s2369
          %v2371 = vld [vmem:[%s2370] ss:$2 sm:$0xff]
          %s2372 = scalar_lea.vmem %s2370, 16 [#allocation3]
          %v2373 = vld [vmem:[%s2372] ss:$2 sm:$0xff]
          %v2374 = vld [vmem:[%s3 + $0x20] sm:$0xff]
          %v2375 = vld [vmem:[%s3 + $0x28] sm:$0xff]
          %v2377 = vsel %vm931, %v2371, 0
          %v2380 = vsel %vm931, %v2373, 0
          %2382 = vmatprep.subr.mxu0 0.0
          %2383 = vmatpush1.msra.mxu0 %v2374
          %2384 = vmatprep.subr.mxu0 0.0
          %2385 = vmatpush1.msra.mxu0 %v2375
          %2386 = vmatprep.subr.mxu0 0.0
          %2387 = vmatpush1.msra.mxu0 0.0
          %2388 = vmatprep.subr.mxu0 0.0
          %2389 = vmatpush1.msra.mxu0 0.0
          %2390 = vmatprep.subr.mxu0 0.0
          %2391 = vmatpush1.msra.mxu0 0.0
          %2392 = vmatprep.subr.mxu0 0.0
          %2393 = vmatpush1.msra.mxu0 0.0
          %2394 = vmatprep.subr.mxu0 0.0
          %2395 = vmatpush1.msra.mxu0 0.0
          %2396 = vmatprep.subr.mxu0 0.0
          %2397 = vmatpush1.msra.mxu0 0.0
          %2398 = vmatprep.subr.mxu0 0.0
          %2399 = vmatpush1.msra.mxu0 0.0
          %2400 = vmatprep.subr.mxu0 0.0
          %2401 = vmatpush1.msra.mxu0 0.0
          %2402 = vmatprep.subr.mxu0 0.0
          %2403 = vmatpush1.msra.mxu0 0.0
          %2404 = vmatprep.subr.mxu0 0.0
          %2405 = vmatpush1.msra.mxu0 0.0
          %2406 = vmatprep.subr.mxu0 0.0
          %2407 = vmatpush1.msra.mxu0 0.0
          %2408 = vmatprep.subr.mxu0 0.0
          %2409 = vmatpush1.msra.mxu0 0.0
          %2410 = vmatprep.subr.mxu0 0.0
          %2411 = vmatpush1.msra.mxu0 0.0
          %2412 = vmatprep.subr.mxu0 0.0
          %2413 = vmatpush1.msra.mxu0 0.0
          %2414 = vmatprep.subr.mxu0 0.0
          %2415 = vmatpush1.msra.mxu0 0.0
          %2416 = vmatprep.subr.mxu0 0.0
          %2417 = vmatpush1.msra.mxu0 0.0
          %2418 = vmatprep.subr.mxu0 0.0
          %2419 = vmatpush1.msra.mxu0 0.0
          %2420 = vmatprep.subr.mxu0 0.0
          %2421 = vmatpush1.msra.mxu0 0.0
          %2422 = vmatprep.subr.mxu0 0.0
          %2423 = vmatpush1.msra.mxu0 0.0
          %2424 = vmatprep.subr.mxu0 0.0
          %2425 = vmatpush1.msra.mxu0 0.0
          %2426 = vmatprep.subr.mxu0 0.0
          %2427 = vmatpush1.msra.mxu0 0.0
          %2428 = vmatprep.subr.mxu0 0.0
          %2429 = vmatpush1.msra.mxu0 0.0
          %2430 = vmatprep.subr.mxu0 0.0
          %2431 = vmatpush1.msra.mxu0 0.0
          %2432 = vmatprep.subr.mxu0 0.0
          %2433 = vmatpush1.msra.mxu0 0.0
          %2434 = vmatprep.subr.mxu0 0.0
          %2435 = vmatpush1.msra.mxu0 0.0
          %2436 = vmatprep.subr.mxu0 0.0
          %2437 = vmatpush1.msra.mxu0 0.0
          %2438 = vmatprep.subr.mxu0 0.0
          %2439 = vmatpush1.msra.mxu0 0.0
          %2440 = vmatprep.subr.mxu0 0.0
          %2441 = vmatpush1.msra.mxu0 0.0
          %2442 = vmatprep.subr.mxu0 0.0
          %2443 = vmatpush1.msra.mxu0 0.0
          %2444 = vmatprep.subr.mxu0 0.0
          %2445 = vmatpush1.msra.mxu0 0.0
          %2446 = vmatprep.mubr.f32.mxu0 0.0
          %2447 = vmatmul.mubr.f32.gmra.mrb[0].mxu0 %v2377
          %v2448 = vpop.f32.mrb[0].mxu0
          %v2449 = vadd.f32 0.0, %v2448
          %v2450 = vpop.f32.mrb[0].mxu0
          %2451 = vmatprep.mubr.f32.mxu0 0.0
          %2452 = vmatmul.mubr.f32.gmra.mrb[0].mxu0 %v2380
          %v2453 = vpop.f32.mrb[0].mxu0
          %v2454 = vadd.f32 0.0, %v2453
          %v2455 = vpop.f32.mrb[0].mxu0
          %2456 = vdwg.mxu0
          %v2457 = vadd.f32 %v2361, %v2449
          %v2458 = vadd.f32 %v2366, %v2454
          %s2459 = smul.u32 %s2188, 2
          %s2460 = sadd.s32 %s2459, 1
          %s2461 = smul.u32 %s2460, 34
          %s2462 = scalar_lea.vmem [#allocation3], %s2461
          %v2463 = vld [vmem:[%s2462] ss:$2 sm:$0xff]
          %s2464 = scalar_lea.vmem %s2462, 16 [#allocation3]
          %v2465 = vld [vmem:[%s2464] ss:$2 sm:$0xff]
          %v2466 = vld [vmem:[%s3 + $0x30] sm:$0xff]
          %v2467 = vld [vmem:[%s3 + $0x38] sm:$0xff]
          %v2469 = vsel %vm931, %v2463, 0
          %v2472 = vsel %vm931, %v2465, 0
          %2474 = vmatprep.subr.mxu0 0.0
          %2475 = vmatpush1.msra.mxu0 %v2466
          %2476 = vmatprep.subr.mxu0 0.0
          %2477 = vmatpush1.msra.mxu0 %v2467
          %2478 = vmatprep.subr.mxu0 0.0
          %2479 = vmatpush1.msra.mxu0 0.0
          %2480 = vmatprep.subr.mxu0 0.0
          %2481 = vmatpush1.msra.mxu0 0.0
          %2482 = vmatprep.subr.mxu0 0.0
          %2483 = vmatpush1.msra.mxu0 0.0
          %2484 = vmatprep.subr.mxu0 0.0
          %2485 = vmatpush1.msra.mxu0 0.0
          %2486 = vmatprep.subr.mxu0 0.0
          %2487 = vmatpush1.msra.mxu0 0.0
          %2488 = vmatprep.subr.mxu0 0.0
          %2489 = vmatpush1.msra.mxu0 0.0
          %2490 = vmatprep.subr.mxu0 0.0
          %2491 = vmatpush1.msra.mxu0 0.0
          %2492 = vmatprep.subr.mxu0 0.0
          %2493 = vmatpush1.msra.mxu0 0.0
          %2494 = vmatprep.subr.mxu0 0.0
          %2495 = vmatpush1.msra.mxu0 0.0
          %2496 = vmatprep.subr.mxu0 0.0
          %2497 = vmatpush1.msra.mxu0 0.0
          %2498 = vmatprep.subr.mxu0 0.0
          %2499 = vmatpush1.msra.mxu0 0.0
          %2500 = vmatprep.subr.mxu0 0.0
          %2501 = vmatpush1.msra.mxu0 0.0
          %2502 = vmatprep.subr.mxu0 0.0
          %2503 = vmatpush1.msra.mxu0 0.0
          %2504 = vmatprep.subr.mxu0 0.0
          %2505 = vmatpush1.msra.mxu0 0.0
          %2506 = vmatprep.subr.mxu0 0.0
          %2507 = vmatpush1.msra.mxu0 0.0
          %2508 = vmatprep.subr.mxu0 0.0
          %2509 = vmatpush1.msra.mxu0 0.0
          %2510 = vmatprep.subr.mxu0 0.0
          %2511 = vmatpush1.msra.mxu0 0.0
          %2512 = vmatprep.subr.mxu0 0.0
          %2513 = vmatpush1.msra.mxu0 0.0
          %2514 = vmatprep.subr.mxu0 0.0
          %2515 = vmatpush1.msra.mxu0 0.0
          %2516 = vmatprep.subr.mxu0 0.0
          %2517 = vmatpush1.msra.mxu0 0.0
          %2518 = vmatprep.subr.mxu0 0.0
          %2519 = vmatpush1.msra.mxu0 0.0
          %2520 = vmatprep.subr.mxu0 0.0
          %2521 = vmatpush1.msra.mxu0 0.0
          %2522 = vmatprep.subr.mxu0 0.0
          %2523 = vmatpush1.msra.mxu0 0.0
          %2524 = vmatprep.subr.mxu0 0.0
          %2525 = vmatpush1.msra.mxu0 0.0
          %2526 = vmatprep.subr.mxu0 0.0
          %2527 = vmatpush1.msra.mxu0 0.0
          %2528 = vmatprep.subr.mxu0 0.0
          %2529 = vmatpush1.msra.mxu0 0.0
          %2530 = vmatprep.subr.mxu0 0.0
          %2531 = vmatpush1.msra.mxu0 0.0
          %2532 = vmatprep.subr.mxu0 0.0
          %2533 = vmatpush1.msra.mxu0 0.0
          %2534 = vmatprep.subr.mxu0 0.0
          %2535 = vmatpush1.msra.mxu0 0.0
          %2536 = vmatprep.subr.mxu0 0.0
          %2537 = vmatpush1.msra.mxu0 0.0
          %2538 = vmatprep.mubr.f32.mxu0 0.0
          %2539 = vmatmul.mubr.f32.gmra.mrb[0].mxu0 %v2469
          %v2540 = vpop.f32.mrb[0].mxu0
          %v2541 = vadd.f32 0.0, %v2540
          %v2542 = vpop.f32.mrb[0].mxu0
          %2543 = vmatprep.mubr.f32.mxu0 0.0
          %2544 = vmatmul.mubr.f32.gmra.mrb[0].mxu0 %v2472
          %v2545 = vpop.f32.mrb[0].mxu0
          %v2546 = vadd.f32 0.0, %v2545
          %v2547 = vpop.f32.mrb[0].mxu0
          %2548 = vdwg.mxu0
          %v2549 = vadd.f32 %v2457, %v2541
          %v2550 = vadd.f32 %v2458, %v2546
          %s2551 = sadd.s32 %s2461, 1
          %s2552 = scalar_lea.vmem [#allocation3], %s2551
          %v2553 = vld [vmem:[%s2552] ss:$2 sm:$0xff]
          %s2554 = scalar_lea.vmem %s2552, 16 [#allocation3]
          %v2555 = vld [vmem:[%s2554] ss:$2 sm:$0xff]
          %v2556 = vld [vmem:[%s3 + $0x40] sm:$0xff]
          %v2557 = vld [vmem:[%s3 + $0x48] sm:$0xff]
          %v2559 = vsel %vm931, %v2553, 0
          %v2562 = vsel %vm931, %v2555, 0
          %2564 = vmatprep.subr.mxu0 0.0
          %2565 = vmatpush1.msra.mxu0 %v2556
          %2566 = vmatprep.subr.mxu0 0.0
          %2567 = vmatpush1.msra.mxu0 %v2557
          %2568 = vmatprep.subr.mxu0 0.0
          %2569 = vmatpush1.msra.mxu0 0.0
          %2570 = vmatprep.subr.mxu0 0.0
          %2571 = vmatpush1.msra.mxu0 0.0
          %2572 = vmatprep.subr.mxu0 0.0
          %2573 = vmatpush1.msra.mxu0 0.0
          %2574 = vmatprep.subr.mxu0 0.0
          %2575 = vmatpush1.msra.mxu0 0.0
          %2576 = vmatprep.subr.mxu0 0.0
          %2577 = vmatpush1.msra.mxu0 0.0
          %2578 = vmatprep.subr.mxu0 0.0
          %2579 = vmatpush1.msra.mxu0 0.0
          %2580 = vmatprep.subr.mxu0 0.0
          %2581 = vmatpush1.msra.mxu0 0.0
          %2582 = vmatprep.subr.mxu0 0.0
          %2583 = vmatpush1.msra.mxu0 0.0
          %2584 = vmatprep.subr.mxu0 0.0
          %2585 = vmatpush1.msra.mxu0 0.0
          %2586 = vmatprep.subr.mxu0 0.0
          %2587 = vmatpush1.msra.mxu0 0.0
          %2588 = vmatprep.subr.mxu0 0.0
          %2589 = vmatpush1.msra.mxu0 0.0
          %2590 = vmatprep.subr.mxu0 0.0
          %2591 = vmatpush1.msra.mxu0 0.0
          %2592 = vmatprep.subr.mxu0 0.0
          %2593 = vmatpush1.msra.mxu0 0.0
          %2594 = vmatprep.subr.mxu0 0.0
          %2595 = vmatpush1.msra.mxu0 0.0
          %2596 = vmatprep.subr.mxu0 0.0
          %2597 = vmatpush1.msra.mxu0 0.0
          %2598 = vmatprep.subr.mxu0 0.0
          %2599 = vmatpush1.msra.mxu0 0.0
          %2600 = vmatprep.subr.mxu0 0.0
          %2601 = vmatpush1.msra.mxu0 0.0
          %2602 = vmatprep.subr.mxu0 0.0
          %2603 = vmatpush1.msra.mxu0 0.0
          %2604 = vmatprep.subr.mxu0 0.0
          %2605 = vmatpush1.msra.mxu0 0.0
          %2606 = vmatprep.subr.mxu0 0.0
          %2607 = vmatpush1.msra.mxu0 0.0
          %2608 = vmatprep.subr.mxu0 0.0
          %2609 = vmatpush1.msra.mxu0 0.0
          %2610 = vmatprep.subr.mxu0 0.0
          %2611 = vmatpush1.msra.mxu0 0.0
          %2612 = vmatprep.subr.mxu0 0.0
          %2613 = vmatpush1.msra.mxu0 0.0
          %2614 = vmatprep.subr.mxu0 0.0
          %2615 = vmatpush1.msra.mxu0 0.0
          %2616 = vmatprep.subr.mxu0 0.0
          %2617 = vmatpush1.msra.mxu0 0.0
          %2618 = vmatprep.subr.mxu0 0.0
          %2619 = vmatpush1.msra.mxu0 0.0
          %2620 = vmatprep.subr.mxu0 0.0
          %2621 = vmatpush1.msra.mxu0 0.0
          %2622 = vmatprep.subr.mxu0 0.0
          %2623 = vmatpush1.msra.mxu0 0.0
          %2624 = vmatprep.subr.mxu0 0.0
          %2625 = vmatpush1.msra.mxu0 0.0
          %2626 = vmatprep.subr.mxu0 0.0
          %2627 = vmatpush1.msra.mxu0 0.0
          %2628 = vmatprep.mubr.f32.mxu0 0.0
          %2629 = vmatmul.mubr.f32.gmra.mrb[0].mxu0 %v2559
          %v2630 = vpop.f32.mrb[0].mxu0
          %v2631 = vadd.f32 0.0, %v2630
          %v2632 = vpop.f32.mrb[0].mxu0
          %2633 = vmatprep.mubr.f32.mxu0 0.0
          %2634 = vmatmul.mubr.f32.gmra.mrb[0].mxu0 %v2562
          %v2635 = vpop.f32.mrb[0].mxu0
          %v2636 = vadd.f32 0.0, %v2635
          %v2637 = vpop.f32.mrb[0].mxu0
          %2638 = vdwg.mxu0
          %v2639 = vadd.f32 %v2549, %v2631
          %v2640 = vadd.f32 %v2550, %v2636
          %s2641 = sadd.s32 %s2461, 2
          %s2642 = scalar_lea.vmem [#allocation3], %s2641
          %v2643 = vld [vmem:[%s2642] ss:$2 sm:$0xff]
          %s2644 = scalar_lea.vmem %s2642, 16 [#allocation3]
          %v2645 = vld [vmem:[%s2644] ss:$2 sm:$0xff]
          %v2646 = vld [vmem:[%s3 + $0x50] sm:$0xff]
          %v2647 = vld [vmem:[%s3 + $0x58] sm:$0xff]
          %v2649 = vsel %vm931, %v2643, 0
          %v2652 = vsel %vm931, %v2645, 0
          %2654 = vmatprep.subr.mxu0 0.0
          %2655 = vmatpush1.msra.mxu0 %v2646
          %2656 = vmatprep.subr.mxu0 0.0
          %2657 = vmatpush1.msra.mxu0 %v2647
          %2658 = vmatprep.subr.mxu0 0.0
          %2659 = vmatpush1.msra.mxu0 0.0
          %2660 = vmatprep.subr.mxu0 0.0
          %2661 = vmatpush1.msra.mxu0 0.0
          %2662 = vmatprep.subr.mxu0 0.0
          %2663 = vmatpush1.msra.mxu0 0.0
          %2664 = vmatprep.subr.mxu0 0.0
          %2665 = vmatpush1.msra.mxu0 0.0
          %2666 = vmatprep.subr.mxu0 0.0
          %2667 = vmatpush1.msra.mxu0 0.0
          %2668 = vmatprep.subr.mxu0 0.0
          %2669 = vmatpush1.msra.mxu0 0.0
          %2670 = vmatprep.subr.mxu0 0.0
          %2671 = vmatpush1.msra.mxu0 0.0
          %2672 = vmatprep.subr.mxu0 0.0
          %2673 = vmatpush1.msra.mxu0 0.0
          %2674 = vmatprep.subr.mxu0 0.0
          %2675 = vmatpush1.msra.mxu0 0.0
          %2676 = vmatprep.subr.mxu0 0.0
          %2677 = vmatpush1.msra.mxu0 0.0
          %2678 = vmatprep.subr.mxu0 0.0
          %2679 = vmatpush1.msra.mxu0 0.0
          %2680 = vmatprep.subr.mxu0 0.0
          %2681 = vmatpush1.msra.mxu0 0.0
          %2682 = vmatprep.subr.mxu0 0.0
          %2683 = vmatpush1.msra.mxu0 0.0
          %2684 = vmatprep.subr.mxu0 0.0
          %2685 = vmatpush1.msra.mxu0 0.0
          %2686 = vmatprep.subr.mxu0 0.0
          %2687 = vmatpush1.msra.mxu0 0.0
          %2688 = vmatprep.subr.mxu0 0.0
          %2689 = vmatpush1.msra.mxu0 0.0
          %2690 = vmatprep.subr.mxu0 0.0
          %2691 = vmatpush1.msra.mxu0 0.0
          %2692 = vmatprep.subr.mxu0 0.0
          %2693 = vmatpush1.msra.mxu0 0.0
          %2694 = vmatprep.subr.mxu0 0.0
          %2695 = vmatpush1.msra.mxu0 0.0
          %2696 = vmatprep.subr.mxu0 0.0
          %2697 = vmatpush1.msra.mxu0 0.0
          %2698 = vmatprep.subr.mxu0 0.0
          %2699 = vmatpush1.msra.mxu0 0.0
          %2700 = vmatprep.subr.mxu0 0.0
          %2701 = vmatpush1.msra.mxu0 0.0
          %2702 = vmatprep.subr.mxu0 0.0
          %2703 = vmatpush1.msra.mxu0 0.0
          %2704 = vmatprep.subr.mxu0 0.0
          %2705 = vmatpush1.msra.mxu0 0.0
          %2706 = vmatprep.subr.mxu0 0.0
          %2707 = vmatpush1.msra.mxu0 0.0
          %2708 = vmatprep.subr.mxu0 0.0
          %2709 = vmatpush1.msra.mxu0 0.0
          %2710 = vmatprep.subr.mxu0 0.0
          %2711 = vmatpush1.msra.mxu0 0.0
          %2712 = vmatprep.subr.mxu0 0.0
          %2713 = vmatpush1.msra.mxu0 0.0
          %2714 = vmatprep.subr.mxu0 0.0
          %2715 = vmatpush1.msra.mxu0 0.0
          %2716 = vmatprep.subr.mxu0 0.0
          %2717 = vmatpush1.msra.mxu0 0.0
          %2718 = vmatprep.mubr.f32.mxu0 0.0
          %2719 = vmatmul.mubr.f32.gmra.mrb[0].mxu0 %v2649
          %v2720 = vpop.f32.mrb[0].mxu0
          %v2721 = vadd.f32 0.0, %v2720
          %v2722 = vpop.f32.mrb[0].mxu0
          %2723 = vmatprep.mubr.f32.mxu0 0.0
          %2724 = vmatmul.mubr.f32.gmra.mrb[0].mxu0 %v2652
          %v2725 = vpop.f32.mrb[0].mxu0
          %v2726 = vadd.f32 0.0, %v2725
          %v2727 = vpop.f32.mrb[0].mxu0
          %2728 = vdwg.mxu0
          %v2729 = vadd.f32 %v2639, %v2721
          %v2730 = vadd.f32 %v2640, %v2726
          %s2731 = sadd.s32 %s2459, 2
          %s2732 = smul.u32 %s2731, 34
          %s2733 = scalar_lea.vmem [#allocation3], %s2732
          %v2734 = vld [vmem:[%s2733] ss:$2 sm:$0xff]
          %s2735 = scalar_lea.vmem %s2733, 16 [#allocation3]
          %v2736 = vld [vmem:[%s2735] ss:$2 sm:$0xff]
          %v2737 = vld [vmem:[%s3 + $0x60] sm:$0xff]
          %v2738 = vld [vmem:[%s3 + $0x68] sm:$0xff]
          %v2740 = vsel %vm931, %v2734, 0
          %v2743 = vsel %vm931, %v2736, 0
          %2745 = vmatprep.subr.mxu0 0.0
          %2746 = vmatpush1.msra.mxu0 %v2737
          %2747 = vmatprep.subr.mxu0 0.0
          %2748 = vmatpush1.msra.mxu0 %v2738
          %2749 = vmatprep.subr.mxu0 0.0
          %2750 = vmatpush1.msra.mxu0 0.0
          %2751 = vmatprep.subr.mxu0 0.0
          %2752 = vmatpush1.msra.mxu0 0.0
          %2753 = vmatprep.subr.mxu0 0.0
          %2754 = vmatpush1.msra.mxu0 0.0
          %2755 = vmatprep.subr.mxu0 0.0
          %2756 = vmatpush1.msra.mxu0 0.0
          %2757 = vmatprep.subr.mxu0 0.0
          %2758 = vmatpush1.msra.mxu0 0.0
          %2759 = vmatprep.subr.mxu0 0.0
          %2760 = vmatpush1.msra.mxu0 0.0
          %2761 = vmatprep.subr.mxu0 0.0
          %2762 = vmatpush1.msra.mxu0 0.0
          %2763 = vmatprep.subr.mxu0 0.0
          %2764 = vmatpush1.msra.mxu0 0.0
          %2765 = vmatprep.subr.mxu0 0.0
          %2766 = vmatpush1.msra.mxu0 0.0
          %2767 = vmatprep.subr.mxu0 0.0
          %2768 = vmatpush1.msra.mxu0 0.0
          %2769 = vmatprep.subr.mxu0 0.0
          %2770 = vmatpush1.msra.mxu0 0.0
          %2771 = vmatprep.subr.mxu0 0.0
          %2772 = vmatpush1.msra.mxu0 0.0
          %2773 = vmatprep.subr.mxu0 0.0
          %2774 = vmatpush1.msra.mxu0 0.0
          %2775 = vmatprep.subr.mxu0 0.0
          %2776 = vmatpush1.msra.mxu0 0.0
          %2777 = vmatprep.subr.mxu0 0.0
          %2778 = vmatpush1.msra.mxu0 0.0
          %2779 = vmatprep.subr.mxu0 0.0
          %2780 = vmatpush1.msra.mxu0 0.0
          %2781 = vmatprep.subr.mxu0 0.0
          %2782 = vmatpush1.msra.mxu0 0.0
          %2783 = vmatprep.subr.mxu0 0.0
          %2784 = vmatpush1.msra.mxu0 0.0
          %2785 = vmatprep.subr.mxu0 0.0
          %2786 = vmatpush1.msra.mxu0 0.0
          %2787 = vmatprep.subr.mxu0 0.0
          %2788 = vmatpush1.msra.mxu0 0.0
          %2789 = vmatprep.subr.mxu0 0.0
          %2790 = vmatpush1.msra.mxu0 0.0
          %2791 = vmatprep.subr.mxu0 0.0
          %2792 = vmatpush1.msra.mxu0 0.0
          %2793 = vmatprep.subr.mxu0 0.0
          %2794 = vmatpush1.msra.mxu0 0.0
          %2795 = vmatprep.subr.mxu0 0.0
          %2796 = vmatpush1.msra.mxu0 0.0
          %2797 = vmatprep.subr.mxu0 0.0
          %2798 = vmatpush1.msra.mxu0 0.0
          %2799 = vmatprep.subr.mxu0 0.0
          %2800 = vmatpush1.msra.mxu0 0.0
          %2801 = vmatprep.subr.mxu0 0.0
          %2802 = vmatpush1.msra.mxu0 0.0
          %2803 = vmatprep.subr.mxu0 0.0
          %2804 = vmatpush1.msra.mxu0 0.0
          %2805 = vmatprep.subr.mxu0 0.0
          %2806 = vmatpush1.msra.mxu0 0.0
          %2807 = vmatprep.subr.mxu0 0.0
          %2808 = vmatpush1.msra.mxu0 0.0
          %2809 = vmatprep.mubr.f32.mxu0 0.0
          %2810 = vmatmul.mubr.f32.gmra.mrb[0].mxu0 %v2740
          %v2811 = vpop.f32.mrb[0].mxu0
          %v2812 = vadd.f32 0.0, %v2811
          %v2813 = vpop.f32.mrb[0].mxu0
          %2814 = vmatprep.mubr.f32.mxu0 0.0
          %2815 = vmatmul.mubr.f32.gmra.mrb[0].mxu0 %v2743
          %v2816 = vpop.f32.mrb[0].mxu0
          %v2817 = vadd.f32 0.0, %v2816
          %v2818 = vpop.f32.mrb[0].mxu0
          %2819 = vdwg.mxu0
          %v2820 = vadd.f32 %v2729, %v2812
          %v2821 = vadd.f32 %v2730, %v2817
          %s2822 = sadd.s32 %s2732, 1
          %s2823 = scalar_lea.vmem [#allocation3], %s2822
          %v2824 = vld [vmem:[%s2823] ss:$2 sm:$0xff]
          %s2825 = scalar_lea.vmem %s2823, 16 [#allocation3]
          %v2826 = vld [vmem:[%s2825] ss:$2 sm:$0xff]
          %v2827 = vld [vmem:[%s3 + $0x70] sm:$0xff]
          %v2828 = vld [vmem:[%s3 + $0x78] sm:$0xff]
          %v2830 = vsel %vm931, %v2824, 0
          %v2833 = vsel %vm931, %v2826, 0
          %2835 = vmatprep.subr.mxu0 0.0
          %2836 = vmatpush1.msra.mxu0 %v2827
          %2837 = vmatprep.subr.mxu0 0.0
          %2838 = vmatpush1.msra.mxu0 %v2828
          %2839 = vmatprep.subr.mxu0 0.0
          %2840 = vmatpush1.msra.mxu0 0.0
          %2841 = vmatprep.subr.mxu0 0.0
          %2842 = vmatpush1.msra.mxu0 0.0
          %2843 = vmatprep.subr.mxu0 0.0
          %2844 = vmatpush1.msra.mxu0 0.0
          %2845 = vmatprep.subr.mxu0 0.0
          %2846 = vmatpush1.msra.mxu0 0.0
          %2847 = vmatprep.subr.mxu0 0.0
          %2848 = vmatpush1.msra.mxu0 0.0
          %2849 = vmatprep.subr.mxu0 0.0
          %2850 = vmatpush1.msra.mxu0 0.0
          %2851 = vmatprep.subr.mxu0 0.0
          %2852 = vmatpush1.msra.mxu0 0.0
          %2853 = vmatprep.subr.mxu0 0.0
          %2854 = vmatpush1.msra.mxu0 0.0
          %2855 = vmatprep.subr.mxu0 0.0
          %2856 = vmatpush1.msra.mxu0 0.0
          %2857 = vmatprep.subr.mxu0 0.0
          %2858 = vmatpush1.msra.mxu0 0.0
          %2859 = vmatprep.subr.mxu0 0.0
          %2860 = vmatpush1.msra.mxu0 0.0
          %2861 = vmatprep.subr.mxu0 0.0
          %2862 = vmatpush1.msra.mxu0 0.0
          %2863 = vmatprep.subr.mxu0 0.0
          %2864 = vmatpush1.msra.mxu0 0.0
          %2865 = vmatprep.subr.mxu0 0.0
          %2866 = vmatpush1.msra.mxu0 0.0
          %2867 = vmatprep.subr.mxu0 0.0
          %2868 = vmatpush1.msra.mxu0 0.0
          %2869 = vmatprep.subr.mxu0 0.0
          %2870 = vmatpush1.msra.mxu0 0.0
          %2871 = vmatprep.subr.mxu0 0.0
          %2872 = vmatpush1.msra.mxu0 0.0
          %2873 = vmatprep.subr.mxu0 0.0
          %2874 = vmatpush1.msra.mxu0 0.0
          %2875 = vmatprep.subr.mxu0 0.0
          %2876 = vmatpush1.msra.mxu0 0.0
          %2877 = vmatprep.subr.mxu0 0.0
          %2878 = vmatpush1.msra.mxu0 0.0
          %2879 = vmatprep.subr.mxu0 0.0
          %2880 = vmatpush1.msra.mxu0 0.0
          %2881 = vmatprep.subr.mxu0 0.0
          %2882 = vmatpush1.msra.mxu0 0.0
          %2883 = vmatprep.subr.mxu0 0.0
          %2884 = vmatpush1.msra.mxu0 0.0
          %2885 = vmatprep.subr.mxu0 0.0
          %2886 = vmatpush1.msra.mxu0 0.0
          %2887 = vmatprep.subr.mxu0 0.0
          %2888 = vmatpush1.msra.mxu0 0.0
          %2889 = vmatprep.subr.mxu0 0.0
          %2890 = vmatpush1.msra.mxu0 0.0
          %2891 = vmatprep.subr.mxu0 0.0
          %2892 = vmatpush1.msra.mxu0 0.0
          %2893 = vmatprep.subr.mxu0 0.0
          %2894 = vmatpush1.msra.mxu0 0.0
          %2895 = vmatprep.subr.mxu0 0.0
          %2896 = vmatpush1.msra.mxu0 0.0
          %2897 = vmatprep.subr.mxu0 0.0
          %2898 = vmatpush1.msra.mxu0 0.0
          %2899 = vmatprep.mubr.f32.mxu0 0.0
          %2900 = vmatmul.mubr.f32.gmra.mrb[0].mxu0 %v2830
          %v2901 = vpop.f32.mrb[0].mxu0
          %v2902 = vadd.f32 0.0, %v2901
          %v2903 = vpop.f32.mrb[0].mxu0
          %2904 = vmatprep.mubr.f32.mxu0 0.0
          %2905 = vmatmul.mubr.f32.gmra.mrb[0].mxu0 %v2833
          %v2906 = vpop.f32.mrb[0].mxu0
          %v2907 = vadd.f32 0.0, %v2906
          %v2908 = vpop.f32.mrb[0].mxu0
          %2909 = vdwg.mxu0
          %v2910 = vadd.f32 %v2820, %v2902
          %v2911 = vadd.f32 %v2821, %v2907
          %s2912 = sadd.s32 %s2732, 2
          %s2913 = scalar_lea.vmem [#allocation3], %s2912
          %v2914 = vld [vmem:[%s2913] ss:$2 sm:$0xff]
          %s2915 = scalar_lea.vmem %s2913, 16 [#allocation3]
          %v2916 = vld [vmem:[%s2915] ss:$2 sm:$0xff]
          %v2917 = vld [vmem:[%s3 + $0x80] sm:$0xff]
          %v2918 = vld [vmem:[%s3 + $0x88] sm:$0xff]
          %v2920 = vsel %vm931, %v2914, 0
          %v2923 = vsel %vm931, %v2916, 0
          %2925 = vmatprep.subr.mxu0 0.0
          %2926 = vmatpush1.msra.mxu0 %v2917
          %2927 = vmatprep.subr.mxu0 0.0
          %2928 = vmatpush1.msra.mxu0 %v2918
          %2929 = vmatprep.subr.mxu0 0.0
          %2930 = vmatpush1.msra.mxu0 0.0
          %2931 = vmatprep.subr.mxu0 0.0
          %2932 = vmatpush1.msra.mxu0 0.0
          %2933 = vmatprep.subr.mxu0 0.0
          %2934 = vmatpush1.msra.mxu0 0.0
          %2935 = vmatprep.subr.mxu0 0.0
          %2936 = vmatpush1.msra.mxu0 0.0
          %2937 = vmatprep.subr.mxu0 0.0
          %2938 = vmatpush1.msra.mxu0 0.0
          %2939 = vmatprep.subr.mxu0 0.0
          %2940 = vmatpush1.msra.mxu0 0.0
          %2941 = vmatprep.subr.mxu0 0.0
          %2942 = vmatpush1.msra.mxu0 0.0
          %2943 = vmatprep.subr.mxu0 0.0
          %2944 = vmatpush1.msra.mxu0 0.0
          %2945 = vmatprep.subr.mxu0 0.0
          %2946 = vmatpush1.msra.mxu0 0.0
          %2947 = vmatprep.subr.mxu0 0.0
          %2948 = vmatpush1.msra.mxu0 0.0
          %2949 = vmatprep.subr.mxu0 0.0
          %2950 = vmatpush1.msra.mxu0 0.0
          %2951 = vmatprep.subr.mxu0 0.0
          %2952 = vmatpush1.msra.mxu0 0.0
          %2953 = vmatprep.subr.mxu0 0.0
          %2954 = vmatpush1.msra.mxu0 0.0
          %2955 = vmatprep.subr.mxu0 0.0
          %2956 = vmatpush1.msra.mxu0 0.0
          %2957 = vmatprep.subr.mxu0 0.0
          %2958 = vmatpush1.msra.mxu0 0.0
          %2959 = vmatprep.subr.mxu0 0.0
          %2960 = vmatpush1.msra.mxu0 0.0
          %2961 = vmatprep.subr.mxu0 0.0
          %2962 = vmatpush1.msra.mxu0 0.0
          %2963 = vmatprep.subr.mxu0 0.0
          %2964 = vmatpush1.msra.mxu0 0.0
          %2965 = vmatprep.subr.mxu0 0.0
          %2966 = vmatpush1.msra.mxu0 0.0
          %2967 = vmatprep.subr.mxu0 0.0
          %2968 = vmatpush1.msra.mxu0 0.0
          %2969 = vmatprep.subr.mxu0 0.0
          %2970 = vmatpush1.msra.mxu0 0.0
          %2971 = vmatprep.subr.mxu0 0.0
          %2972 = vmatpush1.msra.mxu0 0.0
          %2973 = vmatprep.subr.mxu0 0.0
          %2974 = vmatpush1.msra.mxu0 0.0
          %2975 = vmatprep.subr.mxu0 0.0
          %2976 = vmatpush1.msra.mxu0 0.0
          %2977 = vmatprep.subr.mxu0 0.0
          %2978 = vmatpush1.msra.mxu0 0.0
          %2979 = vmatprep.subr.mxu0 0.0
          %2980 = vmatpush1.msra.mxu0 0.0
          %2981 = vmatprep.subr.mxu0 0.0
          %2982 = vmatpush1.msra.mxu0 0.0
          %2983 = vmatprep.subr.mxu0 0.0
          %2984 = vmatpush1.msra.mxu0 0.0
          %2985 = vmatprep.subr.mxu0 0.0
          %2986 = vmatpush1.msra.mxu0 0.0
          %2987 = vmatprep.subr.mxu0 0.0
          %2988 = vmatpush1.msra.mxu0 0.0
          %2989 = vmatprep.mubr.f32.mxu0 0.0
          %2990 = vmatmul.mubr.f32.gmra.mrb[0].mxu0 %v2920
          %v2991 = vpop.f32.mrb[0].mxu0
          %v2992 = vadd.f32 0.0, %v2991
          %v2993 = vpop.f32.mrb[0].mxu0
          %2994 = vmatprep.mubr.f32.mxu0 0.0
          %2995 = vmatmul.mubr.f32.gmra.mrb[0].mxu0 %v2923
          %v2996 = vpop.f32.mrb[0].mxu0
          %v2997 = vadd.f32 0.0, %v2996
          %v2998 = vpop.f32.mrb[0].mxu0
          %2999 = vdwg.mxu0
          %v3000 = vadd.f32 %v2910, %v2992
          %v3001 = vadd.f32 %v2911, %v2997
          %v3002 = vld [vmem:[%s4] sm:$0x1]
          %v3004 = vlaneseq
          %v3005 = vshrl.u32 %v3004, 7
          %v3006 = vsub.s32 0, %v3005
          %v3007 = vrot.slane %v3002, %v3006
          %v3009 = vadd.f32 %v3000, %v3007
          %v3010 = vadd.f32 %v3001, %v3007
          %v3011 = vmax.f32 %v3009, 0.0
          %v3012 = vmax.f32 %v3010, 0.0
          %s3013 = sadd.s32 %s2188, 1
          %s3014 = smul.u32 %s3013, 18
          %s3015 = sadd.s32 %s3014, 1
          %s3016 = scalar_lea.vmem [#allocation4], %s3015
          %3017 = vst.msk [vmem:[%s3016] sm:$0xff] %vm1078, %v3011
          %3018 = vst.msk [vmem:[%s3016 + $0x8] sm:$0xff] %vm1078, %v3012
        $region83: #{image_encoder_forward.3} parent=63 // loop_footer
          %s2192 = sadd.s32 1, %s2188
        $region84: #{image_encoder_forward.3} parent=63 // loop_footer_branch
          %2187 = sbr.rel target = $region80
        $region85: #{image_encoder_forward.3} parent=63 // loop_exit
          _
        loop: start=0, step=1, limit=8
        $region86: #{image_encoder_forward.3} parent=63 // loop_pre_header
          _
        $region87: #{image_encoder_forward.3} parent=63 // loop_header
          %s3020 = sphi 0, %s3024
          %p3021 = scmp.ge.s32.totalorder %s3020, 8
        $region88: #{image_encoder_forward.3} parent=63 // loop_header_branch
          %3023 = sbr.rel (%p3021) target = $region92
        $region89: #{image_encoder_forward.3} parent=63 // loop_body
          %s3025 = smul.u32 %s3020, 36
          %s3026 = scalar_lea.vmem [#allocation4], %s3025
          %v3027 = vld [vmem:[%s3026] ss:$2 sm:$0xff]
          %v3028 = vld [vmem:[%s5] sm:$0xff]
          %v3029 = vld [vmem:[%s5 + $0x8] sm:$0xff]
          %v3030 = vld [vmem:[%s5 + $0x10] sm:$0xff]
          %v3031 = vld [vmem:[%s5 + $0x18] sm:$0xff]
          %s3032 = sadd.s32 %s3025, 1
          %s3033 = scalar_lea.vmem [#allocation4], %s3032
          %v3034 = vld [vmem:[%s3033] ss:$2 sm:$0xff]
          %v3035 = vld [vmem:[%s5 + $0x20] sm:$0xff]
          %v3036 = vld [vmem:[%s5 + $0x28] sm:$0xff]
          %v3037 = vld [vmem:[%s5 + $0x30] sm:$0xff]
          %v3038 = vld [vmem:[%s5 + $0x38] sm:$0xff]
          %v3040 = vsel %vm1078, %v3034, 0
          %3042 = vmatprep.subr.mxu0 0.0
          %3043 = vmatpush1.msra.mxu0 %v3035
          %3044 = vmatprep.subr.mxu0 0.0
          %3045 = vmatpush1.msra.mxu0 %v3036
          %3046 = vmatprep.subr.mxu0 0.0
          %3047 = vmatpush1.msra.mxu0 %v3037
          %3048 = vmatprep.subr.mxu0 0.0
          %3049 = vmatpush1.msra.mxu0 %v3038
          %3050 = vmatprep.subr.mxu0 0.0
          %3051 = vmatpush1.msra.mxu0 0.0
          %3052 = vmatprep.subr.mxu0 0.0
          %3053 = vmatpush1.msra.mxu0 0.0
          %3054 = vmatprep.subr.mxu0 0.0
          %3055 = vmatpush1.msra.mxu0 0.0
          %3056 = vmatprep.subr.mxu0 0.0
          %3057 = vmatpush1.msra.mxu0 0.0
          %3058 = vmatprep.subr.mxu0 0.0
          %3059 = vmatpush1.msra.mxu0 0.0
          %3060 = vmatprep.subr.mxu0 0.0
          %3061 = vmatpush1.msra.mxu0 0.0
          %3062 = vmatprep.subr.mxu0 0.0
          %3063 = vmatpush1.msra.mxu0 0.0
          %3064 = vmatprep.subr.mxu0 0.0
          %3065 = vmatpush1.msra.mxu0 0.0
          %3066 = vmatprep.subr.mxu0 0.0
          %3067 = vmatpush1.msra.mxu0 0.0
          %3068 = vmatprep.subr.mxu0 0.0
          %3069 = vmatpush1.msra.mxu0 0.0
          %3070 = vmatprep.subr.mxu0 0.0
          %3071 = vmatpush1.msra.mxu0 0.0
          %3072 = vmatprep.subr.mxu0 0.0
          %3073 = vmatpush1.msra.mxu0 0.0
          %3074 = vmatprep.subr.mxu0 0.0
          %3075 = vmatpush1.msra.mxu0 0.0
          %3076 = vmatprep.subr.mxu0 0.0
          %3077 = vmatpush1.msra.mxu0 0.0
          %3078 = vmatprep.subr.mxu0 0.0
          %3079 = vmatpush1.msra.mxu0 0.0
          %3080 = vmatprep.subr.mxu0 0.0
          %3081 = vmatpush1.msra.mxu0 0.0
          %3082 = vmatprep.subr.mxu0 0.0
          %3083 = vmatpush1.msra.mxu0 0.0
          %3084 = vmatprep.subr.mxu0 0.0
          %3085 = vmatpush1.msra.mxu0 0.0
          %3086 = vmatprep.subr.mxu0 0.0
          %3087 = vmatpush1.msra.mxu0 0.0
          %3088 = vmatprep.subr.mxu0 0.0
          %3089 = vmatpush1.msra.mxu0 0.0
          %3090 = vmatprep.subr.mxu0 0.0
          %3091 = vmatpush1.msra.mxu0 0.0
          %3092 = vmatprep.subr.mxu0 0.0
          %3093 = vmatpush1.msra.mxu0 0.0
          %3094 = vmatprep.subr.mxu0 0.0
          %3095 = vmatpush1.msra.mxu0 0.0
          %3096 = vmatprep.subr.mxu0 0.0
          %3097 = vmatpush1.msra.mxu0 0.0
          %3098 = vmatprep.subr.mxu0 0.0
          %3099 = vmatpush1.msra.mxu0 0.0
          %3100 = vmatprep.subr.mxu0 0.0
          %3101 = vmatpush1.msra.mxu0 0.0
          %3102 = vmatprep.subr.mxu0 0.0
          %3103 = vmatpush1.msra.mxu0 0.0
          %3104 = vmatprep.subr.mxu0 0.0
          %3105 = vmatpush1.msra.mxu0 0.0
          %3106 = vmatprep.mubr.f32.mxu0 0.0
          %3107 = vmatmul.mubr.f32.gmra.mrb[0].mxu0 %v3040
          %v3108 = vpop.f32.mrb[0].mxu0
          %v3109 = vadd.f32 0.0, %v3108
          %v3110 = vpop.f32.mrb[0].mxu0
          %3111 = vdwg.mxu0
          %v3113 = vsel %vm1078, %v3027, 0
          %3115 = vmatprep.subr.mxu0 0.0
          %3116 = vmatpush1.msra.mxu0 %v3028
          %3117 = vmatprep.subr.mxu0 0.0
          %3118 = vmatpush1.msra.mxu0 %v3029
          %3119 = vmatprep.subr.mxu0 0.0
          %3120 = vmatpush1.msra.mxu0 %v3030
          %3121 = vmatprep.subr.mxu0 0.0
          %3122 = vmatpush1.msra.mxu0 %v3031
          %3123 = vmatprep.subr.mxu0 0.0
          %3124 = vmatpush1.msra.mxu0 0.0
          %3125 = vmatprep.subr.mxu0 0.0
          %3126 = vmatpush1.msra.mxu0 0.0
          %3127 = vmatprep.subr.mxu0 0.0
          %3128 = vmatpush1.msra.mxu0 0.0
          %3129 = vmatprep.subr.mxu0 0.0
          %3130 = vmatpush1.msra.mxu0 0.0
          %3131 = vmatprep.subr.mxu0 0.0
          %3132 = vmatpush1.msra.mxu0 0.0
          %3133 = vmatprep.subr.mxu0 0.0
          %3134 = vmatpush1.msra.mxu0 0.0
          %3135 = vmatprep.subr.mxu0 0.0
          %3136 = vmatpush1.msra.mxu0 0.0
          %3137 = vmatprep.subr.mxu0 0.0
          %3138 = vmatpush1.msra.mxu0 0.0
          %3139 = vmatprep.subr.mxu0 0.0
          %3140 = vmatpush1.msra.mxu0 0.0
          %3141 = vmatprep.subr.mxu0 0.0
          %3142 = vmatpush1.msra.mxu0 0.0
          %3143 = vmatprep.subr.mxu0 0.0
          %3144 = vmatpush1.msra.mxu0 0.0
          %3145 = vmatprep.subr.mxu0 0.0
          %3146 = vmatpush1.msra.mxu0 0.0
          %3147 = vmatprep.subr.mxu0 0.0
          %3148 = vmatpush1.msra.mxu0 0.0
          %3149 = vmatprep.subr.mxu0 0.0
          %3150 = vmatpush1.msra.mxu0 0.0
          %3151 = vmatprep.subr.mxu0 0.0
          %3152 = vmatpush1.msra.mxu0 0.0
          %3153 = vmatprep.subr.mxu0 0.0
          %3154 = vmatpush1.msra.mxu0 0.0
          %3155 = vmatprep.subr.mxu0 0.0
          %3156 = vmatpush1.msra.mxu0 0.0
          %3157 = vmatprep.subr.mxu0 0.0
          %3158 = vmatpush1.msra.mxu0 0.0
          %3159 = vmatprep.subr.mxu0 0.0
          %3160 = vmatpush1.msra.mxu0 0.0
          %3161 = vmatprep.subr.mxu0 0.0
          %3162 = vmatpush1.msra.mxu0 0.0
          %3163 = vmatprep.subr.mxu0 0.0
          %3164 = vmatpush1.msra.mxu0 0.0
          %3165 = vmatprep.subr.mxu0 0.0
          %3166 = vmatpush1.msra.mxu0 0.0
          %3167 = vmatprep.subr.mxu0 0.0
          %3168 = vmatpush1.msra.mxu0 0.0
          %3169 = vmatprep.subr.mxu0 0.0
          %3170 = vmatpush1.msra.mxu0 0.0
          %3171 = vmatprep.subr.mxu0 0.0
          %3172 = vmatpush1.msra.mxu0 0.0
          %3173 = vmatprep.subr.mxu0 0.0
          %3174 = vmatpush1.msra.mxu0 0.0
          %3175 = vmatprep.subr.mxu0 0.0
          %3176 = vmatpush1.msra.mxu0 0.0
          %3177 = vmatprep.subr.mxu0 0.0
          %3178 = vmatpush1.msra.mxu0 0.0
          %3179 = vmatprep.mubr.f32.mxu0 0.0
          %3180 = vmatmul.mubr.f32.gmra.mrb[0].mxu0 %v3113
          %v3181 = vpop.f32.mrb[0].mxu0
          %v3182 = vadd.f32 %v3109, %v3181
          %v3183 = vpop.f32.mrb[0].mxu0
          %3184 = vdwg.mxu0
          %s3185 = sadd.s32 %s3025, 2
          %s3186 = scalar_lea.vmem [#allocation4], %s3185
          %v3187 = vld [vmem:[%s3186] ss:$2 sm:$0xff]
          %v3188 = vld [vmem:[%s5 + $0x40] sm:$0xff]
          %v3189 = vld [vmem:[%s5 + $0x48] sm:$0xff]
          %v3190 = vld [vmem:[%s5 + $0x50] sm:$0xff]
          %v3191 = vld [vmem:[%s5 + $0x58] sm:$0xff]
          %v3193 = vsel %vm1078, %v3187, 0
          %3195 = vmatprep.subr.mxu0 0.0
          %3196 = vmatpush1.msra.mxu0 %v3188
          %3197 = vmatprep.subr.mxu0 0.0
          %3198 = vmatpush1.msra.mxu0 %v3189
          %3199 = vmatprep.subr.mxu0 0.0
          %3200 = vmatpush1.msra.mxu0 %v3190
          %3201 = vmatprep.subr.mxu0 0.0
          %3202 = vmatpush1.msra.mxu0 %v3191
          %3203 = vmatprep.subr.mxu0 0.0
          %3204 = vmatpush1.msra.mxu0 0.0
          %3205 = vmatprep.subr.mxu0 0.0
          %3206 = vmatpush1.msra.mxu0 0.0
          %3207 = vmatprep.subr.mxu0 0.0
          %3208 = vmatpush1.msra.mxu0 0.0
          %3209 = vmatprep.subr.mxu0 0.0
          %3210 = vmatpush1.msra.mxu0 0.0
          %3211 = vmatprep.subr.mxu0 0.0
          %3212 = vmatpush1.msra.mxu0 0.0
          %3213 = vmatprep.subr.mxu0 0.0
          %3214 = vmatpush1.msra.mxu0 0.0
          %3215 = vmatprep.subr.mxu0 0.0
          %3216 = vmatpush1.msra.mxu0 0.0
          %3217 = vmatprep.subr.mxu0 0.0
          %3218 = vmatpush1.msra.mxu0 0.0
          %3219 = vmatprep.subr.mxu0 0.0
          %3220 = vmatpush1.msra.mxu0 0.0
          %3221 = vmatprep.subr.mxu0 0.0
          %3222 = vmatpush1.msra.mxu0 0.0
          %3223 = vmatprep.subr.mxu0 0.0
          %3224 = vmatpush1.msra.mxu0 0.0
          %3225 = vmatprep.subr.mxu0 0.0
          %3226 = vmatpush1.msra.mxu0 0.0
          %3227 = vmatprep.subr.mxu0 0.0
          %3228 = vmatpush1.msra.mxu0 0.0
          %3229 = vmatprep.subr.mxu0 0.0
          %3230 = vmatpush1.msra.mxu0 0.0
          %3231 = vmatprep.subr.mxu0 0.0
          %3232 = vmatpush1.msra.mxu0 0.0
          %3233 = vmatprep.subr.mxu0 0.0
          %3234 = vmatpush1.msra.mxu0 0.0
          %3235 = vmatprep.subr.mxu0 0.0
          %3236 = vmatpush1.msra.mxu0 0.0
          %3237 = vmatprep.subr.mxu0 0.0
          %3238 = vmatpush1.msra.mxu0 0.0
          %3239 = vmatprep.subr.mxu0 0.0
          %3240 = vmatpush1.msra.mxu0 0.0
          %3241 = vmatprep.subr.mxu0 0.0
          %3242 = vmatpush1.msra.mxu0 0.0
          %3243 = vmatprep.subr.mxu0 0.0
          %3244 = vmatpush1.msra.mxu0 0.0
          %3245 = vmatprep.subr.mxu0 0.0
          %3246 = vmatpush1.msra.mxu0 0.0
          %3247 = vmatprep.subr.mxu0 0.0
          %3248 = vmatpush1.msra.mxu0 0.0
          %3249 = vmatprep.subr.mxu0 0.0
          %3250 = vmatpush1.msra.mxu0 0.0
          %3251 = vmatprep.subr.mxu0 0.0
          %3252 = vmatpush1.msra.mxu0 0.0
          %3253 = vmatprep.subr.mxu0 0.0
          %3254 = vmatpush1.msra.mxu0 0.0
          %3255 = vmatprep.subr.mxu0 0.0
          %3256 = vmatpush1.msra.mxu0 0.0
          %3257 = vmatprep.subr.mxu0 0.0
          %3258 = vmatpush1.msra.mxu0 0.0
          %3259 = vmatprep.mubr.f32.mxu0 0.0
          %3260 = vmatmul.mubr.f32.gmra.mrb[0].mxu0 %v3193
          %v3261 = vpop.f32.mrb[0].mxu0
          %v3262 = vadd.f32 0.0, %v3261
          %v3263 = vpop.f32.mrb[0].mxu0
          %3264 = vdwg.mxu0
          %v3265 = vadd.f32 %v3182, %v3262
          %s3266 = smul.u32 %s3020, 2
          %s3267 = sadd.s32 %s3266, 1
          %s3268 = smul.u32 %s3267, 18
          %s3269 = scalar_lea.vmem [#allocation4], %s3268
          %v3270 = vld [vmem:[%s3269] ss:$2 sm:$0xff]
          %v3271 = vld [vmem:[%s5 + $0x60] sm:$0xff]
          %v3272 = vld [vmem:[%s5 + $0x68] sm:$0xff]
          %v3273 = vld [vmem:[%s5 + $0x70] sm:$0xff]
          %v3274 = vld [vmem:[%s5 + $0x78] sm:$0xff]
          %v3276 = vsel %vm1078, %v3270, 0
          %3278 = vmatprep.subr.mxu0 0.0
          %3279 = vmatpush1.msra.mxu0 %v3271
          %3280 = vmatprep.subr.mxu0 0.0
          %3281 = vmatpush1.msra.mxu0 %v3272
          %3282 = vmatprep.subr.mxu0 0.0
          %3283 = vmatpush1.msra.mxu0 %v3273
          %3284 = vmatprep.subr.mxu0 0.0
          %3285 = vmatpush1.msra.mxu0 %v3274
          %3286 = vmatprep.subr.mxu0 0.0
          %3287 = vmatpush1.msra.mxu0 0.0
          %3288 = vmatprep.subr.mxu0 0.0
          %3289 = vmatpush1.msra.mxu0 0.0
          %3290 = vmatprep.subr.mxu0 0.0
          %3291 = vmatpush1.msra.mxu0 0.0
          %3292 = vmatprep.subr.mxu0 0.0
          %3293 = vmatpush1.msra.mxu0 0.0
          %3294 = vmatprep.subr.mxu0 0.0
          %3295 = vmatpush1.msra.mxu0 0.0
          %3296 = vmatprep.subr.mxu0 0.0
          %3297 = vmatpush1.msra.mxu0 0.0
          %3298 = vmatprep.subr.mxu0 0.0
          %3299 = vmatpush1.msra.mxu0 0.0
          %3300 = vmatprep.subr.mxu0 0.0
          %3301 = vmatpush1.msra.mxu0 0.0
          %3302 = vmatprep.subr.mxu0 0.0
          %3303 = vmatpush1.msra.mxu0 0.0
          %3304 = vmatprep.subr.mxu0 0.0
          %3305 = vmatpush1.msra.mxu0 0.0
          %3306 = vmatprep.subr.mxu0 0.0
          %3307 = vmatpush1.msra.mxu0 0.0
          %3308 = vmatprep.subr.mxu0 0.0
          %3309 = vmatpush1.msra.mxu0 0.0
          %3310 = vmatprep.subr.mxu0 0.0
          %3311 = vmatpush1.msra.mxu0 0.0
          %3312 = vmatprep.subr.mxu0 0.0
          %3313 = vmatpush1.msra.mxu0 0.0
          %3314 = vmatprep.subr.mxu0 0.0
          %3315 = vmatpush1.msra.mxu0 0.0
          %3316 = vmatprep.subr.mxu0 0.0
          %3317 = vmatpush1.msra.mxu0 0.0
          %3318 = vmatprep.subr.mxu0 0.0
          %3319 = vmatpush1.msra.mxu0 0.0
          %3320 = vmatprep.subr.mxu0 0.0
          %3321 = vmatpush1.msra.mxu0 0.0
          %3322 = vmatprep.subr.mxu0 0.0
          %3323 = vmatpush1.msra.mxu0 0.0
          %3324 = vmatprep.subr.mxu0 0.0
          %3325 = vmatpush1.msra.mxu0 0.0
          %3326 = vmatprep.subr.mxu0 0.0
          %3327 = vmatpush1.msra.mxu0 0.0
          %3328 = vmatprep.subr.mxu0 0.0
          %3329 = vmatpush1.msra.mxu0 0.0
          %3330 = vmatprep.subr.mxu0 0.0
          %3331 = vmatpush1.msra.mxu0 0.0
          %3332 = vmatprep.subr.mxu0 0.0
          %3333 = vmatpush1.msra.mxu0 0.0
          %3334 = vmatprep.subr.mxu0 0.0
          %3335 = vmatpush1.msra.mxu0 0.0
          %3336 = vmatprep.subr.mxu0 0.0
          %3337 = vmatpush1.msra.mxu0 0.0
          %3338 = vmatprep.subr.mxu0 0.0
          %3339 = vmatpush1.msra.mxu0 0.0
          %3340 = vmatprep.subr.mxu0 0.0
          %3341 = vmatpush1.msra.mxu0 0.0
          %3342 = vmatprep.mubr.f32.mxu0 0.0
          %3343 = vmatmul.mubr.f32.gmra.mrb[0].mxu0 %v3276
          %v3344 = vpop.f32.mrb[0].mxu0
          %v3345 = vadd.f32 0.0, %v3344
          %v3346 = vpop.f32.mrb[0].mxu0
          %3347 = vdwg.mxu0
          %v3348 = vadd.f32 %v3265, %v3345
          %s3349 = sadd.s32 %s3268, 1
          %s3350 = scalar_lea.vmem [#allocation4], %s3349
          %v3351 = vld [vmem:[%s3350] ss:$2 sm:$0xff]
          %v3352 = vld [vmem:[%s5 + $0x80] sm:$0xff]
          %v3353 = vld [vmem:[%s5 + $0x88] sm:$0xff]
          %v3354 = vld [vmem:[%s5 + $0x90] sm:$0xff]
          %v3355 = vld [vmem:[%s5 + $0x98] sm:$0xff]
          %v3357 = vsel %vm1078, %v3351, 0
          %3359 = vmatprep.subr.mxu0 0.0
          %3360 = vmatpush1.msra.mxu0 %v3352
          %3361 = vmatprep.subr.mxu0 0.0
          %3362 = vmatpush1.msra.mxu0 %v3353
          %3363 = vmatprep.subr.mxu0 0.0
          %3364 = vmatpush1.msra.mxu0 %v3354
          %3365 = vmatprep.subr.mxu0 0.0
          %3366 = vmatpush1.msra.mxu0 %v3355
          %3367 = vmatprep.subr.mxu0 0.0
          %3368 = vmatpush1.msra.mxu0 0.0
          %3369 = vmatprep.subr.mxu0 0.0
          %3370 = vmatpush1.msra.mxu0 0.0
          %3371 = vmatprep.subr.mxu0 0.0
          %3372 = vmatpush1.msra.mxu0 0.0
          %3373 = vmatprep.subr.mxu0 0.0
          %3374 = vmatpush1.msra.mxu0 0.0
          %3375 = vmatprep.subr.mxu0 0.0
          %3376 = vmatpush1.msra.mxu0 0.0
          %3377 = vmatprep.subr.mxu0 0.0
          %3378 = vmatpush1.msra.mxu0 0.0
          %3379 = vmatprep.subr.mxu0 0.0
          %3380 = vmatpush1.msra.mxu0 0.0
          %3381 = vmatprep.subr.mxu0 0.0
          %3382 = vmatpush1.msra.mxu0 0.0
          %3383 = vmatprep.subr.mxu0 0.0
          %3384 = vmatpush1.msra.mxu0 0.0
          %3385 = vmatprep.subr.mxu0 0.0
          %3386 = vmatpush1.msra.mxu0 0.0
          %3387 = vmatprep.subr.mxu0 0.0
          %3388 = vmatpush1.msra.mxu0 0.0
          %3389 = vmatprep.subr.mxu0 0.0
          %3390 = vmatpush1.msra.mxu0 0.0
          %3391 = vmatprep.subr.mxu0 0.0
          %3392 = vmatpush1.msra.mxu0 0.0
          %3393 = vmatprep.subr.mxu0 0.0
          %3394 = vmatpush1.msra.mxu0 0.0
          %3395 = vmatprep.subr.mxu0 0.0
          %3396 = vmatpush1.msra.mxu0 0.0
          %3397 = vmatprep.subr.mxu0 0.0
          %3398 = vmatpush1.msra.mxu0 0.0
          %3399 = vmatprep.subr.mxu0 0.0
          %3400 = vmatpush1.msra.mxu0 0.0
          %3401 = vmatprep.subr.mxu0 0.0
          %3402 = vmatpush1.msra.mxu0 0.0
          %3403 = vmatprep.subr.mxu0 0.0
          %3404 = vmatpush1.msra.mxu0 0.0
          %3405 = vmatprep.subr.mxu0 0.0
          %3406 = vmatpush1.msra.mxu0 0.0
          %3407 = vmatprep.subr.mxu0 0.0
          %3408 = vmatpush1.msra.mxu0 0.0
          %3409 = vmatprep.subr.mxu0 0.0
          %3410 = vmatpush1.msra.mxu0 0.0
          %3411 = vmatprep.subr.mxu0 0.0
          %3412 = vmatpush1.msra.mxu0 0.0
          %3413 = vmatprep.subr.mxu0 0.0
          %3414 = vmatpush1.msra.mxu0 0.0
          %3415 = vmatprep.subr.mxu0 0.0
          %3416 = vmatpush1.msra.mxu0 0.0
          %3417 = vmatprep.subr.mxu0 0.0
          %3418 = vmatpush1.msra.mxu0 0.0
          %3419 = vmatprep.subr.mxu0 0.0
          %3420 = vmatpush1.msra.mxu0 0.0
          %3421 = vmatprep.subr.mxu0 0.0
          %3422 = vmatpush1.msra.mxu0 0.0
          %3423 = vmatprep.mubr.f32.mxu0 0.0
          %3424 = vmatmul.mubr.f32.gmra.mrb[0].mxu0 %v3357
          %v3425 = vpop.f32.mrb[0].mxu0
          %v3426 = vadd.f32 0.0, %v3425
          %v3427 = vpop.f32.mrb[0].mxu0
          %3428 = vdwg.mxu0
          %v3429 = vadd.f32 %v3348, %v3426
          %s3430 = sadd.s32 %s3268, 2
          %s3431 = scalar_lea.vmem [#allocation4], %s3430
          %v3432 = vld [vmem:[%s3431] ss:$2 sm:$0xff]
          %v3433 = vld [vmem:[%s5 + $0xa0] sm:$0xff]
          %v3434 = vld [vmem:[%s5 + $0xa8] sm:$0xff]
          %v3435 = vld [vmem:[%s5 + $0xb0] sm:$0xff]
          %v3436 = vld [vmem:[%s5 + $0xb8] sm:$0xff]
          %v3438 = vsel %vm1078, %v3432, 0
          %3440 = vmatprep.subr.mxu0 0.0
          %3441 = vmatpush1.msra.mxu0 %v3433
          %3442 = vmatprep.subr.mxu0 0.0
          %3443 = vmatpush1.msra.mxu0 %v3434
          %3444 = vmatprep.subr.mxu0 0.0
          %3445 = vmatpush1.msra.mxu0 %v3435
          %3446 = vmatprep.subr.mxu0 0.0
          %3447 = vmatpush1.msra.mxu0 %v3436
          %3448 = vmatprep.subr.mxu0 0.0
          %3449 = vmatpush1.msra.mxu0 0.0
          %3450 = vmatprep.subr.mxu0 0.0
          %3451 = vmatpush1.msra.mxu0 0.0
          %3452 = vmatprep.subr.mxu0 0.0
          %3453 = vmatpush1.msra.mxu0 0.0
          %3454 = vmatprep.subr.mxu0 0.0
          %3455 = vmatpush1.msra.mxu0 0.0
          %3456 = vmatprep.subr.mxu0 0.0
          %3457 = vmatpush1.msra.mxu0 0.0
          %3458 = vmatprep.subr.mxu0 0.0
          %3459 = vmatpush1.msra.mxu0 0.0
          %3460 = vmatprep.subr.mxu0 0.0
          %3461 = vmatpush1.msra.mxu0 0.0
          %3462 = vmatprep.subr.mxu0 0.0
          %3463 = vmatpush1.msra.mxu0 0.0
          %3464 = vmatprep.subr.mxu0 0.0
          %3465 = vmatpush1.msra.mxu0 0.0
          %3466 = vmatprep.subr.mxu0 0.0
          %3467 = vmatpush1.msra.mxu0 0.0
          %3468 = vmatprep.subr.mxu0 0.0
          %3469 = vmatpush1.msra.mxu0 0.0
          %3470 = vmatprep.subr.mxu0 0.0
          %3471 = vmatpush1.msra.mxu0 0.0
          %3472 = vmatprep.subr.mxu0 0.0
          %3473 = vmatpush1.msra.mxu0 0.0
          %3474 = vmatprep.subr.mxu0 0.0
          %3475 = vmatpush1.msra.mxu0 0.0
          %3476 = vmatprep.subr.mxu0 0.0
          %3477 = vmatpush1.msra.mxu0 0.0
          %3478 = vmatprep.subr.mxu0 0.0
          %3479 = vmatpush1.msra.mxu0 0.0
          %3480 = vmatprep.subr.mxu0 0.0
          %3481 = vmatpush1.msra.mxu0 0.0
          %3482 = vmatprep.subr.mxu0 0.0
          %3483 = vmatpush1.msra.mxu0 0.0
          %3484 = vmatprep.subr.mxu0 0.0
          %3485 = vmatpush1.msra.mxu0 0.0
          %3486 = vmatprep.subr.mxu0 0.0
          %3487 = vmatpush1.msra.mxu0 0.0
          %3488 = vmatprep.subr.mxu0 0.0
          %3489 = vmatpush1.msra.mxu0 0.0
          %3490 = vmatprep.subr.mxu0 0.0
          %3491 = vmatpush1.msra.mxu0 0.0
          %3492 = vmatprep.subr.mxu0 0.0
          %3493 = vmatpush1.msra.mxu0 0.0
          %3494 = vmatprep.subr.mxu0 0.0
          %3495 = vmatpush1.msra.mxu0 0.0
          %3496 = vmatprep.subr.mxu0 0.0
          %3497 = vmatpush1.msra.mxu0 0.0
          %3498 = vmatprep.subr.mxu0 0.0
          %3499 = vmatpush1.msra.mxu0 0.0
          %3500 = vmatprep.subr.mxu0 0.0
          %3501 = vmatpush1.msra.mxu0 0.0
          %3502 = vmatprep.subr.mxu0 0.0
          %3503 = vmatpush1.msra.mxu0 0.0
          %3504 = vmatprep.mubr.f32.mxu0 0.0
          %3505 = vmatmul.mubr.f32.gmra.mrb[0].mxu0 %v3438
          %v3506 = vpop.f32.mrb[0].mxu0
          %v3507 = vadd.f32 0.0, %v3506
          %v3508 = vpop.f32.mrb[0].mxu0
          %3509 = vdwg.mxu0
          %v3510 = vadd.f32 %v3429, %v3507
          %s3511 = sadd.s32 %s3266, 2
          %s3512 = smul.u32 %s3511, 18
          %s3513 = scalar_lea.vmem [#allocation4], %s3512
          %v3514 = vld [vmem:[%s3513] ss:$2 sm:$0xff]
          %v3515 = vld [vmem:[%s5 + $0xc0] sm:$0xff]
          %v3516 = vld [vmem:[%s5 + $0xc8] sm:$0xff]
          %v3517 = vld [vmem:[%s5 + $0xd0] sm:$0xff]
          %v3518 = vld [vmem:[%s5 + $0xd8] sm:$0xff]
          %v3520 = vsel %vm1078, %v3514, 0
          %3522 = vmatprep.subr.mxu0 0.0
          %3523 = vmatpush1.msra.mxu0 %v3515
          %3524 = vmatprep.subr.mxu0 0.0
          %3525 = vmatpush1.msra.mxu0 %v3516
          %3526 = vmatprep.subr.mxu0 0.0
          %3527 = vmatpush1.msra.mxu0 %v3517
          %3528 = vmatprep.subr.mxu0 0.0
          %3529 = vmatpush1.msra.mxu0 %v3518
          %3530 = vmatprep.subr.mxu0 0.0
          %3531 = vmatpush1.msra.mxu0 0.0
          %3532 = vmatprep.subr.mxu0 0.0
          %3533 = vmatpush1.msra.mxu0 0.0
          %3534 = vmatprep.subr.mxu0 0.0
          %3535 = vmatpush1.msra.mxu0 0.0
          %3536 = vmatprep.subr.mxu0 0.0
          %3537 = vmatpush1.msra.mxu0 0.0
          %3538 = vmatprep.subr.mxu0 0.0
          %3539 = vmatpush1.msra.mxu0 0.0
          %3540 = vmatprep.subr.mxu0 0.0
          %3541 = vmatpush1.msra.mxu0 0.0
          %3542 = vmatprep.subr.mxu0 0.0
          %3543 = vmatpush1.msra.mxu0 0.0
          %3544 = vmatprep.subr.mxu0 0.0
          %3545 = vmatpush1.msra.mxu0 0.0
          %3546 = vmatprep.subr.mxu0 0.0
          %3547 = vmatpush1.msra.mxu0 0.0
          %3548 = vmatprep.subr.mxu0 0.0
          %3549 = vmatpush1.msra.mxu0 0.0
          %3550 = vmatprep.subr.mxu0 0.0
          %3551 = vmatpush1.msra.mxu0 0.0
          %3552 = vmatprep.subr.mxu0 0.0
          %3553 = vmatpush1.msra.mxu0 0.0
          %3554 = vmatprep.subr.mxu0 0.0
          %3555 = vmatpush1.msra.mxu0 0.0
          %3556 = vmatprep.subr.mxu0 0.0
          %3557 = vmatpush1.msra.mxu0 0.0
          %3558 = vmatprep.subr.mxu0 0.0
          %3559 = vmatpush1.msra.mxu0 0.0
          %3560 = vmatprep.subr.mxu0 0.0
          %3561 = vmatpush1.msra.mxu0 0.0
          %3562 = vmatprep.subr.mxu0 0.0
          %3563 = vmatpush1.msra.mxu0 0.0
          %3564 = vmatprep.subr.mxu0 0.0
          %3565 = vmatpush1.msra.mxu0 0.0
          %3566 = vmatprep.subr.mxu0 0.0
          %3567 = vmatpush1.msra.mxu0 0.0
          %3568 = vmatprep.subr.mxu0 0.0
          %3569 = vmatpush1.msra.mxu0 0.0
          %3570 = vmatprep.subr.mxu0 0.0
          %3571 = vmatpush1.msra.mxu0 0.0
          %3572 = vmatprep.subr.mxu0 0.0
          %3573 = vmatpush1.msra.mxu0 0.0
          %3574 = vmatprep.subr.mxu0 0.0
          %3575 = vmatpush1.msra.mxu0 0.0
          %3576 = vmatprep.subr.mxu0 0.0
          %3577 = vmatpush1.msra.mxu0 0.0
          %3578 = vmatprep.subr.mxu0 0.0
          %3579 = vmatpush1.msra.mxu0 0.0
          %3580 = vmatprep.subr.mxu0 0.0
          %3581 = vmatpush1.msra.mxu0 0.0
          %3582 = vmatprep.subr.mxu0 0.0
          %3583 = vmatpush1.msra.mxu0 0.0
          %3584 = vmatprep.subr.mxu0 0.0
          %3585 = vmatpush1.msra.mxu0 0.0
          %3586 = vmatprep.mubr.f32.mxu0 0.0
          %3587 = vmatmul.mubr.f32.gmra.mrb[0].mxu0 %v3520
          %v3588 = vpop.f32.mrb[0].mxu0
          %v3589 = vadd.f32 0.0, %v3588
          %v3590 = vpop.f32.mrb[0].mxu0
          %3591 = vdwg.mxu0
          %v3592 = vadd.f32 %v3510, %v3589
          %s3593 = sadd.s32 %s3512, 1
          %s3594 = scalar_lea.vmem [#allocation4], %s3593
          %v3595 = vld [vmem:[%s3594] ss:$2 sm:$0xff]
          %v3596 = vld [vmem:[%s5 + $0xe0] sm:$0xff]
          %v3597 = vld [vmem:[%s5 + $0xe8] sm:$0xff]
          %v3598 = vld [vmem:[%s5 + $0xf0] sm:$0xff]
          %v3599 = vld [vmem:[%s5 + $0xf8] sm:$0xff]
          %v3601 = vsel %vm1078, %v3595, 0
          %3603 = vmatprep.subr.mxu0 0.0
          %3604 = vmatpush1.msra.mxu0 %v3596
          %3605 = vmatprep.subr.mxu0 0.0
          %3606 = vmatpush1.msra.mxu0 %v3597
          %3607 = vmatprep.subr.mxu0 0.0
          %3608 = vmatpush1.msra.mxu0 %v3598
          %3609 = vmatprep.subr.mxu0 0.0
          %3610 = vmatpush1.msra.mxu0 %v3599
          %3611 = vmatprep.subr.mxu0 0.0
          %3612 = vmatpush1.msra.mxu0 0.0
          %3613 = vmatprep.subr.mxu0 0.0
          %3614 = vmatpush1.msra.mxu0 0.0
          %3615 = vmatprep.subr.mxu0 0.0
          %3616 = vmatpush1.msra.mxu0 0.0
          %3617 = vmatprep.subr.mxu0 0.0
          %3618 = vmatpush1.msra.mxu0 0.0
          %3619 = vmatprep.subr.mxu0 0.0
          %3620 = vmatpush1.msra.mxu0 0.0
          %3621 = vmatprep.subr.mxu0 0.0
          %3622 = vmatpush1.msra.mxu0 0.0
          %3623 = vmatprep.subr.mxu0 0.0
          %3624 = vmatpush1.msra.mxu0 0.0
          %3625 = vmatprep.subr.mxu0 0.0
          %3626 = vmatpush1.msra.mxu0 0.0
          %3627 = vmatprep.subr.mxu0 0.0
          %3628 = vmatpush1.msra.mxu0 0.0
          %3629 = vmatprep.subr.mxu0 0.0
          %3630 = vmatpush1.msra.mxu0 0.0
          %3631 = vmatprep.subr.mxu0 0.0
          %3632 = vmatpush1.msra.mxu0 0.0
          %3633 = vmatprep.subr.mxu0 0.0
          %3634 = vmatpush1.msra.mxu0 0.0
          %3635 = vmatprep.subr.mxu0 0.0
          %3636 = vmatpush1.msra.mxu0 0.0
          %3637 = vmatprep.subr.mxu0 0.0
          %3638 = vmatpush1.msra.mxu0 0.0
          %3639 = vmatprep.subr.mxu0 0.0
          %3640 = vmatpush1.msra.mxu0 0.0
          %3641 = vmatprep.subr.mxu0 0.0
          %3642 = vmatpush1.msra.mxu0 0.0
          %3643 = vmatprep.subr.mxu0 0.0
          %3644 = vmatpush1.msra.mxu0 0.0
          %3645 = vmatprep.subr.mxu0 0.0
          %3646 = vmatpush1.msra.mxu0 0.0
          %3647 = vmatprep.subr.mxu0 0.0
          %3648 = vmatpush1.msra.mxu0 0.0
          %3649 = vmatprep.subr.mxu0 0.0
          %3650 = vmatpush1.msra.mxu0 0.0
          %3651 = vmatprep.subr.mxu0 0.0
          %3652 = vmatpush1.msra.mxu0 0.0
          %3653 = vmatprep.subr.mxu0 0.0
          %3654 = vmatpush1.msra.mxu0 0.0
          %3655 = vmatprep.subr.mxu0 0.0
          %3656 = vmatpush1.msra.mxu0 0.0
          %3657 = vmatprep.subr.mxu0 0.0
          %3658 = vmatpush1.msra.mxu0 0.0
          %3659 = vmatprep.subr.mxu0 0.0
          %3660 = vmatpush1.msra.mxu0 0.0
          %3661 = vmatprep.subr.mxu0 0.0
          %3662 = vmatpush1.msra.mxu0 0.0
          %3663 = vmatprep.subr.mxu0 0.0
          %3664 = vmatpush1.msra.mxu0 0.0
          %3665 = vmatprep.subr.mxu0 0.0
          %3666 = vmatpush1.msra.mxu0 0.0
          %3667 = vmatprep.mubr.f32.mxu0 0.0
          %3668 = vmatmul.mubr.f32.gmra.mrb[0].mxu0 %v3601
          %v3669 = vpop.f32.mrb[0].mxu0
          %v3670 = vadd.f32 0.0, %v3669
          %v3671 = vpop.f32.mrb[0].mxu0
          %3672 = vdwg.mxu0
          %v3673 = vadd.f32 %v3592, %v3670
          %s3674 = sadd.s32 %s3512, 2
          %s3675 = scalar_lea.vmem [#allocation4], %s3674
          %v3676 = vld [vmem:[%s3675] ss:$2 sm:$0xff]
          %v3677 = vld [vmem:[%s5 + $0x100] sm:$0xff]
          %v3678 = vld [vmem:[%s5 + $0x108] sm:$0xff]
          %v3679 = vld [vmem:[%s5 + $0x110] sm:$0xff]
          %v3680 = vld [vmem:[%s5 + $0x118] sm:$0xff]
          %v3682 = vsel %vm1078, %v3676, 0
          %3684 = vmatprep.subr.mxu0 0.0
          %3685 = vmatpush1.msra.mxu0 %v3677
          %3686 = vmatprep.subr.mxu0 0.0
          %3687 = vmatpush1.msra.mxu0 %v3678
          %3688 = vmatprep.subr.mxu0 0.0
          %3689 = vmatpush1.msra.mxu0 %v3679
          %3690 = vmatprep.subr.mxu0 0.0
          %3691 = vmatpush1.msra.mxu0 %v3680
          %3692 = vmatprep.subr.mxu0 0.0
          %3693 = vmatpush1.msra.mxu0 0.0
          %3694 = vmatprep.subr.mxu0 0.0
          %3695 = vmatpush1.msra.mxu0 0.0
          %3696 = vmatprep.subr.mxu0 0.0
          %3697 = vmatpush1.msra.mxu0 0.0
          %3698 = vmatprep.subr.mxu0 0.0
          %3699 = vmatpush1.msra.mxu0 0.0
          %3700 = vmatprep.subr.mxu0 0.0
          %3701 = vmatpush1.msra.mxu0 0.0
          %3702 = vmatprep.subr.mxu0 0.0
          %3703 = vmatpush1.msra.mxu0 0.0
          %3704 = vmatprep.subr.mxu0 0.0
          %3705 = vmatpush1.msra.mxu0 0.0
          %3706 = vmatprep.subr.mxu0 0.0
          %3707 = vmatpush1.msra.mxu0 0.0
          %3708 = vmatprep.subr.mxu0 0.0
          %3709 = vmatpush1.msra.mxu0 0.0
          %3710 = vmatprep.subr.mxu0 0.0
          %3711 = vmatpush1.msra.mxu0 0.0
          %3712 = vmatprep.subr.mxu0 0.0
          %3713 = vmatpush1.msra.mxu0 0.0
          %3714 = vmatprep.subr.mxu0 0.0
          %3715 = vmatpush1.msra.mxu0 0.0
          %3716 = vmatprep.subr.mxu0 0.0
          %3717 = vmatpush1.msra.mxu0 0.0
          %3718 = vmatprep.subr.mxu0 0.0
          %3719 = vmatpush1.msra.mxu0 0.0
          %3720 = vmatprep.subr.mxu0 0.0
          %3721 = vmatpush1.msra.mxu0 0.0
          %3722 = vmatprep.subr.mxu0 0.0
          %3723 = vmatpush1.msra.mxu0 0.0
          %3724 = vmatprep.subr.mxu0 0.0
          %3725 = vmatpush1.msra.mxu0 0.0
          %3726 = vmatprep.subr.mxu0 0.0
          %3727 = vmatpush1.msra.mxu0 0.0
          %3728 = vmatprep.subr.mxu0 0.0
          %3729 = vmatpush1.msra.mxu0 0.0
          %3730 = vmatprep.subr.mxu0 0.0
          %3731 = vmatpush1.msra.mxu0 0.0
          %3732 = vmatprep.subr.mxu0 0.0
          %3733 = vmatpush1.msra.mxu0 0.0
          %3734 = vmatprep.subr.mxu0 0.0
          %3735 = vmatpush1.msra.mxu0 0.0
          %3736 = vmatprep.subr.mxu0 0.0
          %3737 = vmatpush1.msra.mxu0 0.0
          %3738 = vmatprep.subr.mxu0 0.0
          %3739 = vmatpush1.msra.mxu0 0.0
          %3740 = vmatprep.subr.mxu0 0.0
          %3741 = vmatpush1.msra.mxu0 0.0
          %3742 = vmatprep.subr.mxu0 0.0
          %3743 = vmatpush1.msra.mxu0 0.0
          %3744 = vmatprep.subr.mxu0 0.0
          %3745 = vmatpush1.msra.mxu0 0.0
          %3746 = vmatprep.subr.mxu0 0.0
          %3747 = vmatpush1.msra.mxu0 0.0
          %3748 = vmatprep.mubr.f32.mxu0 0.0
          %3749 = vmatmul.mubr.f32.gmra.mrb[0].mxu0 %v3682
          %v3750 = vpop.f32.mrb[0].mxu0
          %v3751 = vadd.f32 0.0, %v3750
          %v3752 = vpop.f32.mrb[0].mxu0
          %3753 = vdwg.mxu0
          %v3754 = vadd.f32 %v3673, %v3751
          %v3755 = vld [vmem:[%s6] sm:$0x1]
          %v3757 = vlaneseq
          %v3758 = vshrl.u32 %v3757, 7
          %v3759 = vsub.s32 0, %v3758
          %v3760 = vrot.slane %v3755, %v3759
          %v3762 = vadd.f32 %v3754, %v3760
          %v3763 = vmax.f32 %v3762, 0.0
          %s3764 = sadd.s32 %s3020, 1
          %s3765 = smul.u32 %s3764, 10
          %s3766 = sadd.s32 %s3765, 1
          %s3767 = scalar_lea.vmem [#allocation5], %s3766
          %3768 = vst.msk [vmem:[%s3767] sm:$0xff] %vm1121, %v3763
        $region90: #{image_encoder_forward.3} parent=63 // loop_footer
          %s3024 = sadd.s32 1, %s3020
        $region91: #{image_encoder_forward.3} parent=63 // loop_footer_branch
          %3019 = sbr.rel target = $region87
        $region92: #{image_encoder_forward.3} parent=63 // loop_exit
          _
        loop: start=0, step=1, limit=4
        $region93: #{image_encoder_forward.3} parent=63 // loop_pre_header
          _
        $region94: #{image_encoder_forward.3} parent=63 // loop_header
          %s3770 = sphi 0, %s3774
          %p3771 = scmp.ge.s32.totalorder %s3770, 4
        $region95: #{image_encoder_forward.3} parent=63 // loop_header_branch
          %3773 = sbr.rel (%p3771) target = $region99
        $region96: #{image_encoder_forward.3} parent=63 // loop_body
          %s3775 = smul.u32 %s3770, 20
          %s3776 = scalar_lea.vmem [#allocation5], %s3775
          %v3777 = vld [vmem:[%s3776] ss:$2 sm:$0xf]
          %v3778 = vld [vmem:[%s7] sm:$0xff]
          %v3779 = vld [vmem:[%s7 + $0x8] sm:$0xff]
          %v3780 = vld [vmem:[%s7 + $0x10] sm:$0xff]
          %v3781 = vld [vmem:[%s7 + $0x18] sm:$0xff]
          %v3782 = vld [vmem:[%s7 + $0x20] sm:$0xff]
          %v3783 = vld [vmem:[%s7 + $0x28] sm:$0xff]
          %v3784 = vld [vmem:[%s7 + $0x30] sm:$0xff]
          %v3785 = vld [vmem:[%s7 + $0x38] sm:$0xff]
          %s3786 = sadd.s32 %s3775, 1
          %s3787 = scalar_lea.vmem [#allocation5], %s3786
          %v3788 = vld [vmem:[%s3787] ss:$2 sm:$0xf]
          %v3789 = vld [vmem:[%s7 + $0x40] sm:$0xff]
          %v3790 = vld [vmem:[%s7 + $0x48] sm:$0xff]
          %v3791 = vld [vmem:[%s7 + $0x50] sm:$0xff]
          %v3792 = vld [vmem:[%s7 + $0x58] sm:$0xff]
          %v3793 = vld [vmem:[%s7 + $0x60] sm:$0xff]
          %v3794 = vld [vmem:[%s7 + $0x68] sm:$0xff]
          %v3795 = vld [vmem:[%s7 + $0x70] sm:$0xff]
          %v3796 = vld [vmem:[%s7 + $0x78] sm:$0xff]
          %v3798 = vsel %vm1121, %v3788, 0
          %3800 = vmatprep.subr.mxu0 0.0
          %3801 = vmatpush1.msra.mxu0 %v3789
          %3802 = vmatprep.subr.mxu0 0.0
          %3803 = vmatpush1.msra.mxu0 %v3790
          %3804 = vmatprep.subr.mxu0 0.0
          %3805 = vmatpush1.msra.mxu0 %v3791
          %3806 = vmatprep.subr.mxu0 0.0
          %3807 = vmatpush1.msra.mxu0 %v3792
          %3808 = vmatprep.subr.mxu0 0.0
          %3809 = vmatpush1.msra.mxu0 %v3793
          %3810 = vmatprep.subr.mxu0 0.0
          %3811 = vmatpush1.msra.mxu0 %v3794
          %3812 = vmatprep.subr.mxu0 0.0
          %3813 = vmatpush1.msra.mxu0 %v3795
          %3814 = vmatprep.subr.mxu0 0.0
          %3815 = vmatpush1.msra.mxu0 %v3796
          %3816 = vmatprep.subr.mxu0 0.0
          %3817 = vmatpush1.msra.mxu0 0.0
          %3818 = vmatprep.subr.mxu0 0.0
          %3819 = vmatpush1.msra.mxu0 0.0
          %3820 = vmatprep.subr.mxu0 0.0
          %3821 = vmatpush1.msra.mxu0 0.0
          %3822 = vmatprep.subr.mxu0 0.0
          %3823 = vmatpush1.msra.mxu0 0.0
          %3824 = vmatprep.subr.mxu0 0.0
          %3825 = vmatpush1.msra.mxu0 0.0
          %3826 = vmatprep.subr.mxu0 0.0
          %3827 = vmatpush1.msra.mxu0 0.0
          %3828 = vmatprep.subr.mxu0 0.0
          %3829 = vmatpush1.msra.mxu0 0.0
          %3830 = vmatprep.subr.mxu0 0.0
          %3831 = vmatpush1.msra.mxu0 0.0
          %3832 = vmatprep.subr.mxu0 0.0
          %3833 = vmatpush1.msra.mxu0 0.0
          %3834 = vmatprep.subr.mxu0 0.0
          %3835 = vmatpush1.msra.mxu0 0.0
          %3836 = vmatprep.subr.mxu0 0.0
          %3837 = vmatpush1.msra.mxu0 0.0
          %3838 = vmatprep.subr.mxu0 0.0
          %3839 = vmatpush1.msra.mxu0 0.0
          %3840 = vmatprep.subr.mxu0 0.0
          %3841 = vmatpush1.msra.mxu0 0.0
          %3842 = vmatprep.subr.mxu0 0.0
          %3843 = vmatpush1.msra.mxu0 0.0
          %3844 = vmatprep.subr.mxu0 0.0
          %3845 = vmatpush1.msra.mxu0 0.0
          %3846 = vmatprep.subr.mxu0 0.0
          %3847 = vmatpush1.msra.mxu0 0.0
          %3848 = vmatprep.subr.mxu0 0.0
          %3849 = vmatpush1.msra.mxu0 0.0
          %3850 = vmatprep.subr.mxu0 0.0
          %3851 = vmatpush1.msra.mxu0 0.0
          %3852 = vmatprep.subr.mxu0 0.0
          %3853 = vmatpush1.msra.mxu0 0.0
          %3854 = vmatprep.subr.mxu0 0.0
          %3855 = vmatpush1.msra.mxu0 0.0
          %3856 = vmatprep.subr.mxu0 0.0
          %3857 = vmatpush1.msra.mxu0 0.0
          %3858 = vmatprep.subr.mxu0 0.0
          %3859 = vmatpush1.msra.mxu0 0.0
          %3860 = vmatprep.subr.mxu0 0.0
          %3861 = vmatpush1.msra.mxu0 0.0
          %3862 = vmatprep.subr.mxu0 0.0
          %3863 = vmatpush1.msra.mxu0 0.0
          %3864 = vmatprep.mubr.f32.mxu0 0.0
          %3865 = vmatmul.mubr.f32.gmra.mrb[0].mxu0 %v3798
          %v3866 = vpop.f32.mrb[0].mxu0
          %v3867 = vadd.f32 0.0, %v3866
          %v3868 = vpop.f32.mrb[0].mxu0
          %3869 = vdwg.mxu0
          %v3871 = vsel %vm1121, %v3777, 0
          %3873 = vmatprep.subr.mxu0 0.0
          %3874 = vmatpush1.msra.mxu0 %v3778
          %3875 = vmatprep.subr.mxu0 0.0
          %3876 = vmatpush1.msra.mxu0 %v3779
          %3877 = vmatprep.subr.mxu0 0.0
          %3878 = vmatpush1.msra.mxu0 %v3780
          %3879 = vmatprep.subr.mxu0 0.0
          %3880 = vmatpush1.msra.mxu0 %v3781
          %3881 = vmatprep.subr.mxu0 0.0
          %3882 = vmatpush1.msra.mxu0 %v3782
          %3883 = vmatprep.subr.mxu0 0.0
          %3884 = vmatpush1.msra.mxu0 %v3783
          %3885 = vmatprep.subr.mxu0 0.0
          %3886 = vmatpush1.msra.mxu0 %v3784
          %3887 = vmatprep.subr.mxu0 0.0
          %3888 = vmatpush1.msra.mxu0 %v3785
          %3889 = vmatprep.subr.mxu0 0.0
          %3890 = vmatpush1.msra.mxu0 0.0
          %3891 = vmatprep.subr.mxu0 0.0
          %3892 = vmatpush1.msra.mxu0 0.0
          %3893 = vmatprep.subr.mxu0 0.0
          %3894 = vmatpush1.msra.mxu0 0.0
          %3895 = vmatprep.subr.mxu0 0.0
          %3896 = vmatpush1.msra.mxu0 0.0
          %3897 = vmatprep.subr.mxu0 0.0
          %3898 = vmatpush1.msra.mxu0 0.0
          %3899 = vmatprep.subr.mxu0 0.0
          %3900 = vmatpush1.msra.mxu0 0.0
          %3901 = vmatprep.subr.mxu0 0.0
          %3902 = vmatpush1.msra.mxu0 0.0
          %3903 = vmatprep.subr.mxu0 0.0
          %3904 = vmatpush1.msra.mxu0 0.0
          %3905 = vmatprep.subr.mxu0 0.0
          %3906 = vmatpush1.msra.mxu0 0.0
          %3907 = vmatprep.subr.mxu0 0.0
          %3908 = vmatpush1.msra.mxu0 0.0
          %3909 = vmatprep.subr.mxu0 0.0
          %3910 = vmatpush1.msra.mxu0 0.0
          %3911 = vmatprep.subr.mxu0 0.0
          %3912 = vmatpush1.msra.mxu0 0.0
          %3913 = vmatprep.subr.mxu0 0.0
          %3914 = vmatpush1.msra.mxu0 0.0
          %3915 = vmatprep.subr.mxu0 0.0
          %3916 = vmatpush1.msra.mxu0 0.0
          %3917 = vmatprep.subr.mxu0 0.0
          %3918 = vmatpush1.msra.mxu0 0.0
          %3919 = vmatprep.subr.mxu0 0.0
          %3920 = vmatpush1.msra.mxu0 0.0
          %3921 = vmatprep.subr.mxu0 0.0
          %3922 = vmatpush1.msra.mxu0 0.0
          %3923 = vmatprep.subr.mxu0 0.0
          %3924 = vmatpush1.msra.mxu0 0.0
          %3925 = vmatprep.subr.mxu0 0.0
          %3926 = vmatpush1.msra.mxu0 0.0
          %3927 = vmatprep.subr.mxu0 0.0
          %3928 = vmatpush1.msra.mxu0 0.0
          %3929 = vmatprep.subr.mxu0 0.0
          %3930 = vmatpush1.msra.mxu0 0.0
          %3931 = vmatprep.subr.mxu0 0.0
          %3932 = vmatpush1.msra.mxu0 0.0
          %3933 = vmatprep.subr.mxu0 0.0
          %3934 = vmatpush1.msra.mxu0 0.0
          %3935 = vmatprep.subr.mxu0 0.0
          %3936 = vmatpush1.msra.mxu0 0.0
          %3937 = vmatprep.mubr.f32.mxu0 0.0
          %3938 = vmatmul.mubr.f32.gmra.mrb[0].mxu0 %v3871
          %v3939 = vpop.f32.mrb[0].mxu0
          %v3940 = vadd.f32 %v3867, %v3939
          %v3941 = vpop.f32.mrb[0].mxu0
          %3942 = vdwg.mxu0
          %s3943 = sadd.s32 %s3775, 2
          %s3944 = scalar_lea.vmem [#allocation5], %s3943
          %v3945 = vld [vmem:[%s3944] ss:$2 sm:$0xf]
          %v3946 = vld [vmem:[%s7 + $0x80] sm:$0xff]
          %v3947 = vld [vmem:[%s7 + $0x88] sm:$0xff]
          %v3948 = vld [vmem:[%s7 + $0x90] sm:$0xff]
          %v3949 = vld [vmem:[%s7 + $0x98] sm:$0xff]
          %v3950 = vld [vmem:[%s7 + $0xa0] sm:$0xff]
          %v3951 = vld [vmem:[%s7 + $0xa8] sm:$0xff]
          %v3952 = vld [vmem:[%s7 + $0xb0] sm:$0xff]
          %v3953 = vld [vmem:[%s7 + $0xb8] sm:$0xff]
          %v3955 = vsel %vm1121, %v3945, 0
          %3957 = vmatprep.subr.mxu0 0.0
          %3958 = vmatpush1.msra.mxu0 %v3946
          %3959 = vmatprep.subr.mxu0 0.0
          %3960 = vmatpush1.msra.mxu0 %v3947
          %3961 = vmatprep.subr.mxu0 0.0
          %3962 = vmatpush1.msra.mxu0 %v3948
          %3963 = vmatprep.subr.mxu0 0.0
          %3964 = vmatpush1.msra.mxu0 %v3949
          %3965 = vmatprep.subr.mxu0 0.0
          %3966 = vmatpush1.msra.mxu0 %v3950
          %3967 = vmatprep.subr.mxu0 0.0
          %3968 = vmatpush1.msra.mxu0 %v3951
          %3969 = vmatprep.subr.mxu0 0.0
          %3970 = vmatpush1.msra.mxu0 %v3952
          %3971 = vmatprep.subr.mxu0 0.0
          %3972 = vmatpush1.msra.mxu0 %v3953
          %3973 = vmatprep.subr.mxu0 0.0
          %3974 = vmatpush1.msra.mxu0 0.0
          %3975 = vmatprep.subr.mxu0 0.0
          %3976 = vmatpush1.msra.mxu0 0.0
          %3977 = vmatprep.subr.mxu0 0.0
          %3978 = vmatpush1.msra.mxu0 0.0
          %3979 = vmatprep.subr.mxu0 0.0
          %3980 = vmatpush1.msra.mxu0 0.0
          %3981 = vmatprep.subr.mxu0 0.0
          %3982 = vmatpush1.msra.mxu0 0.0
          %3983 = vmatprep.subr.mxu0 0.0
          %3984 = vmatpush1.msra.mxu0 0.0
          %3985 = vmatprep.subr.mxu0 0.0
          %3986 = vmatpush1.msra.mxu0 0.0
          %3987 = vmatprep.subr.mxu0 0.0
          %3988 = vmatpush1.msra.mxu0 0.0
          %3989 = vmatprep.subr.mxu0 0.0
          %3990 = vmatpush1.msra.mxu0 0.0
          %3991 = vmatprep.subr.mxu0 0.0
          %3992 = vmatpush1.msra.mxu0 0.0
          %3993 = vmatprep.subr.mxu0 0.0
          %3994 = vmatpush1.msra.mxu0 0.0
          %3995 = vmatprep.subr.mxu0 0.0
          %3996 = vmatpush1.msra.mxu0 0.0
          %3997 = vmatprep.subr.mxu0 0.0
          %3998 = vmatpush1.msra.mxu0 0.0
          %3999 = vmatprep.subr.mxu0 0.0
          %4000 = vmatpush1.msra.mxu0 0.0
          %4001 = vmatprep.subr.mxu0 0.0
          %4002 = vmatpush1.msra.mxu0 0.0
          %4003 = vmatprep.subr.mxu0 0.0
          %4004 = vmatpush1.msra.mxu0 0.0
          %4005 = vmatprep.subr.mxu0 0.0
          %4006 = vmatpush1.msra.mxu0 0.0
          %4007 = vmatprep.subr.mxu0 0.0
          %4008 = vmatpush1.msra.mxu0 0.0
          %4009 = vmatprep.subr.mxu0 0.0
          %4010 = vmatpush1.msra.mxu0 0.0
          %4011 = vmatprep.subr.mxu0 0.0
          %4012 = vmatpush1.msra.mxu0 0.0
          %4013 = vmatprep.subr.mxu0 0.0
          %4014 = vmatpush1.msra.mxu0 0.0
          %4015 = vmatprep.subr.mxu0 0.0
          %4016 = vmatpush1.msra.mxu0 0.0
          %4017 = vmatprep.subr.mxu0 0.0
          %4018 = vmatpush1.msra.mxu0 0.0
          %4019 = vmatprep.subr.mxu0 0.0
          %4020 = vmatpush1.msra.mxu0 0.0
          %4021 = vmatprep.mubr.f32.mxu0 0.0
          %4022 = vmatmul.mubr.f32.gmra.mrb[0].mxu0 %v3955
          %v4023 = vpop.f32.mrb[0].mxu0
          %v4024 = vadd.f32 0.0, %v4023
          %v4025 = vpop.f32.mrb[0].mxu0
          %4026 = vdwg.mxu0
          %v4027 = vadd.f32 %v3940, %v4024
          %s4028 = smul.u32 %s3770, 2
          %s4029 = sadd.s32 %s4028, 1
          %s4030 = smul.u32 %s4029, 10
          %s4031 = scalar_lea.vmem [#allocation5], %s4030
          %v4032 = vld [vmem:[%s4031] ss:$2 sm:$0xf]
          %v4033 = vld [vmem:[%s7 + $0xc0] sm:$0xff]
          %v4034 = vld [vmem:[%s7 + $0xc8] sm:$0xff]
          %v4035 = vld [vmem:[%s7 + $0xd0] sm:$0xff]
          %v4036 = vld [vmem:[%s7 + $0xd8] sm:$0xff]
          %v4037 = vld [vmem:[%s7 + $0xe0] sm:$0xff]
          %v4038 = vld [vmem:[%s7 + $0xe8] sm:$0xff]
          %v4039 = vld [vmem:[%s7 + $0xf0] sm:$0xff]
          %v4040 = vld [vmem:[%s7 + $0xf8] sm:$0xff]
          %v4042 = vsel %vm1121, %v4032, 0
          %4044 = vmatprep.subr.mxu0 0.0
          %4045 = vmatpush1.msra.mxu0 %v4033
          %4046 = vmatprep.subr.mxu0 0.0
          %4047 = vmatpush1.msra.mxu0 %v4034
          %4048 = vmatprep.subr.mxu0 0.0
          %4049 = vmatpush1.msra.mxu0 %v4035
          %4050 = vmatprep.subr.mxu0 0.0
          %4051 = vmatpush1.msra.mxu0 %v4036
          %4052 = vmatprep.subr.mxu0 0.0
          %4053 = vmatpush1.msra.mxu0 %v4037
          %4054 = vmatprep.subr.mxu0 0.0
          %4055 = vmatpush1.msra.mxu0 %v4038
          %4056 = vmatprep.subr.mxu0 0.0
          %4057 = vmatpush1.msra.mxu0 %v4039
          %4058 = vmatprep.subr.mxu0 0.0
          %4059 = vmatpush1.msra.mxu0 %v4040
          %4060 = vmatprep.subr.mxu0 0.0
          %4061 = vmatpush1.msra.mxu0 0.0
          %4062 = vmatprep.subr.mxu0 0.0
          %4063 = vmatpush1.msra.mxu0 0.0
          %4064 = vmatprep.subr.mxu0 0.0
          %4065 = vmatpush1.msra.mxu0 0.0
          %4066 = vmatprep.subr.mxu0 0.0
          %4067 = vmatpush1.msra.mxu0 0.0
          %4068 = vmatprep.subr.mxu0 0.0
          %4069 = vmatpush1.msra.mxu0 0.0
          %4070 = vmatprep.subr.mxu0 0.0
          %4071 = vmatpush1.msra.mxu0 0.0
          %4072 = vmatprep.subr.mxu0 0.0
          %4073 = vmatpush1.msra.mxu0 0.0
          %4074 = vmatprep.subr.mxu0 0.0
          %4075 = vmatpush1.msra.mxu0 0.0
          %4076 = vmatprep.subr.mxu0 0.0
          %4077 = vmatpush1.msra.mxu0 0.0
          %4078 = vmatprep.subr.mxu0 0.0
          %4079 = vmatpush1.msra.mxu0 0.0
          %4080 = vmatprep.subr.mxu0 0.0
          %4081 = vmatpush1.msra.mxu0 0.0
          %4082 = vmatprep.subr.mxu0 0.0
          %4083 = vmatpush1.msra.mxu0 0.0
          %4084 = vmatprep.subr.mxu0 0.0
          %4085 = vmatpush1.msra.mxu0 0.0
          %4086 = vmatprep.subr.mxu0 0.0
          %4087 = vmatpush1.msra.mxu0 0.0
          %4088 = vmatprep.subr.mxu0 0.0
          %4089 = vmatpush1.msra.mxu0 0.0
          %4090 = vmatprep.subr.mxu0 0.0
          %4091 = vmatpush1.msra.mxu0 0.0
          %4092 = vmatprep.subr.mxu0 0.0
          %4093 = vmatpush1.msra.mxu0 0.0
          %4094 = vmatprep.subr.mxu0 0.0
          %4095 = vmatpush1.msra.mxu0 0.0
          %4096 = vmatprep.subr.mxu0 0.0
          %4097 = vmatpush1.msra.mxu0 0.0
          %4098 = vmatprep.subr.mxu0 0.0
          %4099 = vmatpush1.msra.mxu0 0.0
          %4100 = vmatprep.subr.mxu0 0.0
          %4101 = vmatpush1.msra.mxu0 0.0
          %4102 = vmatprep.subr.mxu0 0.0
          %4103 = vmatpush1.msra.mxu0 0.0
          %4104 = vmatprep.subr.mxu0 0.0
          %4105 = vmatpush1.msra.mxu0 0.0
          %4106 = vmatprep.subr.mxu0 0.0
          %4107 = vmatpush1.msra.mxu0 0.0
          %4108 = vmatprep.mubr.f32.mxu0 0.0
          %4109 = vmatmul.mubr.f32.gmra.mrb[0].mxu0 %v4042
          %v4110 = vpop.f32.mrb[0].mxu0
          %v4111 = vadd.f32 0.0, %v4110
          %v4112 = vpop.f32.mrb[0].mxu0
          %4113 = vdwg.mxu0
          %v4114 = vadd.f32 %v4027, %v4111
          %s4115 = sadd.s32 %s4030, 1
          %s4116 = scalar_lea.vmem [#allocation5], %s4115
          %v4117 = vld [vmem:[%s4116] ss:$2 sm:$0xf]
          %v4118 = vld [vmem:[%s7 + $0x100] sm:$0xff]
          %v4119 = vld [vmem:[%s7 + $0x108] sm:$0xff]
          %v4120 = vld [vmem:[%s7 + $0x110] sm:$0xff]
          %v4121 = vld [vmem:[%s7 + $0x118] sm:$0xff]
          %v4122 = vld [vmem:[%s7 + $0x120] sm:$0xff]
          %v4123 = vld [vmem:[%s7 + $0x128] sm:$0xff]
          %v4124 = vld [vmem:[%s7 + $0x130] sm:$0xff]
          %v4125 = vld [vmem:[%s7 + $0x138] sm:$0xff]
          %v4127 = vsel %vm1121, %v4117, 0
          %4129 = vmatprep.subr.mxu0 0.0
          %4130 = vmatpush1.msra.mxu0 %v4118
          %4131 = vmatprep.subr.mxu0 0.0
          %4132 = vmatpush1.msra.mxu0 %v4119
          %4133 = vmatprep.subr.mxu0 0.0
          %4134 = vmatpush1.msra.mxu0 %v4120
          %4135 = vmatprep.subr.mxu0 0.0
          %4136 = vmatpush1.msra.mxu0 %v4121
          %4137 = vmatprep.subr.mxu0 0.0
          %4138 = vmatpush1.msra.mxu0 %v4122
          %4139 = vmatprep.subr.mxu0 0.0
          %4140 = vmatpush1.msra.mxu0 %v4123
          %4141 = vmatprep.subr.mxu0 0.0
          %4142 = vmatpush1.msra.mxu0 %v4124
          %4143 = vmatprep.subr.mxu0 0.0
          %4144 = vmatpush1.msra.mxu0 %v4125
          %4145 = vmatprep.subr.mxu0 0.0
          %4146 = vmatpush1.msra.mxu0 0.0
          %4147 = vmatprep.subr.mxu0 0.0
          %4148 = vmatpush1.msra.mxu0 0.0
          %4149 = vmatprep.subr.mxu0 0.0
          %4150 = vmatpush1.msra.mxu0 0.0
          %4151 = vmatprep.subr.mxu0 0.0
          %4152 = vmatpush1.msra.mxu0 0.0
          %4153 = vmatprep.subr.mxu0 0.0
          %4154 = vmatpush1.msra.mxu0 0.0
          %4155 = vmatprep.subr.mxu0 0.0
          %4156 = vmatpush1.msra.mxu0 0.0
          %4157 = vmatprep.subr.mxu0 0.0
          %4158 = vmatpush1.msra.mxu0 0.0
          %4159 = vmatprep.subr.mxu0 0.0
          %4160 = vmatpush1.msra.mxu0 0.0
          %4161 = vmatprep.subr.mxu0 0.0
          %4162 = vmatpush1.msra.mxu0 0.0
          %4163 = vmatprep.subr.mxu0 0.0
          %4164 = vmatpush1.msra.mxu0 0.0
          %4165 = vmatprep.subr.mxu0 0.0
          %4166 = vmatpush1.msra.mxu0 0.0
          %4167 = vmatprep.subr.mxu0 0.0
          %4168 = vmatpush1.msra.mxu0 0.0
          %4169 = vmatprep.subr.mxu0 0.0
          %4170 = vmatpush1.msra.mxu0 0.0
          %4171 = vmatprep.subr.mxu0 0.0
          %4172 = vmatpush1.msra.mxu0 0.0
          %4173 = vmatprep.subr.mxu0 0.0
          %4174 = vmatpush1.msra.mxu0 0.0
          %4175 = vmatprep.subr.mxu0 0.0
          %4176 = vmatpush1.msra.mxu0 0.0
          %4177 = vmatprep.subr.mxu0 0.0
          %4178 = vmatpush1.msra.mxu0 0.0
          %4179 = vmatprep.subr.mxu0 0.0
          %4180 = vmatpush1.msra.mxu0 0.0
          %4181 = vmatprep.subr.mxu0 0.0
          %4182 = vmatpush1.msra.mxu0 0.0
          %4183 = vmatprep.subr.mxu0 0.0
          %4184 = vmatpush1.msra.mxu0 0.0
          %4185 = vmatprep.subr.mxu0 0.0
          %4186 = vmatpush1.msra.mxu0 0.0
          %4187 = vmatprep.subr.mxu0 0.0
          %4188 = vmatpush1.msra.mxu0 0.0
          %4189 = vmatprep.subr.mxu0 0.0
          %4190 = vmatpush1.msra.mxu0 0.0
          %4191 = vmatprep.subr.mxu0 0.0
          %4192 = vmatpush1.msra.mxu0 0.0
          %4193 = vmatprep.mubr.f32.mxu0 0.0
          %4194 = vmatmul.mubr.f32.gmra.mrb[0].mxu0 %v4127
          %v4195 = vpop.f32.mrb[0].mxu0
          %v4196 = vadd.f32 0.0, %v4195
          %v4197 = vpop.f32.mrb[0].mxu0
          %4198 = vdwg.mxu0
          %v4199 = vadd.f32 %v4114, %v4196
          %s4200 = sadd.s32 %s4030, 2
          %s4201 = scalar_lea.vmem [#allocation5], %s4200
          %v4202 = vld [vmem:[%s4201] ss:$2 sm:$0xf]
          %v4203 = vld [vmem:[%s7 + $0x140] sm:$0xff]
          %v4204 = vld [vmem:[%s7 + $0x148] sm:$0xff]
          %v4205 = vld [vmem:[%s7 + $0x150] sm:$0xff]
          %v4206 = vld [vmem:[%s7 + $0x158] sm:$0xff]
          %v4207 = vld [vmem:[%s7 + $0x160] sm:$0xff]
          %v4208 = vld [vmem:[%s7 + $0x168] sm:$0xff]
          %v4209 = vld [vmem:[%s7 + $0x170] sm:$0xff]
          %v4210 = vld [vmem:[%s7 + $0x178] sm:$0xff]
          %v4212 = vsel %vm1121, %v4202, 0
          %4214 = vmatprep.subr.mxu0 0.0
          %4215 = vmatpush1.msra.mxu0 %v4203
          %4216 = vmatprep.subr.mxu0 0.0
          %4217 = vmatpush1.msra.mxu0 %v4204
          %4218 = vmatprep.subr.mxu0 0.0
          %4219 = vmatpush1.msra.mxu0 %v4205
          %4220 = vmatprep.subr.mxu0 0.0
          %4221 = vmatpush1.msra.mxu0 %v4206
          %4222 = vmatprep.subr.mxu0 0.0
          %4223 = vmatpush1.msra.mxu0 %v4207
          %4224 = vmatprep.subr.mxu0 0.0
          %4225 = vmatpush1.msra.mxu0 %v4208
          %4226 = vmatprep.subr.mxu0 0.0
          %4227 = vmatpush1.msra.mxu0 %v4209
          %4228 = vmatprep.subr.mxu0 0.0
          %4229 = vmatpush1.msra.mxu0 %v4210
          %4230 = vmatprep.subr.mxu0 0.0
          %4231 = vmatpush1.msra.mxu0 0.0
          %4232 = vmatprep.subr.mxu0 0.0
          %4233 = vmatpush1.msra.mxu0 0.0
          %4234 = vmatprep.subr.mxu0 0.0
          %4235 = vmatpush1.msra.mxu0 0.0
          %4236 = vmatprep.subr.mxu0 0.0
          %4237 = vmatpush1.msra.mxu0 0.0
          %4238 = vmatprep.subr.mxu0 0.0
          %4239 = vmatpush1.msra.mxu0 0.0
          %4240 = vmatprep.subr.mxu0 0.0
          %4241 = vmatpush1.msra.mxu0 0.0
          %4242 = vmatprep.subr.mxu0 0.0
          %4243 = vmatpush1.msra.mxu0 0.0
          %4244 = vmatprep.subr.mxu0 0.0
          %4245 = vmatpush1.msra.mxu0 0.0
          %4246 = vmatprep.subr.mxu0 0.0
          %4247 = vmatpush1.msra.mxu0 0.0
          %4248 = vmatprep.subr.mxu0 0.0
          %4249 = vmatpush1.msra.mxu0 0.0
          %4250 = vmatprep.subr.mxu0 0.0
          %4251 = vmatpush1.msra.mxu0 0.0
          %4252 = vmatprep.subr.mxu0 0.0
          %4253 = vmatpush1.msra.mxu0 0.0
          %4254 = vmatprep.subr.mxu0 0.0
          %4255 = vmatpush1.msra.mxu0 0.0
          %4256 = vmatprep.subr.mxu0 0.0
          %4257 = vmatpush1.msra.mxu0 0.0
          %4258 = vmatprep.subr.mxu0 0.0
          %4259 = vmatpush1.msra.mxu0 0.0
          %4260 = vmatprep.subr.mxu0 0.0
          %4261 = vmatpush1.msra.mxu0 0.0
          %4262 = vmatprep.subr.mxu0 0.0
          %4263 = vmatpush1.msra.mxu0 0.0
          %4264 = vmatprep.subr.mxu0 0.0
          %4265 = vmatpush1.msra.mxu0 0.0
          %4266 = vmatprep.subr.mxu0 0.0
          %4267 = vmatpush1.msra.mxu0 0.0
          %4268 = vmatprep.subr.mxu0 0.0
          %4269 = vmatpush1.msra.mxu0 0.0
          %4270 = vmatprep.subr.mxu0 0.0
          %4271 = vmatpush1.msra.mxu0 0.0
          %4272 = vmatprep.subr.mxu0 0.0
          %4273 = vmatpush1.msra.mxu0 0.0
          %4274 = vmatprep.subr.mxu0 0.0
          %4275 = vmatpush1.msra.mxu0 0.0
          %4276 = vmatprep.subr.mxu0 0.0
          %4277 = vmatpush1.msra.mxu0 0.0
          %4278 = vmatprep.mubr.f32.mxu0 0.0
          %4279 = vmatmul.mubr.f32.gmra.mrb[0].mxu0 %v4212
          %v4280 = vpop.f32.mrb[0].mxu0
          %v4281 = vadd.f32 0.0, %v4280
          %v4282 = vpop.f32.mrb[0].mxu0
          %4283 = vdwg.mxu0
          %v4284 = vadd.f32 %v4199, %v4281
          %s4285 = sadd.s32 %s4028, 2
          %s4286 = smul.u32 %s4285, 10
          %s4287 = scalar_lea.vmem [#allocation5], %s4286
          %v4288 = vld [vmem:[%s4287] ss:$2 sm:$0xf]
          %v4289 = vld [vmem:[%s7 + $0x180] sm:$0xff]
          %v4290 = vld [vmem:[%s7 + $0x188] sm:$0xff]
          %v4291 = vld [vmem:[%s7 + $0x190] sm:$0xff]
          %v4292 = vld [vmem:[%s7 + $0x198] sm:$0xff]
          %v4293 = vld [vmem:[%s7 + $0x1a0] sm:$0xff]
          %v4294 = vld [vmem:[%s7 + $0x1a8] sm:$0xff]
          %v4295 = vld [vmem:[%s7 + $0x1b0] sm:$0xff]
          %v4296 = vld [vmem:[%s7 + $0x1b8] sm:$0xff]
          %v4298 = vsel %vm1121, %v4288, 0
          %4300 = vmatprep.subr.mxu0 0.0
          %4301 = vmatpush1.msra.mxu0 %v4289
          %4302 = vmatprep.subr.mxu0 0.0
          %4303 = vmatpush1.msra.mxu0 %v4290
          %4304 = vmatprep.subr.mxu0 0.0
          %4305 = vmatpush1.msra.mxu0 %v4291
          %4306 = vmatprep.subr.mxu0 0.0
          %4307 = vmatpush1.msra.mxu0 %v4292
          %4308 = vmatprep.subr.mxu0 0.0
          %4309 = vmatpush1.msra.mxu0 %v4293
          %4310 = vmatprep.subr.mxu0 0.0
          %4311 = vmatpush1.msra.mxu0 %v4294
          %4312 = vmatprep.subr.mxu0 0.0
          %4313 = vmatpush1.msra.mxu0 %v4295
          %4314 = vmatprep.subr.mxu0 0.0
          %4315 = vmatpush1.msra.mxu0 %v4296
          %4316 = vmatprep.subr.mxu0 0.0
          %4317 = vmatpush1.msra.mxu0 0.0
          %4318 = vmatprep.subr.mxu0 0.0
          %4319 = vmatpush1.msra.mxu0 0.0
          %4320 = vmatprep.subr.mxu0 0.0
          %4321 = vmatpush1.msra.mxu0 0.0
          %4322 = vmatprep.subr.mxu0 0.0
          %4323 = vmatpush1.msra.mxu0 0.0
          %4324 = vmatprep.subr.mxu0 0.0
          %4325 = vmatpush1.msra.mxu0 0.0
          %4326 = vmatprep.subr.mxu0 0.0
          %4327 = vmatpush1.msra.mxu0 0.0
          %4328 = vmatprep.subr.mxu0 0.0
          %4329 = vmatpush1.msra.mxu0 0.0
          %4330 = vmatprep.subr.mxu0 0.0
          %4331 = vmatpush1.msra.mxu0 0.0
          %4332 = vmatprep.subr.mxu0 0.0
          %4333 = vmatpush1.msra.mxu0 0.0
          %4334 = vmatprep.subr.mxu0 0.0
          %4335 = vmatpush1.msra.mxu0 0.0
          %4336 = vmatprep.subr.mxu0 0.0
          %4337 = vmatpush1.msra.mxu0 0.0
          %4338 = vmatprep.subr.mxu0 0.0
          %4339 = vmatpush1.msra.mxu0 0.0
          %4340 = vmatprep.subr.mxu0 0.0
          %4341 = vmatpush1.msra.mxu0 0.0
          %4342 = vmatprep.subr.mxu0 0.0
          %4343 = vmatpush1.msra.mxu0 0.0
          %4344 = vmatprep.subr.mxu0 0.0
          %4345 = vmatpush1.msra.mxu0 0.0
          %4346 = vmatprep.subr.mxu0 0.0
          %4347 = vmatpush1.msra.mxu0 0.0
          %4348 = vmatprep.subr.mxu0 0.0
          %4349 = vmatpush1.msra.mxu0 0.0
          %4350 = vmatprep.subr.mxu0 0.0
          %4351 = vmatpush1.msra.mxu0 0.0
          %4352 = vmatprep.subr.mxu0 0.0
          %4353 = vmatpush1.msra.mxu0 0.0
          %4354 = vmatprep.subr.mxu0 0.0
          %4355 = vmatpush1.msra.mxu0 0.0
          %4356 = vmatprep.subr.mxu0 0.0
          %4357 = vmatpush1.msra.mxu0 0.0
          %4358 = vmatprep.subr.mxu0 0.0
          %4359 = vmatpush1.msra.mxu0 0.0
          %4360 = vmatprep.subr.mxu0 0.0
          %4361 = vmatpush1.msra.mxu0 0.0
          %4362 = vmatprep.subr.mxu0 0.0
          %4363 = vmatpush1.msra.mxu0 0.0
          %4364 = vmatprep.mubr.f32.mxu0 0.0
          %4365 = vmatmul.mubr.f32.gmra.mrb[0].mxu0 %v4298
          %v4366 = vpop.f32.mrb[0].mxu0
          %v4367 = vadd.f32 0.0, %v4366
          %v4368 = vpop.f32.mrb[0].mxu0
          %4369 = vdwg.mxu0
          %v4370 = vadd.f32 %v4284, %v4367
          %s4371 = sadd.s32 %s4286, 1
          %s4372 = scalar_lea.vmem [#allocation5], %s4371
          %v4373 = vld [vmem:[%s4372] ss:$2 sm:$0xf]
          %v4374 = vld [vmem:[%s7 + $0x1c0] sm:$0xff]
          %v4375 = vld [vmem:[%s7 + $0x1c8] sm:$0xff]
          %v4376 = vld [vmem:[%s7 + $0x1d0] sm:$0xff]
          %v4377 = vld [vmem:[%s7 + $0x1d8] sm:$0xff]
          %v4378 = vld [vmem:[%s7 + $0x1e0] sm:$0xff]
          %v4379 = vld [vmem:[%s7 + $0x1e8] sm:$0xff]
          %v4380 = vld [vmem:[%s7 + $0x1f0] sm:$0xff]
          %v4381 = vld [vmem:[%s7 + $0x1f8] sm:$0xff]
          %v4383 = vsel %vm1121, %v4373, 0
          %4385 = vmatprep.subr.mxu0 0.0
          %4386 = vmatpush1.msra.mxu0 %v4374
          %4387 = vmatprep.subr.mxu0 0.0
          %4388 = vmatpush1.msra.mxu0 %v4375
          %4389 = vmatprep.subr.mxu0 0.0
          %4390 = vmatpush1.msra.mxu0 %v4376
          %4391 = vmatprep.subr.mxu0 0.0
          %4392 = vmatpush1.msra.mxu0 %v4377
          %4393 = vmatprep.subr.mxu0 0.0
          %4394 = vmatpush1.msra.mxu0 %v4378
          %4395 = vmatprep.subr.mxu0 0.0
          %4396 = vmatpush1.msra.mxu0 %v4379
          %4397 = vmatprep.subr.mxu0 0.0
          %4398 = vmatpush1.msra.mxu0 %v4380
          %4399 = vmatprep.subr.mxu0 0.0
          %4400 = vmatpush1.msra.mxu0 %v4381
          %4401 = vmatprep.subr.mxu0 0.0
          %4402 = vmatpush1.msra.mxu0 0.0
          %4403 = vmatprep.subr.mxu0 0.0
          %4404 = vmatpush1.msra.mxu0 0.0
          %4405 = vmatprep.subr.mxu0 0.0
          %4406 = vmatpush1.msra.mxu0 0.0
          %4407 = vmatprep.subr.mxu0 0.0
          %4408 = vmatpush1.msra.mxu0 0.0
          %4409 = vmatprep.subr.mxu0 0.0
          %4410 = vmatpush1.msra.mxu0 0.0
          %4411 = vmatprep.subr.mxu0 0.0
          %4412 = vmatpush1.msra.mxu0 0.0
          %4413 = vmatprep.subr.mxu0 0.0
          %4414 = vmatpush1.msra.mxu0 0.0
          %4415 = vmatprep.subr.mxu0 0.0
          %4416 = vmatpush1.msra.mxu0 0.0
          %4417 = vmatprep.subr.mxu0 0.0
          %4418 = vmatpush1.msra.mxu0 0.0
          %4419 = vmatprep.subr.mxu0 0.0
          %4420 = vmatpush1.msra.mxu0 0.0
          %4421 = vmatprep.subr.mxu0 0.0
          %4422 = vmatpush1.msra.mxu0 0.0
          %4423 = vmatprep.subr.mxu0 0.0
          %4424 = vmatpush1.msra.mxu0 0.0
          %4425 = vmatprep.subr.mxu0 0.0
          %4426 = vmatpush1.msra.mxu0 0.0
          %4427 = vmatprep.subr.mxu0 0.0
          %4428 = vmatpush1.msra.mxu0 0.0
          %4429 = vmatprep.subr.mxu0 0.0
          %4430 = vmatpush1.msra.mxu0 0.0
          %4431 = vmatprep.subr.mxu0 0.0
          %4432 = vmatpush1.msra.mxu0 0.0
          %4433 = vmatprep.subr.mxu0 0.0
          %4434 = vmatpush1.msra.mxu0 0.0
          %4435 = vmatprep.subr.mxu0 0.0
          %4436 = vmatpush1.msra.mxu0 0.0
          %4437 = vmatprep.subr.mxu0 0.0
          %4438 = vmatpush1.msra.mxu0 0.0
          %4439 = vmatprep.subr.mxu0 0.0
          %4440 = vmatpush1.msra.mxu0 0.0
          %4441 = vmatprep.subr.mxu0 0.0
          %4442 = vmatpush1.msra.mxu0 0.0
          %4443 = vmatprep.subr.mxu0 0.0
          %4444 = vmatpush1.msra.mxu0 0.0
          %4445 = vmatprep.subr.mxu0 0.0
          %4446 = vmatpush1.msra.mxu0 0.0
          %4447 = vmatprep.subr.mxu0 0.0
          %4448 = vmatpush1.msra.mxu0 0.0
          %4449 = vmatprep.mubr.f32.mxu0 0.0
          %4450 = vmatmul.mubr.f32.gmra.mrb[0].mxu0 %v4383
          %v4451 = vpop.f32.mrb[0].mxu0
          %v4452 = vadd.f32 0.0, %v4451
          %v4453 = vpop.f32.mrb[0].mxu0
          %4454 = vdwg.mxu0
          %v4455 = vadd.f32 %v4370, %v4452
          %s4456 = sadd.s32 %s4286, 2
          %s4457 = scalar_lea.vmem [#allocation5], %s4456
          %v4458 = vld [vmem:[%s4457] ss:$2 sm:$0xf]
          %v4459 = vld [vmem:[%s7 + $0x200] sm:$0xff]
          %v4460 = vld [vmem:[%s7 + $0x208] sm:$0xff]
          %v4461 = vld [vmem:[%s7 + $0x210] sm:$0xff]
          %v4462 = vld [vmem:[%s7 + $0x218] sm:$0xff]
          %v4463 = vld [vmem:[%s7 + $0x220] sm:$0xff]
          %v4464 = vld [vmem:[%s7 + $0x228] sm:$0xff]
          %v4465 = vld [vmem:[%s7 + $0x230] sm:$0xff]
          %v4466 = vld [vmem:[%s7 + $0x238] sm:$0xff]
          %v4468 = vsel %vm1121, %v4458, 0
          %4470 = vmatprep.subr.mxu0 0.0
          %4471 = vmatpush1.msra.mxu0 %v4459
          %4472 = vmatprep.subr.mxu0 0.0
          %4473 = vmatpush1.msra.mxu0 %v4460
          %4474 = vmatprep.subr.mxu0 0.0
          %4475 = vmatpush1.msra.mxu0 %v4461
          %4476 = vmatprep.subr.mxu0 0.0
          %4477 = vmatpush1.msra.mxu0 %v4462
          %4478 = vmatprep.subr.mxu0 0.0
          %4479 = vmatpush1.msra.mxu0 %v4463
          %4480 = vmatprep.subr.mxu0 0.0
          %4481 = vmatpush1.msra.mxu0 %v4464
          %4482 = vmatprep.subr.mxu0 0.0
          %4483 = vmatpush1.msra.mxu0 %v4465
          %4484 = vmatprep.subr.mxu0 0.0
          %4485 = vmatpush1.msra.mxu0 %v4466
          %4486 = vmatprep.subr.mxu0 0.0
          %4487 = vmatpush1.msra.mxu0 0.0
          %4488 = vmatprep.subr.mxu0 0.0
          %4489 = vmatpush1.msra.mxu0 0.0
          %4490 = vmatprep.subr.mxu0 0.0
          %4491 = vmatpush1.msra.mxu0 0.0
          %4492 = vmatprep.subr.mxu0 0.0
          %4493 = vmatpush1.msra.mxu0 0.0
          %4494 = vmatprep.subr.mxu0 0.0
          %4495 = vmatpush1.msra.mxu0 0.0
          %4496 = vmatprep.subr.mxu0 0.0
          %4497 = vmatpush1.msra.mxu0 0.0
          %4498 = vmatprep.subr.mxu0 0.0
          %4499 = vmatpush1.msra.mxu0 0.0
          %4500 = vmatprep.subr.mxu0 0.0
          %4501 = vmatpush1.msra.mxu0 0.0
          %4502 = vmatprep.subr.mxu0 0.0
          %4503 = vmatpush1.msra.mxu0 0.0
          %4504 = vmatprep.subr.mxu0 0.0
          %4505 = vmatpush1.msra.mxu0 0.0
          %4506 = vmatprep.subr.mxu0 0.0
          %4507 = vmatpush1.msra.mxu0 0.0
          %4508 = vmatprep.subr.mxu0 0.0
          %4509 = vmatpush1.msra.mxu0 0.0
          %4510 = vmatprep.subr.mxu0 0.0
          %4511 = vmatpush1.msra.mxu0 0.0
          %4512 = vmatprep.subr.mxu0 0.0
          %4513 = vmatpush1.msra.mxu0 0.0
          %4514 = vmatprep.subr.mxu0 0.0
          %4515 = vmatpush1.msra.mxu0 0.0
          %4516 = vmatprep.subr.mxu0 0.0
          %4517 = vmatpush1.msra.mxu0 0.0
          %4518 = vmatprep.subr.mxu0 0.0
          %4519 = vmatpush1.msra.mxu0 0.0
          %4520 = vmatprep.subr.mxu0 0.0
          %4521 = vmatpush1.msra.mxu0 0.0
          %4522 = vmatprep.subr.mxu0 0.0
          %4523 = vmatpush1.msra.mxu0 0.0
          %4524 = vmatprep.subr.mxu0 0.0
          %4525 = vmatpush1.msra.mxu0 0.0
          %4526 = vmatprep.subr.mxu0 0.0
          %4527 = vmatpush1.msra.mxu0 0.0
          %4528 = vmatprep.subr.mxu0 0.0
          %4529 = vmatpush1.msra.mxu0 0.0
          %4530 = vmatprep.subr.mxu0 0.0
          %4531 = vmatpush1.msra.mxu0 0.0
          %4532 = vmatprep.subr.mxu0 0.0
          %4533 = vmatpush1.msra.mxu0 0.0
          %4534 = vmatprep.mubr.f32.mxu0 0.0
          %4535 = vmatmul.mubr.f32.gmra.mrb[0].mxu0 %v4468
          %v4536 = vpop.f32.mrb[0].mxu0
          %v4537 = vadd.f32 0.0, %v4536
          %v4538 = vpop.f32.mrb[0].mxu0
          %4539 = vdwg.mxu0
          %v4540 = vadd.f32 %v4455, %v4537
          %v4541 = vld [vmem:[%s8] sm:$0x1]
          %v4543 = vlaneseq
          %v4544 = vshrl.u32 %v4543, 7
          %v4545 = vsub.s32 0, %v4544
          %v4546 = vrot.slane %v4541, %v4545
          %v4548 = vadd.f32 %v4540, %v4546
          %v4549 = vmax.f32 %v4548, 0.0
          %s4550 = smul.u32 %s3770, 4
          %s4551 = scalar_lea.vmem [#allocation6], %s4550
          %4552 = vst.msk [vmem:[%s4551] sm:$0xf] %vm1134, %v4549
        $region97: #{image_encoder_forward.3} parent=63 // loop_footer
          %s3774 = sadd.s32 1, %s3770
        $region98: #{image_encoder_forward.3} parent=63 // loop_footer_branch
          %3769 = sbr.rel target = $region94
        $region99: #{image_encoder_forward.3} parent=63 // loop_exit
          _
        %v4553 = vld [vmem:[#allocation6] sm:$0x1]
        %v4554 = vld [vmem:[%s9] sm:$0xff]
        %v4555 = vld [vmem:[%s9 + $0x8] sm:$0xff]
        %v4556 = vld [vmem:[%s9 + $0x10] sm:$0xff]
        %v4557 = vld [vmem:[%s9 + $0x18] sm:$0xff]
        %v4558 = vld [vmem:[%s9 + $0x20] sm:$0xff]
        %v4559 = vld [vmem:[%s9 + $0x28] sm:$0xff]
        %v4560 = vld [vmem:[%s9 + $0x30] sm:$0xff]
        %v4561 = vld [vmem:[%s9 + $0x38] sm:$0xff]
        %v4562 = vld [vmem:[#allocation6 + $0x1] sm:$0x1]
        %v4563 = vld [vmem:[%s9 + $0x40] sm:$0xff]
        %v4564 = vld [vmem:[%s9 + $0x48] sm:$0xff]
        %v4565 = vld [vmem:[%s9 + $0x50] sm:$0xff]
        %v4566 = vld [vmem:[%s9 + $0x58] sm:$0xff]
        %v4567 = vld [vmem:[%s9 + $0x60] sm:$0xff]
        %v4568 = vld [vmem:[%s9 + $0x68] sm:$0xff]
        %v4569 = vld [vmem:[%s9 + $0x70] sm:$0xff]
        %v4570 = vld [vmem:[%s9 + $0x78] sm:$0xff]
        %v4572 = vsel %vm1121, %v4562, 0
        %4574 = vmatprep.subr.mxu0 0.0
        %4575 = vmatpush1.msra.mxu0 %v4563
        %4576 = vmatprep.subr.mxu0 0.0
        %4577 = vmatpush1.msra.mxu0 %v4564
        %4578 = vmatprep.subr.mxu0 0.0
        %4579 = vmatpush1.msra.mxu0 %v4565
        %4580 = vmatprep.subr.mxu0 0.0
        %4581 = vmatpush1.msra.mxu0 %v4566
        %4582 = vmatprep.subr.mxu0 0.0
        %4583 = vmatpush1.msra.mxu0 %v4567
        %4584 = vmatprep.subr.mxu0 0.0
        %4585 = vmatpush1.msra.mxu0 %v4568
        %4586 = vmatprep.subr.mxu0 0.0
        %4587 = vmatpush1.msra.mxu0 %v4569
        %4588 = vmatprep.subr.mxu0 0.0
        %4589 = vmatpush1.msra.mxu0 %v4570
        %4590 = vmatprep.subr.mxu0 0.0
        %4591 = vmatpush1.msra.mxu0 0.0
        %4592 = vmatprep.subr.mxu0 0.0
        %4593 = vmatpush1.msra.mxu0 0.0
        %4594 = vmatprep.subr.mxu0 0.0
        %4595 = vmatpush1.msra.mxu0 0.0
        %4596 = vmatprep.subr.mxu0 0.0
        %4597 = vmatpush1.msra.mxu0 0.0
        %4598 = vmatprep.subr.mxu0 0.0
        %4599 = vmatpush1.msra.mxu0 0.0
        %4600 = vmatprep.subr.mxu0 0.0
        %4601 = vmatpush1.msra.mxu0 0.0
        %4602 = vmatprep.subr.mxu0 0.0
        %4603 = vmatpush1.msra.mxu0 0.0
        %4604 = vmatprep.subr.mxu0 0.0
        %4605 = vmatpush1.msra.mxu0 0.0
        %4606 = vmatprep.subr.mxu0 0.0
        %4607 = vmatpush1.msra.mxu0 0.0
        %4608 = vmatprep.subr.mxu0 0.0
        %4609 = vmatpush1.msra.mxu0 0.0
        %4610 = vmatprep.subr.mxu0 0.0
        %4611 = vmatpush1.msra.mxu0 0.0
        %4612 = vmatprep.subr.mxu0 0.0
        %4613 = vmatpush1.msra.mxu0 0.0
        %4614 = vmatprep.subr.mxu0 0.0
        %4615 = vmatpush1.msra.mxu0 0.0
        %4616 = vmatprep.subr.mxu0 0.0
        %4617 = vmatpush1.msra.mxu0 0.0
        %4618 = vmatprep.subr.mxu0 0.0
        %4619 = vmatpush1.msra.mxu0 0.0
        %4620 = vmatprep.subr.mxu0 0.0
        %4621 = vmatpush1.msra.mxu0 0.0
        %4622 = vmatprep.subr.mxu0 0.0
        %4623 = vmatpush1.msra.mxu0 0.0
        %4624 = vmatprep.subr.mxu0 0.0
        %4625 = vmatpush1.msra.mxu0 0.0
        %4626 = vmatprep.subr.mxu0 0.0
        %4627 = vmatpush1.msra.mxu0 0.0
        %4628 = vmatprep.subr.mxu0 0.0
        %4629 = vmatpush1.msra.mxu0 0.0
        %4630 = vmatprep.subr.mxu0 0.0
        %4631 = vmatpush1.msra.mxu0 0.0
        %4632 = vmatprep.subr.mxu0 0.0
        %4633 = vmatpush1.msra.mxu0 0.0
        %4634 = vmatprep.subr.mxu0 0.0
        %4635 = vmatpush1.msra.mxu0 0.0
        %4636 = vmatprep.subr.mxu0 0.0
        %4637 = vmatpush1.msra.mxu0 0.0
        %4638 = vmatprep.mubr.f32.mxu0 0.0
        %4639 = vmatmul.mubr.f32.gmra.mrb[0].mxu0 %v4572
        %v4640 = vpop.f32.mrb[0].mxu0
        %v4641 = vadd.f32 0.0, %v4640
        %v4642 = vpop.f32.mrb[0].mxu0
        %4643 = vdwg.mxu0
        %v4645 = vsel %vm1121, %v4553, 0
        %4647 = vmatprep.subr.mxu0 0.0
        %4648 = vmatpush1.msra.mxu0 %v4554
        %4649 = vmatprep.subr.mxu0 0.0
        %4650 = vmatpush1.msra.mxu0 %v4555
        %4651 = vmatprep.subr.mxu0 0.0
        %4652 = vmatpush1.msra.mxu0 %v4556
        %4653 = vmatprep.subr.mxu0 0.0
        %4654 = vmatpush1.msra.mxu0 %v4557
        %4655 = vmatprep.subr.mxu0 0.0
        %4656 = vmatpush1.msra.mxu0 %v4558
        %4657 = vmatprep.subr.mxu0 0.0
        %4658 = vmatpush1.msra.mxu0 %v4559
        %4659 = vmatprep.subr.mxu0 0.0
        %4660 = vmatpush1.msra.mxu0 %v4560
        %4661 = vmatprep.subr.mxu0 0.0
        %4662 = vmatpush1.msra.mxu0 %v4561
        %4663 = vmatprep.subr.mxu0 0.0
        %4664 = vmatpush1.msra.mxu0 0.0
        %4665 = vmatprep.subr.mxu0 0.0
        %4666 = vmatpush1.msra.mxu0 0.0
        %4667 = vmatprep.subr.mxu0 0.0
        %4668 = vmatpush1.msra.mxu0 0.0
        %4669 = vmatprep.subr.mxu0 0.0
        %4670 = vmatpush1.msra.mxu0 0.0
        %4671 = vmatprep.subr.mxu0 0.0
        %4672 = vmatpush1.msra.mxu0 0.0
        %4673 = vmatprep.subr.mxu0 0.0
        %4674 = vmatpush1.msra.mxu0 0.0
        %4675 = vmatprep.subr.mxu0 0.0
        %4676 = vmatpush1.msra.mxu0 0.0
        %4677 = vmatprep.subr.mxu0 0.0
        %4678 = vmatpush1.msra.mxu0 0.0
        %4679 = vmatprep.subr.mxu0 0.0
        %4680 = vmatpush1.msra.mxu0 0.0
        %4681 = vmatprep.subr.mxu0 0.0
        %4682 = vmatpush1.msra.mxu0 0.0
        %4683 = vmatprep.subr.mxu0 0.0
        %4684 = vmatpush1.msra.mxu0 0.0
        %4685 = vmatprep.subr.mxu0 0.0
        %4686 = vmatpush1.msra.mxu0 0.0
        %4687 = vmatprep.subr.mxu0 0.0
        %4688 = vmatpush1.msra.mxu0 0.0
        %4689 = vmatprep.subr.mxu0 0.0
        %4690 = vmatpush1.msra.mxu0 0.0
        %4691 = vmatprep.subr.mxu0 0.0
        %4692 = vmatpush1.msra.mxu0 0.0
        %4693 = vmatprep.subr.mxu0 0.0
        %4694 = vmatpush1.msra.mxu0 0.0
        %4695 = vmatprep.subr.mxu0 0.0
        %4696 = vmatpush1.msra.mxu0 0.0
        %4697 = vmatprep.subr.mxu0 0.0
        %4698 = vmatpush1.msra.mxu0 0.0
        %4699 = vmatprep.subr.mxu0 0.0
        %4700 = vmatpush1.msra.mxu0 0.0
        %4701 = vmatprep.subr.mxu0 0.0
        %4702 = vmatpush1.msra.mxu0 0.0
        %4703 = vmatprep.subr.mxu0 0.0
        %4704 = vmatpush1.msra.mxu0 0.0
        %4705 = vmatprep.subr.mxu0 0.0
        %4706 = vmatpush1.msra.mxu0 0.0
        %4707 = vmatprep.subr.mxu0 0.0
        %4708 = vmatpush1.msra.mxu0 0.0
        %4709 = vmatprep.subr.mxu0 0.0
        %4710 = vmatpush1.msra.mxu0 0.0
        %4711 = vmatprep.mubr.f32.mxu0 0.0
        %4712 = vmatmul.mubr.f32.gmra.mrb[0].mxu0 %v4645
        %v4713 = vpop.f32.mrb[0].mxu0
        %v4714 = vadd.f32 %v4641, %v4713
        %v4715 = vpop.f32.mrb[0].mxu0
        %4716 = vdwg.mxu0
        %v4717 = vld [vmem:[#allocation6 + $0x2] sm:$0x1]
        %v4718 = vld [vmem:[%s9 + $0x80] sm:$0xff]
        %v4719 = vld [vmem:[%s9 + $0x88] sm:$0xff]
        %v4720 = vld [vmem:[%s9 + $0x90] sm:$0xff]
        %v4721 = vld [vmem:[%s9 + $0x98] sm:$0xff]
        %v4722 = vld [vmem:[%s9 + $0xa0] sm:$0xff]
        %v4723 = vld [vmem:[%s9 + $0xa8] sm:$0xff]
        %v4724 = vld [vmem:[%s9 + $0xb0] sm:$0xff]
        %v4725 = vld [vmem:[%s9 + $0xb8] sm:$0xff]
        %v4727 = vsel %vm1121, %v4717, 0
        %4729 = vmatprep.subr.mxu0 0.0
        %4730 = vmatpush1.msra.mxu0 %v4718
        %4731 = vmatprep.subr.mxu0 0.0
        %4732 = vmatpush1.msra.mxu0 %v4719
        %4733 = vmatprep.subr.mxu0 0.0
        %4734 = vmatpush1.msra.mxu0 %v4720
        %4735 = vmatprep.subr.mxu0 0.0
        %4736 = vmatpush1.msra.mxu0 %v4721
        %4737 = vmatprep.subr.mxu0 0.0
        %4738 = vmatpush1.msra.mxu0 %v4722
        %4739 = vmatprep.subr.mxu0 0.0
        %4740 = vmatpush1.msra.mxu0 %v4723
        %4741 = vmatprep.subr.mxu0 0.0
        %4742 = vmatpush1.msra.mxu0 %v4724
        %4743 = vmatprep.subr.mxu0 0.0
        %4744 = vmatpush1.msra.mxu0 %v4725
        %4745 = vmatprep.subr.mxu0 0.0
        %4746 = vmatpush1.msra.mxu0 0.0
        %4747 = vmatprep.subr.mxu0 0.0
        %4748 = vmatpush1.msra.mxu0 0.0
        %4749 = vmatprep.subr.mxu0 0.0
        %4750 = vmatpush1.msra.mxu0 0.0
        %4751 = vmatprep.subr.mxu0 0.0
        %4752 = vmatpush1.msra.mxu0 0.0
        %4753 = vmatprep.subr.mxu0 0.0
        %4754 = vmatpush1.msra.mxu0 0.0
        %4755 = vmatprep.subr.mxu0 0.0
        %4756 = vmatpush1.msra.mxu0 0.0
        %4757 = vmatprep.subr.mxu0 0.0
        %4758 = vmatpush1.msra.mxu0 0.0
        %4759 = vmatprep.subr.mxu0 0.0
        %4760 = vmatpush1.msra.mxu0 0.0
        %4761 = vmatprep.subr.mxu0 0.0
        %4762 = vmatpush1.msra.mxu0 0.0
        %4763 = vmatprep.subr.mxu0 0.0
        %4764 = vmatpush1.msra.mxu0 0.0
        %4765 = vmatprep.subr.mxu0 0.0
        %4766 = vmatpush1.msra.mxu0 0.0
        %4767 = vmatprep.subr.mxu0 0.0
        %4768 = vmatpush1.msra.mxu0 0.0
        %4769 = vmatprep.subr.mxu0 0.0
        %4770 = vmatpush1.msra.mxu0 0.0
        %4771 = vmatprep.subr.mxu0 0.0
        %4772 = vmatpush1.msra.mxu0 0.0
        %4773 = vmatprep.subr.mxu0 0.0
        %4774 = vmatpush1.msra.mxu0 0.0
        %4775 = vmatprep.subr.mxu0 0.0
        %4776 = vmatpush1.msra.mxu0 0.0
        %4777 = vmatprep.subr.mxu0 0.0
        %4778 = vmatpush1.msra.mxu0 0.0
        %4779 = vmatprep.subr.mxu0 0.0
        %4780 = vmatpush1.msra.mxu0 0.0
        %4781 = vmatprep.subr.mxu0 0.0
        %4782 = vmatpush1.msra.mxu0 0.0
        %4783 = vmatprep.subr.mxu0 0.0
        %4784 = vmatpush1.msra.mxu0 0.0
        %4785 = vmatprep.subr.mxu0 0.0
        %4786 = vmatpush1.msra.mxu0 0.0
        %4787 = vmatprep.subr.mxu0 0.0
        %4788 = vmatpush1.msra.mxu0 0.0
        %4789 = vmatprep.subr.mxu0 0.0
        %4790 = vmatpush1.msra.mxu0 0.0
        %4791 = vmatprep.subr.mxu0 0.0
        %4792 = vmatpush1.msra.mxu0 0.0
        %4793 = vmatprep.mubr.f32.mxu0 0.0
        %4794 = vmatmul.mubr.f32.gmra.mrb[0].mxu0 %v4727
        %v4795 = vpop.f32.mrb[0].mxu0
        %v4796 = vadd.f32 0.0, %v4795
        %v4797 = vpop.f32.mrb[0].mxu0
        %4798 = vdwg.mxu0
        %v4799 = vadd.f32 %v4714, %v4796
        %v4800 = vld [vmem:[#allocation6 + $0x3] sm:$0x1]
        %v4801 = vld [vmem:[%s9 + $0xc0] sm:$0xff]
        %v4802 = vld [vmem:[%s9 + $0xc8] sm:$0xff]
        %v4803 = vld [vmem:[%s9 + $0xd0] sm:$0xff]
        %v4804 = vld [vmem:[%s9 + $0xd8] sm:$0xff]
        %v4805 = vld [vmem:[%s9 + $0xe0] sm:$0xff]
        %v4806 = vld [vmem:[%s9 + $0xe8] sm:$0xff]
        %v4807 = vld [vmem:[%s9 + $0xf0] sm:$0xff]
        %v4808 = vld [vmem:[%s9 + $0xf8] sm:$0xff]
        %v4810 = vsel %vm1121, %v4800, 0
        %4812 = vmatprep.subr.mxu0 0.0
        %4813 = vmatpush1.msra.mxu0 %v4801
        %4814 = vmatprep.subr.mxu0 0.0
        %4815 = vmatpush1.msra.mxu0 %v4802
        %4816 = vmatprep.subr.mxu0 0.0
        %4817 = vmatpush1.msra.mxu0 %v4803
        %4818 = vmatprep.subr.mxu0 0.0
        %4819 = vmatpush1.msra.mxu0 %v4804
        %4820 = vmatprep.subr.mxu0 0.0
        %4821 = vmatpush1.msra.mxu0 %v4805
        %4822 = vmatprep.subr.mxu0 0.0
        %4823 = vmatpush1.msra.mxu0 %v4806
        %4824 = vmatprep.subr.mxu0 0.0
        %4825 = vmatpush1.msra.mxu0 %v4807
        %4826 = vmatprep.subr.mxu0 0.0
        %4827 = vmatpush1.msra.mxu0 %v4808
        %4828 = vmatprep.subr.mxu0 0.0
        %4829 = vmatpush1.msra.mxu0 0.0
        %4830 = vmatprep.subr.mxu0 0.0
        %4831 = vmatpush1.msra.mxu0 0.0
        %4832 = vmatprep.subr.mxu0 0.0
        %4833 = vmatpush1.msra.mxu0 0.0
        %4834 = vmatprep.subr.mxu0 0.0
        %4835 = vmatpush1.msra.mxu0 0.0
        %4836 = vmatprep.subr.mxu0 0.0
        %4837 = vmatpush1.msra.mxu0 0.0
        %4838 = vmatprep.subr.mxu0 0.0
        %4839 = vmatpush1.msra.mxu0 0.0
        %4840 = vmatprep.subr.mxu0 0.0
        %4841 = vmatpush1.msra.mxu0 0.0
        %4842 = vmatprep.subr.mxu0 0.0
        %4843 = vmatpush1.msra.mxu0 0.0
        %4844 = vmatprep.subr.mxu0 0.0
        %4845 = vmatpush1.msra.mxu0 0.0
        %4846 = vmatprep.subr.mxu0 0.0
        %4847 = vmatpush1.msra.mxu0 0.0
        %4848 = vmatprep.subr.mxu0 0.0
        %4849 = vmatpush1.msra.mxu0 0.0
        %4850 = vmatprep.subr.mxu0 0.0
        %4851 = vmatpush1.msra.mxu0 0.0
        %4852 = vmatprep.subr.mxu0 0.0
        %4853 = vmatpush1.msra.mxu0 0.0
        %4854 = vmatprep.subr.mxu0 0.0
        %4855 = vmatpush1.msra.mxu0 0.0
        %4856 = vmatprep.subr.mxu0 0.0
        %4857 = vmatpush1.msra.mxu0 0.0
        %4858 = vmatprep.subr.mxu0 0.0
        %4859 = vmatpush1.msra.mxu0 0.0
        %4860 = vmatprep.subr.mxu0 0.0
        %4861 = vmatpush1.msra.mxu0 0.0
        %4862 = vmatprep.subr.mxu0 0.0
        %4863 = vmatpush1.msra.mxu0 0.0
        %4864 = vmatprep.subr.mxu0 0.0
        %4865 = vmatpush1.msra.mxu0 0.0
        %4866 = vmatprep.subr.mxu0 0.0
        %4867 = vmatpush1.msra.mxu0 0.0
        %4868 = vmatprep.subr.mxu0 0.0
        %4869 = vmatpush1.msra.mxu0 0.0
        %4870 = vmatprep.subr.mxu0 0.0
        %4871 = vmatpush1.msra.mxu0 0.0
        %4872 = vmatprep.subr.mxu0 0.0
        %4873 = vmatpush1.msra.mxu0 0.0
        %4874 = vmatprep.subr.mxu0 0.0
        %4875 = vmatpush1.msra.mxu0 0.0
        %4876 = vmatprep.mubr.f32.mxu0 0.0
        %4877 = vmatmul.mubr.f32.gmra.mrb[0].mxu0 %v4810
        %v4878 = vpop.f32.mrb[0].mxu0
        %v4879 = vadd.f32 0.0, %v4878
        %v4880 = vpop.f32.mrb[0].mxu0
        %4881 = vdwg.mxu0
        %v4882 = vadd.f32 %v4799, %v4879
        %v4883 = vld [vmem:[#allocation6 + $0x4] sm:$0x1]
        %v4884 = vld [vmem:[%s9 + $0x100] sm:$0xff]
        %v4885 = vld [vmem:[%s9 + $0x108] sm:$0xff]
        %v4886 = vld [vmem:[%s9 + $0x110] sm:$0xff]
        %v4887 = vld [vmem:[%s9 + $0x118] sm:$0xff]
        %v4888 = vld [vmem:[%s9 + $0x120] sm:$0xff]
        %v4889 = vld [vmem:[%s9 + $0x128] sm:$0xff]
        %v4890 = vld [vmem:[%s9 + $0x130] sm:$0xff]
        %v4891 = vld [vmem:[%s9 + $0x138] sm:$0xff]
        %v4893 = vsel %vm1121, %v4883, 0
        %4895 = vmatprep.subr.mxu0 0.0
        %4896 = vmatpush1.msra.mxu0 %v4884
        %4897 = vmatprep.subr.mxu0 0.0
        %4898 = vmatpush1.msra.mxu0 %v4885
        %4899 = vmatprep.subr.mxu0 0.0
        %4900 = vmatpush1.msra.mxu0 %v4886
        %4901 = vmatprep.subr.mxu0 0.0
        %4902 = vmatpush1.msra.mxu0 %v4887
        %4903 = vmatprep.subr.mxu0 0.0
        %4904 = vmatpush1.msra.mxu0 %v4888
        %4905 = vmatprep.subr.mxu0 0.0
        %4906 = vmatpush1.msra.mxu0 %v4889
        %4907 = vmatprep.subr.mxu0 0.0
        %4908 = vmatpush1.msra.mxu0 %v4890
        %4909 = vmatprep.subr.mxu0 0.0
        %4910 = vmatpush1.msra.mxu0 %v4891
        %4911 = vmatprep.subr.mxu0 0.0
        %4912 = vmatpush1.msra.mxu0 0.0
        %4913 = vmatprep.subr.mxu0 0.0
        %4914 = vmatpush1.msra.mxu0 0.0
        %4915 = vmatprep.subr.mxu0 0.0
        %4916 = vmatpush1.msra.mxu0 0.0
        %4917 = vmatprep.subr.mxu0 0.0
        %4918 = vmatpush1.msra.mxu0 0.0
        %4919 = vmatprep.subr.mxu0 0.0
        %4920 = vmatpush1.msra.mxu0 0.0
        %4921 = vmatprep.subr.mxu0 0.0
        %4922 = vmatpush1.msra.mxu0 0.0
        %4923 = vmatprep.subr.mxu0 0.0
        %4924 = vmatpush1.msra.mxu0 0.0
        %4925 = vmatprep.subr.mxu0 0.0
        %4926 = vmatpush1.msra.mxu0 0.0
        %4927 = vmatprep.subr.mxu0 0.0
        %4928 = vmatpush1.msra.mxu0 0.0
        %4929 = vmatprep.subr.mxu0 0.0
        %4930 = vmatpush1.msra.mxu0 0.0
        %4931 = vmatprep.subr.mxu0 0.0
        %4932 = vmatpush1.msra.mxu0 0.0
        %4933 = vmatprep.subr.mxu0 0.0
        %4934 = vmatpush1.msra.mxu0 0.0
        %4935 = vmatprep.subr.mxu0 0.0
        %4936 = vmatpush1.msra.mxu0 0.0
        %4937 = vmatprep.subr.mxu0 0.0
        %4938 = vmatpush1.msra.mxu0 0.0
        %4939 = vmatprep.subr.mxu0 0.0
        %4940 = vmatpush1.msra.mxu0 0.0
        %4941 = vmatprep.subr.mxu0 0.0
        %4942 = vmatpush1.msra.mxu0 0.0
        %4943 = vmatprep.subr.mxu0 0.0
        %4944 = vmatpush1.msra.mxu0 0.0
        %4945 = vmatprep.subr.mxu0 0.0
        %4946 = vmatpush1.msra.mxu0 0.0
        %4947 = vmatprep.subr.mxu0 0.0
        %4948 = vmatpush1.msra.mxu0 0.0
        %4949 = vmatprep.subr.mxu0 0.0
        %4950 = vmatpush1.msra.mxu0 0.0
        %4951 = vmatprep.subr.mxu0 0.0
        %4952 = vmatpush1.msra.mxu0 0.0
        %4953 = vmatprep.subr.mxu0 0.0
        %4954 = vmatpush1.msra.mxu0 0.0
        %4955 = vmatprep.subr.mxu0 0.0
        %4956 = vmatpush1.msra.mxu0 0.0
        %4957 = vmatprep.subr.mxu0 0.0
        %4958 = vmatpush1.msra.mxu0 0.0
        %4959 = vmatprep.mubr.f32.mxu0 0.0
        %4960 = vmatmul.mubr.f32.gmra.mrb[0].mxu0 %v4893
        %v4961 = vpop.f32.mrb[0].mxu0
        %v4962 = vadd.f32 0.0, %v4961
        %v4963 = vpop.f32.mrb[0].mxu0
        %4964 = vdwg.mxu0
        %v4965 = vadd.f32 %v4882, %v4962
        %v4966 = vld [vmem:[#allocation6 + $0x5] sm:$0x1]
        %v4967 = vld [vmem:[%s9 + $0x140] sm:$0xff]
        %v4968 = vld [vmem:[%s9 + $0x148] sm:$0xff]
        %v4969 = vld [vmem:[%s9 + $0x150] sm:$0xff]
        %v4970 = vld [vmem:[%s9 + $0x158] sm:$0xff]
        %v4971 = vld [vmem:[%s9 + $0x160] sm:$0xff]
        %v4972 = vld [vmem:[%s9 + $0x168] sm:$0xff]
        %v4973 = vld [vmem:[%s9 + $0x170] sm:$0xff]
        %v4974 = vld [vmem:[%s9 + $0x178] sm:$0xff]
        %v4976 = vsel %vm1121, %v4966, 0
        %4978 = vmatprep.subr.mxu0 0.0
        %4979 = vmatpush1.msra.mxu0 %v4967
        %4980 = vmatprep.subr.mxu0 0.0
        %4981 = vmatpush1.msra.mxu0 %v4968
        %4982 = vmatprep.subr.mxu0 0.0
        %4983 = vmatpush1.msra.mxu0 %v4969
        %4984 = vmatprep.subr.mxu0 0.0
        %4985 = vmatpush1.msra.mxu0 %v4970
        %4986 = vmatprep.subr.mxu0 0.0
        %4987 = vmatpush1.msra.mxu0 %v4971
        %4988 = vmatprep.subr.mxu0 0.0
        %4989 = vmatpush1.msra.mxu0 %v4972
        %4990 = vmatprep.subr.mxu0 0.0
        %4991 = vmatpush1.msra.mxu0 %v4973
        %4992 = vmatprep.subr.mxu0 0.0
        %4993 = vmatpush1.msra.mxu0 %v4974
        %4994 = vmatprep.subr.mxu0 0.0
        %4995 = vmatpush1.msra.mxu0 0.0
        %4996 = vmatprep.subr.mxu0 0.0
        %4997 = vmatpush1.msra.mxu0 0.0
        %4998 = vmatprep.subr.mxu0 0.0
        %4999 = vmatpush1.msra.mxu0 0.0
        %5000 = vmatprep.subr.mxu0 0.0
        %5001 = vmatpush1.msra.mxu0 0.0
        %5002 = vmatprep.subr.mxu0 0.0
        %5003 = vmatpush1.msra.mxu0 0.0
        %5004 = vmatprep.subr.mxu0 0.0
        %5005 = vmatpush1.msra.mxu0 0.0
        %5006 = vmatprep.subr.mxu0 0.0
        %5007 = vmatpush1.msra.mxu0 0.0
        %5008 = vmatprep.subr.mxu0 0.0
        %5009 = vmatpush1.msra.mxu0 0.0
        %5010 = vmatprep.subr.mxu0 0.0
        %5011 = vmatpush1.msra.mxu0 0.0
        %5012 = vmatprep.subr.mxu0 0.0
        %5013 = vmatpush1.msra.mxu0 0.0
        %5014 = vmatprep.subr.mxu0 0.0
        %5015 = vmatpush1.msra.mxu0 0.0
        %5016 = vmatprep.subr.mxu0 0.0
        %5017 = vmatpush1.msra.mxu0 0.0
        %5018 = vmatprep.subr.mxu0 0.0
        %5019 = vmatpush1.msra.mxu0 0.0
        %5020 = vmatprep.subr.mxu0 0.0
        %5021 = vmatpush1.msra.mxu0 0.0
        %5022 = vmatprep.subr.mxu0 0.0
        %5023 = vmatpush1.msra.mxu0 0.0
        %5024 = vmatprep.subr.mxu0 0.0
        %5025 = vmatpush1.msra.mxu0 0.0
        %5026 = vmatprep.subr.mxu0 0.0
        %5027 = vmatpush1.msra.mxu0 0.0
        %5028 = vmatprep.subr.mxu0 0.0
        %5029 = vmatpush1.msra.mxu0 0.0
        %5030 = vmatprep.subr.mxu0 0.0
        %5031 = vmatpush1.msra.mxu0 0.0
        %5032 = vmatprep.subr.mxu0 0.0
        %5033 = vmatpush1.msra.mxu0 0.0
        %5034 = vmatprep.subr.mxu0 0.0
        %5035 = vmatpush1.msra.mxu0 0.0
        %5036 = vmatprep.subr.mxu0 0.0
        %5037 = vmatpush1.msra.mxu0 0.0
        %5038 = vmatprep.subr.mxu0 0.0
        %5039 = vmatpush1.msra.mxu0 0.0
        %5040 = vmatprep.subr.mxu0 0.0
        %5041 = vmatpush1.msra.mxu0 0.0
        %5042 = vmatprep.mubr.f32.mxu0 0.0
        %5043 = vmatmul.mubr.f32.gmra.mrb[0].mxu0 %v4976
        %v5044 = vpop.f32.mrb[0].mxu0
        %v5045 = vadd.f32 0.0, %v5044
        %v5046 = vpop.f32.mrb[0].mxu0
        %5047 = vdwg.mxu0
        %v5048 = vadd.f32 %v4965, %v5045
        %v5049 = vld [vmem:[#allocation6 + $0x6] sm:$0x1]
        %v5050 = vld [vmem:[%s9 + $0x180] sm:$0xff]
        %v5051 = vld [vmem:[%s9 + $0x188] sm:$0xff]
        %v5052 = vld [vmem:[%s9 + $0x190] sm:$0xff]
        %v5053 = vld [vmem:[%s9 + $0x198] sm:$0xff]
        %v5054 = vld [vmem:[%s9 + $0x1a0] sm:$0xff]
        %v5055 = vld [vmem:[%s9 + $0x1a8] sm:$0xff]
        %v5056 = vld [vmem:[%s9 + $0x1b0] sm:$0xff]
        %v5057 = vld [vmem:[%s9 + $0x1b8] sm:$0xff]
        %v5059 = vsel %vm1121, %v5049, 0
        %5061 = vmatprep.subr.mxu0 0.0
        %5062 = vmatpush1.msra.mxu0 %v5050
        %5063 = vmatprep.subr.mxu0 0.0
        %5064 = vmatpush1.msra.mxu0 %v5051
        %5065 = vmatprep.subr.mxu0 0.0
        %5066 = vmatpush1.msra.mxu0 %v5052
        %5067 = vmatprep.subr.mxu0 0.0
        %5068 = vmatpush1.msra.mxu0 %v5053
        %5069 = vmatprep.subr.mxu0 0.0
        %5070 = vmatpush1.msra.mxu0 %v5054
        %5071 = vmatprep.subr.mxu0 0.0
        %5072 = vmatpush1.msra.mxu0 %v5055
        %5073 = vmatprep.subr.mxu0 0.0
        %5074 = vmatpush1.msra.mxu0 %v5056
        %5075 = vmatprep.subr.mxu0 0.0
        %5076 = vmatpush1.msra.mxu0 %v5057
        %5077 = vmatprep.subr.mxu0 0.0
        %5078 = vmatpush1.msra.mxu0 0.0
        %5079 = vmatprep.subr.mxu0 0.0
        %5080 = vmatpush1.msra.mxu0 0.0
        %5081 = vmatprep.subr.mxu0 0.0
        %5082 = vmatpush1.msra.mxu0 0.0
        %5083 = vmatprep.subr.mxu0 0.0
        %5084 = vmatpush1.msra.mxu0 0.0
        %5085 = vmatprep.subr.mxu0 0.0
        %5086 = vmatpush1.msra.mxu0 0.0
        %5087 = vmatprep.subr.mxu0 0.0
        %5088 = vmatpush1.msra.mxu0 0.0
        %5089 = vmatprep.subr.mxu0 0.0
        %5090 = vmatpush1.msra.mxu0 0.0
        %5091 = vmatprep.subr.mxu0 0.0
        %5092 = vmatpush1.msra.mxu0 0.0
        %5093 = vmatprep.subr.mxu0 0.0
        %5094 = vmatpush1.msra.mxu0 0.0
        %5095 = vmatprep.subr.mxu0 0.0
        %5096 = vmatpush1.msra.mxu0 0.0
        %5097 = vmatprep.subr.mxu0 0.0
        %5098 = vmatpush1.msra.mxu0 0.0
        %5099 = vmatprep.subr.mxu0 0.0
        %5100 = vmatpush1.msra.mxu0 0.0
        %5101 = vmatprep.subr.mxu0 0.0
        %5102 = vmatpush1.msra.mxu0 0.0
        %5103 = vmatprep.subr.mxu0 0.0
        %5104 = vmatpush1.msra.mxu0 0.0
        %5105 = vmatprep.subr.mxu0 0.0
        %5106 = vmatpush1.msra.mxu0 0.0
        %5107 = vmatprep.subr.mxu0 0.0
        %5108 = vmatpush1.msra.mxu0 0.0
        %5109 = vmatprep.subr.mxu0 0.0
        %5110 = vmatpush1.msra.mxu0 0.0
        %5111 = vmatprep.subr.mxu0 0.0
        %5112 = vmatpush1.msra.mxu0 0.0
        %5113 = vmatprep.subr.mxu0 0.0
        %5114 = vmatpush1.msra.mxu0 0.0
        %5115 = vmatprep.subr.mxu0 0.0
        %5116 = vmatpush1.msra.mxu0 0.0
        %5117 = vmatprep.subr.mxu0 0.0
        %5118 = vmatpush1.msra.mxu0 0.0
        %5119 = vmatprep.subr.mxu0 0.0
        %5120 = vmatpush1.msra.mxu0 0.0
        %5121 = vmatprep.subr.mxu0 0.0
        %5122 = vmatpush1.msra.mxu0 0.0
        %5123 = vmatprep.subr.mxu0 0.0
        %5124 = vmatpush1.msra.mxu0 0.0
        %5125 = vmatprep.mubr.f32.mxu0 0.0
        %5126 = vmatmul.mubr.f32.gmra.mrb[0].mxu0 %v5059
        %v5127 = vpop.f32.mrb[0].mxu0
        %v5128 = vadd.f32 0.0, %v5127
        %v5129 = vpop.f32.mrb[0].mxu0
        %5130 = vdwg.mxu0
        %v5131 = vadd.f32 %v5048, %v5128
        %v5132 = vld [vmem:[#allocation6 + $0x7] sm:$0x1]
        %v5133 = vld [vmem:[%s9 + $0x1c0] sm:$0xff]
        %v5134 = vld [vmem:[%s9 + $0x1c8] sm:$0xff]
        %v5135 = vld [vmem:[%s9 + $0x1d0] sm:$0xff]
        %v5136 = vld [vmem:[%s9 + $0x1d8] sm:$0xff]
        %v5137 = vld [vmem:[%s9 + $0x1e0] sm:$0xff]
        %v5138 = vld [vmem:[%s9 + $0x1e8] sm:$0xff]
        %v5139 = vld [vmem:[%s9 + $0x1f0] sm:$0xff]
        %v5140 = vld [vmem:[%s9 + $0x1f8] sm:$0xff]
        %v5142 = vsel %vm1121, %v5132, 0
        %5144 = vmatprep.subr.mxu0 0.0
        %5145 = vmatpush1.msra.mxu0 %v5133
        %5146 = vmatprep.subr.mxu0 0.0
        %5147 = vmatpush1.msra.mxu0 %v5134
        %5148 = vmatprep.subr.mxu0 0.0
        %5149 = vmatpush1.msra.mxu0 %v5135
        %5150 = vmatprep.subr.mxu0 0.0
        %5151 = vmatpush1.msra.mxu0 %v5136
        %5152 = vmatprep.subr.mxu0 0.0
        %5153 = vmatpush1.msra.mxu0 %v5137
        %5154 = vmatprep.subr.mxu0 0.0
        %5155 = vmatpush1.msra.mxu0 %v5138
        %5156 = vmatprep.subr.mxu0 0.0
        %5157 = vmatpush1.msra.mxu0 %v5139
        %5158 = vmatprep.subr.mxu0 0.0
        %5159 = vmatpush1.msra.mxu0 %v5140
        %5160 = vmatprep.subr.mxu0 0.0
        %5161 = vmatpush1.msra.mxu0 0.0
        %5162 = vmatprep.subr.mxu0 0.0
        %5163 = vmatpush1.msra.mxu0 0.0
        %5164 = vmatprep.subr.mxu0 0.0
        %5165 = vmatpush1.msra.mxu0 0.0
        %5166 = vmatprep.subr.mxu0 0.0
        %5167 = vmatpush1.msra.mxu0 0.0
        %5168 = vmatprep.subr.mxu0 0.0
        %5169 = vmatpush1.msra.mxu0 0.0
        %5170 = vmatprep.subr.mxu0 0.0
        %5171 = vmatpush1.msra.mxu0 0.0
        %5172 = vmatprep.subr.mxu0 0.0
        %5173 = vmatpush1.msra.mxu0 0.0
        %5174 = vmatprep.subr.mxu0 0.0
        %5175 = vmatpush1.msra.mxu0 0.0
        %5176 = vmatprep.subr.mxu0 0.0
        %5177 = vmatpush1.msra.mxu0 0.0
        %5178 = vmatprep.subr.mxu0 0.0
        %5179 = vmatpush1.msra.mxu0 0.0
        %5180 = vmatprep.subr.mxu0 0.0
        %5181 = vmatpush1.msra.mxu0 0.0
        %5182 = vmatprep.subr.mxu0 0.0
        %5183 = vmatpush1.msra.mxu0 0.0
        %5184 = vmatprep.subr.mxu0 0.0
        %5185 = vmatpush1.msra.mxu0 0.0
        %5186 = vmatprep.subr.mxu0 0.0
        %5187 = vmatpush1.msra.mxu0 0.0
        %5188 = vmatprep.subr.mxu0 0.0
        %5189 = vmatpush1.msra.mxu0 0.0
        %5190 = vmatprep.subr.mxu0 0.0
        %5191 = vmatpush1.msra.mxu0 0.0
        %5192 = vmatprep.subr.mxu0 0.0
        %5193 = vmatpush1.msra.mxu0 0.0
        %5194 = vmatprep.subr.mxu0 0.0
        %5195 = vmatpush1.msra.mxu0 0.0
        %5196 = vmatprep.subr.mxu0 0.0
        %5197 = vmatpush1.msra.mxu0 0.0
        %5198 = vmatprep.subr.mxu0 0.0
        %5199 = vmatpush1.msra.mxu0 0.0
        %5200 = vmatprep.subr.mxu0 0.0
        %5201 = vmatpush1.msra.mxu0 0.0
        %5202 = vmatprep.subr.mxu0 0.0
        %5203 = vmatpush1.msra.mxu0 0.0
        %5204 = vmatprep.subr.mxu0 0.0
        %5205 = vmatpush1.msra.mxu0 0.0
        %5206 = vmatprep.subr.mxu0 0.0
        %5207 = vmatpush1.msra.mxu0 0.0
        %5208 = vmatprep.mubr.f32.mxu0 0.0
        %5209 = vmatmul.mubr.f32.gmra.mrb[0].mxu0 %v5142
        %v5210 = vpop.f32.mrb[0].mxu0
        %v5211 = vadd.f32 0.0, %v5210
        %v5212 = vpop.f32.mrb[0].mxu0
        %5213 = vdwg.mxu0
        %v5214 = vadd.f32 %v5131, %v5211
        %v5215 = vld [vmem:[#allocation6 + $0x8] sm:$0x1]
        %v5216 = vld [vmem:[%s9 + $0x200] sm:$0xff]
        %v5217 = vld [vmem:[%s9 + $0x208] sm:$0xff]
        %v5218 = vld [vmem:[%s9 + $0x210] sm:$0xff]
        %v5219 = vld [vmem:[%s9 + $0x218] sm:$0xff]
        %v5220 = vld [vmem:[%s9 + $0x220] sm:$0xff]
        %v5221 = vld [vmem:[%s9 + $0x228] sm:$0xff]
        %v5222 = vld [vmem:[%s9 + $0x230] sm:$0xff]
        %v5223 = vld [vmem:[%s9 + $0x238] sm:$0xff]
        %v5225 = vsel %vm1121, %v5215, 0
        %5227 = vmatprep.subr.mxu0 0.0
        %5228 = vmatpush1.msra.mxu0 %v5216
        %5229 = vmatprep.subr.mxu0 0.0
        %5230 = vmatpush1.msra.mxu0 %v5217
        %5231 = vmatprep.subr.mxu0 0.0
        %5232 = vmatpush1.msra.mxu0 %v5218
        %5233 = vmatprep.subr.mxu0 0.0
        %5234 = vmatpush1.msra.mxu0 %v5219
        %5235 = vmatprep.subr.mxu0 0.0
        %5236 = vmatpush1.msra.mxu0 %v5220
        %5237 = vmatprep.subr.mxu0 0.0
        %5238 = vmatpush1.msra.mxu0 %v5221
        %5239 = vmatprep.subr.mxu0 0.0
        %5240 = vmatpush1.msra.mxu0 %v5222
        %5241 = vmatprep.subr.mxu0 0.0
        %5242 = vmatpush1.msra.mxu0 %v5223
        %5243 = vmatprep.subr.mxu0 0.0
        %5244 = vmatpush1.msra.mxu0 0.0
        %5245 = vmatprep.subr.mxu0 0.0
        %5246 = vmatpush1.msra.mxu0 0.0
        %5247 = vmatprep.subr.mxu0 0.0
        %5248 = vmatpush1.msra.mxu0 0.0
        %5249 = vmatprep.subr.mxu0 0.0
        %5250 = vmatpush1.msra.mxu0 0.0
        %5251 = vmatprep.subr.mxu0 0.0
        %5252 = vmatpush1.msra.mxu0 0.0
        %5253 = vmatprep.subr.mxu0 0.0
        %5254 = vmatpush1.msra.mxu0 0.0
        %5255 = vmatprep.subr.mxu0 0.0
        %5256 = vmatpush1.msra.mxu0 0.0
        %5257 = vmatprep.subr.mxu0 0.0
        %5258 = vmatpush1.msra.mxu0 0.0
        %5259 = vmatprep.subr.mxu0 0.0
        %5260 = vmatpush1.msra.mxu0 0.0
        %5261 = vmatprep.subr.mxu0 0.0
        %5262 = vmatpush1.msra.mxu0 0.0
        %5263 = vmatprep.subr.mxu0 0.0
        %5264 = vmatpush1.msra.mxu0 0.0
        %5265 = vmatprep.subr.mxu0 0.0
        %5266 = vmatpush1.msra.mxu0 0.0
        %5267 = vmatprep.subr.mxu0 0.0
        %5268 = vmatpush1.msra.mxu0 0.0
        %5269 = vmatprep.subr.mxu0 0.0
        %5270 = vmatpush1.msra.mxu0 0.0
        %5271 = vmatprep.subr.mxu0 0.0
        %5272 = vmatpush1.msra.mxu0 0.0
        %5273 = vmatprep.subr.mxu0 0.0
        %5274 = vmatpush1.msra.mxu0 0.0
        %5275 = vmatprep.subr.mxu0 0.0
        %5276 = vmatpush1.msra.mxu0 0.0
        %5277 = vmatprep.subr.mxu0 0.0
        %5278 = vmatpush1.msra.mxu0 0.0
        %5279 = vmatprep.subr.mxu0 0.0
        %5280 = vmatpush1.msra.mxu0 0.0
        %5281 = vmatprep.subr.mxu0 0.0
        %5282 = vmatpush1.msra.mxu0 0.0
        %5283 = vmatprep.subr.mxu0 0.0
        %5284 = vmatpush1.msra.mxu0 0.0
        %5285 = vmatprep.subr.mxu0 0.0
        %5286 = vmatpush1.msra.mxu0 0.0
        %5287 = vmatprep.subr.mxu0 0.0
        %5288 = vmatpush1.msra.mxu0 0.0
        %5289 = vmatprep.subr.mxu0 0.0
        %5290 = vmatpush1.msra.mxu0 0.0
        %5291 = vmatprep.mubr.f32.mxu0 0.0
        %5292 = vmatmul.mubr.f32.gmra.mrb[0].mxu0 %v5225
        %v5293 = vpop.f32.mrb[0].mxu0
        %v5294 = vadd.f32 0.0, %v5293
        %v5295 = vpop.f32.mrb[0].mxu0
        %5296 = vdwg.mxu0
        %v5297 = vadd.f32 %v5214, %v5294
        %v5298 = vld [vmem:[#allocation6 + $0x9] sm:$0x1]
        %v5299 = vld [vmem:[%s9 + $0x240] sm:$0xff]
        %v5300 = vld [vmem:[%s9 + $0x248] sm:$0xff]
        %v5301 = vld [vmem:[%s9 + $0x250] sm:$0xff]
        %v5302 = vld [vmem:[%s9 + $0x258] sm:$0xff]
        %v5303 = vld [vmem:[%s9 + $0x260] sm:$0xff]
        %v5304 = vld [vmem:[%s9 + $0x268] sm:$0xff]
        %v5305 = vld [vmem:[%s9 + $0x270] sm:$0xff]
        %v5306 = vld [vmem:[%s9 + $0x278] sm:$0xff]
        %v5308 = vsel %vm1121, %v5298, 0
        %5310 = vmatprep.subr.mxu0 0.0
        %5311 = vmatpush1.msra.mxu0 %v5299
        %5312 = vmatprep.subr.mxu0 0.0
        %5313 = vmatpush1.msra.mxu0 %v5300
        %5314 = vmatprep.subr.mxu0 0.0
        %5315 = vmatpush1.msra.mxu0 %v5301
        %5316 = vmatprep.subr.mxu0 0.0
        %5317 = vmatpush1.msra.mxu0 %v5302
        %5318 = vmatprep.subr.mxu0 0.0
        %5319 = vmatpush1.msra.mxu0 %v5303
        %5320 = vmatprep.subr.mxu0 0.0
        %5321 = vmatpush1.msra.mxu0 %v5304
        %5322 = vmatprep.subr.mxu0 0.0
        %5323 = vmatpush1.msra.mxu0 %v5305
        %5324 = vmatprep.subr.mxu0 0.0
        %5325 = vmatpush1.msra.mxu0 %v5306
        %5326 = vmatprep.subr.mxu0 0.0
        %5327 = vmatpush1.msra.mxu0 0.0
        %5328 = vmatprep.subr.mxu0 0.0
        %5329 = vmatpush1.msra.mxu0 0.0
        %5330 = vmatprep.subr.mxu0 0.0
        %5331 = vmatpush1.msra.mxu0 0.0
        %5332 = vmatprep.subr.mxu0 0.0
        %5333 = vmatpush1.msra.mxu0 0.0
        %5334 = vmatprep.subr.mxu0 0.0
        %5335 = vmatpush1.msra.mxu0 0.0
        %5336 = vmatprep.subr.mxu0 0.0
        %5337 = vmatpush1.msra.mxu0 0.0
        %5338 = vmatprep.subr.mxu0 0.0
        %5339 = vmatpush1.msra.mxu0 0.0
        %5340 = vmatprep.subr.mxu0 0.0
        %5341 = vmatpush1.msra.mxu0 0.0
        %5342 = vmatprep.subr.mxu0 0.0
        %5343 = vmatpush1.msra.mxu0 0.0
        %5344 = vmatprep.subr.mxu0 0.0
        %5345 = vmatpush1.msra.mxu0 0.0
        %5346 = vmatprep.subr.mxu0 0.0
        %5347 = vmatpush1.msra.mxu0 0.0
        %5348 = vmatprep.subr.mxu0 0.0
        %5349 = vmatpush1.msra.mxu0 0.0
        %5350 = vmatprep.subr.mxu0 0.0
        %5351 = vmatpush1.msra.mxu0 0.0
        %5352 = vmatprep.subr.mxu0 0.0
        %5353 = vmatpush1.msra.mxu0 0.0
        %5354 = vmatprep.subr.mxu0 0.0
        %5355 = vmatpush1.msra.mxu0 0.0
        %5356 = vmatprep.subr.mxu0 0.0
        %5357 = vmatpush1.msra.mxu0 0.0
        %5358 = vmatprep.subr.mxu0 0.0
        %5359 = vmatpush1.msra.mxu0 0.0
        %5360 = vmatprep.subr.mxu0 0.0
        %5361 = vmatpush1.msra.mxu0 0.0
        %5362 = vmatprep.subr.mxu0 0.0
        %5363 = vmatpush1.msra.mxu0 0.0
        %5364 = vmatprep.subr.mxu0 0.0
        %5365 = vmatpush1.msra.mxu0 0.0
        %5366 = vmatprep.subr.mxu0 0.0
        %5367 = vmatpush1.msra.mxu0 0.0
        %5368 = vmatprep.subr.mxu0 0.0
        %5369 = vmatpush1.msra.mxu0 0.0
        %5370 = vmatprep.subr.mxu0 0.0
        %5371 = vmatpush1.msra.mxu0 0.0
        %5372 = vmatprep.subr.mxu0 0.0
        %5373 = vmatpush1.msra.mxu0 0.0
        %5374 = vmatprep.mubr.f32.mxu0 0.0
        %5375 = vmatmul.mubr.f32.gmra.mrb[0].mxu0 %v5308
        %v5376 = vpop.f32.mrb[0].mxu0
        %v5377 = vadd.f32 0.0, %v5376
        %v5378 = vpop.f32.mrb[0].mxu0
        %5379 = vdwg.mxu0
        %v5380 = vadd.f32 %v5297, %v5377
        %v5381 = vld [vmem:[#allocation6 + $0xa] sm:$0x1]
        %v5382 = vld [vmem:[%s9 + $0x280] sm:$0xff]
        %v5383 = vld [vmem:[%s9 + $0x288] sm:$0xff]
        %v5384 = vld [vmem:[%s9 + $0x290] sm:$0xff]
        %v5385 = vld [vmem:[%s9 + $0x298] sm:$0xff]
        %v5386 = vld [vmem:[%s9 + $0x2a0] sm:$0xff]
        %v5387 = vld [vmem:[%s9 + $0x2a8] sm:$0xff]
        %v5388 = vld [vmem:[%s9 + $0x2b0] sm:$0xff]
        %v5389 = vld [vmem:[%s9 + $0x2b8] sm:$0xff]
        %v5391 = vsel %vm1121, %v5381, 0
        %5393 = vmatprep.subr.mxu0 0.0
        %5394 = vmatpush1.msra.mxu0 %v5382
        %5395 = vmatprep.subr.mxu0 0.0
        %5396 = vmatpush1.msra.mxu0 %v5383
        %5397 = vmatprep.subr.mxu0 0.0
        %5398 = vmatpush1.msra.mxu0 %v5384
        %5399 = vmatprep.subr.mxu0 0.0
        %5400 = vmatpush1.msra.mxu0 %v5385
        %5401 = vmatprep.subr.mxu0 0.0
        %5402 = vmatpush1.msra.mxu0 %v5386
        %5403 = vmatprep.subr.mxu0 0.0
        %5404 = vmatpush1.msra.mxu0 %v5387
        %5405 = vmatprep.subr.mxu0 0.0
        %5406 = vmatpush1.msra.mxu0 %v5388
        %5407 = vmatprep.subr.mxu0 0.0
        %5408 = vmatpush1.msra.mxu0 %v5389
        %5409 = vmatprep.subr.mxu0 0.0
        %5410 = vmatpush1.msra.mxu0 0.0
        %5411 = vmatprep.subr.mxu0 0.0
        %5412 = vmatpush1.msra.mxu0 0.0
        %5413 = vmatprep.subr.mxu0 0.0
        %5414 = vmatpush1.msra.mxu0 0.0
        %5415 = vmatprep.subr.mxu0 0.0
        %5416 = vmatpush1.msra.mxu0 0.0
        %5417 = vmatprep.subr.mxu0 0.0
        %5418 = vmatpush1.msra.mxu0 0.0
        %5419 = vmatprep.subr.mxu0 0.0
        %5420 = vmatpush1.msra.mxu0 0.0
        %5421 = vmatprep.subr.mxu0 0.0
        %5422 = vmatpush1.msra.mxu0 0.0
        %5423 = vmatprep.subr.mxu0 0.0
        %5424 = vmatpush1.msra.mxu0 0.0
        %5425 = vmatprep.subr.mxu0 0.0
        %5426 = vmatpush1.msra.mxu0 0.0
        %5427 = vmatprep.subr.mxu0 0.0
        %5428 = vmatpush1.msra.mxu0 0.0
        %5429 = vmatprep.subr.mxu0 0.0
        %5430 = vmatpush1.msra.mxu0 0.0
        %5431 = vmatprep.subr.mxu0 0.0
        %5432 = vmatpush1.msra.mxu0 0.0
        %5433 = vmatprep.subr.mxu0 0.0
        %5434 = vmatpush1.msra.mxu0 0.0
        %5435 = vmatprep.subr.mxu0 0.0
        %5436 = vmatpush1.msra.mxu0 0.0
        %5437 = vmatprep.subr.mxu0 0.0
        %5438 = vmatpush1.msra.mxu0 0.0
        %5439 = vmatprep.subr.mxu0 0.0
        %5440 = vmatpush1.msra.mxu0 0.0
        %5441 = vmatprep.subr.mxu0 0.0
        %5442 = vmatpush1.msra.mxu0 0.0
        %5443 = vmatprep.subr.mxu0 0.0
        %5444 = vmatpush1.msra.mxu0 0.0
        %5445 = vmatprep.subr.mxu0 0.0
        %5446 = vmatpush1.msra.mxu0 0.0
        %5447 = vmatprep.subr.mxu0 0.0
        %5448 = vmatpush1.msra.mxu0 0.0
        %5449 = vmatprep.subr.mxu0 0.0
        %5450 = vmatpush1.msra.mxu0 0.0
        %5451 = vmatprep.subr.mxu0 0.0
        %5452 = vmatpush1.msra.mxu0 0.0
        %5453 = vmatprep.subr.mxu0 0.0
        %5454 = vmatpush1.msra.mxu0 0.0
        %5455 = vmatprep.subr.mxu0 0.0
        %5456 = vmatpush1.msra.mxu0 0.0
        %5457 = vmatprep.mubr.f32.mxu0 0.0
        %5458 = vmatmul.mubr.f32.gmra.mrb[0].mxu0 %v5391
        %v5459 = vpop.f32.mrb[0].mxu0
        %v5460 = vadd.f32 0.0, %v5459
        %v5461 = vpop.f32.mrb[0].mxu0
        %5462 = vdwg.mxu0
        %v5463 = vadd.f32 %v5380, %v5460
        %v5464 = vld [vmem:[#allocation6 + $0xb] sm:$0x1]
        %v5465 = vld [vmem:[%s9 + $0x2c0] sm:$0xff]
        %v5466 = vld [vmem:[%s9 + $0x2c8] sm:$0xff]
        %v5467 = vld [vmem:[%s9 + $0x2d0] sm:$0xff]
        %v5468 = vld [vmem:[%s9 + $0x2d8] sm:$0xff]
        %v5469 = vld [vmem:[%s9 + $0x2e0] sm:$0xff]
        %v5470 = vld [vmem:[%s9 + $0x2e8] sm:$0xff]
        %v5471 = vld [vmem:[%s9 + $0x2f0] sm:$0xff]
        %v5472 = vld [vmem:[%s9 + $0x2f8] sm:$0xff]
        %v5474 = vsel %vm1121, %v5464, 0
        %5476 = vmatprep.subr.mxu0 0.0
        %5477 = vmatpush1.msra.mxu0 %v5465
        %5478 = vmatprep.subr.mxu0 0.0
        %5479 = vmatpush1.msra.mxu0 %v5466
        %5480 = vmatprep.subr.mxu0 0.0
        %5481 = vmatpush1.msra.mxu0 %v5467
        %5482 = vmatprep.subr.mxu0 0.0
        %5483 = vmatpush1.msra.mxu0 %v5468
        %5484 = vmatprep.subr.mxu0 0.0
        %5485 = vmatpush1.msra.mxu0 %v5469
        %5486 = vmatprep.subr.mxu0 0.0
        %5487 = vmatpush1.msra.mxu0 %v5470
        %5488 = vmatprep.subr.mxu0 0.0
        %5489 = vmatpush1.msra.mxu0 %v5471
        %5490 = vmatprep.subr.mxu0 0.0
        %5491 = vmatpush1.msra.mxu0 %v5472
        %5492 = vmatprep.subr.mxu0 0.0
        %5493 = vmatpush1.msra.mxu0 0.0
        %5494 = vmatprep.subr.mxu0 0.0
        %5495 = vmatpush1.msra.mxu0 0.0
        %5496 = vmatprep.subr.mxu0 0.0
        %5497 = vmatpush1.msra.mxu0 0.0
        %5498 = vmatprep.subr.mxu0 0.0
        %5499 = vmatpush1.msra.mxu0 0.0
        %5500 = vmatprep.subr.mxu0 0.0
        %5501 = vmatpush1.msra.mxu0 0.0
        %5502 = vmatprep.subr.mxu0 0.0
        %5503 = vmatpush1.msra.mxu0 0.0
        %5504 = vmatprep.subr.mxu0 0.0
        %5505 = vmatpush1.msra.mxu0 0.0
        %5506 = vmatprep.subr.mxu0 0.0
        %5507 = vmatpush1.msra.mxu0 0.0
        %5508 = vmatprep.subr.mxu0 0.0
        %5509 = vmatpush1.msra.mxu0 0.0
        %5510 = vmatprep.subr.mxu0 0.0
        %5511 = vmatpush1.msra.mxu0 0.0
        %5512 = vmatprep.subr.mxu0 0.0
        %5513 = vmatpush1.msra.mxu0 0.0
        %5514 = vmatprep.subr.mxu0 0.0
        %5515 = vmatpush1.msra.mxu0 0.0
        %5516 = vmatprep.subr.mxu0 0.0
        %5517 = vmatpush1.msra.mxu0 0.0
        %5518 = vmatprep.subr.mxu0 0.0
        %5519 = vmatpush1.msra.mxu0 0.0
        %5520 = vmatprep.subr.mxu0 0.0
        %5521 = vmatpush1.msra.mxu0 0.0
        %5522 = vmatprep.subr.mxu0 0.0
        %5523 = vmatpush1.msra.mxu0 0.0
        %5524 = vmatprep.subr.mxu0 0.0
        %5525 = vmatpush1.msra.mxu0 0.0
        %5526 = vmatprep.subr.mxu0 0.0
        %5527 = vmatpush1.msra.mxu0 0.0
        %5528 = vmatprep.subr.mxu0 0.0
        %5529 = vmatpush1.msra.mxu0 0.0
        %5530 = vmatprep.subr.mxu0 0.0
        %5531 = vmatpush1.msra.mxu0 0.0
        %5532 = vmatprep.subr.mxu0 0.0
        %5533 = vmatpush1.msra.mxu0 0.0
        %5534 = vmatprep.subr.mxu0 0.0
        %5535 = vmatpush1.msra.mxu0 0.0
        %5536 = vmatprep.subr.mxu0 0.0
        %5537 = vmatpush1.msra.mxu0 0.0
        %5538 = vmatprep.subr.mxu0 0.0
        %5539 = vmatpush1.msra.mxu0 0.0
        %5540 = vmatprep.mubr.f32.mxu0 0.0
        %5541 = vmatmul.mubr.f32.gmra.mrb[0].mxu0 %v5474
        %v5542 = vpop.f32.mrb[0].mxu0
        %v5543 = vadd.f32 0.0, %v5542
        %v5544 = vpop.f32.mrb[0].mxu0
        %5545 = vdwg.mxu0
        %v5546 = vadd.f32 %v5463, %v5543
        %v5547 = vld [vmem:[#allocation6 + $0xc] sm:$0x1]
        %v5548 = vld [vmem:[%s9 + $0x300] sm:$0xff]
        %v5549 = vld [vmem:[%s9 + $0x308] sm:$0xff]
        %v5550 = vld [vmem:[%s9 + $0x310] sm:$0xff]
        %v5551 = vld [vmem:[%s9 + $0x318] sm:$0xff]
        %v5552 = vld [vmem:[%s9 + $0x320] sm:$0xff]
        %v5553 = vld [vmem:[%s9 + $0x328] sm:$0xff]
        %v5554 = vld [vmem:[%s9 + $0x330] sm:$0xff]
        %v5555 = vld [vmem:[%s9 + $0x338] sm:$0xff]
        %v5557 = vsel %vm1121, %v5547, 0
        %5559 = vmatprep.subr.mxu0 0.0
        %5560 = vmatpush1.msra.mxu0 %v5548
        %5561 = vmatprep.subr.mxu0 0.0
        %5562 = vmatpush1.msra.mxu0 %v5549
        %5563 = vmatprep.subr.mxu0 0.0
        %5564 = vmatpush1.msra.mxu0 %v5550
        %5565 = vmatprep.subr.mxu0 0.0
        %5566 = vmatpush1.msra.mxu0 %v5551
        %5567 = vmatprep.subr.mxu0 0.0
        %5568 = vmatpush1.msra.mxu0 %v5552
        %5569 = vmatprep.subr.mxu0 0.0
        %5570 = vmatpush1.msra.mxu0 %v5553
        %5571 = vmatprep.subr.mxu0 0.0
        %5572 = vmatpush1.msra.mxu0 %v5554
        %5573 = vmatprep.subr.mxu0 0.0
        %5574 = vmatpush1.msra.mxu0 %v5555
        %5575 = vmatprep.subr.mxu0 0.0
        %5576 = vmatpush1.msra.mxu0 0.0
        %5577 = vmatprep.subr.mxu0 0.0
        %5578 = vmatpush1.msra.mxu0 0.0
        %5579 = vmatprep.subr.mxu0 0.0
        %5580 = vmatpush1.msra.mxu0 0.0
        %5581 = vmatprep.subr.mxu0 0.0
        %5582 = vmatpush1.msra.mxu0 0.0
        %5583 = vmatprep.subr.mxu0 0.0
        %5584 = vmatpush1.msra.mxu0 0.0
        %5585 = vmatprep.subr.mxu0 0.0
        %5586 = vmatpush1.msra.mxu0 0.0
        %5587 = vmatprep.subr.mxu0 0.0
        %5588 = vmatpush1.msra.mxu0 0.0
        %5589 = vmatprep.subr.mxu0 0.0
        %5590 = vmatpush1.msra.mxu0 0.0
        %5591 = vmatprep.subr.mxu0 0.0
        %5592 = vmatpush1.msra.mxu0 0.0
        %5593 = vmatprep.subr.mxu0 0.0
        %5594 = vmatpush1.msra.mxu0 0.0
        %5595 = vmatprep.subr.mxu0 0.0
        %5596 = vmatpush1.msra.mxu0 0.0
        %5597 = vmatprep.subr.mxu0 0.0
        %5598 = vmatpush1.msra.mxu0 0.0
        %5599 = vmatprep.subr.mxu0 0.0
        %5600 = vmatpush1.msra.mxu0 0.0
        %5601 = vmatprep.subr.mxu0 0.0
        %5602 = vmatpush1.msra.mxu0 0.0
        %5603 = vmatprep.subr.mxu0 0.0
        %5604 = vmatpush1.msra.mxu0 0.0
        %5605 = vmatprep.subr.mxu0 0.0
        %5606 = vmatpush1.msra.mxu0 0.0
        %5607 = vmatprep.subr.mxu0 0.0
        %5608 = vmatpush1.msra.mxu0 0.0
        %5609 = vmatprep.subr.mxu0 0.0
        %5610 = vmatpush1.msra.mxu0 0.0
        %5611 = vmatprep.subr.mxu0 0.0
        %5612 = vmatpush1.msra.mxu0 0.0
        %5613 = vmatprep.subr.mxu0 0.0
        %5614 = vmatpush1.msra.mxu0 0.0
        %5615 = vmatprep.subr.mxu0 0.0
        %5616 = vmatpush1.msra.mxu0 0.0
        %5617 = vmatprep.subr.mxu0 0.0
        %5618 = vmatpush1.msra.mxu0 0.0
        %5619 = vmatprep.subr.mxu0 0.0
        %5620 = vmatpush1.msra.mxu0 0.0
        %5621 = vmatprep.subr.mxu0 0.0
        %5622 = vmatpush1.msra.mxu0 0.0
        %5623 = vmatprep.mubr.f32.mxu0 0.0
        %5624 = vmatmul.mubr.f32.gmra.mrb[0].mxu0 %v5557
        %v5625 = vpop.f32.mrb[0].mxu0
        %v5626 = vadd.f32 0.0, %v5625
        %v5627 = vpop.f32.mrb[0].mxu0
        %5628 = vdwg.mxu0
        %v5629 = vadd.f32 %v5546, %v5626
        %v5630 = vld [vmem:[#allocation6 + $0xd] sm:$0x1]
        %v5631 = vld [vmem:[%s9 + $0x340] sm:$0xff]
        %v5632 = vld [vmem:[%s9 + $0x348] sm:$0xff]
        %v5633 = vld [vmem:[%s9 + $0x350] sm:$0xff]
        %v5634 = vld [vmem:[%s9 + $0x358] sm:$0xff]
        %v5635 = vld [vmem:[%s9 + $0x360] sm:$0xff]
        %v5636 = vld [vmem:[%s9 + $0x368] sm:$0xff]
        %v5637 = vld [vmem:[%s9 + $0x370] sm:$0xff]
        %v5638 = vld [vmem:[%s9 + $0x378] sm:$0xff]
        %v5640 = vsel %vm1121, %v5630, 0
        %5642 = vmatprep.subr.mxu0 0.0
        %5643 = vmatpush1.msra.mxu0 %v5631
        %5644 = vmatprep.subr.mxu0 0.0
        %5645 = vmatpush1.msra.mxu0 %v5632
        %5646 = vmatprep.subr.mxu0 0.0
        %5647 = vmatpush1.msra.mxu0 %v5633
        %5648 = vmatprep.subr.mxu0 0.0
        %5649 = vmatpush1.msra.mxu0 %v5634
        %5650 = vmatprep.subr.mxu0 0.0
        %5651 = vmatpush1.msra.mxu0 %v5635
        %5652 = vmatprep.subr.mxu0 0.0
        %5653 = vmatpush1.msra.mxu0 %v5636
        %5654 = vmatprep.subr.mxu0 0.0
        %5655 = vmatpush1.msra.mxu0 %v5637
        %5656 = vmatprep.subr.mxu0 0.0
        %5657 = vmatpush1.msra.mxu0 %v5638
        %5658 = vmatprep.subr.mxu0 0.0
        %5659 = vmatpush1.msra.mxu0 0.0
        %5660 = vmatprep.subr.mxu0 0.0
        %5661 = vmatpush1.msra.mxu0 0.0
        %5662 = vmatprep.subr.mxu0 0.0
        %5663 = vmatpush1.msra.mxu0 0.0
        %5664 = vmatprep.subr.mxu0 0.0
        %5665 = vmatpush1.msra.mxu0 0.0
        %5666 = vmatprep.subr.mxu0 0.0
        %5667 = vmatpush1.msra.mxu0 0.0
        %5668 = vmatprep.subr.mxu0 0.0
        %5669 = vmatpush1.msra.mxu0 0.0
        %5670 = vmatprep.subr.mxu0 0.0
        %5671 = vmatpush1.msra.mxu0 0.0
        %5672 = vmatprep.subr.mxu0 0.0
        %5673 = vmatpush1.msra.mxu0 0.0
        %5674 = vmatprep.subr.mxu0 0.0
        %5675 = vmatpush1.msra.mxu0 0.0
        %5676 = vmatprep.subr.mxu0 0.0
        %5677 = vmatpush1.msra.mxu0 0.0
        %5678 = vmatprep.subr.mxu0 0.0
        %5679 = vmatpush1.msra.mxu0 0.0
        %5680 = vmatprep.subr.mxu0 0.0
        %5681 = vmatpush1.msra.mxu0 0.0
        %5682 = vmatprep.subr.mxu0 0.0
        %5683 = vmatpush1.msra.mxu0 0.0
        %5684 = vmatprep.subr.mxu0 0.0
        %5685 = vmatpush1.msra.mxu0 0.0
        %5686 = vmatprep.subr.mxu0 0.0
        %5687 = vmatpush1.msra.mxu0 0.0
        %5688 = vmatprep.subr.mxu0 0.0
        %5689 = vmatpush1.msra.mxu0 0.0
        %5690 = vmatprep.subr.mxu0 0.0
        %5691 = vmatpush1.msra.mxu0 0.0
        %5692 = vmatprep.subr.mxu0 0.0
        %5693 = vmatpush1.msra.mxu0 0.0
        %5694 = vmatprep.subr.mxu0 0.0
        %5695 = vmatpush1.msra.mxu0 0.0
        %5696 = vmatprep.subr.mxu0 0.0
        %5697 = vmatpush1.msra.mxu0 0.0
        %5698 = vmatprep.subr.mxu0 0.0
        %5699 = vmatpush1.msra.mxu0 0.0
        %5700 = vmatprep.subr.mxu0 0.0
        %5701 = vmatpush1.msra.mxu0 0.0
        %5702 = vmatprep.subr.mxu0 0.0
        %5703 = vmatpush1.msra.mxu0 0.0
        %5704 = vmatprep.subr.mxu0 0.0
        %5705 = vmatpush1.msra.mxu0 0.0
        %5706 = vmatprep.mubr.f32.mxu0 0.0
        %5707 = vmatmul.mubr.f32.gmra.mrb[0].mxu0 %v5640
        %v5708 = vpop.f32.mrb[0].mxu0
        %v5709 = vadd.f32 0.0, %v5708
        %v5710 = vpop.f32.mrb[0].mxu0
        %5711 = vdwg.mxu0
        %v5712 = vadd.f32 %v5629, %v5709
        %v5713 = vld [vmem:[#allocation6 + $0xe] sm:$0x1]
        %v5714 = vld [vmem:[%s9 + $0x380] sm:$0xff]
        %v5715 = vld [vmem:[%s9 + $0x388] sm:$0xff]
        %v5716 = vld [vmem:[%s9 + $0x390] sm:$0xff]
        %v5717 = vld [vmem:[%s9 + $0x398] sm:$0xff]
        %v5718 = vld [vmem:[%s9 + $0x3a0] sm:$0xff]
        %v5719 = vld [vmem:[%s9 + $0x3a8] sm:$0xff]
        %v5720 = vld [vmem:[%s9 + $0x3b0] sm:$0xff]
        %v5721 = vld [vmem:[%s9 + $0x3b8] sm:$0xff]
        %v5723 = vsel %vm1121, %v5713, 0
        %5725 = vmatprep.subr.mxu0 0.0
        %5726 = vmatpush1.msra.mxu0 %v5714
        %5727 = vmatprep.subr.mxu0 0.0
        %5728 = vmatpush1.msra.mxu0 %v5715
        %5729 = vmatprep.subr.mxu0 0.0
        %5730 = vmatpush1.msra.mxu0 %v5716
        %5731 = vmatprep.subr.mxu0 0.0
        %5732 = vmatpush1.msra.mxu0 %v5717
        %5733 = vmatprep.subr.mxu0 0.0
        %5734 = vmatpush1.msra.mxu0 %v5718
        %5735 = vmatprep.subr.mxu0 0.0
        %5736 = vmatpush1.msra.mxu0 %v5719
        %5737 = vmatprep.subr.mxu0 0.0
        %5738 = vmatpush1.msra.mxu0 %v5720
        %5739 = vmatprep.subr.mxu0 0.0
        %5740 = vmatpush1.msra.mxu0 %v5721
        %5741 = vmatprep.subr.mxu0 0.0
        %5742 = vmatpush1.msra.mxu0 0.0
        %5743 = vmatprep.subr.mxu0 0.0
        %5744 = vmatpush1.msra.mxu0 0.0
        %5745 = vmatprep.subr.mxu0 0.0
        %5746 = vmatpush1.msra.mxu0 0.0
        %5747 = vmatprep.subr.mxu0 0.0
        %5748 = vmatpush1.msra.mxu0 0.0
        %5749 = vmatprep.subr.mxu0 0.0
        %5750 = vmatpush1.msra.mxu0 0.0
        %5751 = vmatprep.subr.mxu0 0.0
        %5752 = vmatpush1.msra.mxu0 0.0
        %5753 = vmatprep.subr.mxu0 0.0
        %5754 = vmatpush1.msra.mxu0 0.0
        %5755 = vmatprep.subr.mxu0 0.0
        %5756 = vmatpush1.msra.mxu0 0.0
        %5757 = vmatprep.subr.mxu0 0.0
        %5758 = vmatpush1.msra.mxu0 0.0
        %5759 = vmatprep.subr.mxu0 0.0
        %5760 = vmatpush1.msra.mxu0 0.0
        %5761 = vmatprep.subr.mxu0 0.0
        %5762 = vmatpush1.msra.mxu0 0.0
        %5763 = vmatprep.subr.mxu0 0.0
        %5764 = vmatpush1.msra.mxu0 0.0
        %5765 = vmatprep.subr.mxu0 0.0
        %5766 = vmatpush1.msra.mxu0 0.0
        %5767 = vmatprep.subr.mxu0 0.0
        %5768 = vmatpush1.msra.mxu0 0.0
        %5769 = vmatprep.subr.mxu0 0.0
        %5770 = vmatpush1.msra.mxu0 0.0
        %5771 = vmatprep.subr.mxu0 0.0
        %5772 = vmatpush1.msra.mxu0 0.0
        %5773 = vmatprep.subr.mxu0 0.0
        %5774 = vmatpush1.msra.mxu0 0.0
        %5775 = vmatprep.subr.mxu0 0.0
        %5776 = vmatpush1.msra.mxu0 0.0
        %5777 = vmatprep.subr.mxu0 0.0
        %5778 = vmatpush1.msra.mxu0 0.0
        %5779 = vmatprep.subr.mxu0 0.0
        %5780 = vmatpush1.msra.mxu0 0.0
        %5781 = vmatprep.subr.mxu0 0.0
        %5782 = vmatpush1.msra.mxu0 0.0
        %5783 = vmatprep.subr.mxu0 0.0
        %5784 = vmatpush1.msra.mxu0 0.0
        %5785 = vmatprep.subr.mxu0 0.0
        %5786 = vmatpush1.msra.mxu0 0.0
        %5787 = vmatprep.subr.mxu0 0.0
        %5788 = vmatpush1.msra.mxu0 0.0
        %5789 = vmatprep.mubr.f32.mxu0 0.0
        %5790 = vmatmul.mubr.f32.gmra.mrb[0].mxu0 %v5723
        %v5791 = vpop.f32.mrb[0].mxu0
        %v5792 = vadd.f32 0.0, %v5791
        %v5793 = vpop.f32.mrb[0].mxu0
        %5794 = vdwg.mxu0
        %v5795 = vadd.f32 %v5712, %v5792
        %v5796 = vld [vmem:[#allocation6 + $0xf] sm:$0x1]
        %v5797 = vld [vmem:[%s9 + $0x3c0] sm:$0xff]
        %v5798 = vld [vmem:[%s9 + $0x3c8] sm:$0xff]
        %v5799 = vld [vmem:[%s9 + $0x3d0] sm:$0xff]
        %v5800 = vld [vmem:[%s9 + $0x3d8] sm:$0xff]
        %v5801 = vld [vmem:[%s9 + $0x3e0] sm:$0xff]
        %v5802 = vld [vmem:[%s9 + $0x3e8] sm:$0xff]
        %v5803 = vld [vmem:[%s9 + $0x3f0] sm:$0xff]
        %v5804 = vld [vmem:[%s9 + $0x3f8] sm:$0xff]
        %v5806 = vsel %vm1121, %v5796, 0
        %5808 = vmatprep.subr.mxu0 0.0
        %5809 = vmatpush1.msra.mxu0 %v5797
        %5810 = vmatprep.subr.mxu0 0.0
        %5811 = vmatpush1.msra.mxu0 %v5798
        %5812 = vmatprep.subr.mxu0 0.0
        %5813 = vmatpush1.msra.mxu0 %v5799
        %5814 = vmatprep.subr.mxu0 0.0
        %5815 = vmatpush1.msra.mxu0 %v5800
        %5816 = vmatprep.subr.mxu0 0.0
        %5817 = vmatpush1.msra.mxu0 %v5801
        %5818 = vmatprep.subr.mxu0 0.0
        %5819 = vmatpush1.msra.mxu0 %v5802
        %5820 = vmatprep.subr.mxu0 0.0
        %5821 = vmatpush1.msra.mxu0 %v5803
        %5822 = vmatprep.subr.mxu0 0.0
        %5823 = vmatpush1.msra.mxu0 %v5804
        %5824 = vmatprep.subr.mxu0 0.0
        %5825 = vmatpush1.msra.mxu0 0.0
        %5826 = vmatprep.subr.mxu0 0.0
        %5827 = vmatpush1.msra.mxu0 0.0
        %5828 = vmatprep.subr.mxu0 0.0
        %5829 = vmatpush1.msra.mxu0 0.0
        %5830 = vmatprep.subr.mxu0 0.0
        %5831 = vmatpush1.msra.mxu0 0.0
        %5832 = vmatprep.subr.mxu0 0.0
        %5833 = vmatpush1.msra.mxu0 0.0
        %5834 = vmatprep.subr.mxu0 0.0
        %5835 = vmatpush1.msra.mxu0 0.0
        %5836 = vmatprep.subr.mxu0 0.0
        %5837 = vmatpush1.msra.mxu0 0.0
        %5838 = vmatprep.subr.mxu0 0.0
        %5839 = vmatpush1.msra.mxu0 0.0
        %5840 = vmatprep.subr.mxu0 0.0
        %5841 = vmatpush1.msra.mxu0 0.0
        %5842 = vmatprep.subr.mxu0 0.0
        %5843 = vmatpush1.msra.mxu0 0.0
        %5844 = vmatprep.subr.mxu0 0.0
        %5845 = vmatpush1.msra.mxu0 0.0
        %5846 = vmatprep.subr.mxu0 0.0
        %5847 = vmatpush1.msra.mxu0 0.0
        %5848 = vmatprep.subr.mxu0 0.0
        %5849 = vmatpush1.msra.mxu0 0.0
        %5850 = vmatprep.subr.mxu0 0.0
        %5851 = vmatpush1.msra.mxu0 0.0
        %5852 = vmatprep.subr.mxu0 0.0
        %5853 = vmatpush1.msra.mxu0 0.0
        %5854 = vmatprep.subr.mxu0 0.0
        %5855 = vmatpush1.msra.mxu0 0.0
        %5856 = vmatprep.subr.mxu0 0.0
        %5857 = vmatpush1.msra.mxu0 0.0
        %5858 = vmatprep.subr.mxu0 0.0
        %5859 = vmatpush1.msra.mxu0 0.0
        %5860 = vmatprep.subr.mxu0 0.0
        %5861 = vmatpush1.msra.mxu0 0.0
        %5862 = vmatprep.subr.mxu0 0.0
        %5863 = vmatpush1.msra.mxu0 0.0
        %5864 = vmatprep.subr.mxu0 0.0
        %5865 = vmatpush1.msra.mxu0 0.0
        %5866 = vmatprep.subr.mxu0 0.0
        %5867 = vmatpush1.msra.mxu0 0.0
        %5868 = vmatprep.subr.mxu0 0.0
        %5869 = vmatpush1.msra.mxu0 0.0
        %5870 = vmatprep.subr.mxu0 0.0
        %5871 = vmatpush1.msra.mxu0 0.0
        %5872 = vmatprep.mubr.f32.mxu0 0.0
        %5873 = vmatmul.mubr.f32.gmra.mrb[0].mxu0 %v5806
        %v5874 = vpop.f32.mrb[0].mxu0
        %v5875 = vadd.f32 0.0, %v5874
        %v5876 = vpop.f32.mrb[0].mxu0
        %5877 = vdwg.mxu0
        %v5878 = vadd.f32 %v5795, %v5875
        %v5879 = vld [vmem:[%s10] sm:$0x1]
        %v5880 = vadd.f32 %v5878, %v5879
        %v5881 = vmax.f32 %v5880, 0.0
        %vm5882 = vcmask 122880
        %5883 = vst.msk [vmem:[%s378] sm:$0x1] %vm5882, %v5881
        %s5884 = sand.u32 %s269, 1
        %s5885 = scalar_lea.sflag [#allocation8], %s5884
        %s5886 = sand.u32 %s269, 1
        %s5887 = scalar_lea.vmem [#allocation7], %s5886
        // Predicated region
        $region100: #{image_encoder_forward.3} parent=63 // pred_check
          %p5888 = pneg %p279
        $region101: #{image_encoder_forward.3} parent=63 // pred_check_branch
          %5890 = sbr.rel (%p5888) target = $region103
        $region102: #{image_encoder_forward.3} parent=63 // pred_region
          %s5892 = ssub.s32 16, 16
          %5893 = vsyncadd %s5885, %s5892
          %s5894 = smul.addr %s25, 16
          %s5895 = scalar_lea.hbm %s11, %s5894
          %s5897 = sshll.u32 %s5887, 4
          %s5898 = int_to_ptr.vmem [resolvable:$true] %s5897
          %5900 = dma.vmem_to_hbm [thread:$0]  %s5898, 16, %s5895, %s5885
        $region103: #{image_encoder_forward.3} parent=63 // pred_fallthru
          _
      $region64: #{image_encoder_forward.3} parent=5 // pred_fallthru
        _
      %p5901 = scmp.le.s32.totalorder 2, %s20
      // Predicated region
      $region104: #{image_encoder_forward.3} parent=5 // pred_check
        %p5902 = pneg %p5901
      $region105: #{image_encoder_forward.3} parent=5 // pred_check_branch
        %5904 = sbr.rel (%p5902) target = $region107
      $region106: #{image_encoder_forward.3} parent=5 // pred_region
        %s5905 = ssub.s32 %s20, 2
        // Predicated region
        $region108: #{image_encoder_forward.3} parent=106 // pred_check
          %p5906 = pneg %p285
        $region109: #{image_encoder_forward.3} parent=106 // pred_check_branch
          %5908 = sbr.rel (%p5906) target = $region111
        $region110: #{image_encoder_forward.3} parent=106 // pred_region
          %s5909 = sand.u32 %s270, 1
          %s5910 = scalar_lea.sflag [#allocation8], %s5909
          %s5911 = sand.u32 %s270, 1
          %s5912 = scalar_lea.vmem [#allocation7], %s5911
          %5913 = dma.done %s5910, 16
        $region111: #{image_encoder_forward.3} parent=106 // pred_fallthru
          _
      $region107: #{image_encoder_forward.3} parent=5 // pred_fallthru
        _
    $region6: #{image_encoder_forward.3} parent=1 // loop_footer
      %s24 = sadd.s32 1, %s20
    $region7: #{image_encoder_forward.3} parent=1 // loop_footer_branch
      %19 = sbr.rel target = $region3
    $region8: #{image_encoder_forward.3} parent=1 // loop_exit
      _
    %5914 = vsyncpa [#allocation8], 1
    %s5915 = scalar_lea.sflag [#allocation8], 1
    %5916 = vsyncpa %s5915, 1

</llo_original>
